<compile_context>
chip_gen: v5e
topology: v5e:2x2
jax: 0.10.0
libtpu: 0.0.40
codegen_flags: <defaults>
</compile_context>

<pallas_src>
import math

import jax
import jax.numpy as jnp
import numpy as np
from jax.experimental import pallas as pl
from jax.experimental.pallas import tpu as pltpu

_LN_EPS = 1e-6
_PADL = 8   # W-axis (sublane) offset of the interior inside the padded scratch


def _gelu_tanh(x):
    # tanh-form GELU; jnp.tanh lowers to the EUP.  |err| vs exact erf-GELU is
    # well inside the 5e-3 test tolerance (not bit-identical to nn.GELU()).
    c = math.sqrt(2.0 / math.pi)
    return 0.5 * x * (1.0 + jnp.tanh(c * (x + 0.044715 * x * x * x)))


def _block_kernel(x_ref, dww_ref, dwb_ref, lnw_ref, lnb_ref,
                  w1_ref, b1_ref, w2_ref, b2_ref, g_ref,
                  o_ref, xpad_ref, yn_ref):
    B, H, W, C = x_ref.shape
    HP = H + 6
    WP = xpad_ref.shape[2]          # _PADL + W + 3
    RS = math.gcd(H, 8)             # output rows per dwconv strip
    n_strips = H // RS

    # ---- depthwise 7x7 conv (zero pad=3, groups=C) + LayerNorm, per strip ----
    def image_body(b, carry):
        # Zero only this image's halo (cols the conv actually reads).  Done
        # every grid step: scratch is per-TensorCore, so a program_id==0 guard
        # would leave the second core's halo uninitialized on v7x.
        xpad_ref[b, pl.ds(0, 3), :, :] = jnp.zeros((3, WP, C), jnp.float32)
        xpad_ref[b, pl.ds(H + 3, 3), :, :] = jnp.zeros((3, WP, C), jnp.float32)
        xpad_ref[b, :, pl.ds(_PADL - 3, 3), :] = jnp.zeros((HP, 3, C), jnp.float32)
        xpad_ref[b, :, pl.ds(_PADL + W, 3), :] = jnp.zeros((HP, 3, C), jnp.float32)
        # Interior: sublane-aligned store at W-offset _PADL.  x is not kept
        # live in vregs across the conv; it is re-read at the residual.
        xpad_ref[b, pl.ds(3, H), pl.ds(_PADL, W), :] = x_ref[b]

        def strip_body(s, carry2):
            r0 = pl.multiple_of(s * RS, RS)
            acc = jnp.zeros((RS, W, C), jnp.float32)
            for kh in range(7):
                # One padded row-band load per kh; the 7 kw-shifted views are
                # static sublane slices of this value (XLU), not 49 separate
                # unaligned VMEM loads.
                band = xpad_ref[b, pl.ds(r0 + kh, RS), :, :]     # (RS, WP, C)
                for kw in range(7):
                    c0 = _PADL - 3 + kw
                    tap = dww_ref[kh * 7 + kw].reshape(1, 1, C)  # per-channel
                    acc = acc + band[:, c0:c0 + W, :] * tap
            y = (acc + dwb_ref[...].reshape(1, 1, C)).reshape(RS * W, C)

            # LayerNorm over channels (channels_last, eps=1e-6), f32.
            u = jnp.mean(y, axis=-1, keepdims=True)
            d = y - u
            var = jnp.mean(d * d, axis=-1, keepdims=True)
            yn = d * jax.lax.rsqrt(var + _LN_EPS)
            yn = yn * lnw_ref[...] + lnb_ref[...]

            row0 = pl.multiple_of((b * H + r0) * W, RS * W)
            yn_ref[pl.ds(row0, RS * W), :] = yn.astype(jnp.bfloat16)
            return carry2

        return jax.lax.fori_loop(0, n_strips, strip_body, carry)

    jax.lax.fori_loop(0, B, image_body, 0)

    # ---- MLP over all B images at once (M = B*H*W rows), bf16 MXU, f32 acc ---
    yn = yn_ref[...]                                               # (rows, C) bf16
    h = jnp.dot(yn, w1_ref[...], preferred_element_type=jnp.float32) + b1_ref[...]
    h = _gelu_tanh(h)
    z = jnp.dot(h.astype(jnp.bfloat16), w2_ref[...],
                preferred_element_type=jnp.float32)
    z = (z + b2_ref[...]) * g_ref[...]

    # ---- residual (x re-read from VMEM: cheap vld, no long live-range) ------
    o_ref[...] = (x_ref[...] + z.reshape(B, H, W, C)).astype(o_ref.dtype)


def _pick_images_per_step(N, H, W):
    # Batch images per grid step so the MXU sees M = B*H*W >= ~512 rows and the
    # ~0.35us per-grid-step overhead is amortized; B must divide N.
    B = 1
    while N % (2 * B) == 0 and B * H * W < 512:
        B *= 2
    return B


@jax.jit
def block_forward(x, dw_w, dw_b, ln_w, ln_b, w1, b1, w2, b2, gamma):
    """ConvNeXt Block forward (drop_path = Identity).

    x:     (N, C, H, W) float32 (NCHW, as in the PyTorch module)
    dw_w:  (C, 1, 7, 7) depthwise conv weight (torch layout);  dw_b: (C,)
    ln_w, ln_b: (C,)   LayerNorm affine
    w1: (C, 4C) == pwconv1.weight.T ; b1: (4C,)
    w2: (4C, C) == pwconv2.weight.T ; b2: (C,)
    gamma: (C,) layer-scale
    """
    N, C, H, W = x.shape
    C4 = 4 * C
    B = _pick_images_per_step(N, H, W)
    grid_n = N // B
    HP, WP = H + 6, _PADL + W + 3

    # Layout plumbing (outside the kernel): channels-last so C sits on lanes;
    # pwconv weights pre-transposed; MXU weight operands pre-cast to bf16.
    x_nhwc = jnp.transpose(x, (0, 2, 3, 1))                 # (N, H, W, C)
    dww = jnp.transpose(dw_w.reshape(C, 49), (1, 0))        # (49, C), row = kh*7+kw
    dwb = dw_b.reshape(1, C)
    lnw = ln_w.reshape(1, C)
    lnb = ln_b.reshape(1, C)
    w1_bf = w1.astype(jnp.bfloat16)
    w2_bf = w2.astype(jnp.bfloat16)
    b1r = b1.reshape(1, C4)
    b2r = b2.reshape(1, C)
    g = gamma.reshape(1, C)

    out_nhwc = pl.pallas_call(
        _block_kernel,
        out_shape=jax.ShapeDtypeStruct((N, H, W, C), x.dtype),
        grid_spec=pltpu.PrefetchScalarGridSpec(
            num_scalar_prefetch=0,
            grid=(grid_n,),
            in_specs=[
                pl.BlockSpec((B, H, W, C), lambda n: (n, 0, 0, 0)),   # x (NHWC)
                pl.BlockSpec((49, C), lambda n: (0, 0)),              # dw weights
                pl.BlockSpec((1, C), lambda n: (0, 0)),               # dw bias
                pl.BlockSpec((1, C), lambda n: (0, 0)),               # LN weight
                pl.BlockSpec((1, C), lambda n: (0, 0)),               # LN bias
                pl.BlockSpec((C, C4), lambda n: (0, 0)),              # w1 (bf16)
                pl.BlockSpec((1, C4), lambda n: (0, 0)),              # b1
                pl.BlockSpec((C4, C), lambda n: (0, 0)),              # w2 (bf16)
                pl.BlockSpec((1, C), lambda n: (0, 0)),               # b2
                pl.BlockSpec((1, C), lambda n: (0, 0)),               # gamma
            ],
            out_specs=pl.BlockSpec((B, H, W, C), lambda n: (n, 0, 0, 0)),
            scratch_shapes=[
                pltpu.VMEM((B, HP, WP, C), jnp.float32),    # zero-padded input
                pltpu.VMEM((B * H * W, C), jnp.bfloat16),   # post-LN activations
            ],
        ),
        compiler_params=pltpu.CompilerParams(
            # "parallel" batch axis: shards grid steps across TCs on v7x.
            dimension_semantics=("parallel",),
            # Above the 32 MiB scoped default; still safe on v7x (64 MiB phys).
            vmem_limit_bytes=48 * 1024 * 1024,
        ),
    )(x_nhwc, dww, dwb, lnw, lnb, w1_bf, b1r, w2_bf, b2r, g)

    return jnp.transpose(out_nhwc, (0, 3, 1, 2))


def block_ref(x, dw_w, dw_b, ln_w, ln_b, w1, b1, w2, b2, gamma):
    """Pure-JAX reference mirroring the PyTorch Block.forward."""
    N, C, H, W = x.shape
    y = jax.lax.conv_general_dilated(
        x, dw_w, window_strides=(1, 1), padding=((3, 3), (3, 3)),
        dimension_numbers=('NCHW', 'OIHW', 'NCHW'), feature_group_count=C)
    y = y + dw_b[None, :, None, None]
    y = jnp.transpose(y, (0, 2, 3, 1))                                 # NHWC
    u = jnp.mean(y, axis=-1, keepdims=True)
    s = jnp.mean((y - u) ** 2, axis=-1, keepdims=True)
    y = (y - u) / jnp.sqrt(s + _LN_EPS) * ln_w + ln_b
    h = y @ w1 + b1
    h = jax.nn.gelu(h, approximate=False)
    z = h @ w2 + b2
    z = z * gamma
    return x + jnp.transpose(z, (0, 3, 1, 2))


if __name__ == "__main__":
    key = jax.random.PRNGKey(0)
    N, dim, H, W = 2, 32, 16, 16
    ks = jax.random.split(key, 10)
    x = jax.random.normal(ks[0], (N, dim, H, W), jnp.float32)
    dw_w = 0.1 * jax.random.normal(ks[1], (dim, 1, 7, 7), jnp.float32)
    dw_b = 0.1 * jax.random.normal(ks[2], (dim,), jnp.float32)
    ln_w = 1.0 + 0.1 * jax.random.normal(ks[3], (dim,), jnp.float32)
    ln_b = 0.1 * jax.random.normal(ks[4], (dim,), jnp.float32)
    w1 = 0.05 * jax.random.normal(ks[5], (dim, 4 * dim), jnp.float32)   # pwconv1.weight.T
    b1 = 0.1 * jax.random.normal(ks[6], (4 * dim,), jnp.float32)
    w2 = 0.05 * jax.random.normal(ks[7], (4 * dim, dim), jnp.float32)   # pwconv2.weight.T
    b2 = 0.1 * jax.random.normal(ks[8], (dim,), jnp.float32)
    gamma = 0.1 * jax.random.normal(ks[9], (dim,), jnp.float32)         # layer-scale

    out = jax.block_until_ready(
        block_forward(x, dw_w, dw_b, ln_w, ln_b, w1, b1, w2, b2, gamma))
    ref = block_ref(x, dw_w, dw_b, ln_w, ln_b, w1, b1, w2, b2, gamma)
    np.testing.assert_allclose(np.asarray(out), np.asarray(ref), rtol=5e-3, atol=5e-3)
    print("KERNEL_OK")
</pallas_src>

<mosaic_0001>
module attributes {stable_mosaic.version = 11 : i64} {
  func.func @_block_kernel(%arg0: i32, %arg1: memref<2x16x16x32xf32, #tpu.memory_space<vmem>>, %arg2: memref<49x32xf32, #tpu.memory_space<vmem>>, %arg3: memref<1x32xf32, #tpu.memory_space<vmem>>, %arg4: memref<1x32xf32, #tpu.memory_space<vmem>>, %arg5: memref<1x32xf32, #tpu.memory_space<vmem>>, %arg6: memref<32x128xbf16, #tpu.memory_space<vmem>>, %arg7: memref<1x128xf32, #tpu.memory_space<vmem>>, %arg8: memref<128x32xbf16, #tpu.memory_space<vmem>>, %arg9: memref<1x32xf32, #tpu.memory_space<vmem>>, %arg10: memref<1x32xf32, #tpu.memory_space<vmem>>, %arg11: memref<2x16x16x32xf32, #tpu.memory_space<vmem>>, %arg12: memref<2x22x27x32xf32, #tpu.memory_space<vmem>>, %arg13: memref<512x32xbf16, #tpu.memory_space<vmem>>) attributes {dimension_semantics = [#tpu.dimension_semantics<parallel>], iteration_bounds = array<i64: 1>, scalar_prefetch = 0 : i64, scratch_operands = 2 : i64, tpu.core_type = #tpu.core_type<tc>, window_params = [{transform_indices = @transform_0, window_bounds = array<i64: 2, 16, 16, 32>}, {pipeline_mode = #tpu.pipeline_mode<synchronous>, transform_indices = @transform_1, window_bounds = array<i64: 49, 32>}, {pipeline_mode = #tpu.pipeline_mode<synchronous>, transform_indices = @transform_2, window_bounds = array<i64: 1, 32>}, {pipeline_mode = #tpu.pipeline_mode<synchronous>, transform_indices = @transform_3, window_bounds = array<i64: 1, 32>}, {pipeline_mode = #tpu.pipeline_mode<synchronous>, transform_indices = @transform_4, window_bounds = array<i64: 1, 32>}, {pipeline_mode = #tpu.pipeline_mode<synchronous>, transform_indices = @transform_5, window_bounds = array<i64: 32, 128>}, {pipeline_mode = #tpu.pipeline_mode<synchronous>, transform_indices = @transform_6, window_bounds = array<i64: 1, 128>}, {pipeline_mode = #tpu.pipeline_mode<synchronous>, transform_indices = @transform_7, window_bounds = array<i64: 128, 32>}, {pipeline_mode = #tpu.pipeline_mode<synchronous>, transform_indices = @transform_8, window_bounds = array<i64: 1, 32>}, {pipeline_mode = #tpu.pipeline_mode<synchronous>, transform_indices = @transform_9, window_bounds = array<i64: 1, 32>}, {transform_indices = @transform_10, window_bounds = array<i64: 2, 16, 16, 32>}]} {
    %c0_i32 = arith.constant 0 : i32
    %c2_i32 = arith.constant 2 : i32
    %0 = arith.addi %c0_i32, %c2_i32 : i32
    %c1_i32 = arith.constant 1 : i32
    scf.for %arg14 = %c0_i32 to %0 step %c1_i32  : i32 {
      %cst_25 = arith.constant 0.000000e+00 : f32
      %33 = vector.broadcast %cst_25 : f32 to vector<3x27x32xf32>
      %34 = arith.index_cast %arg14 : i32 to index
      %c0_26 = arith.constant 0 : index
      %c0_27 = arith.constant 0 : index
      %c0_28 = arith.constant 0 : index
      %35 = vector.load %arg12[%34, %c0_26, %c0_27, %c0_28] : memref<2x22x27x32xf32, #tpu.memory_space<vmem>>, vector<1x3x27x32xf32>
      %36 = vector.shape_cast %35 : vector<1x3x27x32xf32> to vector<3x27x32xf32>
      %37 = vector.shape_cast %33 : vector<3x27x32xf32> to vector<1x3x27x32xf32>
      tpu.vector_store %arg12[%34, %c0_26, %c0_27, %c0_28], %37 {strides = array<i32>} : memref<2x22x27x32xf32, #tpu.memory_space<vmem>>, vector<1x3x27x32xf32>,
      %cst_29 = arith.constant 0.000000e+00 : f32
      %38 = vector.broadcast %cst_29 : f32 to vector<3x27x32xf32>
      %39 = arith.index_cast %arg14 : i32 to index
      %c19 = arith.constant 19 : index
      %c0_30 = arith.constant 0 : index
      %c0_31 = arith.constant 0 : index
      %40 = vector.load %arg12[%39, %c19, %c0_30, %c0_31] : memref<2x22x27x32xf32, #tpu.memory_space<vmem>>, vector<1x3x27x32xf32>
      %41 = vector.shape_cast %40 : vector<1x3x27x32xf32> to vector<3x27x32xf32>
      %42 = vector.shape_cast %38 : vector<3x27x32xf32> to vector<1x3x27x32xf32>
      tpu.vector_store %arg12[%39, %c19, %c0_30, %c0_31], %42 {strides = array<i32>} : memref<2x22x27x32xf32, #tpu.memory_space<vmem>>, vector<1x3x27x32xf32>,
      %cst_32 = arith.constant 0.000000e+00 : f32
      %43 = vector.broadcast %cst_32 : f32 to vector<22x3x32xf32>
      %44 = arith.index_cast %arg14 : i32 to index
      %c0_33 = arith.constant 0 : index
      %c5 = arith.constant 5 : index
      %c0_34 = arith.constant 0 : index
      %45 = vector.load %arg12[%44, %c0_33, %c5, %c0_34] : memref<2x22x27x32xf32, #tpu.memory_space<vmem>>, vector<1x22x3x32xf32>
      %46 = vector.shape_cast %45 : vector<1x22x3x32xf32> to vector<22x3x32xf32>
      %47 = vector.shape_cast %43 : vector<22x3x32xf32> to vector<1x22x3x32xf32>
      tpu.vector_store %arg12[%44, %c0_33, %c5, %c0_34], %47 {strides = array<i32>} : memref<2x22x27x32xf32, #tpu.memory_space<vmem>>, vector<1x22x3x32xf32>,
      %cst_35 = arith.constant 0.000000e+00 : f32
      %48 = vector.broadcast %cst_35 : f32 to vector<22x3x32xf32>
      %49 = arith.index_cast %arg14 : i32 to index
      %c0_36 = arith.constant 0 : index
      %c24 = arith.constant 24 : index
      %c0_37 = arith.constant 0 : index
      %50 = vector.load %arg12[%49, %c0_36, %c24, %c0_37] : memref<2x22x27x32xf32, #tpu.memory_space<vmem>>, vector<1x22x3x32xf32>
      %51 = vector.shape_cast %50 : vector<1x22x3x32xf32> to vector<22x3x32xf32>
      %52 = vector.shape_cast %48 : vector<22x3x32xf32> to vector<1x22x3x32xf32>
      tpu.vector_store %arg12[%49, %c0_36, %c24, %c0_37], %52 {strides = array<i32>} : memref<2x22x27x32xf32, #tpu.memory_space<vmem>>, vector<1x22x3x32xf32>,
      %53 = arith.index_cast %arg14 : i32 to index
      %c0_38 = arith.constant 0 : index
      %c0_39 = arith.constant 0 : index
      %c0_40 = arith.constant 0 : index
      %54 = vector.load %arg1[%53, %c0_38, %c0_39, %c0_40] : memref<2x16x16x32xf32, #tpu.memory_space<vmem>>, vector<1x16x16x32xf32>
      %55 = vector.shape_cast %54 : vector<1x16x16x32xf32> to vector<16x16x32xf32>
      %56 = arith.index_cast %arg14 : i32 to index
      %c3 = arith.constant 3 : index
      %c8 = arith.constant 8 : index
      %c0_41 = arith.constant 0 : index
      %57 = vector.load %arg12[%56, %c3, %c8, %c0_41] : memref<2x22x27x32xf32, #tpu.memory_space<vmem>>, vector<1x16x16x32xf32>
      %58 = vector.shape_cast %57 : vector<1x16x16x32xf32> to vector<16x16x32xf32>
      %59 = vector.shape_cast %55 : vector<16x16x32xf32> to vector<1x16x16x32xf32>
      tpu.vector_store %arg12[%56, %c3, %c8, %c0_41], %59 {strides = array<i32>} : memref<2x22x27x32xf32, #tpu.memory_space<vmem>>, vector<1x16x16x32xf32>,
      %c0_i32_42 = arith.constant 0 : i32
      %c2_i32_43 = arith.constant 2 : i32
      %60 = arith.addi %c0_i32_42, %c2_i32_43 : i32
      %c1_i32_44 = arith.constant 1 : i32
      scf.for %arg15 = %c0_i32_42 to %60 step %c1_i32_44  : i32 {
        %c8_i32 = arith.constant 8 : i32
        %61 = arith.muli %arg15, %c8_i32 : i32
        %62 = tpu.assume_multiple %61, 8 : i32
        %cst_46 = arith.constant 0.000000e+00 : f32
        %63 = vector.broadcast %cst_46 : f32 to vector<8x16x32xf32>
        %c0_i32_47 = arith.constant 0 : i32
        %64 = arith.addi %62, %c0_i32_47 : i32
        %65 = arith.index_cast %arg14 : i32 to index
        %66 = arith.index_cast %64 : i32 to index
        %c0_48 = arith.constant 0 : index
        %c0_49 = arith.constant 0 : index
        %67 = vector.load %arg12[%65, %66, %c0_48, %c0_49] : memref<2x22x27x32xf32, #tpu.memory_space<vmem>>, vector<1x8x27x32xf32>
        %68 = vector.shape_cast %67 : vector<1x8x27x32xf32> to vector<8x27x32xf32>
        %c0_50 = arith.constant 0 : index
        %c0_51 = arith.constant 0 : index
        %69 = vector.load %arg2[%c0_50, %c0_51] : memref<49x32xf32, #tpu.memory_space<vmem>>, vector<1x32xf32>
        %70 = vector.shape_cast %69 : vector<1x32xf32> to vector<32xf32>
        %71 = vector.shape_cast %70 : vector<32xf32> to vector<1x1x32xf32>
        %72 = vector.extract_strided_slice %68 {offsets = [0, 5, 0], sizes = [8, 16, 32], strides = [1, 1, 1]} : vector<8x27x32xf32> to vector<8x16x32xf32>
        %73 = vector.broadcast %71 : vector<1x1x32xf32> to vector<8x16x32xf32>
        %74 = arith.mulf %72, %73 : vector<8x16x32xf32>
        %75 = arith.addf %63, %74 : vector<8x16x32xf32>
        %c1 = arith.constant 1 : index
        %c0_52 = arith.constant 0 : index
        %76 = vector.load %arg2[%c1, %c0_52] : memref<49x32xf32, #tpu.memory_space<vmem>>, vector<1x32xf32>
        %77 = vector.shape_cast %76 : vector<1x32xf32> to vector<32xf32>
        %78 = vector.shape_cast %77 : vector<32xf32> to vector<1x1x32xf32>
        %79 = vector.extract_strided_slice %68 {offsets = [0, 6, 0], sizes = [8, 16, 32], strides = [1, 1, 1]} : vector<8x27x32xf32> to vector<8x16x32xf32>
        %80 = vector.broadcast %78 : vector<1x1x32xf32> to vector<8x16x32xf32>
        %81 = arith.mulf %79, %80 : vector<8x16x32xf32>
        %82 = arith.addf %75, %81 : vector<8x16x32xf32>
        %c2 = arith.constant 2 : index
        %c0_53 = arith.constant 0 : index
        %83 = vector.load %arg2[%c2, %c0_53] : memref<49x32xf32, #tpu.memory_space<vmem>>, vector<1x32xf32>
        %84 = vector.shape_cast %83 : vector<1x32xf32> to vector<32xf32>
        %85 = vector.shape_cast %84 : vector<32xf32> to vector<1x1x32xf32>
        %86 = vector.extract_strided_slice %68 {offsets = [0, 7, 0], sizes = [8, 16, 32], strides = [1, 1, 1]} : vector<8x27x32xf32> to vector<8x16x32xf32>
        %87 = vector.broadcast %85 : vector<1x1x32xf32> to vector<8x16x32xf32>
        %88 = arith.mulf %86, %87 : vector<8x16x32xf32>
        %89 = arith.addf %82, %88 : vector<8x16x32xf32>
        %c3_54 = arith.constant 3 : index
        %c0_55 = arith.constant 0 : index
        %90 = vector.load %arg2[%c3_54, %c0_55] : memref<49x32xf32, #tpu.memory_space<vmem>>, vector<1x32xf32>
        %91 = vector.shape_cast %90 : vector<1x32xf32> to vector<32xf32>
        %92 = vector.shape_cast %91 : vector<32xf32> to vector<1x1x32xf32>
        %93 = vector.extract_strided_slice %68 {offsets = [0, 8, 0], sizes = [8, 16, 32], strides = [1, 1, 1]} : vector<8x27x32xf32> to vector<8x16x32xf32>
        %94 = vector.broadcast %92 : vector<1x1x32xf32> to vector<8x16x32xf32>
        %95 = arith.mulf %93, %94 : vector<8x16x32xf32>
        %96 = arith.addf %89, %95 : vector<8x16x32xf32>
        %c4 = arith.constant 4 : index
        %c0_56 = arith.constant 0 : index
        %97 = vector.load %arg2[%c4, %c0_56] : memref<49x32xf32, #tpu.memory_space<vmem>>, vector<1x32xf32>
        %98 = vector.shape_cast %97 : vector<1x32xf32> to vector<32xf32>
        %99 = vector.shape_cast %98 : vector<32xf32> to vector<1x1x32xf32>
        %100 = vector.extract_strided_slice %68 {offsets = [0, 9, 0], sizes = [8, 16, 32], strides = [1, 1, 1]} : vector<8x27x32xf32> to vector<8x16x32xf32>
        %101 = vector.broadcast %99 : vector<1x1x32xf32> to vector<8x16x32xf32>
        %102 = arith.mulf %100, %101 : vector<8x16x32xf32>
        %103 = arith.addf %96, %102 : vector<8x16x32xf32>
        %c5_57 = arith.constant 5 : index
        %c0_58 = arith.constant 0 : index
        %104 = vector.load %arg2[%c5_57, %c0_58] : memref<49x32xf32, #tpu.memory_space<vmem>>, vector<1x32xf32>
        %105 = vector.shape_cast %104 : vector<1x32xf32> to vector<32xf32>
        %106 = vector.shape_cast %105 : vector<32xf32> to vector<1x1x32xf32>
        %107 = vector.extract_strided_slice %68 {offsets = [0, 10, 0], sizes = [8, 16, 32], strides = [1, 1, 1]} : vector<8x27x32xf32> to vector<8x16x32xf32>
        %108 = vector.broadcast %106 : vector<1x1x32xf32> to vector<8x16x32xf32>
        %109 = arith.mulf %107, %108 : vector<8x16x32xf32>
        %110 = arith.addf %103, %109 : vector<8x16x32xf32>
        %c6 = arith.constant 6 : index
        %c0_59 = arith.constant 0 : index
        %111 = vector.load %arg2[%c6, %c0_59] : memref<49x32xf32, #tpu.memory_space<vmem>>, vector<1x32xf32>
        %112 = vector.shape_cast %111 : vector<1x32xf32> to vector<32xf32>
        %113 = vector.shape_cast %112 : vector<32xf32> to vector<1x1x32xf32>
        %114 = vector.extract_strided_slice %68 {offsets = [0, 11, 0], sizes = [8, 16, 32], strides = [1, 1, 1]} : vector<8x27x32xf32> to vector<8x16x32xf32>
        %115 = vector.broadcast %113 : vector<1x1x32xf32> to vector<8x16x32xf32>
        %116 = arith.mulf %114, %115 : vector<8x16x32xf32>
        %117 = arith.addf %110, %116 : vector<8x16x32xf32>
        %c1_i32_60 = arith.constant 1 : i32
        %118 = arith.addi %62, %c1_i32_60 : i32
        %119 = arith.index_cast %arg14 : i32 to index
        %120 = arith.index_cast %118 : i32 to index
        %c0_61 = arith.constant 0 : index
        %c0_62 = arith.constant 0 : index
        %121 = vector.load %arg12[%119, %120, %c0_61, %c0_62] : memref<2x22x27x32xf32, #tpu.memory_space<vmem>>, vector<1x8x27x32xf32>
        %122 = vector.shape_cast %121 : vector<1x8x27x32xf32> to vector<8x27x32xf32>
        %c7 = arith.constant 7 : index
        %c0_63 = arith.constant 0 : index
        %123 = vector.load %arg2[%c7, %c0_63] : memref<49x32xf32, #tpu.memory_space<vmem>>, vector<1x32xf32>
        %124 = vector.shape_cast %123 : vector<1x32xf32> to vector<32xf32>
        %125 = vector.shape_cast %124 : vector<32xf32> to vector<1x1x32xf32>
        %126 = vector.extract_strided_slice %122 {offsets = [0, 5, 0], sizes = [8, 16, 32], strides = [1, 1, 1]} : vector<8x27x32xf32> to vector<8x16x32xf32>
        %127 = vector.broadcast %125 : vector<1x1x32xf32> to vector<8x16x32xf32>
        %128 = arith.mulf %126, %127 : vector<8x16x32xf32>
        %129 = arith.addf %117, %128 : vector<8x16x32xf32>
        %c8_64 = arith.constant 8 : index
        %c0_65 = arith.constant 0 : index
        %130 = vector.load %arg2[%c8_64, %c0_65] : memref<49x32xf32, #tpu.memory_space<vmem>>, vector<1x32xf32>
        %131 = vector.shape_cast %130 : vector<1x32xf32> to vector<32xf32>
        %132 = vector.shape_cast %131 : vector<32xf32> to vector<1x1x32xf32>
        %133 = vector.extract_strided_slice %122 {offsets = [0, 6, 0], sizes = [8, 16, 32], strides = [1, 1, 1]} : vector<8x27x32xf32> to vector<8x16x32xf32>
        %134 = vector.broadcast %132 : vector<1x1x32xf32> to vector<8x16x32xf32>
        %135 = arith.mulf %133, %134 : vector<8x16x32xf32>
        %136 = arith.addf %129, %135 : vector<8x16x32xf32>
        %c9 = arith.constant 9 : index
        %c0_66 = arith.constant 0 : index
        %137 = vector.load %arg2[%c9, %c0_66] : memref<49x32xf32, #tpu.memory_space<vmem>>, vector<1x32xf32>
        %138 = vector.shape_cast %137 : vector<1x32xf32> to vector<32xf32>
        %139 = vector.shape_cast %138 : vector<32xf32> to vector<1x1x32xf32>
        %140 = vector.extract_strided_slice %122 {offsets = [0, 7, 0], sizes = [8, 16, 32], strides = [1, 1, 1]} : vector<8x27x32xf32> to vector<8x16x32xf32>
        %141 = vector.broadcast %139 : vector<1x1x32xf32> to vector<8x16x32xf32>
        %142 = arith.mulf %140, %141 : vector<8x16x32xf32>
        %143 = arith.addf %136, %142 : vector<8x16x32xf32>
        %c10 = arith.constant 10 : index
        %c0_67 = arith.constant 0 : index
        %144 = vector.load %arg2[%c10, %c0_67] : memref<49x32xf32, #tpu.memory_space<vmem>>, vector<1x32xf32>
        %145 = vector.shape_cast %144 : vector<1x32xf32> to vector<32xf32>
        %146 = vector.shape_cast %145 : vector<32xf32> to vector<1x1x32xf32>
        %147 = vector.extract_strided_slice %122 {offsets = [0, 8, 0], sizes = [8, 16, 32], strides = [1, 1, 1]} : vector<8x27x32xf32> to vector<8x16x32xf32>
        %148 = vector.broadcast %146 : vector<1x1x32xf32> to vector<8x16x32xf32>
        %149 = arith.mulf %147, %148 : vector<8x16x32xf32>
        %150 = arith.addf %143, %149 : vector<8x16x32xf32>
        %c11 = arith.constant 11 : index
        %c0_68 = arith.constant 0 : index
        %151 = vector.load %arg2[%c11, %c0_68] : memref<49x32xf32, #tpu.memory_space<vmem>>, vector<1x32xf32>
        %152 = vector.shape_cast %151 : vector<1x32xf32> to vector<32xf32>
        %153 = vector.shape_cast %152 : vector<32xf32> to vector<1x1x32xf32>
        %154 = vector.extract_strided_slice %122 {offsets = [0, 9, 0], sizes = [8, 16, 32], strides = [1, 1, 1]} : vector<8x27x32xf32> to vector<8x16x32xf32>
        %155 = vector.broadcast %153 : vector<1x1x32xf32> to vector<8x16x32xf32>
        %156 = arith.mulf %154, %155 : vector<8x16x32xf32>
        %157 = arith.addf %150, %156 : vector<8x16x32xf32>
        %c12 = arith.constant 12 : index
        %c0_69 = arith.constant 0 : index
        %158 = vector.load %arg2[%c12, %c0_69] : memref<49x32xf32, #tpu.memory_space<vmem>>, vector<1x32xf32>
        %159 = vector.shape_cast %158 : vector<1x32xf32> to vector<32xf32>
        %160 = vector.shape_cast %159 : vector<32xf32> to vector<1x1x32xf32>
        %161 = vector.extract_strided_slice %122 {offsets = [0, 10, 0], sizes = [8, 16, 32], strides = [1, 1, 1]} : vector<8x27x32xf32> to vector<8x16x32xf32>
        %162 = vector.broadcast %160 : vector<1x1x32xf32> to vector<8x16x32xf32>
        %163 = arith.mulf %161, %162 : vector<8x16x32xf32>
        %164 = arith.addf %157, %163 : vector<8x16x32xf32>
        %c13 = arith.constant 13 : index
        %c0_70 = arith.constant 0 : index
        %165 = vector.load %arg2[%c13, %c0_70] : memref<49x32xf32, #tpu.memory_space<vmem>>, vector<1x32xf32>
        %166 = vector.shape_cast %165 : vector<1x32xf32> to vector<32xf32>
        %167 = vector.shape_cast %166 : vector<32xf32> to vector<1x1x32xf32>
        %168 = vector.extract_strided_slice %122 {offsets = [0, 11, 0], sizes = [8, 16, 32], strides = [1, 1, 1]} : vector<8x27x32xf32> to vector<8x16x32xf32>
        %169 = vector.broadcast %167 : vector<1x1x32xf32> to vector<8x16x32xf32>
        %170 = arith.mulf %168, %169 : vector<8x16x32xf32>
        %171 = arith.addf %164, %170 : vector<8x16x32xf32>
        %c2_i32_71 = arith.constant 2 : i32
        %172 = arith.addi %62, %c2_i32_71 : i32
        %173 = arith.index_cast %arg14 : i32 to index
        %174 = arith.index_cast %172 : i32 to index
        %c0_72 = arith.constant 0 : index
        %c0_73 = arith.constant 0 : index
        %175 = vector.load %arg12[%173, %174, %c0_72, %c0_73] : memref<2x22x27x32xf32, #tpu.memory_space<vmem>>, vector<1x8x27x32xf32>
        %176 = vector.shape_cast %175 : vector<1x8x27x32xf32> to vector<8x27x32xf32>
        %c14 = arith.constant 14 : index
        %c0_74 = arith.constant 0 : index
        %177 = vector.load %arg2[%c14, %c0_74] : memref<49x32xf32, #tpu.memory_space<vmem>>, vector<1x32xf32>
        %178 = vector.shape_cast %177 : vector<1x32xf32> to vector<32xf32>
        %179 = vector.shape_cast %178 : vector<32xf32> to vector<1x1x32xf32>
        %180 = vector.extract_strided_slice %176 {offsets = [0, 5, 0], sizes = [8, 16, 32], strides = [1, 1, 1]} : vector<8x27x32xf32> to vector<8x16x32xf32>
        %181 = vector.broadcast %179 : vector<1x1x32xf32> to vector<8x16x32xf32>
        %182 = arith.mulf %180, %181 : vector<8x16x32xf32>
        %183 = arith.addf %171, %182 : vector<8x16x32xf32>
        %c15 = arith.constant 15 : index
        %c0_75 = arith.constant 0 : index
        %184 = vector.load %arg2[%c15, %c0_75] : memref<49x32xf32, #tpu.memory_space<vmem>>, vector<1x32xf32>
        %185 = vector.shape_cast %184 : vector<1x32xf32> to vector<32xf32>
        %186 = vector.shape_cast %185 : vector<32xf32> to vector<1x1x32xf32>
        %187 = vector.extract_strided_slice %176 {offsets = [0, 6, 0], sizes = [8, 16, 32], strides = [1, 1, 1]} : vector<8x27x32xf32> to vector<8x16x32xf32>
        %188 = vector.broadcast %186 : vector<1x1x32xf32> to vector<8x16x32xf32>
        %189 = arith.mulf %187, %188 : vector<8x16x32xf32>
        %190 = arith.addf %183, %189 : vector<8x16x32xf32>
        %c16 = arith.constant 16 : index
        %c0_76 = arith.constant 0 : index
        %191 = vector.load %arg2[%c16, %c0_76] : memref<49x32xf32, #tpu.memory_space<vmem>>, vector<1x32xf32>
        %192 = vector.shape_cast %191 : vector<1x32xf32> to vector<32xf32>
        %193 = vector.shape_cast %192 : vector<32xf32> to vector<1x1x32xf32>
        %194 = vector.extract_strided_slice %176 {offsets = [0, 7, 0], sizes = [8, 16, 32], strides = [1, 1, 1]} : vector<8x27x32xf32> to vector<8x16x32xf32>
        %195 = vector.broadcast %193 : vector<1x1x32xf32> to vector<8x16x32xf32>
        %196 = arith.mulf %194, %195 : vector<8x16x32xf32>
        %197 = arith.addf %190, %196 : vector<8x16x32xf32>
        %c17 = arith.constant 17 : index
        %c0_77 = arith.constant 0 : index
        %198 = vector.load %arg2[%c17, %c0_77] : memref<49x32xf32, #tpu.memory_space<vmem>>, vector<1x32xf32>
        %199 = vector.shape_cast %198 : vector<1x32xf32> to vector<32xf32>
        %200 = vector.shape_cast %199 : vector<32xf32> to vector<1x1x32xf32>
        %201 = vector.extract_strided_slice %176 {offsets = [0, 8, 0], sizes = [8, 16, 32], strides = [1, 1, 1]} : vector<8x27x32xf32> to vector<8x16x32xf32>
        %202 = vector.broadcast %200 : vector<1x1x32xf32> to vector<8x16x32xf32>
        %203 = arith.mulf %201, %202 : vector<8x16x32xf32>
        %204 = arith.addf %197, %203 : vector<8x16x32xf32>
        %c18 = arith.constant 18 : index
        %c0_78 = arith.constant 0 : index
        %205 = vector.load %arg2[%c18, %c0_78] : memref<49x32xf32, #tpu.memory_space<vmem>>, vector<1x32xf32>
        %206 = vector.shape_cast %205 : vector<1x32xf32> to vector<32xf32>
        %207 = vector.shape_cast %206 : vector<32xf32> to vector<1x1x32xf32>
        %208 = vector.extract_strided_slice %176 {offsets = [0, 9, 0], sizes = [8, 16, 32], strides = [1, 1, 1]} : vector<8x27x32xf32> to vector<8x16x32xf32>
        %209 = vector.broadcast %207 : vector<1x1x32xf32> to vector<8x16x32xf32>
        %210 = arith.mulf %208, %209 : vector<8x16x32xf32>
        %211 = arith.addf %204, %210 : vector<8x16x32xf32>
        %c19_79 = arith.constant 19 : index
        %c0_80 = arith.constant 0 : index
        %212 = vector.load %arg2[%c19_79, %c0_80] : memref<49x32xf32, #tpu.memory_space<vmem>>, vector<1x32xf32>
        %213 = vector.shape_cast %212 : vector<1x32xf32> to vector<32xf32>
        %214 = vector.shape_cast %213 : vector<32xf32> to vector<1x1x32xf32>
        %215 = vector.extract_strided_slice %176 {offsets = [0, 10, 0], sizes = [8, 16, 32], strides = [1, 1, 1]} : vector<8x27x32xf32> to vector<8x16x32xf32>
        %216 = vector.broadcast %214 : vector<1x1x32xf32> to vector<8x16x32xf32>
        %217 = arith.mulf %215, %216 : vector<8x16x32xf32>
        %218 = arith.addf %211, %217 : vector<8x16x32xf32>
        %c20 = arith.constant 20 : index
        %c0_81 = arith.constant 0 : index
        %219 = vector.load %arg2[%c20, %c0_81] : memref<49x32xf32, #tpu.memory_space<vmem>>, vector<1x32xf32>
        %220 = vector.shape_cast %219 : vector<1x32xf32> to vector<32xf32>
        %221 = vector.shape_cast %220 : vector<32xf32> to vector<1x1x32xf32>
        %222 = vector.extract_strided_slice %176 {offsets = [0, 11, 0], sizes = [8, 16, 32], strides = [1, 1, 1]} : vector<8x27x32xf32> to vector<8x16x32xf32>
        %223 = vector.broadcast %221 : vector<1x1x32xf32> to vector<8x16x32xf32>
        %224 = arith.mulf %222, %223 : vector<8x16x32xf32>
        %225 = arith.addf %218, %224 : vector<8x16x32xf32>
        %c3_i32 = arith.constant 3 : i32
        %226 = arith.addi %62, %c3_i32 : i32
        %227 = arith.index_cast %arg14 : i32 to index
        %228 = arith.index_cast %226 : i32 to index
        %c0_82 = arith.constant 0 : index
        %c0_83 = arith.constant 0 : index
        %229 = vector.load %arg12[%227, %228, %c0_82, %c0_83] : memref<2x22x27x32xf32, #tpu.memory_space<vmem>>, vector<1x8x27x32xf32>
        %230 = vector.shape_cast %229 : vector<1x8x27x32xf32> to vector<8x27x32xf32>
        %c21 = arith.constant 21 : index
        %c0_84 = arith.constant 0 : index
        %231 = vector.load %arg2[%c21, %c0_84] : memref<49x32xf32, #tpu.memory_space<vmem>>, vector<1x32xf32>
        %232 = vector.shape_cast %231 : vector<1x32xf32> to vector<32xf32>
        %233 = vector.shape_cast %232 : vector<32xf32> to vector<1x1x32xf32>
        %234 = vector.extract_strided_slice %230 {offsets = [0, 5, 0], sizes = [8, 16, 32], strides = [1, 1, 1]} : vector<8x27x32xf32> to vector<8x16x32xf32>
        %235 = vector.broadcast %233 : vector<1x1x32xf32> to vector<8x16x32xf32>
        %236 = arith.mulf %234, %235 : vector<8x16x32xf32>
        %237 = arith.addf %225, %236 : vector<8x16x32xf32>
        %c22 = arith.constant 22 : index
        %c0_85 = arith.constant 0 : index
        %238 = vector.load %arg2[%c22, %c0_85] : memref<49x32xf32, #tpu.memory_space<vmem>>, vector<1x32xf32>
        %239 = vector.shape_cast %238 : vector<1x32xf32> to vector<32xf32>
        %240 = vector.shape_cast %239 : vector<32xf32> to vector<1x1x32xf32>
        %241 = vector.extract_strided_slice %230 {offsets = [0, 6, 0], sizes = [8, 16, 32], strides = [1, 1, 1]} : vector<8x27x32xf32> to vector<8x16x32xf32>
        %242 = vector.broadcast %240 : vector<1x1x32xf32> to vector<8x16x32xf32>
        %243 = arith.mulf %241, %242 : vector<8x16x32xf32>
        %244 = arith.addf %237, %243 : vector<8x16x32xf32>
        %c23 = arith.constant 23 : index
        %c0_86 = arith.constant 0 : index
        %245 = vector.load %arg2[%c23, %c0_86] : memref<49x32xf32, #tpu.memory_space<vmem>>, vector<1x32xf32>
        %246 = vector.shape_cast %245 : vector<1x32xf32> to vector<32xf32>
        %247 = vector.shape_cast %246 : vector<32xf32> to vector<1x1x32xf32>
        %248 = vector.extract_strided_slice %230 {offsets = [0, 7, 0], sizes = [8, 16, 32], strides = [1, 1, 1]} : vector<8x27x32xf32> to vector<8x16x32xf32>
        %249 = vector.broadcast %247 : vector<1x1x32xf32> to vector<8x16x32xf32>
        %250 = arith.mulf %248, %249 : vector<8x16x32xf32>
        %251 = arith.addf %244, %250 : vector<8x16x32xf32>
        %c24_87 = arith.constant 24 : index
        %c0_88 = arith.constant 0 : index
        %252 = vector.load %arg2[%c24_87, %c0_88] : memref<49x32xf32, #tpu.memory_space<vmem>>, vector<1x32xf32>
        %253 = vector.shape_cast %252 : vector<1x32xf32> to vector<32xf32>
        %254 = vector.shape_cast %253 : vector<32xf32> to vector<1x1x32xf32>
        %255 = vector.extract_strided_slice %230 {offsets = [0, 8, 0], sizes = [8, 16, 32], strides = [1, 1, 1]} : vector<8x27x32xf32> to vector<8x16x32xf32>
        %256 = vector.broadcast %254 : vector<1x1x32xf32> to vector<8x16x32xf32>
        %257 = arith.mulf %255, %256 : vector<8x16x32xf32>
        %258 = arith.addf %251, %257 : vector<8x16x32xf32>
        %c25 = arith.constant 25 : index
        %c0_89 = arith.constant 0 : index
        %259 = vector.load %arg2[%c25, %c0_89] : memref<49x32xf32, #tpu.memory_space<vmem>>, vector<1x32xf32>
        %260 = vector.shape_cast %259 : vector<1x32xf32> to vector<32xf32>
        %261 = vector.shape_cast %260 : vector<32xf32> to vector<1x1x32xf32>
        %262 = vector.extract_strided_slice %230 {offsets = [0, 9, 0], sizes = [8, 16, 32], strides = [1, 1, 1]} : vector<8x27x32xf32> to vector<8x16x32xf32>
        %263 = vector.broadcast %261 : vector<1x1x32xf32> to vector<8x16x32xf32>
        %264 = arith.mulf %262, %263 : vector<8x16x32xf32>
        %265 = arith.addf %258, %264 : vector<8x16x32xf32>
        %c26 = arith.constant 26 : index
        %c0_90 = arith.constant 0 : index
        %266 = vector.load %arg2[%c26, %c0_90] : memref<49x32xf32, #tpu.memory_space<vmem>>, vector<1x32xf32>
        %267 = vector.shape_cast %266 : vector<1x32xf32> to vector<32xf32>
        %268 = vector.shape_cast %267 : vector<32xf32> to vector<1x1x32xf32>
        %269 = vector.extract_strided_slice %230 {offsets = [0, 10, 0], sizes = [8, 16, 32], strides = [1, 1, 1]} : vector<8x27x32xf32> to vector<8x16x32xf32>
        %270 = vector.broadcast %268 : vector<1x1x32xf32> to vector<8x16x32xf32>
        %271 = arith.mulf %269, %270 : vector<8x16x32xf32>
        %272 = arith.addf %265, %271 : vector<8x16x32xf32>
        %c27 = arith.constant 27 : index
        %c0_91 = arith.constant 0 : index
        %273 = vector.load %arg2[%c27, %c0_91] : memref<49x32xf32, #tpu.memory_space<vmem>>, vector<1x32xf32>
        %274 = vector.shape_cast %273 : vector<1x32xf32> to vector<32xf32>
        %275 = vector.shape_cast %274 : vector<32xf32> to vector<1x1x32xf32>
        %276 = vector.extract_strided_slice %230 {offsets = [0, 11, 0], sizes = [8, 16, 32], strides = [1, 1, 1]} : vector<8x27x32xf32> to vector<8x16x32xf32>
        %277 = vector.broadcast %275 : vector<1x1x32xf32> to vector<8x16x32xf32>
        %278 = arith.mulf %276, %277 : vector<8x16x32xf32>
        %279 = arith.addf %272, %278 : vector<8x16x32xf32>
        %c4_i32 = arith.constant 4 : i32
        %280 = arith.addi %62, %c4_i32 : i32
        %281 = arith.index_cast %arg14 : i32 to index
        %282 = arith.index_cast %280 : i32 to index
        %c0_92 = arith.constant 0 : index
        %c0_93 = arith.constant 0 : index
        %283 = vector.load %arg12[%281, %282, %c0_92, %c0_93] : memref<2x22x27x32xf32, #tpu.memory_space<vmem>>, vector<1x8x27x32xf32>
        %284 = vector.shape_cast %283 : vector<1x8x27x32xf32> to vector<8x27x32xf32>
        %c28 = arith.constant 28 : index
        %c0_94 = arith.constant 0 : index
        %285 = vector.load %arg2[%c28, %c0_94] : memref<49x32xf32, #tpu.memory_space<vmem>>, vector<1x32xf32>
        %286 = vector.shape_cast %285 : vector<1x32xf32> to vector<32xf32>
        %287 = vector.shape_cast %286 : vector<32xf32> to vector<1x1x32xf32>
        %288 = vector.extract_strided_slice %284 {offsets = [0, 5, 0], sizes = [8, 16, 32], strides = [1, 1, 1]} : vector<8x27x32xf32> to vector<8x16x32xf32>
        %289 = vector.broadcast %287 : vector<1x1x32xf32> to vector<8x16x32xf32>
        %290 = arith.mulf %288, %289 : vector<8x16x32xf32>
        %291 = arith.addf %279, %290 : vector<8x16x32xf32>
        %c29 = arith.constant 29 : index
        %c0_95 = arith.constant 0 : index
        %292 = vector.load %arg2[%c29, %c0_95] : memref<49x32xf32, #tpu.memory_space<vmem>>, vector<1x32xf32>
        %293 = vector.shape_cast %292 : vector<1x32xf32> to vector<32xf32>
        %294 = vector.shape_cast %293 : vector<32xf32> to vector<1x1x32xf32>
        %295 = vector.extract_strided_slice %284 {offsets = [0, 6, 0], sizes = [8, 16, 32], strides = [1, 1, 1]} : vector<8x27x32xf32> to vector<8x16x32xf32>
        %296 = vector.broadcast %294 : vector<1x1x32xf32> to vector<8x16x32xf32>
        %297 = arith.mulf %295, %296 : vector<8x16x32xf32>
        %298 = arith.addf %291, %297 : vector<8x16x32xf32>
        %c30 = arith.constant 30 : index
        %c0_96 = arith.constant 0 : index
        %299 = vector.load %arg2[%c30, %c0_96] : memref<49x32xf32, #tpu.memory_space<vmem>>, vector<1x32xf32>
        %300 = vector.shape_cast %299 : vector<1x32xf32> to vector<32xf32>
        %301 = vector.shape_cast %300 : vector<32xf32> to vector<1x1x32xf32>
        %302 = vector.extract_strided_slice %284 {offsets = [0, 7, 0], sizes = [8, 16, 32], strides = [1, 1, 1]} : vector<8x27x32xf32> to vector<8x16x32xf32>
        %303 = vector.broadcast %301 : vector<1x1x32xf32> to vector<8x16x32xf32>
        %304 = arith.mulf %302, %303 : vector<8x16x32xf32>
        %305 = arith.addf %298, %304 : vector<8x16x32xf32>
        %c31 = arith.constant 31 : index
        %c0_97 = arith.constant 0 : index
        %306 = vector.load %arg2[%c31, %c0_97] : memref<49x32xf32, #tpu.memory_space<vmem>>, vector<1x32xf32>
        %307 = vector.shape_cast %306 : vector<1x32xf32> to vector<32xf32>
        %308 = vector.shape_cast %307 : vector<32xf32> to vector<1x1x32xf32>
        %309 = vector.extract_strided_slice %284 {offsets = [0, 8, 0], sizes = [8, 16, 32], strides = [1, 1, 1]} : vector<8x27x32xf32> to vector<8x16x32xf32>
        %310 = vector.broadcast %308 : vector<1x1x32xf32> to vector<8x16x32xf32>
        %311 = arith.mulf %309, %310 : vector<8x16x32xf32>
        %312 = arith.addf %305, %311 : vector<8x16x32xf32>
        %c32 = arith.constant 32 : index
        %c0_98 = arith.constant 0 : index
        %313 = vector.load %arg2[%c32, %c0_98] : memref<49x32xf32, #tpu.memory_space<vmem>>, vector<1x32xf32>
        %314 = vector.shape_cast %313 : vector<1x32xf32> to vector<32xf32>
        %315 = vector.shape_cast %314 : vector<32xf32> to vector<1x1x32xf32>
        %316 = vector.extract_strided_slice %284 {offsets = [0, 9, 0], sizes = [8, 16, 32], strides = [1, 1, 1]} : vector<8x27x32xf32> to vector<8x16x32xf32>
        %317 = vector.broadcast %315 : vector<1x1x32xf32> to vector<8x16x32xf32>
        %318 = arith.mulf %316, %317 : vector<8x16x32xf32>
        %319 = arith.addf %312, %318 : vector<8x16x32xf32>
        %c33 = arith.constant 33 : index
        %c0_99 = arith.constant 0 : index
        %320 = vector.load %arg2[%c33, %c0_99] : memref<49x32xf32, #tpu.memory_space<vmem>>, vector<1x32xf32>
        %321 = vector.shape_cast %320 : vector<1x32xf32> to vector<32xf32>
        %322 = vector.shape_cast %321 : vector<32xf32> to vector<1x1x32xf32>
        %323 = vector.extract_strided_slice %284 {offsets = [0, 10, 0], sizes = [8, 16, 32], strides = [1, 1, 1]} : vector<8x27x32xf32> to vector<8x16x32xf32>
        %324 = vector.broadcast %322 : vector<1x1x32xf32> to vector<8x16x32xf32>
        %325 = arith.mulf %323, %324 : vector<8x16x32xf32>
        %326 = arith.addf %319, %325 : vector<8x16x32xf32>
        %c34 = arith.constant 34 : index
        %c0_100 = arith.constant 0 : index
        %327 = vector.load %arg2[%c34, %c0_100] : memref<49x32xf32, #tpu.memory_space<vmem>>, vector<1x32xf32>
        %328 = vector.shape_cast %327 : vector<1x32xf32> to vector<32xf32>
        %329 = vector.shape_cast %328 : vector<32xf32> to vector<1x1x32xf32>
        %330 = vector.extract_strided_slice %284 {offsets = [0, 11, 0], sizes = [8, 16, 32], strides = [1, 1, 1]} : vector<8x27x32xf32> to vector<8x16x32xf32>
        %331 = vector.broadcast %329 : vector<1x1x32xf32> to vector<8x16x32xf32>
        %332 = arith.mulf %330, %331 : vector<8x16x32xf32>
        %333 = arith.addf %326, %332 : vector<8x16x32xf32>
        %c5_i32 = arith.constant 5 : i32
        %334 = arith.addi %62, %c5_i32 : i32
        %335 = arith.index_cast %arg14 : i32 to index
        %336 = arith.index_cast %334 : i32 to index
        %c0_101 = arith.constant 0 : index
        %c0_102 = arith.constant 0 : index
        %337 = vector.load %arg12[%335, %336, %c0_101, %c0_102] : memref<2x22x27x32xf32, #tpu.memory_space<vmem>>, vector<1x8x27x32xf32>
        %338 = vector.shape_cast %337 : vector<1x8x27x32xf32> to vector<8x27x32xf32>
        %c35 = arith.constant 35 : index
        %c0_103 = arith.constant 0 : index
        %339 = vector.load %arg2[%c35, %c0_103] : memref<49x32xf32, #tpu.memory_space<vmem>>, vector<1x32xf32>
        %340 = vector.shape_cast %339 : vector<1x32xf32> to vector<32xf32>
        %341 = vector.shape_cast %340 : vector<32xf32> to vector<1x1x32xf32>
        %342 = vector.extract_strided_slice %338 {offsets = [0, 5, 0], sizes = [8, 16, 32], strides = [1, 1, 1]} : vector<8x27x32xf32> to vector<8x16x32xf32>
        %343 = vector.broadcast %341 : vector<1x1x32xf32> to vector<8x16x32xf32>
        %344 = arith.mulf %342, %343 : vector<8x16x32xf32>
        %345 = arith.addf %333, %344 : vector<8x16x32xf32>
        %c36 = arith.constant 36 : index
        %c0_104 = arith.constant 0 : index
        %346 = vector.load %arg2[%c36, %c0_104] : memref<49x32xf32, #tpu.memory_space<vmem>>, vector<1x32xf32>
        %347 = vector.shape_cast %346 : vector<1x32xf32> to vector<32xf32>
        %348 = vector.shape_cast %347 : vector<32xf32> to vector<1x1x32xf32>
        %349 = vector.extract_strided_slice %338 {offsets = [0, 6, 0], sizes = [8, 16, 32], strides = [1, 1, 1]} : vector<8x27x32xf32> to vector<8x16x32xf32>
        %350 = vector.broadcast %348 : vector<1x1x32xf32> to vector<8x16x32xf32>
        %351 = arith.mulf %349, %350 : vector<8x16x32xf32>
        %352 = arith.addf %345, %351 : vector<8x16x32xf32>
        %c37 = arith.constant 37 : index
        %c0_105 = arith.constant 0 : index
        %353 = vector.load %arg2[%c37, %c0_105] : memref<49x32xf32, #tpu.memory_space<vmem>>, vector<1x32xf32>
        %354 = vector.shape_cast %353 : vector<1x32xf32> to vector<32xf32>
        %355 = vector.shape_cast %354 : vector<32xf32> to vector<1x1x32xf32>
        %356 = vector.extract_strided_slice %338 {offsets = [0, 7, 0], sizes = [8, 16, 32], strides = [1, 1, 1]} : vector<8x27x32xf32> to vector<8x16x32xf32>
        %357 = vector.broadcast %355 : vector<1x1x32xf32> to vector<8x16x32xf32>
        %358 = arith.mulf %356, %357 : vector<8x16x32xf32>
        %359 = arith.addf %352, %358 : vector<8x16x32xf32>
        %c38 = arith.constant 38 : index
        %c0_106 = arith.constant 0 : index
        %360 = vector.load %arg2[%c38, %c0_106] : memref<49x32xf32, #tpu.memory_space<vmem>>, vector<1x32xf32>
        %361 = vector.shape_cast %360 : vector<1x32xf32> to vector<32xf32>
        %362 = vector.shape_cast %361 : vector<32xf32> to vector<1x1x32xf32>
        %363 = vector.extract_strided_slice %338 {offsets = [0, 8, 0], sizes = [8, 16, 32], strides = [1, 1, 1]} : vector<8x27x32xf32> to vector<8x16x32xf32>
        %364 = vector.broadcast %362 : vector<1x1x32xf32> to vector<8x16x32xf32>
        %365 = arith.mulf %363, %364 : vector<8x16x32xf32>
        %366 = arith.addf %359, %365 : vector<8x16x32xf32>
        %c39 = arith.constant 39 : index
        %c0_107 = arith.constant 0 : index
        %367 = vector.load %arg2[%c39, %c0_107] : memref<49x32xf32, #tpu.memory_space<vmem>>, vector<1x32xf32>
        %368 = vector.shape_cast %367 : vector<1x32xf32> to vector<32xf32>
        %369 = vector.shape_cast %368 : vector<32xf32> to vector<1x1x32xf32>
        %370 = vector.extract_strided_slice %338 {offsets = [0, 9, 0], sizes = [8, 16, 32], strides = [1, 1, 1]} : vector<8x27x32xf32> to vector<8x16x32xf32>
        %371 = vector.broadcast %369 : vector<1x1x32xf32> to vector<8x16x32xf32>
        %372 = arith.mulf %370, %371 : vector<8x16x32xf32>
        %373 = arith.addf %366, %372 : vector<8x16x32xf32>
        %c40 = arith.constant 40 : index
        %c0_108 = arith.constant 0 : index
        %374 = vector.load %arg2[%c40, %c0_108] : memref<49x32xf32, #tpu.memory_space<vmem>>, vector<1x32xf32>
        %375 = vector.shape_cast %374 : vector<1x32xf32> to vector<32xf32>
        %376 = vector.shape_cast %375 : vector<32xf32> to vector<1x1x32xf32>
        %377 = vector.extract_strided_slice %338 {offsets = [0, 10, 0], sizes = [8, 16, 32], strides = [1, 1, 1]} : vector<8x27x32xf32> to vector<8x16x32xf32>
        %378 = vector.broadcast %376 : vector<1x1x32xf32> to vector<8x16x32xf32>
        %379 = arith.mulf %377, %378 : vector<8x16x32xf32>
        %380 = arith.addf %373, %379 : vector<8x16x32xf32>
        %c41 = arith.constant 41 : index
        %c0_109 = arith.constant 0 : index
        %381 = vector.load %arg2[%c41, %c0_109] : memref<49x32xf32, #tpu.memory_space<vmem>>, vector<1x32xf32>
        %382 = vector.shape_cast %381 : vector<1x32xf32> to vector<32xf32>
        %383 = vector.shape_cast %382 : vector<32xf32> to vector<1x1x32xf32>
        %384 = vector.extract_strided_slice %338 {offsets = [0, 11, 0], sizes = [8, 16, 32], strides = [1, 1, 1]} : vector<8x27x32xf32> to vector<8x16x32xf32>
        %385 = vector.broadcast %383 : vector<1x1x32xf32> to vector<8x16x32xf32>
        %386 = arith.mulf %384, %385 : vector<8x16x32xf32>
        %387 = arith.addf %380, %386 : vector<8x16x32xf32>
        %c6_i32 = arith.constant 6 : i32
        %388 = arith.addi %62, %c6_i32 : i32
        %389 = arith.index_cast %arg14 : i32 to index
        %390 = arith.index_cast %388 : i32 to index
        %c0_110 = arith.constant 0 : index
        %c0_111 = arith.constant 0 : index
        %391 = vector.load %arg12[%389, %390, %c0_110, %c0_111] : memref<2x22x27x32xf32, #tpu.memory_space<vmem>>, vector<1x8x27x32xf32>
        %392 = vector.shape_cast %391 : vector<1x8x27x32xf32> to vector<8x27x32xf32>
        %c42 = arith.constant 42 : index
        %c0_112 = arith.constant 0 : index
        %393 = vector.load %arg2[%c42, %c0_112] : memref<49x32xf32, #tpu.memory_space<vmem>>, vector<1x32xf32>
        %394 = vector.shape_cast %393 : vector<1x32xf32> to vector<32xf32>
        %395 = vector.shape_cast %394 : vector<32xf32> to vector<1x1x32xf32>
        %396 = vector.extract_strided_slice %392 {offsets = [0, 5, 0], sizes = [8, 16, 32], strides = [1, 1, 1]} : vector<8x27x32xf32> to vector<8x16x32xf32>
        %397 = vector.broadcast %395 : vector<1x1x32xf32> to vector<8x16x32xf32>
        %398 = arith.mulf %396, %397 : vector<8x16x32xf32>
        %399 = arith.addf %387, %398 : vector<8x16x32xf32>
        %c43 = arith.constant 43 : index
        %c0_113 = arith.constant 0 : index
        %400 = vector.load %arg2[%c43, %c0_113] : memref<49x32xf32, #tpu.memory_space<vmem>>, vector<1x32xf32>
        %401 = vector.shape_cast %400 : vector<1x32xf32> to vector<32xf32>
        %402 = vector.shape_cast %401 : vector<32xf32> to vector<1x1x32xf32>
        %403 = vector.extract_strided_slice %392 {offsets = [0, 6, 0], sizes = [8, 16, 32], strides = [1, 1, 1]} : vector<8x27x32xf32> to vector<8x16x32xf32>
        %404 = vector.broadcast %402 : vector<1x1x32xf32> to vector<8x16x32xf32>
        %405 = arith.mulf %403, %404 : vector<8x16x32xf32>
        %406 = arith.addf %399, %405 : vector<8x16x32xf32>
        %c44 = arith.constant 44 : index
        %c0_114 = arith.constant 0 : index
        %407 = vector.load %arg2[%c44, %c0_114] : memref<49x32xf32, #tpu.memory_space<vmem>>, vector<1x32xf32>
        %408 = vector.shape_cast %407 : vector<1x32xf32> to vector<32xf32>
        %409 = vector.shape_cast %408 : vector<32xf32> to vector<1x1x32xf32>
        %410 = vector.extract_strided_slice %392 {offsets = [0, 7, 0], sizes = [8, 16, 32], strides = [1, 1, 1]} : vector<8x27x32xf32> to vector<8x16x32xf32>
        %411 = vector.broadcast %409 : vector<1x1x32xf32> to vector<8x16x32xf32>
        %412 = arith.mulf %410, %411 : vector<8x16x32xf32>
        %413 = arith.addf %406, %412 : vector<8x16x32xf32>
        %c45 = arith.constant 45 : index
        %c0_115 = arith.constant 0 : index
        %414 = vector.load %arg2[%c45, %c0_115] : memref<49x32xf32, #tpu.memory_space<vmem>>, vector<1x32xf32>
        %415 = vector.shape_cast %414 : vector<1x32xf32> to vector<32xf32>
        %416 = vector.shape_cast %415 : vector<32xf32> to vector<1x1x32xf32>
        %417 = vector.extract_strided_slice %392 {offsets = [0, 8, 0], sizes = [8, 16, 32], strides = [1, 1, 1]} : vector<8x27x32xf32> to vector<8x16x32xf32>
        %418 = vector.broadcast %416 : vector<1x1x32xf32> to vector<8x16x32xf32>
        %419 = arith.mulf %417, %418 : vector<8x16x32xf32>
        %420 = arith.addf %413, %419 : vector<8x16x32xf32>
        %c46 = arith.constant 46 : index
        %c0_116 = arith.constant 0 : index
        %421 = vector.load %arg2[%c46, %c0_116] : memref<49x32xf32, #tpu.memory_space<vmem>>, vector<1x32xf32>
        %422 = vector.shape_cast %421 : vector<1x32xf32> to vector<32xf32>
        %423 = vector.shape_cast %422 : vector<32xf32> to vector<1x1x32xf32>
        %424 = vector.extract_strided_slice %392 {offsets = [0, 9, 0], sizes = [8, 16, 32], strides = [1, 1, 1]} : vector<8x27x32xf32> to vector<8x16x32xf32>
        %425 = vector.broadcast %423 : vector<1x1x32xf32> to vector<8x16x32xf32>
        %426 = arith.mulf %424, %425 : vector<8x16x32xf32>
        %427 = arith.addf %420, %426 : vector<8x16x32xf32>
        %c47 = arith.constant 47 : index
        %c0_117 = arith.constant 0 : index
        %428 = vector.load %arg2[%c47, %c0_117] : memref<49x32xf32, #tpu.memory_space<vmem>>, vector<1x32xf32>
        %429 = vector.shape_cast %428 : vector<1x32xf32> to vector<32xf32>
        %430 = vector.shape_cast %429 : vector<32xf32> to vector<1x1x32xf32>
        %431 = vector.extract_strided_slice %392 {offsets = [0, 10, 0], sizes = [8, 16, 32], strides = [1, 1, 1]} : vector<8x27x32xf32> to vector<8x16x32xf32>
        %432 = vector.broadcast %430 : vector<1x1x32xf32> to vector<8x16x32xf32>
        %433 = arith.mulf %431, %432 : vector<8x16x32xf32>
        %434 = arith.addf %427, %433 : vector<8x16x32xf32>
        %c48 = arith.constant 48 : index
        %c0_118 = arith.constant 0 : index
        %435 = vector.load %arg2[%c48, %c0_118] : memref<49x32xf32, #tpu.memory_space<vmem>>, vector<1x32xf32>
        %436 = vector.shape_cast %435 : vector<1x32xf32> to vector<32xf32>
        %437 = vector.shape_cast %436 : vector<32xf32> to vector<1x1x32xf32>
        %438 = vector.extract_strided_slice %392 {offsets = [0, 11, 0], sizes = [8, 16, 32], strides = [1, 1, 1]} : vector<8x27x32xf32> to vector<8x16x32xf32>
        %439 = vector.broadcast %437 : vector<1x1x32xf32> to vector<8x16x32xf32>
        %440 = arith.mulf %438, %439 : vector<8x16x32xf32>
        %441 = arith.addf %434, %440 : vector<8x16x32xf32>
        %c0_119 = arith.constant 0 : index
        %c0_120 = arith.constant 0 : index
        %442 = vector.load %arg3[%c0_119, %c0_120] : memref<1x32xf32, #tpu.memory_space<vmem>>, vector<1x32xf32>
        %443 = vector.shape_cast %442 : vector<1x32xf32> to vector<1x1x32xf32>
        %444 = vector.broadcast %443 : vector<1x1x32xf32> to vector<8x16x32xf32>
        %445 = arith.addf %441, %444 : vector<8x16x32xf32>
        %446 = vector.shape_cast %445 : vector<8x16x32xf32> to vector<128x32xf32>
        %cst_121 = arith.constant dense<0.000000e+00> : vector<128xf32>
        %447 = vector.multi_reduction <add>, %446, %cst_121 [1] : vector<128x32xf32> to vector<128xf32>
        %448 = vector.shape_cast %447 : vector<128xf32> to vector<128x1xf32>
        %cst_122 = arith.constant 3.200000e+01 : f32
        %449 = vector.broadcast %cst_122 : f32 to vector<128x1xf32>
        %450 = arith.divf %448, %449 : vector<128x1xf32>
        %451 = vector.broadcast %450 : vector<128x1xf32> to vector<128x32xf32>
        %452 = arith.subf %446, %451 : vector<128x32xf32>
        %453 = arith.mulf %452, %452 : vector<128x32xf32>
        %cst_123 = arith.constant dense<0.000000e+00> : vector<128xf32>
        %454 = vector.multi_reduction <add>, %453, %cst_123 [1] : vector<128x32xf32> to vector<128xf32>
        %455 = vector.shape_cast %454 : vector<128xf32> to vector<128x1xf32>
        %cst_124 = arith.constant 3.200000e+01 : f32
        %456 = vector.broadcast %cst_124 : f32 to vector<128x1xf32>
        %457 = arith.divf %455, %456 : vector<128x1xf32>
        %cst_125 = arith.constant 9.99999997E-7 : f32
        %458 = vector.broadcast %cst_125 : f32 to vector<128x1xf32>
        %459 = arith.addf %457, %458 : vector<128x1xf32>
        %460 = math.rsqrt %459 : vector<128x1xf32>
        %461 = vector.broadcast %460 : vector<128x1xf32> to vector<128x32xf32>
        %462 = arith.mulf %452, %461 : vector<128x32xf32>
        %c0_126 = arith.constant 0 : index
        %c0_127 = arith.constant 0 : index
        %463 = vector.load %arg4[%c0_126, %c0_127] : memref<1x32xf32, #tpu.memory_space<vmem>>, vector<1x32xf32>
        %464 = vector.broadcast %463 : vector<1x32xf32> to vector<128x32xf32>
        %465 = arith.mulf %462, %464 : vector<128x32xf32>
        %c0_128 = arith.constant 0 : index
        %c0_129 = arith.constant 0 : index
        %466 = vector.load %arg5[%c0_128, %c0_129] : memref<1x32xf32, #tpu.memory_space<vmem>>, vector<1x32xf32>
        %467 = vector.broadcast %466 : vector<1x32xf32> to vector<128x32xf32>
        %468 = arith.addf %465, %467 : vector<128x32xf32>
        %c16_i32 = arith.constant 16 : i32
        %469 = arith.muli %arg14, %c16_i32 : i32
        %470 = arith.addi %469, %62 : i32
        %c16_i32_130 = arith.constant 16 : i32
        %471 = arith.muli %470, %c16_i32_130 : i32
        %472 = tpu.assume_multiple %471, 128 : i32
        %473 = arith.truncf %468 : vector<128x32xf32> to vector<128x32xbf16>
        %474 = arith.index_cast %472 : i32 to index
        %c0_131 = arith.constant 0 : index
        %475 = vector.load %arg13[%474, %c0_131] : memref<512x32xbf16, #tpu.memory_space<vmem>>, vector<128x32xbf16>
        tpu.vector_store %arg13[%474, %c0_131], %473 {strides = array<i32>} : memref<512x32xbf16, #tpu.memory_space<vmem>>, vector<128x32xbf16>,
      }
      %c2_i32_45 = arith.constant 2 : i32
    }
    %c2_i32_0 = arith.constant 2 : i32
    %c0 = arith.constant 0 : index
    %c0_1 = arith.constant 0 : index
    %1 = vector.load %arg13[%c0, %c0_1] : memref<512x32xbf16, #tpu.memory_space<vmem>>, vector<512x32xbf16>
    %c0_2 = arith.constant 0 : index
    %c0_3 = arith.constant 0 : index
    %2 = vector.load %arg6[%c0_2, %c0_3] : memref<32x128xbf16, #tpu.memory_space<vmem>>, vector<32x128xbf16>
    %cst = arith.constant dense<0.000000e+00> : vector<512x128xf32>
    %3 = tpu.matmul %1, %2, %cst {dimension_numbers = #tpu.dot_dimension_numbers<[1], [0], [0], [1], [0, 0, 1, 1], [], []>} : vector<512x32xbf16>, vector<32x128xbf16>, vector<512x128xf32> -> vector<512x128xf32>
    %c0_4 = arith.constant 0 : index
    %c0_5 = arith.constant 0 : index
    %4 = vector.load %arg7[%c0_4, %c0_5] : memref<1x128xf32, #tpu.memory_space<vmem>>, vector<1x128xf32>
    %5 = vector.broadcast %4 : vector<1x128xf32> to vector<512x128xf32>
    %6 = arith.addf %3, %5 : vector<512x128xf32>
    %cst_6 = arith.constant 5.000000e-01 : f32
    %7 = vector.broadcast %cst_6 : f32 to vector<512x128xf32>
    %8 = arith.mulf %7, %6 : vector<512x128xf32>
    %cst_7 = arith.constant 4.471500e-02 : f32
    %9 = vector.broadcast %cst_7 : f32 to vector<512x128xf32>
    %10 = arith.mulf %9, %6 : vector<512x128xf32>
    %11 = arith.mulf %10, %6 : vector<512x128xf32>
    %12 = arith.mulf %11, %6 : vector<512x128xf32>
    %13 = arith.addf %6, %12 : vector<512x128xf32>
    %cst_8 = arith.constant 0.797884583 : f32
    %14 = vector.broadcast %cst_8 : f32 to vector<512x128xf32>
    %15 = arith.mulf %14, %13 : vector<512x128xf32>
    %16 = math.tanh %15 : vector<512x128xf32>
    %cst_9 = arith.constant 1.000000e+00 : f32
    %17 = vector.broadcast %cst_9 : f32 to vector<512x128xf32>
    %18 = arith.addf %17, %16 : vector<512x128xf32>
    %19 = arith.mulf %8, %18 : vector<512x128xf32>
    %20 = arith.truncf %19 : vector<512x128xf32> to vector<512x128xbf16>
    %c0_10 = arith.constant 0 : index
    %c0_11 = arith.constant 0 : index
    %21 = vector.load %arg8[%c0_10, %c0_11] : memref<128x32xbf16, #tpu.memory_space<vmem>>, vector<128x32xbf16>
    %cst_12 = arith.constant dense<0.000000e+00> : vector<512x32xf32>
    %22 = tpu.matmul %20, %21, %cst_12 {dimension_numbers = #tpu.dot_dimension_numbers<[1], [0], [0], [1], [0, 0, 1, 1], [], []>} : vector<512x128xbf16>, vector<128x32xbf16>, vector<512x32xf32> -> vector<512x32xf32>
    %c0_13 = arith.constant 0 : index
    %c0_14 = arith.constant 0 : index
    %23 = vector.load %arg9[%c0_13, %c0_14] : memref<1x32xf32, #tpu.memory_space<vmem>>, vector<1x32xf32>
    %24 = vector.broadcast %23 : vector<1x32xf32> to vector<512x32xf32>
    %25 = arith.addf %22, %24 : vector<512x32xf32>
    %c0_15 = arith.constant 0 : index
    %c0_16 = arith.constant 0 : index
    %26 = vector.load %arg10[%c0_15, %c0_16] : memref<1x32xf32, #tpu.memory_space<vmem>>, vector<1x32xf32>
    %27 = vector.broadcast %26 : vector<1x32xf32> to vector<512x32xf32>
    %28 = arith.mulf %25, %27 : vector<512x32xf32>
    %c0_17 = arith.constant 0 : index
    %c0_18 = arith.constant 0 : index
    %c0_19 = arith.constant 0 : index
    %c0_20 = arith.constant 0 : index
    %29 = vector.load %arg1[%c0_17, %c0_18, %c0_19, %c0_20] : memref<2x16x16x32xf32, #tpu.memory_space<vmem>>, vector<2x16x16x32xf32>
    %30 = vector.shape_cast %28 : vector<512x32xf32> to vector<2x16x16x32xf32>
    %31 = arith.addf %29, %30 : vector<2x16x16x32xf32>
    %c0_21 = arith.constant 0 : index
    %c0_22 = arith.constant 0 : index
    %c0_23 = arith.constant 0 : index
    %c0_24 = arith.constant 0 : index
    %32 = vector.load %arg11[%c0_21, %c0_22, %c0_23, %c0_24] : memref<2x16x16x32xf32, #tpu.memory_space<vmem>>, vector<2x16x16x32xf32>
    tpu.vector_store %arg11[%c0_21, %c0_22, %c0_23, %c0_24], %31 {strides = array<i32>} : memref<2x16x16x32xf32, #tpu.memory_space<vmem>>, vector<2x16x16x32xf32>,
    return
  }
  func.func @transform_0(%arg0: i32) -> (i32, i32, i32, i32) {
    %c0_i32 = arith.constant 0 : i32
    %c0_i32_0 = arith.constant 0 : i32
    %c0_i32_1 = arith.constant 0 : i32
    %c0_i32_2 = arith.constant 0 : i32
    return %arg0, %c0_i32, %c0_i32_0, %c0_i32_1 : i32, i32, i32, i32
  }
  func.func @transform_1(%arg0: i32) -> (i32, i32) {
    %c0_i32 = arith.constant 0 : i32
    %c0_i32_0 = arith.constant 0 : i32
    %c0_i32_1 = arith.constant 0 : i32
    return %c0_i32, %c0_i32_0 : i32, i32
  }
  func.func @transform_2(%arg0: i32) -> (i32, i32) {
    %c0_i32 = arith.constant 0 : i32
    %c0_i32_0 = arith.constant 0 : i32
    %c0_i32_1 = arith.constant 0 : i32
    return %c0_i32, %c0_i32_0 : i32, i32
  }
  func.func @transform_3(%arg0: i32) -> (i32, i32) {
    %c0_i32 = arith.constant 0 : i32
    %c0_i32_0 = arith.constant 0 : i32
    %c0_i32_1 = arith.constant 0 : i32
    return %c0_i32, %c0_i32_0 : i32, i32
  }
  func.func @transform_4(%arg0: i32) -> (i32, i32) {
    %c0_i32 = arith.constant 0 : i32
    %c0_i32_0 = arith.constant 0 : i32
    %c0_i32_1 = arith.constant 0 : i32
    return %c0_i32, %c0_i32_0 : i32, i32
  }
  func.func @transform_5(%arg0: i32) -> (i32, i32) {
    %c0_i32 = arith.constant 0 : i32
    %c0_i32_0 = arith.constant 0 : i32
    %c0_i32_1 = arith.constant 0 : i32
    return %c0_i32, %c0_i32_0 : i32, i32
  }
  func.func @transform_6(%arg0: i32) -> (i32, i32) {
    %c0_i32 = arith.constant 0 : i32
    %c0_i32_0 = arith.constant 0 : i32
    %c0_i32_1 = arith.constant 0 : i32
    return %c0_i32, %c0_i32_0 : i32, i32
  }
  func.func @transform_7(%arg0: i32) -> (i32, i32) {
    %c0_i32 = arith.constant 0 : i32
    %c0_i32_0 = arith.constant 0 : i32
    %c0_i32_1 = arith.constant 0 : i32
    return %c0_i32, %c0_i32_0 : i32, i32
  }
  func.func @transform_8(%arg0: i32) -> (i32, i32) {
    %c0_i32 = arith.constant 0 : i32
    %c0_i32_0 = arith.constant 0 : i32
    %c0_i32_1 = arith.constant 0 : i32
    return %c0_i32, %c0_i32_0 : i32, i32
  }
  func.func @transform_9(%arg0: i32) -> (i32, i32) {
    %c0_i32 = arith.constant 0 : i32
    %c0_i32_0 = arith.constant 0 : i32
    %c0_i32_1 = arith.constant 0 : i32
    return %c0_i32, %c0_i32_0 : i32, i32
  }
  func.func @transform_10(%arg0: i32) -> (i32, i32, i32, i32) {
    %c0_i32 = arith.constant 0 : i32
    %c0_i32_0 = arith.constant 0 : i32
    %c0_i32_1 = arith.constant 0 : i32
    %c0_i32_2 = arith.constant 0 : i32
    return %arg0, %c0_i32, %c0_i32_0, %c0_i32_1 : i32, i32, i32, i32
  }
}

</mosaic_0001>

<llo_original>
// kernel: block_forward.1
$region0: #{block_forward.1}
  #allocation0 [shape = 'u32[]', space=smem, size = 0x4, offset = 0x4, fixed_abs, tag = 'smem constant byte address 0x4 - core index']
  #allocation1 [shape = 'u32[72,128]{1,0:T(1,128)}', space=vmem, size = 0x9000, scoped, tag = 'internal scratch']
  #allocation2 [shape = 'f32[2,22,27,32]{3,2,1,0:T(8,128)}', space=vmem, size = 0xb0000, scoped, tag = 'scratch operand']
  #allocation3 [shape = 'bf16[512,32]{1,0:T(8,128)(2,1)}', space=vmem, size = 0x20000, scoped, tag = 'scratch operand']
  %s0 = inlined_call_operand.hbm [shape: f32[2,16,16,32], index: 0, kind: input, shape index: {}]
  %s1 = inlined_call_operand.vmem [shape: f32[49,32], index: 1, kind: input, shape index: {}]
  %s2 = inlined_call_operand.vmem [shape: f32[1,32], index: 2, kind: input, shape index: {}]
  %s3 = inlined_call_operand.vmem [shape: f32[1,32], index: 3, kind: input, shape index: {}]
  %s4 = inlined_call_operand.vmem [shape: f32[1,32], index: 4, kind: input, shape index: {}]
  %s5 = inlined_call_operand.vmem [shape: bf16[32,128], index: 5, kind: input, shape index: {}]
  %s6 = inlined_call_operand.vmem [shape: f32[1,128], index: 6, kind: input, shape index: {}]
  %s7 = inlined_call_operand.vmem [shape: bf16[128,32], index: 7, kind: input, shape index: {}]
  %s8 = inlined_call_operand.vmem [shape: f32[1,32], index: 8, kind: input, shape index: {}]
  %s9 = inlined_call_operand.vmem [shape: f32[1,32], index: 9, kind: input, shape index: {}]
  %s10 = inlined_call_operand.hbm [shape: f32[2,16,16,32], index: 10, kind: output, shape index: {}]
  %s11 = sld [smem:[#allocation0]]
  $region68: #{block_forward.1} parent=0
    _
  %s13 = ssub.s32 1, %s11
  %s14 = scalar_select 0, %s13, %s11
  $region1: #{block_forward.1} parent=0
    #allocation4 [shape = 'u8[262144]{0}', space=vmem, size = 0x40000, scoped, tag = 'input window, operand 0, single buffered']
    #allocation5 [shape = 's32[1]{0}', space=sflag, size = 0x4, scoped, tag = 'scoped memory for block_forward.1']
    #allocation6 [shape = 's32[1]{0}', space=sflag, size = 0x4, scoped, tag = 'scoped memory for block_forward.1']
    #allocation7 [shape = 'u8[262144]{0}', space=vmem, size = 0x40000, scoped, tag = 'output window, operand 0, single buffered']
    %15 = vsyncpa [#allocation5], 0
    %16 = vsyncpa [#allocation6], 0
    // Predicated region
    $region2: #{block_forward.1} parent=1 // pred_check
      _
    $region3: #{block_forward.1} parent=1 // pred_check_branch
      %18 = sbr.rel (0) target = $region5
    $region4: #{block_forward.1} parent=1 // pred_region
      %20 = vsyncadd [#allocation5], 0
      %s21 = sshll.u32 %s0, 4
      %s22 = int_to_ptr.hbm [resolvable:$true] %s21
      %s23 = sshll.u32 [#allocation4], 4
      %s24 = int_to_ptr.vmem [resolvable:$true] %s23
      %29 = dma.hbm_to_vmem [thread:$0]  %s22, 8192, %s24, [#allocation5], 128, 128, 8
    $region5: #{block_forward.1} parent=1 // pred_fallthru
      _
    // Predicated region
    $region6: #{block_forward.1} parent=1 // pred_check
      _
    $region7: #{block_forward.1} parent=1 // pred_check_branch
      %31 = sbr.rel (0) target = $region9
    $region8: #{block_forward.1} parent=1 // pred_region
      _
    $region9: #{block_forward.1} parent=1 // pred_fallthru
      _
    // Predicated region
    $region10: #{block_forward.1} parent=1 // pred_check
      _
    $region11: #{block_forward.1} parent=1 // pred_check_branch
      %33 = sbr.rel (0) target = $region13
    $region12: #{block_forward.1} parent=1 // pred_region
      _
    $region13: #{block_forward.1} parent=1 // pred_fallthru
      _
    // Predicated region
    $region14: #{block_forward.1} parent=1 // pred_check
      _
    $region15: #{block_forward.1} parent=1 // pred_check_branch
      %35 = sbr.rel (0) target = $region17
    $region16: #{block_forward.1} parent=1 // pred_region
      _
    $region17: #{block_forward.1} parent=1 // pred_fallthru
      _
    // Predicated region
    $region18: #{block_forward.1} parent=1 // pred_check
      _
    $region19: #{block_forward.1} parent=1 // pred_check_branch
      %37 = sbr.rel (0) target = $region21
    $region20: #{block_forward.1} parent=1 // pred_region
      _
    $region21: #{block_forward.1} parent=1 // pred_fallthru
      _
    // Predicated region
    $region22: #{block_forward.1} parent=1 // pred_check
      _
    $region23: #{block_forward.1} parent=1 // pred_check_branch
      %39 = sbr.rel (0) target = $region25
    $region24: #{block_forward.1} parent=1 // pred_region
      _
    $region25: #{block_forward.1} parent=1 // pred_fallthru
      _
    // Predicated region
    $region26: #{block_forward.1} parent=1 // pred_check
      _
    $region27: #{block_forward.1} parent=1 // pred_check_branch
      %41 = sbr.rel (0) target = $region29
    $region28: #{block_forward.1} parent=1 // pred_region
      _
    $region29: #{block_forward.1} parent=1 // pred_fallthru
      _
    // Predicated region
    $region30: #{block_forward.1} parent=1 // pred_check
      _
    $region31: #{block_forward.1} parent=1 // pred_check_branch
      %43 = sbr.rel (0) target = $region33
    $region32: #{block_forward.1} parent=1 // pred_region
      _
    $region33: #{block_forward.1} parent=1 // pred_fallthru
      _
    // Predicated region
    $region34: #{block_forward.1} parent=1 // pred_check
      _
    $region35: #{block_forward.1} parent=1 // pred_check_branch
      %45 = sbr.rel (0) target = $region37
    $region36: #{block_forward.1} parent=1 // pred_region
      _
    $region37: #{block_forward.1} parent=1 // pred_fallthru
      _
    // Predicated region
    $region38: #{block_forward.1} parent=1 // pred_check
      _
    $region39: #{block_forward.1} parent=1 // pred_check_branch
      %47 = sbr.rel (0) target = $region41
    $region40: #{block_forward.1} parent=1 // pred_region
      _
    $region41: #{block_forward.1} parent=1 // pred_fallthru
      _
    // Predicated region
    $region42: #{block_forward.1} parent=1 // pred_check
      _
    $region43: #{block_forward.1} parent=1 // pred_check_branch
      %49 = sbr.rel (0) target = $region45
    $region44: #{block_forward.1} parent=1 // pred_region
      %51 = dma.done [#allocation5], 8192
    $region45: #{block_forward.1} parent=1 // pred_fallthru
      _
    loop: start=0, step=1, limit=2
    $region46: #{block_forward.1} parent=1 // loop_pre_header
      _
    $region47: #{block_forward.1} parent=1 // loop_header
      %s54 = sphi 0, %s58
      %p55 = scmp.ge.s32.totalorder %s54, 2
    $region48: #{block_forward.1} parent=1 // loop_header_branch
      %57 = sbr.rel (%p55) target = $region52
    $region49: #{block_forward.1} parent=1 // loop_body
      %s59 = smul.u32 %s54, 704
      %s60 = scalar_lea.vmem [#allocation2], %s59
      %vm61 = vcmask 261120
      %62 = vst.msk [vmem:[%s60] sm:$0xff] %vm61, 0.0
      %63 = vst.msk [vmem:[%s60 + $0x8] sm:$0xff] %vm61, 0.0
      %64 = vst.msk [vmem:[%s60 + $0x10] sm:$0xff] %vm61, 0.0
      %vm65 = vcmask 256000
      %66 = vst.msk [vmem:[%s60 + $0x18] sm:$0x7] %vm65, 0.0
      %67 = vst.msk [vmem:[%s60 + $0x20] sm:$0xff] %vm61, 0.0
      %68 = vst.msk [vmem:[%s60 + $0x28] sm:$0xff] %vm61, 0.0
      %69 = vst.msk [vmem:[%s60 + $0x30] sm:$0xff] %vm61, 0.0
      %70 = vst.msk [vmem:[%s60 + $0x38] sm:$0x7] %vm65, 0.0
      %71 = vst.msk [vmem:[%s60 + $0x40] sm:$0xff] %vm61, 0.0
      %72 = vst.msk [vmem:[%s60 + $0x48] sm:$0xff] %vm61, 0.0
      %73 = vst.msk [vmem:[%s60 + $0x50] sm:$0xff] %vm61, 0.0
      %74 = vst.msk [vmem:[%s60 + $0x58] sm:$0x7] %vm65, 0.0
      %s75 = sadd.s32 608, %s59
      %s76 = scalar_lea.vmem [#allocation2], %s75
      %77 = vst.msk [vmem:[%s76] sm:$0xff] %vm61, 0.0
      %78 = vst.msk [vmem:[%s76 + $0x8] sm:$0xff] %vm61, 0.0
      %79 = vst.msk [vmem:[%s76 + $0x10] sm:$0xff] %vm61, 0.0
      %80 = vst.msk [vmem:[%s76 + $0x18] sm:$0x7] %vm65, 0.0
      %81 = vst.msk [vmem:[%s76 + $0x20] sm:$0xff] %vm61, 0.0
      %82 = vst.msk [vmem:[%s76 + $0x28] sm:$0xff] %vm61, 0.0
      %83 = vst.msk [vmem:[%s76 + $0x30] sm:$0xff] %vm61, 0.0
      %84 = vst.msk [vmem:[%s76 + $0x38] sm:$0x7] %vm65, 0.0
      %85 = vst.msk [vmem:[%s76 + $0x40] sm:$0xff] %vm61, 0.0
      %86 = vst.msk [vmem:[%s76 + $0x48] sm:$0xff] %vm61, 0.0
      %87 = vst.msk [vmem:[%s76 + $0x50] sm:$0xff] %vm61, 0.0
      %88 = vst.msk [vmem:[%s76 + $0x58] sm:$0x7] %vm65, 0.0
      %89 = vst.msk [vmem:[%s60 + $0x5] sm:$0x7] %vm65, 0.0
      %90 = vst.msk [vmem:[%s60 + $0x25] sm:$0x7] %vm65, 0.0
      %91 = vst.msk [vmem:[%s60 + $0x45] sm:$0x7] %vm65, 0.0
      %92 = vst.msk [vmem:[%s60 + $0x65] sm:$0x7] %vm65, 0.0
      %93 = vst.msk [vmem:[%s60 + $0x85] sm:$0x7] %vm65, 0.0
      %94 = vst.msk [vmem:[%s60 + $0xa5] sm:$0x7] %vm65, 0.0
      %95 = vst.msk [vmem:[%s60 + $0xc5] sm:$0x7] %vm65, 0.0
      %96 = vst.msk [vmem:[%s60 + $0xe5] sm:$0x7] %vm65, 0.0
      %97 = vst.msk [vmem:[%s60 + $0x105] sm:$0x7] %vm65, 0.0
      %98 = vst.msk [vmem:[%s60 + $0x125] sm:$0x7] %vm65, 0.0
      %99 = vst.msk [vmem:[%s60 + $0x145] sm:$0x7] %vm65, 0.0
      %100 = vst.msk [vmem:[%s60 + $0x165] sm:$0x7] %vm65, 0.0
      %101 = vst.msk [vmem:[%s60 + $0x185] sm:$0x7] %vm65, 0.0
      %102 = vst.msk [vmem:[%s60 + $0x1a5] sm:$0x7] %vm65, 0.0
      %103 = vst.msk [vmem:[%s60 + $0x1c5] sm:$0x7] %vm65, 0.0
      %104 = vst.msk [vmem:[%s60 + $0x1e5] sm:$0x7] %vm65, 0.0
      %105 = vst.msk [vmem:[%s60 + $0x205] sm:$0x7] %vm65, 0.0
      %106 = vst.msk [vmem:[%s60 + $0x225] sm:$0x7] %vm65, 0.0
      %107 = vst.msk [vmem:[%s60 + $0x245] sm:$0x7] %vm65, 0.0
      %108 = vst.msk [vmem:[%s60 + $0x265] sm:$0x7] %vm65, 0.0
      %109 = vst.msk [vmem:[%s60 + $0x285] sm:$0x7] %vm65, 0.0
      %110 = vst.msk [vmem:[%s60 + $0x2a5] sm:$0x7] %vm65, 0.0
      %111 = vst.msk [vmem:[%s60 + $0x18] sm:$0x7] %vm65, 0.0
      %112 = vst.msk [vmem:[%s60 + $0x38] sm:$0x7] %vm65, 0.0
      %113 = vst.msk [vmem:[%s60 + $0x58] sm:$0x7] %vm65, 0.0
      %114 = vst.msk [vmem:[%s60 + $0x78] sm:$0x7] %vm65, 0.0
      %115 = vst.msk [vmem:[%s60 + $0x98] sm:$0x7] %vm65, 0.0
      %116 = vst.msk [vmem:[%s60 + $0xb8] sm:$0x7] %vm65, 0.0
      %117 = vst.msk [vmem:[%s60 + $0xd8] sm:$0x7] %vm65, 0.0
      %118 = vst.msk [vmem:[%s60 + $0xf8] sm:$0x7] %vm65, 0.0
      %119 = vst.msk [vmem:[%s60 + $0x118] sm:$0x7] %vm65, 0.0
      %120 = vst.msk [vmem:[%s60 + $0x138] sm:$0x7] %vm65, 0.0
      %121 = vst.msk [vmem:[%s60 + $0x158] sm:$0x7] %vm65, 0.0
      %122 = vst.msk [vmem:[%s60 + $0x178] sm:$0x7] %vm65, 0.0
      %123 = vst.msk [vmem:[%s60 + $0x198] sm:$0x7] %vm65, 0.0
      %124 = vst.msk [vmem:[%s60 + $0x1b8] sm:$0x7] %vm65, 0.0
      %125 = vst.msk [vmem:[%s60 + $0x1d8] sm:$0x7] %vm65, 0.0
      %126 = vst.msk [vmem:[%s60 + $0x1f8] sm:$0x7] %vm65, 0.0
      %127 = vst.msk [vmem:[%s60 + $0x218] sm:$0x7] %vm65, 0.0
      %128 = vst.msk [vmem:[%s60 + $0x238] sm:$0x7] %vm65, 0.0
      %129 = vst.msk [vmem:[%s60 + $0x258] sm:$0x7] %vm65, 0.0
      %130 = vst.msk [vmem:[%s60 + $0x278] sm:$0x7] %vm65, 0.0
      %131 = vst.msk [vmem:[%s60 + $0x298] sm:$0x7] %vm65, 0.0
      %132 = vst.msk [vmem:[%s60 + $0x2b8] sm:$0x7] %vm65, 0.0
      %s133 = smul.u32 %s54, 256
      %s134 = scalar_lea.vmem [#allocation4], %s133
      %v135 = vld [vmem:[%s134] sm:$0xff]
      %v136 = vld [vmem:[%s134 + $0x8] sm:$0xff]
      %v137 = vld [vmem:[%s134 + $0x10] sm:$0xff]
      %v138 = vld [vmem:[%s134 + $0x18] sm:$0xff]
      %v139 = vld [vmem:[%s134 + $0x20] sm:$0xff]
      %v140 = vld [vmem:[%s134 + $0x28] sm:$0xff]
      %v141 = vld [vmem:[%s134 + $0x30] sm:$0xff]
      %v142 = vld [vmem:[%s134 + $0x38] sm:$0xff]
      %v143 = vld [vmem:[%s134 + $0x40] sm:$0xff]
      %v144 = vld [vmem:[%s134 + $0x48] sm:$0xff]
      %v145 = vld [vmem:[%s134 + $0x50] sm:$0xff]
      %v146 = vld [vmem:[%s134 + $0x58] sm:$0xff]
      %v147 = vld [vmem:[%s134 + $0x60] sm:$0xff]
      %v148 = vld [vmem:[%s134 + $0x68] sm:$0xff]
      %v149 = vld [vmem:[%s134 + $0x70] sm:$0xff]
      %v150 = vld [vmem:[%s134 + $0x78] sm:$0xff]
      %v151 = vld [vmem:[%s134 + $0x80] sm:$0xff]
      %v152 = vld [vmem:[%s134 + $0x88] sm:$0xff]
      %v153 = vld [vmem:[%s134 + $0x90] sm:$0xff]
      %v154 = vld [vmem:[%s134 + $0x98] sm:$0xff]
      %v155 = vld [vmem:[%s134 + $0xa0] sm:$0xff]
      %v156 = vld [vmem:[%s134 + $0xa8] sm:$0xff]
      %v157 = vld [vmem:[%s134 + $0xb0] sm:$0xff]
      %v158 = vld [vmem:[%s134 + $0xb8] sm:$0xff]
      %v159 = vld [vmem:[%s134 + $0xc0] sm:$0xff]
      %v160 = vld [vmem:[%s134 + $0xc8] sm:$0xff]
      %v161 = vld [vmem:[%s134 + $0xd0] sm:$0xff]
      %v162 = vld [vmem:[%s134 + $0xd8] sm:$0xff]
      %v163 = vld [vmem:[%s134 + $0xe0] sm:$0xff]
      %v164 = vld [vmem:[%s134 + $0xe8] sm:$0xff]
      %v165 = vld [vmem:[%s134 + $0xf0] sm:$0xff]
      %v166 = vld [vmem:[%s134 + $0xf8] sm:$0xff]
      %s167 = sadd.s32 96, %s59
      %s168 = scalar_lea.vmem [#allocation2], %s167
      %169 = vst.msk [vmem:[%s168 + $0x8] sm:$0xff] %vm61, %v135
      %170 = vst.msk [vmem:[%s168 + $0x10] sm:$0xff] %vm61, %v136
      %171 = vst.msk [vmem:[%s168 + $0x28] sm:$0xff] %vm61, %v137
      %172 = vst.msk [vmem:[%s168 + $0x30] sm:$0xff] %vm61, %v138
      %173 = vst.msk [vmem:[%s168 + $0x48] sm:$0xff] %vm61, %v139
      %174 = vst.msk [vmem:[%s168 + $0x50] sm:$0xff] %vm61, %v140
      %175 = vst.msk [vmem:[%s168 + $0x68] sm:$0xff] %vm61, %v141
      %176 = vst.msk [vmem:[%s168 + $0x70] sm:$0xff] %vm61, %v142
      %177 = vst.msk [vmem:[%s168 + $0x88] sm:$0xff] %vm61, %v143
      %178 = vst.msk [vmem:[%s168 + $0x90] sm:$0xff] %vm61, %v144
      %179 = vst.msk [vmem:[%s168 + $0xa8] sm:$0xff] %vm61, %v145
      %180 = vst.msk [vmem:[%s168 + $0xb0] sm:$0xff] %vm61, %v146
      %181 = vst.msk [vmem:[%s168 + $0xc8] sm:$0xff] %vm61, %v147
      %182 = vst.msk [vmem:[%s168 + $0xd0] sm:$0xff] %vm61, %v148
      %183 = vst.msk [vmem:[%s168 + $0xe8] sm:$0xff] %vm61, %v149
      %184 = vst.msk [vmem:[%s168 + $0xf0] sm:$0xff] %vm61, %v150
      %185 = vst.msk [vmem:[%s168 + $0x108] sm:$0xff] %vm61, %v151
      %186 = vst.msk [vmem:[%s168 + $0x110] sm:$0xff] %vm61, %v152
      %187 = vst.msk [vmem:[%s168 + $0x128] sm:$0xff] %vm61, %v153
      %188 = vst.msk [vmem:[%s168 + $0x130] sm:$0xff] %vm61, %v154
      %189 = vst.msk [vmem:[%s168 + $0x148] sm:$0xff] %vm61, %v155
      %190 = vst.msk [vmem:[%s168 + $0x150] sm:$0xff] %vm61, %v156
      %191 = vst.msk [vmem:[%s168 + $0x168] sm:$0xff] %vm61, %v157
      %192 = vst.msk [vmem:[%s168 + $0x170] sm:$0xff] %vm61, %v158
      %193 = vst.msk [vmem:[%s168 + $0x188] sm:$0xff] %vm61, %v159
      %194 = vst.msk [vmem:[%s168 + $0x190] sm:$0xff] %vm61, %v160
      %195 = vst.msk [vmem:[%s168 + $0x1a8] sm:$0xff] %vm61, %v161
      %196 = vst.msk [vmem:[%s168 + $0x1b0] sm:$0xff] %vm61, %v162
      %197 = vst.msk [vmem:[%s168 + $0x1c8] sm:$0xff] %vm61, %v163
      %198 = vst.msk [vmem:[%s168 + $0x1d0] sm:$0xff] %vm61, %v164
      %199 = vst.msk [vmem:[%s168 + $0x1e8] sm:$0xff] %vm61, %v165
      %200 = vst.msk [vmem:[%s168 + $0x1f0] sm:$0xff] %vm61, %v166
      loop: start=0, step=1, limit=2
      $region53: #{block_forward.1} parent=49 // loop_pre_header
        _
      $region54: #{block_forward.1} parent=49 // loop_header
        %s202 = sphi 0, %s206
        %p203 = scmp.ge.s32.totalorder %s202, 2
      $region55: #{block_forward.1} parent=49 // loop_header_branch
        %205 = sbr.rel (%p203) target = $region59
      $region56: #{block_forward.1} parent=49 // loop_body
        %s207 = smul.u32 %s202, 8
        %s208 = smul.u32 %s207, 32
        %s209 = sadd.s32 %s208, %s59
        %s210 = scalar_lea.vmem [#allocation2], %s209
        %v211 = vld [vmem:[%s210] sm:$0xff]
        %v212 = vld [vmem:[%s210 + $0x8] sm:$0xff]
        %v213 = vld [vmem:[%s210 + $0x10] sm:$0xff]
        %v214 = vld [vmem:[%s210 + $0x18] sm:$0x7]
        %v215 = vld [vmem:[%s210 + $0x20] sm:$0xff]
        %v216 = vld [vmem:[%s210 + $0x28] sm:$0xff]
        %v217 = vld [vmem:[%s210 + $0x30] sm:$0xff]
        %v218 = vld [vmem:[%s210 + $0x38] sm:$0x7]
        %v219 = vld [vmem:[%s210 + $0x40] sm:$0xff]
        %v220 = vld [vmem:[%s210 + $0x48] sm:$0xff]
        %v221 = vld [vmem:[%s210 + $0x50] sm:$0xff]
        %v222 = vld [vmem:[%s210 + $0x58] sm:$0x7]
        %v223 = vld [vmem:[%s210 + $0x60] sm:$0xff]
        %v224 = vld [vmem:[%s210 + $0x68] sm:$0xff]
        %v225 = vld [vmem:[%s210 + $0x70] sm:$0xff]
        %v226 = vld [vmem:[%s210 + $0x78] sm:$0x7]
        %v227 = vld [vmem:[%s210 + $0x80] sm:$0xff]
        %v228 = vld [vmem:[%s210 + $0x88] sm:$0xff]
        %v229 = vld [vmem:[%s210 + $0x90] sm:$0xff]
        %v230 = vld [vmem:[%s210 + $0x98] sm:$0x7]
        %v231 = vld [vmem:[%s210 + $0xa0] sm:$0xff]
        %v232 = vld [vmem:[%s210 + $0xa8] sm:$0xff]
        %v233 = vld [vmem:[%s210 + $0xb0] sm:$0xff]
        %v234 = vld [vmem:[%s210 + $0xb8] sm:$0x7]
        %v235 = vld [vmem:[%s210 + $0xc0] sm:$0xff]
        %v236 = vld [vmem:[%s210 + $0xc8] sm:$0xff]
        %v237 = vld [vmem:[%s210 + $0xd0] sm:$0xff]
        %v238 = vld [vmem:[%s210 + $0xd8] sm:$0x7]
        %v239 = vld [vmem:[%s210 + $0xe0] sm:$0xff]
        %v240 = vld [vmem:[%s210 + $0xe8] sm:$0xff]
        %v241 = vld [vmem:[%s210 + $0xf0] sm:$0xff]
        %v242 = vld [vmem:[%s210 + $0xf8] sm:$0x7]
        %v243 = vld [vmem:[%s1] sm:$0x1]
        %v244 = vperm.slane %v243, 0
        %v245 = vmul.f32 %v211, %v244
        %v246 = vmul.f32 %v212, %v244
        %v247 = vmul.f32 %v213, %v244
        %v248 = vmul.f32 %v215, %v244
        %v249 = vmul.f32 %v216, %v244
        %v250 = vmul.f32 %v217, %v244
        %v251 = vmul.f32 %v219, %v244
        %v252 = vmul.f32 %v220, %v244
        %v253 = vmul.f32 %v221, %v244
        %v254 = vmul.f32 %v223, %v244
        %v255 = vmul.f32 %v224, %v244
        %v256 = vmul.f32 %v225, %v244
        %v257 = vmul.f32 %v227, %v244
        %v258 = vmul.f32 %v228, %v244
        %v259 = vmul.f32 %v229, %v244
        %v260 = vmul.f32 %v231, %v244
        %v261 = vmul.f32 %v232, %v244
        %v262 = vmul.f32 %v233, %v244
        %v263 = vmul.f32 %v235, %v244
        %v264 = vmul.f32 %v236, %v244
        %v265 = vmul.f32 %v237, %v244
        %v266 = vmul.f32 %v239, %v244
        %v267 = vmul.f32 %v240, %v244
        %v268 = vmul.f32 %v241, %v244
        %v269 = vadd.f32 %v245, 0.0
        %v270 = vadd.f32 %v246, 0.0
        %v271 = vadd.f32 %v247, 0.0
        %v272 = vadd.f32 %v248, 0.0
        %v273 = vadd.f32 %v249, 0.0
        %v274 = vadd.f32 %v250, 0.0
        %v275 = vadd.f32 %v251, 0.0
        %v276 = vadd.f32 %v252, 0.0
        %v277 = vadd.f32 %v253, 0.0
        %v278 = vadd.f32 %v254, 0.0
        %v279 = vadd.f32 %v255, 0.0
        %v280 = vadd.f32 %v256, 0.0
        %v281 = vadd.f32 %v257, 0.0
        %v282 = vadd.f32 %v258, 0.0
        %v283 = vadd.f32 %v259, 0.0
        %v284 = vadd.f32 %v260, 0.0
        %v285 = vadd.f32 %v261, 0.0
        %v286 = vadd.f32 %v262, 0.0
        %v287 = vadd.f32 %v263, 0.0
        %v288 = vadd.f32 %v264, 0.0
        %v289 = vadd.f32 %v265, 0.0
        %v290 = vadd.f32 %v266, 0.0
        %v291 = vadd.f32 %v267, 0.0
        %v292 = vadd.f32 %v268, 0.0
        %v293 = vld [vmem:[%s1 + $0x1] sm:$0x1]
        %v294 = vperm.slane %v293, 0
        %v295 = vmul.f32 %v211, %v294
        %v296 = vmul.f32 %v212, %v294
        %v297 = vmul.f32 %v213, %v294
        %v298 = vmul.f32 %v215, %v294
        %v299 = vmul.f32 %v216, %v294
        %v300 = vmul.f32 %v217, %v294
        %v301 = vmul.f32 %v219, %v294
        %v302 = vmul.f32 %v220, %v294
        %v303 = vmul.f32 %v221, %v294
        %v304 = vmul.f32 %v223, %v294
        %v305 = vmul.f32 %v224, %v294
        %v306 = vmul.f32 %v225, %v294
        %v307 = vmul.f32 %v227, %v294
        %v308 = vmul.f32 %v228, %v294
        %v309 = vmul.f32 %v229, %v294
        %v310 = vmul.f32 %v231, %v294
        %v311 = vmul.f32 %v232, %v294
        %v312 = vmul.f32 %v233, %v294
        %v313 = vmul.f32 %v235, %v294
        %v314 = vmul.f32 %v236, %v294
        %v315 = vmul.f32 %v237, %v294
        %v316 = vmul.f32 %v239, %v294
        %v317 = vmul.f32 %v240, %v294
        %v318 = vmul.f32 %v241, %v294
        %vm343 = vcmask 1046528
        %v344 = vrot.slane %v295, 1
        %v345 = vrot.slane %v296, 1
        %v346 = vsel %vm343, %v344, %v345
        %v347 = vrot.slane %v297, 1
        %v348 = vsel %vm343, %v345, %v347
        %v349 = vrot.slane %v298, 1
        %v350 = vrot.slane %v299, 1
        %v351 = vsel %vm343, %v349, %v350
        %v352 = vrot.slane %v300, 1
        %v353 = vsel %vm343, %v350, %v352
        %v354 = vrot.slane %v301, 1
        %v355 = vrot.slane %v302, 1
        %v356 = vsel %vm343, %v354, %v355
        %v357 = vrot.slane %v303, 1
        %v358 = vsel %vm343, %v355, %v357
        %v359 = vrot.slane %v304, 1
        %v360 = vrot.slane %v305, 1
        %v361 = vsel %vm343, %v359, %v360
        %v362 = vrot.slane %v306, 1
        %v363 = vsel %vm343, %v360, %v362
        %v364 = vrot.slane %v307, 1
        %v365 = vrot.slane %v308, 1
        %v366 = vsel %vm343, %v364, %v365
        %v367 = vrot.slane %v309, 1
        %v368 = vsel %vm343, %v365, %v367
        %v369 = vrot.slane %v310, 1
        %v370 = vrot.slane %v311, 1
        %v371 = vsel %vm343, %v369, %v370
        %v372 = vrot.slane %v312, 1
        %v373 = vsel %vm343, %v370, %v372
        %v374 = vrot.slane %v313, 1
        %v375 = vrot.slane %v314, 1
        %v376 = vsel %vm343, %v374, %v375
        %v377 = vrot.slane %v315, 1
        %v378 = vsel %vm343, %v375, %v377
        %v379 = vrot.slane %v316, 1
        %v380 = vrot.slane %v317, 1
        %v381 = vsel %vm343, %v379, %v380
        %v382 = vrot.slane %v318, 1
        %v383 = vsel %vm343, %v380, %v382
        %v408 = vadd.f32 %v269, %v346
        %v409 = vadd.f32 %v270, %v348
        %v410 = vadd.f32 %v271, %v347
        %v411 = vadd.f32 %v272, %v351
        %v412 = vadd.f32 %v273, %v353
        %v413 = vadd.f32 %v274, %v352
        %v414 = vadd.f32 %v275, %v356
        %v415 = vadd.f32 %v276, %v358
        %v416 = vadd.f32 %v277, %v357
        %v417 = vadd.f32 %v278, %v361
        %v418 = vadd.f32 %v279, %v363
        %v419 = vadd.f32 %v280, %v362
        %v420 = vadd.f32 %v281, %v366
        %v421 = vadd.f32 %v282, %v368
        %v422 = vadd.f32 %v283, %v367
        %v423 = vadd.f32 %v284, %v371
        %v424 = vadd.f32 %v285, %v373
        %v425 = vadd.f32 %v286, %v372
        %v426 = vadd.f32 %v287, %v376
        %v427 = vadd.f32 %v288, %v378
        %v428 = vadd.f32 %v289, %v377
        %v429 = vadd.f32 %v290, %v381
        %v430 = vadd.f32 %v291, %v383
        %v431 = vadd.f32 %v292, %v382
        %v432 = vld [vmem:[%s1 + $0x2] sm:$0x1]
        %v433 = vperm.slane %v432, 0
        %v434 = vmul.f32 %v211, %v433
        %v435 = vmul.f32 %v212, %v433
        %v436 = vmul.f32 %v213, %v433
        %v437 = vmul.f32 %v215, %v433
        %v438 = vmul.f32 %v216, %v433
        %v439 = vmul.f32 %v217, %v433
        %v440 = vmul.f32 %v219, %v433
        %v441 = vmul.f32 %v220, %v433
        %v442 = vmul.f32 %v221, %v433
        %v443 = vmul.f32 %v223, %v433
        %v444 = vmul.f32 %v224, %v433
        %v445 = vmul.f32 %v225, %v433
        %v446 = vmul.f32 %v227, %v433
        %v447 = vmul.f32 %v228, %v433
        %v448 = vmul.f32 %v229, %v433
        %v449 = vmul.f32 %v231, %v433
        %v450 = vmul.f32 %v232, %v433
        %v451 = vmul.f32 %v233, %v433
        %v452 = vmul.f32 %v235, %v433
        %v453 = vmul.f32 %v236, %v433
        %v454 = vmul.f32 %v237, %v433
        %v455 = vmul.f32 %v239, %v433
        %v456 = vmul.f32 %v240, %v433
        %v457 = vmul.f32 %v241, %v433
        %vm482 = vcmask 1045504
        %v483 = vrot.slane %v434, 2
        %v484 = vrot.slane %v435, 2
        %v485 = vsel %vm482, %v483, %v484
        %v486 = vrot.slane %v436, 2
        %v487 = vsel %vm482, %v484, %v486
        %v488 = vrot.slane %v437, 2
        %v489 = vrot.slane %v438, 2
        %v490 = vsel %vm482, %v488, %v489
        %v491 = vrot.slane %v439, 2
        %v492 = vsel %vm482, %v489, %v491
        %v493 = vrot.slane %v440, 2
        %v494 = vrot.slane %v441, 2
        %v495 = vsel %vm482, %v493, %v494
        %v496 = vrot.slane %v442, 2
        %v497 = vsel %vm482, %v494, %v496
        %v498 = vrot.slane %v443, 2
        %v499 = vrot.slane %v444, 2
        %v500 = vsel %vm482, %v498, %v499
        %v501 = vrot.slane %v445, 2
        %v502 = vsel %vm482, %v499, %v501
        %v503 = vrot.slane %v446, 2
        %v504 = vrot.slane %v447, 2
        %v505 = vsel %vm482, %v503, %v504
        %v506 = vrot.slane %v448, 2
        %v507 = vsel %vm482, %v504, %v506
        %v508 = vrot.slane %v449, 2
        %v509 = vrot.slane %v450, 2
        %v510 = vsel %vm482, %v508, %v509
        %v511 = vrot.slane %v451, 2
        %v512 = vsel %vm482, %v509, %v511
        %v513 = vrot.slane %v452, 2
        %v514 = vrot.slane %v453, 2
        %v515 = vsel %vm482, %v513, %v514
        %v516 = vrot.slane %v454, 2
        %v517 = vsel %vm482, %v514, %v516
        %v518 = vrot.slane %v455, 2
        %v519 = vrot.slane %v456, 2
        %v520 = vsel %vm482, %v518, %v519
        %v521 = vrot.slane %v457, 2
        %v522 = vsel %vm482, %v519, %v521
        %v547 = vadd.f32 %v408, %v485
        %v548 = vadd.f32 %v409, %v487
        %v549 = vadd.f32 %v410, %v486
        %v550 = vadd.f32 %v411, %v490
        %v551 = vadd.f32 %v412, %v492
        %v552 = vadd.f32 %v413, %v491
        %v553 = vadd.f32 %v414, %v495
        %v554 = vadd.f32 %v415, %v497
        %v555 = vadd.f32 %v416, %v496
        %v556 = vadd.f32 %v417, %v500
        %v557 = vadd.f32 %v418, %v502
        %v558 = vadd.f32 %v419, %v501
        %v559 = vadd.f32 %v420, %v505
        %v560 = vadd.f32 %v421, %v507
        %v561 = vadd.f32 %v422, %v506
        %v562 = vadd.f32 %v423, %v510
        %v563 = vadd.f32 %v424, %v512
        %v564 = vadd.f32 %v425, %v511
        %v565 = vadd.f32 %v426, %v515
        %v566 = vadd.f32 %v427, %v517
        %v567 = vadd.f32 %v428, %v516
        %v568 = vadd.f32 %v429, %v520
        %v569 = vadd.f32 %v430, %v522
        %v570 = vadd.f32 %v431, %v521
        %v571 = vld [vmem:[%s1 + $0x3] sm:$0x1]
        %v572 = vperm.slane %v571, 0
        %v573 = vmul.f32 %v212, %v572
        %v574 = vmul.f32 %v213, %v572
        %v575 = vmul.f32 %v216, %v572
        %v576 = vmul.f32 %v217, %v572
        %v577 = vmul.f32 %v220, %v572
        %v578 = vmul.f32 %v221, %v572
        %v579 = vmul.f32 %v224, %v572
        %v580 = vmul.f32 %v225, %v572
        %v581 = vmul.f32 %v228, %v572
        %v582 = vmul.f32 %v229, %v572
        %v583 = vmul.f32 %v232, %v572
        %v584 = vmul.f32 %v233, %v572
        %v585 = vmul.f32 %v236, %v572
        %v586 = vmul.f32 %v237, %v572
        %v587 = vmul.f32 %v240, %v572
        %v588 = vmul.f32 %v241, %v572
        %vm605 = vcmask 1044480
        %v606 = vrot.slane %v573, 3
        %v607 = vrot.slane %v574, 3
        %v608 = vsel %vm605, %v606, %v607
        %v609 = vrot.slane %v575, 3
        %v610 = vrot.slane %v576, 3
        %v611 = vsel %vm605, %v609, %v610
        %v612 = vrot.slane %v577, 3
        %v613 = vrot.slane %v578, 3
        %v614 = vsel %vm605, %v612, %v613
        %v615 = vrot.slane %v579, 3
        %v616 = vrot.slane %v580, 3
        %v617 = vsel %vm605, %v615, %v616
        %v618 = vrot.slane %v581, 3
        %v619 = vrot.slane %v582, 3
        %v620 = vsel %vm605, %v618, %v619
        %v621 = vrot.slane %v583, 3
        %v622 = vrot.slane %v584, 3
        %v623 = vsel %vm605, %v621, %v622
        %v624 = vrot.slane %v585, 3
        %v625 = vrot.slane %v586, 3
        %v626 = vsel %vm605, %v624, %v625
        %v627 = vrot.slane %v587, 3
        %v628 = vrot.slane %v588, 3
        %v629 = vsel %vm605, %v627, %v628
        %v654 = vadd.f32 %v547, %v606
        %v655 = vadd.f32 %v548, %v608
        %v656 = vadd.f32 %v549, %v607
        %v657 = vadd.f32 %v550, %v609
        %v658 = vadd.f32 %v551, %v611
        %v659 = vadd.f32 %v552, %v610
        %v660 = vadd.f32 %v553, %v612
        %v661 = vadd.f32 %v554, %v614
        %v662 = vadd.f32 %v555, %v613
        %v663 = vadd.f32 %v556, %v615
        %v664 = vadd.f32 %v557, %v617
        %v665 = vadd.f32 %v558, %v616
        %v666 = vadd.f32 %v559, %v618
        %v667 = vadd.f32 %v560, %v620
        %v668 = vadd.f32 %v561, %v619
        %v669 = vadd.f32 %v562, %v621
        %v670 = vadd.f32 %v563, %v623
        %v671 = vadd.f32 %v564, %v622
        %v672 = vadd.f32 %v565, %v624
        %v673 = vadd.f32 %v566, %v626
        %v674 = vadd.f32 %v567, %v625
        %v675 = vadd.f32 %v568, %v627
        %v676 = vadd.f32 %v569, %v629
        %v677 = vadd.f32 %v570, %v628
        %v678 = vld [vmem:[%s1 + $0x4] sm:$0x1]
        %v679 = vperm.slane %v678, 0
        %v680 = vmul.f32 %v212, %v679
        %v681 = vmul.f32 %v213, %v679
        %v682 = vmul.f32 %v214, %v679
        %v683 = vmul.f32 %v216, %v679
        %v684 = vmul.f32 %v217, %v679
        %v685 = vmul.f32 %v218, %v679
        %v686 = vmul.f32 %v220, %v679
        %v687 = vmul.f32 %v221, %v679
        %v688 = vmul.f32 %v222, %v679
        %v689 = vmul.f32 %v224, %v679
        %v690 = vmul.f32 %v225, %v679
        %v691 = vmul.f32 %v226, %v679
        %v692 = vmul.f32 %v228, %v679
        %v693 = vmul.f32 %v229, %v679
        %v694 = vmul.f32 %v230, %v679
        %v695 = vmul.f32 %v232, %v679
        %v696 = vmul.f32 %v233, %v679
        %v697 = vmul.f32 %v234, %v679
        %v698 = vmul.f32 %v236, %v679
        %v699 = vmul.f32 %v237, %v679
        %v700 = vmul.f32 %v238, %v679
        %v701 = vmul.f32 %v240, %v679
        %v702 = vmul.f32 %v241, %v679
        %v703 = vmul.f32 %v242, %v679
        %vm728 = vcmask 1043456
        %v729 = vrot.slane %v680, 4
        %v730 = vrot.slane %v681, 4
        %v731 = vsel %vm728, %v729, %v730
        %v732 = vrot.slane %v682, 4
        %v733 = vsel %vm728, %v730, %v732
        %v734 = vrot.slane %v683, 4
        %v735 = vrot.slane %v684, 4
        %v736 = vsel %vm728, %v734, %v735
        %v737 = vrot.slane %v685, 4
        %v738 = vsel %vm728, %v735, %v737
        %v739 = vrot.slane %v686, 4
        %v740 = vrot.slane %v687, 4
        %v741 = vsel %vm728, %v739, %v740
        %v742 = vrot.slane %v688, 4
        %v743 = vsel %vm728, %v740, %v742
        %v744 = vrot.slane %v689, 4
        %v745 = vrot.slane %v690, 4
        %v746 = vsel %vm728, %v744, %v745
        %v747 = vrot.slane %v691, 4
        %v748 = vsel %vm728, %v745, %v747
        %v749 = vrot.slane %v692, 4
        %v750 = vrot.slane %v693, 4
        %v751 = vsel %vm728, %v749, %v750
        %v752 = vrot.slane %v694, 4
        %v753 = vsel %vm728, %v750, %v752
        %v754 = vrot.slane %v695, 4
        %v755 = vrot.slane %v696, 4
        %v756 = vsel %vm728, %v754, %v755
        %v757 = vrot.slane %v697, 4
        %v758 = vsel %vm728, %v755, %v757
        %v759 = vrot.slane %v698, 4
        %v760 = vrot.slane %v699, 4
        %v761 = vsel %vm728, %v759, %v760
        %v762 = vrot.slane %v700, 4
        %v763 = vsel %vm728, %v760, %v762
        %v764 = vrot.slane %v701, 4
        %v765 = vrot.slane %v702, 4
        %v766 = vsel %vm728, %v764, %v765
        %v767 = vrot.slane %v703, 4
        %v768 = vsel %vm728, %v765, %v767
        %v793 = vadd.f32 %v654, %v729
        %v794 = vadd.f32 %v655, %v731
        %v795 = vadd.f32 %v656, %v733
        %v796 = vadd.f32 %v657, %v734
        %v797 = vadd.f32 %v658, %v736
        %v798 = vadd.f32 %v659, %v738
        %v799 = vadd.f32 %v660, %v739
        %v800 = vadd.f32 %v661, %v741
        %v801 = vadd.f32 %v662, %v743
        %v802 = vadd.f32 %v663, %v744
        %v803 = vadd.f32 %v664, %v746
        %v804 = vadd.f32 %v665, %v748
        %v805 = vadd.f32 %v666, %v749
        %v806 = vadd.f32 %v667, %v751
        %v807 = vadd.f32 %v668, %v753
        %v808 = vadd.f32 %v669, %v754
        %v809 = vadd.f32 %v670, %v756
        %v810 = vadd.f32 %v671, %v758
        %v811 = vadd.f32 %v672, %v759
        %v812 = vadd.f32 %v673, %v761
        %v813 = vadd.f32 %v674, %v763
        %v814 = vadd.f32 %v675, %v764
        %v815 = vadd.f32 %v676, %v766
        %v816 = vadd.f32 %v677, %v768
        %v817 = vld [vmem:[%s1 + $0x5] sm:$0x1]
        %v818 = vperm.slane %v817, 0
        %v819 = vmul.f32 %v212, %v818
        %v820 = vmul.f32 %v213, %v818
        %v821 = vmul.f32 %v214, %v818
        %v822 = vmul.f32 %v216, %v818
        %v823 = vmul.f32 %v217, %v818
        %v824 = vmul.f32 %v218, %v818
        %v825 = vmul.f32 %v220, %v818
        %v826 = vmul.f32 %v221, %v818
        %v827 = vmul.f32 %v222, %v818
        %v828 = vmul.f32 %v224, %v818
        %v829 = vmul.f32 %v225, %v818
        %v830 = vmul.f32 %v226, %v818
        %v831 = vmul.f32 %v228, %v818
        %v832 = vmul.f32 %v229, %v818
        %v833 = vmul.f32 %v230, %v818
        %v834 = vmul.f32 %v232, %v818
        %v835 = vmul.f32 %v233, %v818
        %v836 = vmul.f32 %v234, %v818
        %v837 = vmul.f32 %v236, %v818
        %v838 = vmul.f32 %v237, %v818
        %v839 = vmul.f32 %v238, %v818
        %v840 = vmul.f32 %v240, %v818
        %v841 = vmul.f32 %v241, %v818
        %v842 = vmul.f32 %v242, %v818
        %vm867 = vcmask 1042432
        %v868 = vrot.slane %v819, 5
        %v869 = vrot.slane %v820, 5
        %v870 = vsel %vm867, %v868, %v869
        %v871 = vrot.slane %v821, 5
        %v872 = vsel %vm867, %v869, %v871
        %v873 = vrot.slane %v822, 5
        %v874 = vrot.slane %v823, 5
        %v875 = vsel %vm867, %v873, %v874
        %v876 = vrot.slane %v824, 5
        %v877 = vsel %vm867, %v874, %v876
        %v878 = vrot.slane %v825, 5
        %v879 = vrot.slane %v826, 5
        %v880 = vsel %vm867, %v878, %v879
        %v881 = vrot.slane %v827, 5
        %v882 = vsel %vm867, %v879, %v881
        %v883 = vrot.slane %v828, 5
        %v884 = vrot.slane %v829, 5
        %v885 = vsel %vm867, %v883, %v884
        %v886 = vrot.slane %v830, 5
        %v887 = vsel %vm867, %v884, %v886
        %v888 = vrot.slane %v831, 5
        %v889 = vrot.slane %v832, 5
        %v890 = vsel %vm867, %v888, %v889
        %v891 = vrot.slane %v833, 5
        %v892 = vsel %vm867, %v889, %v891
        %v893 = vrot.slane %v834, 5
        %v894 = vrot.slane %v835, 5
        %v895 = vsel %vm867, %v893, %v894
        %v896 = vrot.slane %v836, 5
        %v897 = vsel %vm867, %v894, %v896
        %v898 = vrot.slane %v837, 5
        %v899 = vrot.slane %v838, 5
        %v900 = vsel %vm867, %v898, %v899
        %v901 = vrot.slane %v839, 5
        %v902 = vsel %vm867, %v899, %v901
        %v903 = vrot.slane %v840, 5
        %v904 = vrot.slane %v841, 5
        %v905 = vsel %vm867, %v903, %v904
        %v906 = vrot.slane %v842, 5
        %v907 = vsel %vm867, %v904, %v906
        %v932 = vadd.f32 %v793, %v868
        %v933 = vadd.f32 %v794, %v870
        %v934 = vadd.f32 %v795, %v872
        %v935 = vadd.f32 %v796, %v873
        %v936 = vadd.f32 %v797, %v875
        %v937 = vadd.f32 %v798, %v877
        %v938 = vadd.f32 %v799, %v878
        %v939 = vadd.f32 %v800, %v880
        %v940 = vadd.f32 %v801, %v882
        %v941 = vadd.f32 %v802, %v883
        %v942 = vadd.f32 %v803, %v885
        %v943 = vadd.f32 %v804, %v887
        %v944 = vadd.f32 %v805, %v888
        %v945 = vadd.f32 %v806, %v890
        %v946 = vadd.f32 %v807, %v892
        %v947 = vadd.f32 %v808, %v893
        %v948 = vadd.f32 %v809, %v895
        %v949 = vadd.f32 %v810, %v897
        %v950 = vadd.f32 %v811, %v898
        %v951 = vadd.f32 %v812, %v900
        %v952 = vadd.f32 %v813, %v902
        %v953 = vadd.f32 %v814, %v903
        %v954 = vadd.f32 %v815, %v905
        %v955 = vadd.f32 %v816, %v907
        %v956 = vld [vmem:[%s1 + $0x6] sm:$0x1]
        %v957 = vperm.slane %v956, 0
        %v958 = vmul.f32 %v212, %v957
        %v959 = vmul.f32 %v213, %v957
        %v960 = vmul.f32 %v214, %v957
        %v961 = vmul.f32 %v216, %v957
        %v962 = vmul.f32 %v217, %v957
        %v963 = vmul.f32 %v218, %v957
        %v964 = vmul.f32 %v220, %v957
        %v965 = vmul.f32 %v221, %v957
        %v966 = vmul.f32 %v222, %v957
        %v967 = vmul.f32 %v224, %v957
        %v968 = vmul.f32 %v225, %v957
        %v969 = vmul.f32 %v226, %v957
        %v970 = vmul.f32 %v228, %v957
        %v971 = vmul.f32 %v229, %v957
        %v972 = vmul.f32 %v230, %v957
        %v973 = vmul.f32 %v232, %v957
        %v974 = vmul.f32 %v233, %v957
        %v975 = vmul.f32 %v234, %v957
        %v976 = vmul.f32 %v236, %v957
        %v977 = vmul.f32 %v237, %v957
        %v978 = vmul.f32 %v238, %v957
        %v979 = vmul.f32 %v240, %v957
        %v980 = vmul.f32 %v241, %v957
        %v981 = vmul.f32 %v242, %v957
        %vm1006 = vcmask 1041408
        %v1007 = vrot.slane %v958, 6
        %v1008 = vrot.slane %v959, 6
        %v1009 = vsel %vm1006, %v1007, %v1008
        %v1010 = vrot.slane %v960, 6
        %v1011 = vsel %vm1006, %v1008, %v1010
        %v1012 = vrot.slane %v961, 6
        %v1013 = vrot.slane %v962, 6
        %v1014 = vsel %vm1006, %v1012, %v1013
        %v1015 = vrot.slane %v963, 6
        %v1016 = vsel %vm1006, %v1013, %v1015
        %v1017 = vrot.slane %v964, 6
        %v1018 = vrot.slane %v965, 6
        %v1019 = vsel %vm1006, %v1017, %v1018
        %v1020 = vrot.slane %v966, 6
        %v1021 = vsel %vm1006, %v1018, %v1020
        %v1022 = vrot.slane %v967, 6
        %v1023 = vrot.slane %v968, 6
        %v1024 = vsel %vm1006, %v1022, %v1023
        %v1025 = vrot.slane %v969, 6
        %v1026 = vsel %vm1006, %v1023, %v1025
        %v1027 = vrot.slane %v970, 6
        %v1028 = vrot.slane %v971, 6
        %v1029 = vsel %vm1006, %v1027, %v1028
        %v1030 = vrot.slane %v972, 6
        %v1031 = vsel %vm1006, %v1028, %v1030
        %v1032 = vrot.slane %v973, 6
        %v1033 = vrot.slane %v974, 6
        %v1034 = vsel %vm1006, %v1032, %v1033
        %v1035 = vrot.slane %v975, 6
        %v1036 = vsel %vm1006, %v1033, %v1035
        %v1037 = vrot.slane %v976, 6
        %v1038 = vrot.slane %v977, 6
        %v1039 = vsel %vm1006, %v1037, %v1038
        %v1040 = vrot.slane %v978, 6
        %v1041 = vsel %vm1006, %v1038, %v1040
        %v1042 = vrot.slane %v979, 6
        %v1043 = vrot.slane %v980, 6
        %v1044 = vsel %vm1006, %v1042, %v1043
        %v1045 = vrot.slane %v981, 6
        %v1046 = vsel %vm1006, %v1043, %v1045
        %v1071 = vadd.f32 %v932, %v1007
        %v1072 = vadd.f32 %v933, %v1009
        %v1073 = vadd.f32 %v934, %v1011
        %v1074 = vadd.f32 %v935, %v1012
        %v1075 = vadd.f32 %v936, %v1014
        %v1076 = vadd.f32 %v937, %v1016
        %v1077 = vadd.f32 %v938, %v1017
        %v1078 = vadd.f32 %v939, %v1019
        %v1079 = vadd.f32 %v940, %v1021
        %v1080 = vadd.f32 %v941, %v1022
        %v1081 = vadd.f32 %v942, %v1024
        %v1082 = vadd.f32 %v943, %v1026
        %v1083 = vadd.f32 %v944, %v1027
        %v1084 = vadd.f32 %v945, %v1029
        %v1085 = vadd.f32 %v946, %v1031
        %v1086 = vadd.f32 %v947, %v1032
        %v1087 = vadd.f32 %v948, %v1034
        %v1088 = vadd.f32 %v949, %v1036
        %v1089 = vadd.f32 %v950, %v1037
        %v1090 = vadd.f32 %v951, %v1039
        %v1091 = vadd.f32 %v952, %v1041
        %v1092 = vadd.f32 %v953, %v1042
        %v1093 = vadd.f32 %v954, %v1044
        %v1094 = vadd.f32 %v955, %v1046
        %s1095 = sadd.s32 %s207, 1
        %s1096 = smul.u32 %s1095, 32
        %s1097 = sadd.s32 %s1096, %s59
        %s1098 = scalar_lea.vmem [#allocation2], %s1097
        %v1099 = vld [vmem:[%s1098] sm:$0xff]
        %v1100 = vld [vmem:[%s1098 + $0x8] sm:$0xff]
        %v1101 = vld [vmem:[%s1098 + $0x10] sm:$0xff]
        %v1102 = vld [vmem:[%s1098 + $0x18] sm:$0x7]
        %v1103 = vld [vmem:[%s1098 + $0x20] sm:$0xff]
        %v1104 = vld [vmem:[%s1098 + $0x28] sm:$0xff]
        %v1105 = vld [vmem:[%s1098 + $0x30] sm:$0xff]
        %v1106 = vld [vmem:[%s1098 + $0x38] sm:$0x7]
        %v1107 = vld [vmem:[%s1098 + $0x40] sm:$0xff]
        %v1108 = vld [vmem:[%s1098 + $0x48] sm:$0xff]
        %v1109 = vld [vmem:[%s1098 + $0x50] sm:$0xff]
        %v1110 = vld [vmem:[%s1098 + $0x58] sm:$0x7]
        %v1111 = vld [vmem:[%s1098 + $0x60] sm:$0xff]
        %v1112 = vld [vmem:[%s1098 + $0x68] sm:$0xff]
        %v1113 = vld [vmem:[%s1098 + $0x70] sm:$0xff]
        %v1114 = vld [vmem:[%s1098 + $0x78] sm:$0x7]
        %v1115 = vld [vmem:[%s1098 + $0x80] sm:$0xff]
        %v1116 = vld [vmem:[%s1098 + $0x88] sm:$0xff]
        %v1117 = vld [vmem:[%s1098 + $0x90] sm:$0xff]
        %v1118 = vld [vmem:[%s1098 + $0x98] sm:$0x7]
        %v1119 = vld [vmem:[%s1098 + $0xa0] sm:$0xff]
        %v1120 = vld [vmem:[%s1098 + $0xa8] sm:$0xff]
        %v1121 = vld [vmem:[%s1098 + $0xb0] sm:$0xff]
        %v1122 = vld [vmem:[%s1098 + $0xb8] sm:$0x7]
        %v1123 = vld [vmem:[%s1098 + $0xc0] sm:$0xff]
        %v1124 = vld [vmem:[%s1098 + $0xc8] sm:$0xff]
        %v1125 = vld [vmem:[%s1098 + $0xd0] sm:$0xff]
        %v1126 = vld [vmem:[%s1098 + $0xd8] sm:$0x7]
        %v1127 = vld [vmem:[%s1098 + $0xe0] sm:$0xff]
        %v1128 = vld [vmem:[%s1098 + $0xe8] sm:$0xff]
        %v1129 = vld [vmem:[%s1098 + $0xf0] sm:$0xff]
        %v1130 = vld [vmem:[%s1098 + $0xf8] sm:$0x7]
        %v1131 = vld [vmem:[%s1 + $0x7] sm:$0x1]
        %v1132 = vperm.slane %v1131, 0
        %v1133 = vmul.f32 %v1099, %v1132
        %v1134 = vmul.f32 %v1100, %v1132
        %v1135 = vmul.f32 %v1101, %v1132
        %v1136 = vmul.f32 %v1103, %v1132
        %v1137 = vmul.f32 %v1104, %v1132
        %v1138 = vmul.f32 %v1105, %v1132
        %v1139 = vmul.f32 %v1107, %v1132
        %v1140 = vmul.f32 %v1108, %v1132
        %v1141 = vmul.f32 %v1109, %v1132
        %v1142 = vmul.f32 %v1111, %v1132
        %v1143 = vmul.f32 %v1112, %v1132
        %v1144 = vmul.f32 %v1113, %v1132
        %v1145 = vmul.f32 %v1115, %v1132
        %v1146 = vmul.f32 %v1116, %v1132
        %v1147 = vmul.f32 %v1117, %v1132
        %v1148 = vmul.f32 %v1119, %v1132
        %v1149 = vmul.f32 %v1120, %v1132
        %v1150 = vmul.f32 %v1121, %v1132
        %v1151 = vmul.f32 %v1123, %v1132
        %v1152 = vmul.f32 %v1124, %v1132
        %v1153 = vmul.f32 %v1125, %v1132
        %v1154 = vmul.f32 %v1127, %v1132
        %v1155 = vmul.f32 %v1128, %v1132
        %v1156 = vmul.f32 %v1129, %v1132
        %v1157 = vadd.f32 %v1071, %v1133
        %v1158 = vadd.f32 %v1072, %v1134
        %v1159 = vadd.f32 %v1073, %v1135
        %v1160 = vadd.f32 %v1074, %v1136
        %v1161 = vadd.f32 %v1075, %v1137
        %v1162 = vadd.f32 %v1076, %v1138
        %v1163 = vadd.f32 %v1077, %v1139
        %v1164 = vadd.f32 %v1078, %v1140
        %v1165 = vadd.f32 %v1079, %v1141
        %v1166 = vadd.f32 %v1080, %v1142
        %v1167 = vadd.f32 %v1081, %v1143
        %v1168 = vadd.f32 %v1082, %v1144
        %v1169 = vadd.f32 %v1083, %v1145
        %v1170 = vadd.f32 %v1084, %v1146
        %v1171 = vadd.f32 %v1085, %v1147
        %v1172 = vadd.f32 %v1086, %v1148
        %v1173 = vadd.f32 %v1087, %v1149
        %v1174 = vadd.f32 %v1088, %v1150
        %v1175 = vadd.f32 %v1089, %v1151
        %v1176 = vadd.f32 %v1090, %v1152
        %v1177 = vadd.f32 %v1091, %v1153
        %v1178 = vadd.f32 %v1092, %v1154
        %v1179 = vadd.f32 %v1093, %v1155
        %v1180 = vadd.f32 %v1094, %v1156
        %v1181 = vld [vmem:[%s1 + $0x8] sm:$0x1]
        %v1182 = vperm.slane %v1181, 0
        %v1183 = vmul.f32 %v1099, %v1182
        %v1184 = vmul.f32 %v1100, %v1182
        %v1185 = vmul.f32 %v1101, %v1182
        %v1186 = vmul.f32 %v1103, %v1182
        %v1187 = vmul.f32 %v1104, %v1182
        %v1188 = vmul.f32 %v1105, %v1182
        %v1189 = vmul.f32 %v1107, %v1182
        %v1190 = vmul.f32 %v1108, %v1182
        %v1191 = vmul.f32 %v1109, %v1182
        %v1192 = vmul.f32 %v1111, %v1182
        %v1193 = vmul.f32 %v1112, %v1182
        %v1194 = vmul.f32 %v1113, %v1182
        %v1195 = vmul.f32 %v1115, %v1182
        %v1196 = vmul.f32 %v1116, %v1182
        %v1197 = vmul.f32 %v1117, %v1182
        %v1198 = vmul.f32 %v1119, %v1182
        %v1199 = vmul.f32 %v1120, %v1182
        %v1200 = vmul.f32 %v1121, %v1182
        %v1201 = vmul.f32 %v1123, %v1182
        %v1202 = vmul.f32 %v1124, %v1182
        %v1203 = vmul.f32 %v1125, %v1182
        %v1204 = vmul.f32 %v1127, %v1182
        %v1205 = vmul.f32 %v1128, %v1182
        %v1206 = vmul.f32 %v1129, %v1182
        %v1231 = vrot.slane %v1183, 1
        %v1232 = vrot.slane %v1184, 1
        %v1233 = vsel %vm343, %v1231, %v1232
        %v1234 = vrot.slane %v1185, 1
        %v1235 = vsel %vm343, %v1232, %v1234
        %v1236 = vrot.slane %v1186, 1
        %v1237 = vrot.slane %v1187, 1
        %v1238 = vsel %vm343, %v1236, %v1237
        %v1239 = vrot.slane %v1188, 1
        %v1240 = vsel %vm343, %v1237, %v1239
        %v1241 = vrot.slane %v1189, 1
        %v1242 = vrot.slane %v1190, 1
        %v1243 = vsel %vm343, %v1241, %v1242
        %v1244 = vrot.slane %v1191, 1
        %v1245 = vsel %vm343, %v1242, %v1244
        %v1246 = vrot.slane %v1192, 1
        %v1247 = vrot.slane %v1193, 1
        %v1248 = vsel %vm343, %v1246, %v1247
        %v1249 = vrot.slane %v1194, 1
        %v1250 = vsel %vm343, %v1247, %v1249
        %v1251 = vrot.slane %v1195, 1
        %v1252 = vrot.slane %v1196, 1
        %v1253 = vsel %vm343, %v1251, %v1252
        %v1254 = vrot.slane %v1197, 1
        %v1255 = vsel %vm343, %v1252, %v1254
        %v1256 = vrot.slane %v1198, 1
        %v1257 = vrot.slane %v1199, 1
        %v1258 = vsel %vm343, %v1256, %v1257
        %v1259 = vrot.slane %v1200, 1
        %v1260 = vsel %vm343, %v1257, %v1259
        %v1261 = vrot.slane %v1201, 1
        %v1262 = vrot.slane %v1202, 1
        %v1263 = vsel %vm343, %v1261, %v1262
        %v1264 = vrot.slane %v1203, 1
        %v1265 = vsel %vm343, %v1262, %v1264
        %v1266 = vrot.slane %v1204, 1
        %v1267 = vrot.slane %v1205, 1
        %v1268 = vsel %vm343, %v1266, %v1267
        %v1269 = vrot.slane %v1206, 1
        %v1270 = vsel %vm343, %v1267, %v1269
        %v1295 = vadd.f32 %v1157, %v1233
        %v1296 = vadd.f32 %v1158, %v1235
        %v1297 = vadd.f32 %v1159, %v1234
        %v1298 = vadd.f32 %v1160, %v1238
        %v1299 = vadd.f32 %v1161, %v1240
        %v1300 = vadd.f32 %v1162, %v1239
        %v1301 = vadd.f32 %v1163, %v1243
        %v1302 = vadd.f32 %v1164, %v1245
        %v1303 = vadd.f32 %v1165, %v1244
        %v1304 = vadd.f32 %v1166, %v1248
        %v1305 = vadd.f32 %v1167, %v1250
        %v1306 = vadd.f32 %v1168, %v1249
        %v1307 = vadd.f32 %v1169, %v1253
        %v1308 = vadd.f32 %v1170, %v1255
        %v1309 = vadd.f32 %v1171, %v1254
        %v1310 = vadd.f32 %v1172, %v1258
        %v1311 = vadd.f32 %v1173, %v1260
        %v1312 = vadd.f32 %v1174, %v1259
        %v1313 = vadd.f32 %v1175, %v1263
        %v1314 = vadd.f32 %v1176, %v1265
        %v1315 = vadd.f32 %v1177, %v1264
        %v1316 = vadd.f32 %v1178, %v1268
        %v1317 = vadd.f32 %v1179, %v1270
        %v1318 = vadd.f32 %v1180, %v1269
        %v1319 = vld [vmem:[%s1 + $0x9] sm:$0x1]
        %v1320 = vperm.slane %v1319, 0
        %v1321 = vmul.f32 %v1099, %v1320
        %v1322 = vmul.f32 %v1100, %v1320
        %v1323 = vmul.f32 %v1101, %v1320
        %v1324 = vmul.f32 %v1103, %v1320
        %v1325 = vmul.f32 %v1104, %v1320
        %v1326 = vmul.f32 %v1105, %v1320
        %v1327 = vmul.f32 %v1107, %v1320
        %v1328 = vmul.f32 %v1108, %v1320
        %v1329 = vmul.f32 %v1109, %v1320
        %v1330 = vmul.f32 %v1111, %v1320
        %v1331 = vmul.f32 %v1112, %v1320
        %v1332 = vmul.f32 %v1113, %v1320
        %v1333 = vmul.f32 %v1115, %v1320
        %v1334 = vmul.f32 %v1116, %v1320
        %v1335 = vmul.f32 %v1117, %v1320
        %v1336 = vmul.f32 %v1119, %v1320
        %v1337 = vmul.f32 %v1120, %v1320
        %v1338 = vmul.f32 %v1121, %v1320
        %v1339 = vmul.f32 %v1123, %v1320
        %v1340 = vmul.f32 %v1124, %v1320
        %v1341 = vmul.f32 %v1125, %v1320
        %v1342 = vmul.f32 %v1127, %v1320
        %v1343 = vmul.f32 %v1128, %v1320
        %v1344 = vmul.f32 %v1129, %v1320
        %v1369 = vrot.slane %v1321, 2
        %v1370 = vrot.slane %v1322, 2
        %v1371 = vsel %vm482, %v1369, %v1370
        %v1372 = vrot.slane %v1323, 2
        %v1373 = vsel %vm482, %v1370, %v1372
        %v1374 = vrot.slane %v1324, 2
        %v1375 = vrot.slane %v1325, 2
        %v1376 = vsel %vm482, %v1374, %v1375
        %v1377 = vrot.slane %v1326, 2
        %v1378 = vsel %vm482, %v1375, %v1377
        %v1379 = vrot.slane %v1327, 2
        %v1380 = vrot.slane %v1328, 2
        %v1381 = vsel %vm482, %v1379, %v1380
        %v1382 = vrot.slane %v1329, 2
        %v1383 = vsel %vm482, %v1380, %v1382
        %v1384 = vrot.slane %v1330, 2
        %v1385 = vrot.slane %v1331, 2
        %v1386 = vsel %vm482, %v1384, %v1385
        %v1387 = vrot.slane %v1332, 2
        %v1388 = vsel %vm482, %v1385, %v1387
        %v1389 = vrot.slane %v1333, 2
        %v1390 = vrot.slane %v1334, 2
        %v1391 = vsel %vm482, %v1389, %v1390
        %v1392 = vrot.slane %v1335, 2
        %v1393 = vsel %vm482, %v1390, %v1392
        %v1394 = vrot.slane %v1336, 2
        %v1395 = vrot.slane %v1337, 2
        %v1396 = vsel %vm482, %v1394, %v1395
        %v1397 = vrot.slane %v1338, 2
        %v1398 = vsel %vm482, %v1395, %v1397
        %v1399 = vrot.slane %v1339, 2
        %v1400 = vrot.slane %v1340, 2
        %v1401 = vsel %vm482, %v1399, %v1400
        %v1402 = vrot.slane %v1341, 2
        %v1403 = vsel %vm482, %v1400, %v1402
        %v1404 = vrot.slane %v1342, 2
        %v1405 = vrot.slane %v1343, 2
        %v1406 = vsel %vm482, %v1404, %v1405
        %v1407 = vrot.slane %v1344, 2
        %v1408 = vsel %vm482, %v1405, %v1407
        %v1433 = vadd.f32 %v1295, %v1371
        %v1434 = vadd.f32 %v1296, %v1373
        %v1435 = vadd.f32 %v1297, %v1372
        %v1436 = vadd.f32 %v1298, %v1376
        %v1437 = vadd.f32 %v1299, %v1378
        %v1438 = vadd.f32 %v1300, %v1377
        %v1439 = vadd.f32 %v1301, %v1381
        %v1440 = vadd.f32 %v1302, %v1383
        %v1441 = vadd.f32 %v1303, %v1382
        %v1442 = vadd.f32 %v1304, %v1386
        %v1443 = vadd.f32 %v1305, %v1388
        %v1444 = vadd.f32 %v1306, %v1387
        %v1445 = vadd.f32 %v1307, %v1391
        %v1446 = vadd.f32 %v1308, %v1393
        %v1447 = vadd.f32 %v1309, %v1392
        %v1448 = vadd.f32 %v1310, %v1396
        %v1449 = vadd.f32 %v1311, %v1398
        %v1450 = vadd.f32 %v1312, %v1397
        %v1451 = vadd.f32 %v1313, %v1401
        %v1452 = vadd.f32 %v1314, %v1403
        %v1453 = vadd.f32 %v1315, %v1402
        %v1454 = vadd.f32 %v1316, %v1406
        %v1455 = vadd.f32 %v1317, %v1408
        %v1456 = vadd.f32 %v1318, %v1407
        %v1457 = vld [vmem:[%s1 + $0xa] sm:$0x1]
        %v1458 = vperm.slane %v1457, 0
        %v1459 = vmul.f32 %v1100, %v1458
        %v1460 = vmul.f32 %v1101, %v1458
        %v1461 = vmul.f32 %v1104, %v1458
        %v1462 = vmul.f32 %v1105, %v1458
        %v1463 = vmul.f32 %v1108, %v1458
        %v1464 = vmul.f32 %v1109, %v1458
        %v1465 = vmul.f32 %v1112, %v1458
        %v1466 = vmul.f32 %v1113, %v1458
        %v1467 = vmul.f32 %v1116, %v1458
        %v1468 = vmul.f32 %v1117, %v1458
        %v1469 = vmul.f32 %v1120, %v1458
        %v1470 = vmul.f32 %v1121, %v1458
        %v1471 = vmul.f32 %v1124, %v1458
        %v1472 = vmul.f32 %v1125, %v1458
        %v1473 = vmul.f32 %v1128, %v1458
        %v1474 = vmul.f32 %v1129, %v1458
        %v1491 = vrot.slane %v1459, 3
        %v1492 = vrot.slane %v1460, 3
        %v1493 = vsel %vm605, %v1491, %v1492
        %v1494 = vrot.slane %v1461, 3
        %v1495 = vrot.slane %v1462, 3
        %v1496 = vsel %vm605, %v1494, %v1495
        %v1497 = vrot.slane %v1463, 3
        %v1498 = vrot.slane %v1464, 3
        %v1499 = vsel %vm605, %v1497, %v1498
        %v1500 = vrot.slane %v1465, 3
        %v1501 = vrot.slane %v1466, 3
        %v1502 = vsel %vm605, %v1500, %v1501
        %v1503 = vrot.slane %v1467, 3
        %v1504 = vrot.slane %v1468, 3
        %v1505 = vsel %vm605, %v1503, %v1504
        %v1506 = vrot.slane %v1469, 3
        %v1507 = vrot.slane %v1470, 3
        %v1508 = vsel %vm605, %v1506, %v1507
        %v1509 = vrot.slane %v1471, 3
        %v1510 = vrot.slane %v1472, 3
        %v1511 = vsel %vm605, %v1509, %v1510
        %v1512 = vrot.slane %v1473, 3
        %v1513 = vrot.slane %v1474, 3
        %v1514 = vsel %vm605, %v1512, %v1513
        %v1539 = vadd.f32 %v1433, %v1491
        %v1540 = vadd.f32 %v1434, %v1493
        %v1541 = vadd.f32 %v1435, %v1492
        %v1542 = vadd.f32 %v1436, %v1494
        %v1543 = vadd.f32 %v1437, %v1496
        %v1544 = vadd.f32 %v1438, %v1495
        %v1545 = vadd.f32 %v1439, %v1497
        %v1546 = vadd.f32 %v1440, %v1499
        %v1547 = vadd.f32 %v1441, %v1498
        %v1548 = vadd.f32 %v1442, %v1500
        %v1549 = vadd.f32 %v1443, %v1502
        %v1550 = vadd.f32 %v1444, %v1501
        %v1551 = vadd.f32 %v1445, %v1503
        %v1552 = vadd.f32 %v1446, %v1505
        %v1553 = vadd.f32 %v1447, %v1504
        %v1554 = vadd.f32 %v1448, %v1506
        %v1555 = vadd.f32 %v1449, %v1508
        %v1556 = vadd.f32 %v1450, %v1507
        %v1557 = vadd.f32 %v1451, %v1509
        %v1558 = vadd.f32 %v1452, %v1511
        %v1559 = vadd.f32 %v1453, %v1510
        %v1560 = vadd.f32 %v1454, %v1512
        %v1561 = vadd.f32 %v1455, %v1514
        %v1562 = vadd.f32 %v1456, %v1513
        %v1563 = vld [vmem:[%s1 + $0xb] sm:$0x1]
        %v1564 = vperm.slane %v1563, 0
        %v1565 = vmul.f32 %v1100, %v1564
        %v1566 = vmul.f32 %v1101, %v1564
        %v1567 = vmul.f32 %v1102, %v1564
        %v1568 = vmul.f32 %v1104, %v1564
        %v1569 = vmul.f32 %v1105, %v1564
        %v1570 = vmul.f32 %v1106, %v1564
        %v1571 = vmul.f32 %v1108, %v1564
        %v1572 = vmul.f32 %v1109, %v1564
        %v1573 = vmul.f32 %v1110, %v1564
        %v1574 = vmul.f32 %v1112, %v1564
        %v1575 = vmul.f32 %v1113, %v1564
        %v1576 = vmul.f32 %v1114, %v1564
        %v1577 = vmul.f32 %v1116, %v1564
        %v1578 = vmul.f32 %v1117, %v1564
        %v1579 = vmul.f32 %v1118, %v1564
        %v1580 = vmul.f32 %v1120, %v1564
        %v1581 = vmul.f32 %v1121, %v1564
        %v1582 = vmul.f32 %v1122, %v1564
        %v1583 = vmul.f32 %v1124, %v1564
        %v1584 = vmul.f32 %v1125, %v1564
        %v1585 = vmul.f32 %v1126, %v1564
        %v1586 = vmul.f32 %v1128, %v1564
        %v1587 = vmul.f32 %v1129, %v1564
        %v1588 = vmul.f32 %v1130, %v1564
        %v1613 = vrot.slane %v1565, 4
        %v1614 = vrot.slane %v1566, 4
        %v1615 = vsel %vm728, %v1613, %v1614
        %v1616 = vrot.slane %v1567, 4
        %v1617 = vsel %vm728, %v1614, %v1616
        %v1618 = vrot.slane %v1568, 4
        %v1619 = vrot.slane %v1569, 4
        %v1620 = vsel %vm728, %v1618, %v1619
        %v1621 = vrot.slane %v1570, 4
        %v1622 = vsel %vm728, %v1619, %v1621
        %v1623 = vrot.slane %v1571, 4
        %v1624 = vrot.slane %v1572, 4
        %v1625 = vsel %vm728, %v1623, %v1624
        %v1626 = vrot.slane %v1573, 4
        %v1627 = vsel %vm728, %v1624, %v1626
        %v1628 = vrot.slane %v1574, 4
        %v1629 = vrot.slane %v1575, 4
        %v1630 = vsel %vm728, %v1628, %v1629
        %v1631 = vrot.slane %v1576, 4
        %v1632 = vsel %vm728, %v1629, %v1631
        %v1633 = vrot.slane %v1577, 4
        %v1634 = vrot.slane %v1578, 4
        %v1635 = vsel %vm728, %v1633, %v1634
        %v1636 = vrot.slane %v1579, 4
        %v1637 = vsel %vm728, %v1634, %v1636
        %v1638 = vrot.slane %v1580, 4
        %v1639 = vrot.slane %v1581, 4
        %v1640 = vsel %vm728, %v1638, %v1639
        %v1641 = vrot.slane %v1582, 4
        %v1642 = vsel %vm728, %v1639, %v1641
        %v1643 = vrot.slane %v1583, 4
        %v1644 = vrot.slane %v1584, 4
        %v1645 = vsel %vm728, %v1643, %v1644
        %v1646 = vrot.slane %v1585, 4
        %v1647 = vsel %vm728, %v1644, %v1646
        %v1648 = vrot.slane %v1586, 4
        %v1649 = vrot.slane %v1587, 4
        %v1650 = vsel %vm728, %v1648, %v1649
        %v1651 = vrot.slane %v1588, 4
        %v1652 = vsel %vm728, %v1649, %v1651
        %v1677 = vadd.f32 %v1539, %v1613
        %v1678 = vadd.f32 %v1540, %v1615
        %v1679 = vadd.f32 %v1541, %v1617
        %v1680 = vadd.f32 %v1542, %v1618
        %v1681 = vadd.f32 %v1543, %v1620
        %v1682 = vadd.f32 %v1544, %v1622
        %v1683 = vadd.f32 %v1545, %v1623
        %v1684 = vadd.f32 %v1546, %v1625
        %v1685 = vadd.f32 %v1547, %v1627
        %v1686 = vadd.f32 %v1548, %v1628
        %v1687 = vadd.f32 %v1549, %v1630
        %v1688 = vadd.f32 %v1550, %v1632
        %v1689 = vadd.f32 %v1551, %v1633
        %v1690 = vadd.f32 %v1552, %v1635
        %v1691 = vadd.f32 %v1553, %v1637
        %v1692 = vadd.f32 %v1554, %v1638
        %v1693 = vadd.f32 %v1555, %v1640
        %v1694 = vadd.f32 %v1556, %v1642
        %v1695 = vadd.f32 %v1557, %v1643
        %v1696 = vadd.f32 %v1558, %v1645
        %v1697 = vadd.f32 %v1559, %v1647
        %v1698 = vadd.f32 %v1560, %v1648
        %v1699 = vadd.f32 %v1561, %v1650
        %v1700 = vadd.f32 %v1562, %v1652
        %v1701 = vld [vmem:[%s1 + $0xc] sm:$0x1]
        %v1702 = vperm.slane %v1701, 0
        %v1703 = vmul.f32 %v1100, %v1702
        %v1704 = vmul.f32 %v1101, %v1702
        %v1705 = vmul.f32 %v1102, %v1702
        %v1706 = vmul.f32 %v1104, %v1702
        %v1707 = vmul.f32 %v1105, %v1702
        %v1708 = vmul.f32 %v1106, %v1702
        %v1709 = vmul.f32 %v1108, %v1702
        %v1710 = vmul.f32 %v1109, %v1702
        %v1711 = vmul.f32 %v1110, %v1702
        %v1712 = vmul.f32 %v1112, %v1702
        %v1713 = vmul.f32 %v1113, %v1702
        %v1714 = vmul.f32 %v1114, %v1702
        %v1715 = vmul.f32 %v1116, %v1702
        %v1716 = vmul.f32 %v1117, %v1702
        %v1717 = vmul.f32 %v1118, %v1702
        %v1718 = vmul.f32 %v1120, %v1702
        %v1719 = vmul.f32 %v1121, %v1702
        %v1720 = vmul.f32 %v1122, %v1702
        %v1721 = vmul.f32 %v1124, %v1702
        %v1722 = vmul.f32 %v1125, %v1702
        %v1723 = vmul.f32 %v1126, %v1702
        %v1724 = vmul.f32 %v1128, %v1702
        %v1725 = vmul.f32 %v1129, %v1702
        %v1726 = vmul.f32 %v1130, %v1702
        %v1751 = vrot.slane %v1703, 5
        %v1752 = vrot.slane %v1704, 5
        %v1753 = vsel %vm867, %v1751, %v1752
        %v1754 = vrot.slane %v1705, 5
        %v1755 = vsel %vm867, %v1752, %v1754
        %v1756 = vrot.slane %v1706, 5
        %v1757 = vrot.slane %v1707, 5
        %v1758 = vsel %vm867, %v1756, %v1757
        %v1759 = vrot.slane %v1708, 5
        %v1760 = vsel %vm867, %v1757, %v1759
        %v1761 = vrot.slane %v1709, 5
        %v1762 = vrot.slane %v1710, 5
        %v1763 = vsel %vm867, %v1761, %v1762
        %v1764 = vrot.slane %v1711, 5
        %v1765 = vsel %vm867, %v1762, %v1764
        %v1766 = vrot.slane %v1712, 5
        %v1767 = vrot.slane %v1713, 5
        %v1768 = vsel %vm867, %v1766, %v1767
        %v1769 = vrot.slane %v1714, 5
        %v1770 = vsel %vm867, %v1767, %v1769
        %v1771 = vrot.slane %v1715, 5
        %v1772 = vrot.slane %v1716, 5
        %v1773 = vsel %vm867, %v1771, %v1772
        %v1774 = vrot.slane %v1717, 5
        %v1775 = vsel %vm867, %v1772, %v1774
        %v1776 = vrot.slane %v1718, 5
        %v1777 = vrot.slane %v1719, 5
        %v1778 = vsel %vm867, %v1776, %v1777
        %v1779 = vrot.slane %v1720, 5
        %v1780 = vsel %vm867, %v1777, %v1779
        %v1781 = vrot.slane %v1721, 5
        %v1782 = vrot.slane %v1722, 5
        %v1783 = vsel %vm867, %v1781, %v1782
        %v1784 = vrot.slane %v1723, 5
        %v1785 = vsel %vm867, %v1782, %v1784
        %v1786 = vrot.slane %v1724, 5
        %v1787 = vrot.slane %v1725, 5
        %v1788 = vsel %vm867, %v1786, %v1787
        %v1789 = vrot.slane %v1726, 5
        %v1790 = vsel %vm867, %v1787, %v1789
        %v1815 = vadd.f32 %v1677, %v1751
        %v1816 = vadd.f32 %v1678, %v1753
        %v1817 = vadd.f32 %v1679, %v1755
        %v1818 = vadd.f32 %v1680, %v1756
        %v1819 = vadd.f32 %v1681, %v1758
        %v1820 = vadd.f32 %v1682, %v1760
        %v1821 = vadd.f32 %v1683, %v1761
        %v1822 = vadd.f32 %v1684, %v1763
        %v1823 = vadd.f32 %v1685, %v1765
        %v1824 = vadd.f32 %v1686, %v1766
        %v1825 = vadd.f32 %v1687, %v1768
        %v1826 = vadd.f32 %v1688, %v1770
        %v1827 = vadd.f32 %v1689, %v1771
        %v1828 = vadd.f32 %v1690, %v1773
        %v1829 = vadd.f32 %v1691, %v1775
        %v1830 = vadd.f32 %v1692, %v1776
        %v1831 = vadd.f32 %v1693, %v1778
        %v1832 = vadd.f32 %v1694, %v1780
        %v1833 = vadd.f32 %v1695, %v1781
        %v1834 = vadd.f32 %v1696, %v1783
        %v1835 = vadd.f32 %v1697, %v1785
        %v1836 = vadd.f32 %v1698, %v1786
        %v1837 = vadd.f32 %v1699, %v1788
        %v1838 = vadd.f32 %v1700, %v1790
        %v1839 = vld [vmem:[%s1 + $0xd] sm:$0x1]
        %v1840 = vperm.slane %v1839, 0
        %v1841 = vmul.f32 %v1100, %v1840
        %v1842 = vmul.f32 %v1101, %v1840
        %v1843 = vmul.f32 %v1102, %v1840
        %v1844 = vmul.f32 %v1104, %v1840
        %v1845 = vmul.f32 %v1105, %v1840
        %v1846 = vmul.f32 %v1106, %v1840
        %v1847 = vmul.f32 %v1108, %v1840
        %v1848 = vmul.f32 %v1109, %v1840
        %v1849 = vmul.f32 %v1110, %v1840
        %v1850 = vmul.f32 %v1112, %v1840
        %v1851 = vmul.f32 %v1113, %v1840
        %v1852 = vmul.f32 %v1114, %v1840
        %v1853 = vmul.f32 %v1116, %v1840
        %v1854 = vmul.f32 %v1117, %v1840
        %v1855 = vmul.f32 %v1118, %v1840
        %v1856 = vmul.f32 %v1120, %v1840
        %v1857 = vmul.f32 %v1121, %v1840
        %v1858 = vmul.f32 %v1122, %v1840
        %v1859 = vmul.f32 %v1124, %v1840
        %v1860 = vmul.f32 %v1125, %v1840
        %v1861 = vmul.f32 %v1126, %v1840
        %v1862 = vmul.f32 %v1128, %v1840
        %v1863 = vmul.f32 %v1129, %v1840
        %v1864 = vmul.f32 %v1130, %v1840
        %v1889 = vrot.slane %v1841, 6
        %v1890 = vrot.slane %v1842, 6
        %v1891 = vsel %vm1006, %v1889, %v1890
        %v1892 = vrot.slane %v1843, 6
        %v1893 = vsel %vm1006, %v1890, %v1892
        %v1894 = vrot.slane %v1844, 6
        %v1895 = vrot.slane %v1845, 6
        %v1896 = vsel %vm1006, %v1894, %v1895
        %v1897 = vrot.slane %v1846, 6
        %v1898 = vsel %vm1006, %v1895, %v1897
        %v1899 = vrot.slane %v1847, 6
        %v1900 = vrot.slane %v1848, 6
        %v1901 = vsel %vm1006, %v1899, %v1900
        %v1902 = vrot.slane %v1849, 6
        %v1903 = vsel %vm1006, %v1900, %v1902
        %v1904 = vrot.slane %v1850, 6
        %v1905 = vrot.slane %v1851, 6
        %v1906 = vsel %vm1006, %v1904, %v1905
        %v1907 = vrot.slane %v1852, 6
        %v1908 = vsel %vm1006, %v1905, %v1907
        %v1909 = vrot.slane %v1853, 6
        %v1910 = vrot.slane %v1854, 6
        %v1911 = vsel %vm1006, %v1909, %v1910
        %v1912 = vrot.slane %v1855, 6
        %v1913 = vsel %vm1006, %v1910, %v1912
        %v1914 = vrot.slane %v1856, 6
        %v1915 = vrot.slane %v1857, 6
        %v1916 = vsel %vm1006, %v1914, %v1915
        %v1917 = vrot.slane %v1858, 6
        %v1918 = vsel %vm1006, %v1915, %v1917
        %v1919 = vrot.slane %v1859, 6
        %v1920 = vrot.slane %v1860, 6
        %v1921 = vsel %vm1006, %v1919, %v1920
        %v1922 = vrot.slane %v1861, 6
        %v1923 = vsel %vm1006, %v1920, %v1922
        %v1924 = vrot.slane %v1862, 6
        %v1925 = vrot.slane %v1863, 6
        %v1926 = vsel %vm1006, %v1924, %v1925
        %v1927 = vrot.slane %v1864, 6
        %v1928 = vsel %vm1006, %v1925, %v1927
        %v1953 = vadd.f32 %v1815, %v1889
        %v1954 = vadd.f32 %v1816, %v1891
        %v1955 = vadd.f32 %v1817, %v1893
        %v1956 = vadd.f32 %v1818, %v1894
        %v1957 = vadd.f32 %v1819, %v1896
        %v1958 = vadd.f32 %v1820, %v1898
        %v1959 = vadd.f32 %v1821, %v1899
        %v1960 = vadd.f32 %v1822, %v1901
        %v1961 = vadd.f32 %v1823, %v1903
        %v1962 = vadd.f32 %v1824, %v1904
        %v1963 = vadd.f32 %v1825, %v1906
        %v1964 = vadd.f32 %v1826, %v1908
        %v1965 = vadd.f32 %v1827, %v1909
        %v1966 = vadd.f32 %v1828, %v1911
        %v1967 = vadd.f32 %v1829, %v1913
        %v1968 = vadd.f32 %v1830, %v1914
        %v1969 = vadd.f32 %v1831, %v1916
        %v1970 = vadd.f32 %v1832, %v1918
        %v1971 = vadd.f32 %v1833, %v1919
        %v1972 = vadd.f32 %v1834, %v1921
        %v1973 = vadd.f32 %v1835, %v1923
        %v1974 = vadd.f32 %v1836, %v1924
        %v1975 = vadd.f32 %v1837, %v1926
        %v1976 = vadd.f32 %v1838, %v1928
        %s1977 = sadd.s32 %s207, 2
        %s1978 = smul.u32 %s1977, 32
        %s1979 = sadd.s32 %s1978, %s59
        %s1980 = scalar_lea.vmem [#allocation2], %s1979
        %v1981 = vld [vmem:[%s1980] sm:$0xff]
        %v1982 = vld [vmem:[%s1980 + $0x8] sm:$0xff]
        %v1983 = vld [vmem:[%s1980 + $0x10] sm:$0xff]
        %v1984 = vld [vmem:[%s1980 + $0x18] sm:$0x7]
        %v1985 = vld [vmem:[%s1980 + $0x20] sm:$0xff]
        %v1986 = vld [vmem:[%s1980 + $0x28] sm:$0xff]
        %v1987 = vld [vmem:[%s1980 + $0x30] sm:$0xff]
        %v1988 = vld [vmem:[%s1980 + $0x38] sm:$0x7]
        %v1989 = vld [vmem:[%s1980 + $0x40] sm:$0xff]
        %v1990 = vld [vmem:[%s1980 + $0x48] sm:$0xff]
        %v1991 = vld [vmem:[%s1980 + $0x50] sm:$0xff]
        %v1992 = vld [vmem:[%s1980 + $0x58] sm:$0x7]
        %v1993 = vld [vmem:[%s1980 + $0x60] sm:$0xff]
        %v1994 = vld [vmem:[%s1980 + $0x68] sm:$0xff]
        %v1995 = vld [vmem:[%s1980 + $0x70] sm:$0xff]
        %v1996 = vld [vmem:[%s1980 + $0x78] sm:$0x7]
        %v1997 = vld [vmem:[%s1980 + $0x80] sm:$0xff]
        %v1998 = vld [vmem:[%s1980 + $0x88] sm:$0xff]
        %v1999 = vld [vmem:[%s1980 + $0x90] sm:$0xff]
        %v2000 = vld [vmem:[%s1980 + $0x98] sm:$0x7]
        %v2001 = vld [vmem:[%s1980 + $0xa0] sm:$0xff]
        %v2002 = vld [vmem:[%s1980 + $0xa8] sm:$0xff]
        %v2003 = vld [vmem:[%s1980 + $0xb0] sm:$0xff]
        %v2004 = vld [vmem:[%s1980 + $0xb8] sm:$0x7]
        %v2005 = vld [vmem:[%s1980 + $0xc0] sm:$0xff]
        %v2006 = vld [vmem:[%s1980 + $0xc8] sm:$0xff]
        %v2007 = vld [vmem:[%s1980 + $0xd0] sm:$0xff]
        %v2008 = vld [vmem:[%s1980 + $0xd8] sm:$0x7]
        %v2009 = vld [vmem:[%s1980 + $0xe0] sm:$0xff]
        %v2010 = vld [vmem:[%s1980 + $0xe8] sm:$0xff]
        %v2011 = vld [vmem:[%s1980 + $0xf0] sm:$0xff]
        %v2012 = vld [vmem:[%s1980 + $0xf8] sm:$0x7]
        %v2013 = vld [vmem:[%s1 + $0xe] sm:$0x1]
        %v2014 = vperm.slane %v2013, 0
        %v2015 = vmul.f32 %v1981, %v2014
        %v2016 = vmul.f32 %v1982, %v2014
        %v2017 = vmul.f32 %v1983, %v2014
        %v2018 = vmul.f32 %v1985, %v2014
        %v2019 = vmul.f32 %v1986, %v2014
        %v2020 = vmul.f32 %v1987, %v2014
        %v2021 = vmul.f32 %v1989, %v2014
        %v2022 = vmul.f32 %v1990, %v2014
        %v2023 = vmul.f32 %v1991, %v2014
        %v2024 = vmul.f32 %v1993, %v2014
        %v2025 = vmul.f32 %v1994, %v2014
        %v2026 = vmul.f32 %v1995, %v2014
        %v2027 = vmul.f32 %v1997, %v2014
        %v2028 = vmul.f32 %v1998, %v2014
        %v2029 = vmul.f32 %v1999, %v2014
        %v2030 = vmul.f32 %v2001, %v2014
        %v2031 = vmul.f32 %v2002, %v2014
        %v2032 = vmul.f32 %v2003, %v2014
        %v2033 = vmul.f32 %v2005, %v2014
        %v2034 = vmul.f32 %v2006, %v2014
        %v2035 = vmul.f32 %v2007, %v2014
        %v2036 = vmul.f32 %v2009, %v2014
        %v2037 = vmul.f32 %v2010, %v2014
        %v2038 = vmul.f32 %v2011, %v2014
        %v2039 = vadd.f32 %v1953, %v2015
        %v2040 = vadd.f32 %v1954, %v2016
        %v2041 = vadd.f32 %v1955, %v2017
        %v2042 = vadd.f32 %v1956, %v2018
        %v2043 = vadd.f32 %v1957, %v2019
        %v2044 = vadd.f32 %v1958, %v2020
        %v2045 = vadd.f32 %v1959, %v2021
        %v2046 = vadd.f32 %v1960, %v2022
        %v2047 = vadd.f32 %v1961, %v2023
        %v2048 = vadd.f32 %v1962, %v2024
        %v2049 = vadd.f32 %v1963, %v2025
        %v2050 = vadd.f32 %v1964, %v2026
        %v2051 = vadd.f32 %v1965, %v2027
        %v2052 = vadd.f32 %v1966, %v2028
        %v2053 = vadd.f32 %v1967, %v2029
        %v2054 = vadd.f32 %v1968, %v2030
        %v2055 = vadd.f32 %v1969, %v2031
        %v2056 = vadd.f32 %v1970, %v2032
        %v2057 = vadd.f32 %v1971, %v2033
        %v2058 = vadd.f32 %v1972, %v2034
        %v2059 = vadd.f32 %v1973, %v2035
        %v2060 = vadd.f32 %v1974, %v2036
        %v2061 = vadd.f32 %v1975, %v2037
        %v2062 = vadd.f32 %v1976, %v2038
        %v2063 = vld [vmem:[%s1 + $0xf] sm:$0x1]
        %v2064 = vperm.slane %v2063, 0
        %v2065 = vmul.f32 %v1981, %v2064
        %v2066 = vmul.f32 %v1982, %v2064
        %v2067 = vmul.f32 %v1983, %v2064
        %v2068 = vmul.f32 %v1985, %v2064
        %v2069 = vmul.f32 %v1986, %v2064
        %v2070 = vmul.f32 %v1987, %v2064
        %v2071 = vmul.f32 %v1989, %v2064
        %v2072 = vmul.f32 %v1990, %v2064
        %v2073 = vmul.f32 %v1991, %v2064
        %v2074 = vmul.f32 %v1993, %v2064
        %v2075 = vmul.f32 %v1994, %v2064
        %v2076 = vmul.f32 %v1995, %v2064
        %v2077 = vmul.f32 %v1997, %v2064
        %v2078 = vmul.f32 %v1998, %v2064
        %v2079 = vmul.f32 %v1999, %v2064
        %v2080 = vmul.f32 %v2001, %v2064
        %v2081 = vmul.f32 %v2002, %v2064
        %v2082 = vmul.f32 %v2003, %v2064
        %v2083 = vmul.f32 %v2005, %v2064
        %v2084 = vmul.f32 %v2006, %v2064
        %v2085 = vmul.f32 %v2007, %v2064
        %v2086 = vmul.f32 %v2009, %v2064
        %v2087 = vmul.f32 %v2010, %v2064
        %v2088 = vmul.f32 %v2011, %v2064
        %v2113 = vrot.slane %v2065, 1
        %v2114 = vrot.slane %v2066, 1
        %v2115 = vsel %vm343, %v2113, %v2114
        %v2116 = vrot.slane %v2067, 1
        %v2117 = vsel %vm343, %v2114, %v2116
        %v2118 = vrot.slane %v2068, 1
        %v2119 = vrot.slane %v2069, 1
        %v2120 = vsel %vm343, %v2118, %v2119
        %v2121 = vrot.slane %v2070, 1
        %v2122 = vsel %vm343, %v2119, %v2121
        %v2123 = vrot.slane %v2071, 1
        %v2124 = vrot.slane %v2072, 1
        %v2125 = vsel %vm343, %v2123, %v2124
        %v2126 = vrot.slane %v2073, 1
        %v2127 = vsel %vm343, %v2124, %v2126
        %v2128 = vrot.slane %v2074, 1
        %v2129 = vrot.slane %v2075, 1
        %v2130 = vsel %vm343, %v2128, %v2129
        %v2131 = vrot.slane %v2076, 1
        %v2132 = vsel %vm343, %v2129, %v2131
        %v2133 = vrot.slane %v2077, 1
        %v2134 = vrot.slane %v2078, 1
        %v2135 = vsel %vm343, %v2133, %v2134
        %v2136 = vrot.slane %v2079, 1
        %v2137 = vsel %vm343, %v2134, %v2136
        %v2138 = vrot.slane %v2080, 1
        %v2139 = vrot.slane %v2081, 1
        %v2140 = vsel %vm343, %v2138, %v2139
        %v2141 = vrot.slane %v2082, 1
        %v2142 = vsel %vm343, %v2139, %v2141
        %v2143 = vrot.slane %v2083, 1
        %v2144 = vrot.slane %v2084, 1
        %v2145 = vsel %vm343, %v2143, %v2144
        %v2146 = vrot.slane %v2085, 1
        %v2147 = vsel %vm343, %v2144, %v2146
        %v2148 = vrot.slane %v2086, 1
        %v2149 = vrot.slane %v2087, 1
        %v2150 = vsel %vm343, %v2148, %v2149
        %v2151 = vrot.slane %v2088, 1
        %v2152 = vsel %vm343, %v2149, %v2151
        %v2177 = vadd.f32 %v2039, %v2115
        %v2178 = vadd.f32 %v2040, %v2117
        %v2179 = vadd.f32 %v2041, %v2116
        %v2180 = vadd.f32 %v2042, %v2120
        %v2181 = vadd.f32 %v2043, %v2122
        %v2182 = vadd.f32 %v2044, %v2121
        %v2183 = vadd.f32 %v2045, %v2125
        %v2184 = vadd.f32 %v2046, %v2127
        %v2185 = vadd.f32 %v2047, %v2126
        %v2186 = vadd.f32 %v2048, %v2130
        %v2187 = vadd.f32 %v2049, %v2132
        %v2188 = vadd.f32 %v2050, %v2131
        %v2189 = vadd.f32 %v2051, %v2135
        %v2190 = vadd.f32 %v2052, %v2137
        %v2191 = vadd.f32 %v2053, %v2136
        %v2192 = vadd.f32 %v2054, %v2140
        %v2193 = vadd.f32 %v2055, %v2142
        %v2194 = vadd.f32 %v2056, %v2141
        %v2195 = vadd.f32 %v2057, %v2145
        %v2196 = vadd.f32 %v2058, %v2147
        %v2197 = vadd.f32 %v2059, %v2146
        %v2198 = vadd.f32 %v2060, %v2150
        %v2199 = vadd.f32 %v2061, %v2152
        %v2200 = vadd.f32 %v2062, %v2151
        %v2201 = vld [vmem:[%s1 + $0x10] sm:$0x1]
        %v2202 = vperm.slane %v2201, 0
        %v2203 = vmul.f32 %v1981, %v2202
        %v2204 = vmul.f32 %v1982, %v2202
        %v2205 = vmul.f32 %v1983, %v2202
        %v2206 = vmul.f32 %v1985, %v2202
        %v2207 = vmul.f32 %v1986, %v2202
        %v2208 = vmul.f32 %v1987, %v2202
        %v2209 = vmul.f32 %v1989, %v2202
        %v2210 = vmul.f32 %v1990, %v2202
        %v2211 = vmul.f32 %v1991, %v2202
        %v2212 = vmul.f32 %v1993, %v2202
        %v2213 = vmul.f32 %v1994, %v2202
        %v2214 = vmul.f32 %v1995, %v2202
        %v2215 = vmul.f32 %v1997, %v2202
        %v2216 = vmul.f32 %v1998, %v2202
        %v2217 = vmul.f32 %v1999, %v2202
        %v2218 = vmul.f32 %v2001, %v2202
        %v2219 = vmul.f32 %v2002, %v2202
        %v2220 = vmul.f32 %v2003, %v2202
        %v2221 = vmul.f32 %v2005, %v2202
        %v2222 = vmul.f32 %v2006, %v2202
        %v2223 = vmul.f32 %v2007, %v2202
        %v2224 = vmul.f32 %v2009, %v2202
        %v2225 = vmul.f32 %v2010, %v2202
        %v2226 = vmul.f32 %v2011, %v2202
        %v2251 = vrot.slane %v2203, 2
        %v2252 = vrot.slane %v2204, 2
        %v2253 = vsel %vm482, %v2251, %v2252
        %v2254 = vrot.slane %v2205, 2
        %v2255 = vsel %vm482, %v2252, %v2254
        %v2256 = vrot.slane %v2206, 2
        %v2257 = vrot.slane %v2207, 2
        %v2258 = vsel %vm482, %v2256, %v2257
        %v2259 = vrot.slane %v2208, 2
        %v2260 = vsel %vm482, %v2257, %v2259
        %v2261 = vrot.slane %v2209, 2
        %v2262 = vrot.slane %v2210, 2
        %v2263 = vsel %vm482, %v2261, %v2262
        %v2264 = vrot.slane %v2211, 2
        %v2265 = vsel %vm482, %v2262, %v2264
        %v2266 = vrot.slane %v2212, 2
        %v2267 = vrot.slane %v2213, 2
        %v2268 = vsel %vm482, %v2266, %v2267
        %v2269 = vrot.slane %v2214, 2
        %v2270 = vsel %vm482, %v2267, %v2269
        %v2271 = vrot.slane %v2215, 2
        %v2272 = vrot.slane %v2216, 2
        %v2273 = vsel %vm482, %v2271, %v2272
        %v2274 = vrot.slane %v2217, 2
        %v2275 = vsel %vm482, %v2272, %v2274
        %v2276 = vrot.slane %v2218, 2
        %v2277 = vrot.slane %v2219, 2
        %v2278 = vsel %vm482, %v2276, %v2277
        %v2279 = vrot.slane %v2220, 2
        %v2280 = vsel %vm482, %v2277, %v2279
        %v2281 = vrot.slane %v2221, 2
        %v2282 = vrot.slane %v2222, 2
        %v2283 = vsel %vm482, %v2281, %v2282
        %v2284 = vrot.slane %v2223, 2
        %v2285 = vsel %vm482, %v2282, %v2284
        %v2286 = vrot.slane %v2224, 2
        %v2287 = vrot.slane %v2225, 2
        %v2288 = vsel %vm482, %v2286, %v2287
        %v2289 = vrot.slane %v2226, 2
        %v2290 = vsel %vm482, %v2287, %v2289
        %v2315 = vadd.f32 %v2177, %v2253
        %v2316 = vadd.f32 %v2178, %v2255
        %v2317 = vadd.f32 %v2179, %v2254
        %v2318 = vadd.f32 %v2180, %v2258
        %v2319 = vadd.f32 %v2181, %v2260
        %v2320 = vadd.f32 %v2182, %v2259
        %v2321 = vadd.f32 %v2183, %v2263
        %v2322 = vadd.f32 %v2184, %v2265
        %v2323 = vadd.f32 %v2185, %v2264
        %v2324 = vadd.f32 %v2186, %v2268
        %v2325 = vadd.f32 %v2187, %v2270
        %v2326 = vadd.f32 %v2188, %v2269
        %v2327 = vadd.f32 %v2189, %v2273
        %v2328 = vadd.f32 %v2190, %v2275
        %v2329 = vadd.f32 %v2191, %v2274
        %v2330 = vadd.f32 %v2192, %v2278
        %v2331 = vadd.f32 %v2193, %v2280
        %v2332 = vadd.f32 %v2194, %v2279
        %v2333 = vadd.f32 %v2195, %v2283
        %v2334 = vadd.f32 %v2196, %v2285
        %v2335 = vadd.f32 %v2197, %v2284
        %v2336 = vadd.f32 %v2198, %v2288
        %v2337 = vadd.f32 %v2199, %v2290
        %v2338 = vadd.f32 %v2200, %v2289
        %v2339 = vld [vmem:[%s1 + $0x11] sm:$0x1]
        %v2340 = vperm.slane %v2339, 0
        %v2341 = vmul.f32 %v1982, %v2340
        %v2342 = vmul.f32 %v1983, %v2340
        %v2343 = vmul.f32 %v1986, %v2340
        %v2344 = vmul.f32 %v1987, %v2340
        %v2345 = vmul.f32 %v1990, %v2340
        %v2346 = vmul.f32 %v1991, %v2340
        %v2347 = vmul.f32 %v1994, %v2340
        %v2348 = vmul.f32 %v1995, %v2340
        %v2349 = vmul.f32 %v1998, %v2340
        %v2350 = vmul.f32 %v1999, %v2340
        %v2351 = vmul.f32 %v2002, %v2340
        %v2352 = vmul.f32 %v2003, %v2340
        %v2353 = vmul.f32 %v2006, %v2340
        %v2354 = vmul.f32 %v2007, %v2340
        %v2355 = vmul.f32 %v2010, %v2340
        %v2356 = vmul.f32 %v2011, %v2340
        %v2373 = vrot.slane %v2341, 3
        %v2374 = vrot.slane %v2342, 3
        %v2375 = vsel %vm605, %v2373, %v2374
        %v2376 = vrot.slane %v2343, 3
        %v2377 = vrot.slane %v2344, 3
        %v2378 = vsel %vm605, %v2376, %v2377
        %v2379 = vrot.slane %v2345, 3
        %v2380 = vrot.slane %v2346, 3
        %v2381 = vsel %vm605, %v2379, %v2380
        %v2382 = vrot.slane %v2347, 3
        %v2383 = vrot.slane %v2348, 3
        %v2384 = vsel %vm605, %v2382, %v2383
        %v2385 = vrot.slane %v2349, 3
        %v2386 = vrot.slane %v2350, 3
        %v2387 = vsel %vm605, %v2385, %v2386
        %v2388 = vrot.slane %v2351, 3
        %v2389 = vrot.slane %v2352, 3
        %v2390 = vsel %vm605, %v2388, %v2389
        %v2391 = vrot.slane %v2353, 3
        %v2392 = vrot.slane %v2354, 3
        %v2393 = vsel %vm605, %v2391, %v2392
        %v2394 = vrot.slane %v2355, 3
        %v2395 = vrot.slane %v2356, 3
        %v2396 = vsel %vm605, %v2394, %v2395
        %v2421 = vadd.f32 %v2315, %v2373
        %v2422 = vadd.f32 %v2316, %v2375
        %v2423 = vadd.f32 %v2317, %v2374
        %v2424 = vadd.f32 %v2318, %v2376
        %v2425 = vadd.f32 %v2319, %v2378
        %v2426 = vadd.f32 %v2320, %v2377
        %v2427 = vadd.f32 %v2321, %v2379
        %v2428 = vadd.f32 %v2322, %v2381
        %v2429 = vadd.f32 %v2323, %v2380
        %v2430 = vadd.f32 %v2324, %v2382
        %v2431 = vadd.f32 %v2325, %v2384
        %v2432 = vadd.f32 %v2326, %v2383
        %v2433 = vadd.f32 %v2327, %v2385
        %v2434 = vadd.f32 %v2328, %v2387
        %v2435 = vadd.f32 %v2329, %v2386
        %v2436 = vadd.f32 %v2330, %v2388
        %v2437 = vadd.f32 %v2331, %v2390
        %v2438 = vadd.f32 %v2332, %v2389
        %v2439 = vadd.f32 %v2333, %v2391
        %v2440 = vadd.f32 %v2334, %v2393
        %v2441 = vadd.f32 %v2335, %v2392
        %v2442 = vadd.f32 %v2336, %v2394
        %v2443 = vadd.f32 %v2337, %v2396
        %v2444 = vadd.f32 %v2338, %v2395
        %v2445 = vld [vmem:[%s1 + $0x12] sm:$0x1]
        %v2446 = vperm.slane %v2445, 0
        %v2447 = vmul.f32 %v1982, %v2446
        %v2448 = vmul.f32 %v1983, %v2446
        %v2449 = vmul.f32 %v1984, %v2446
        %v2450 = vmul.f32 %v1986, %v2446
        %v2451 = vmul.f32 %v1987, %v2446
        %v2452 = vmul.f32 %v1988, %v2446
        %v2453 = vmul.f32 %v1990, %v2446
        %v2454 = vmul.f32 %v1991, %v2446
        %v2455 = vmul.f32 %v1992, %v2446
        %v2456 = vmul.f32 %v1994, %v2446
        %v2457 = vmul.f32 %v1995, %v2446
        %v2458 = vmul.f32 %v1996, %v2446
        %v2459 = vmul.f32 %v1998, %v2446
        %v2460 = vmul.f32 %v1999, %v2446
        %v2461 = vmul.f32 %v2000, %v2446
        %v2462 = vmul.f32 %v2002, %v2446
        %v2463 = vmul.f32 %v2003, %v2446
        %v2464 = vmul.f32 %v2004, %v2446
        %v2465 = vmul.f32 %v2006, %v2446
        %v2466 = vmul.f32 %v2007, %v2446
        %v2467 = vmul.f32 %v2008, %v2446
        %v2468 = vmul.f32 %v2010, %v2446
        %v2469 = vmul.f32 %v2011, %v2446
        %v2470 = vmul.f32 %v2012, %v2446
        %v2495 = vrot.slane %v2447, 4
        %v2496 = vrot.slane %v2448, 4
        %v2497 = vsel %vm728, %v2495, %v2496
        %v2498 = vrot.slane %v2449, 4
        %v2499 = vsel %vm728, %v2496, %v2498
        %v2500 = vrot.slane %v2450, 4
        %v2501 = vrot.slane %v2451, 4
        %v2502 = vsel %vm728, %v2500, %v2501
        %v2503 = vrot.slane %v2452, 4
        %v2504 = vsel %vm728, %v2501, %v2503
        %v2505 = vrot.slane %v2453, 4
        %v2506 = vrot.slane %v2454, 4
        %v2507 = vsel %vm728, %v2505, %v2506
        %v2508 = vrot.slane %v2455, 4
        %v2509 = vsel %vm728, %v2506, %v2508
        %v2510 = vrot.slane %v2456, 4
        %v2511 = vrot.slane %v2457, 4
        %v2512 = vsel %vm728, %v2510, %v2511
        %v2513 = vrot.slane %v2458, 4
        %v2514 = vsel %vm728, %v2511, %v2513
        %v2515 = vrot.slane %v2459, 4
        %v2516 = vrot.slane %v2460, 4
        %v2517 = vsel %vm728, %v2515, %v2516
        %v2518 = vrot.slane %v2461, 4
        %v2519 = vsel %vm728, %v2516, %v2518
        %v2520 = vrot.slane %v2462, 4
        %v2521 = vrot.slane %v2463, 4
        %v2522 = vsel %vm728, %v2520, %v2521
        %v2523 = vrot.slane %v2464, 4
        %v2524 = vsel %vm728, %v2521, %v2523
        %v2525 = vrot.slane %v2465, 4
        %v2526 = vrot.slane %v2466, 4
        %v2527 = vsel %vm728, %v2525, %v2526
        %v2528 = vrot.slane %v2467, 4
        %v2529 = vsel %vm728, %v2526, %v2528
        %v2530 = vrot.slane %v2468, 4
        %v2531 = vrot.slane %v2469, 4
        %v2532 = vsel %vm728, %v2530, %v2531
        %v2533 = vrot.slane %v2470, 4
        %v2534 = vsel %vm728, %v2531, %v2533
        %v2559 = vadd.f32 %v2421, %v2495
        %v2560 = vadd.f32 %v2422, %v2497
        %v2561 = vadd.f32 %v2423, %v2499
        %v2562 = vadd.f32 %v2424, %v2500
        %v2563 = vadd.f32 %v2425, %v2502
        %v2564 = vadd.f32 %v2426, %v2504
        %v2565 = vadd.f32 %v2427, %v2505
        %v2566 = vadd.f32 %v2428, %v2507
        %v2567 = vadd.f32 %v2429, %v2509
        %v2568 = vadd.f32 %v2430, %v2510
        %v2569 = vadd.f32 %v2431, %v2512
        %v2570 = vadd.f32 %v2432, %v2514
        %v2571 = vadd.f32 %v2433, %v2515
        %v2572 = vadd.f32 %v2434, %v2517
        %v2573 = vadd.f32 %v2435, %v2519
        %v2574 = vadd.f32 %v2436, %v2520
        %v2575 = vadd.f32 %v2437, %v2522
        %v2576 = vadd.f32 %v2438, %v2524
        %v2577 = vadd.f32 %v2439, %v2525
        %v2578 = vadd.f32 %v2440, %v2527
        %v2579 = vadd.f32 %v2441, %v2529
        %v2580 = vadd.f32 %v2442, %v2530
        %v2581 = vadd.f32 %v2443, %v2532
        %v2582 = vadd.f32 %v2444, %v2534
        %v2583 = vld [vmem:[%s1 + $0x13] sm:$0x1]
        %v2584 = vperm.slane %v2583, 0
        %v2585 = vmul.f32 %v1982, %v2584
        %v2586 = vmul.f32 %v1983, %v2584
        %v2587 = vmul.f32 %v1984, %v2584
        %v2588 = vmul.f32 %v1986, %v2584
        %v2589 = vmul.f32 %v1987, %v2584
        %v2590 = vmul.f32 %v1988, %v2584
        %v2591 = vmul.f32 %v1990, %v2584
        %v2592 = vmul.f32 %v1991, %v2584
        %v2593 = vmul.f32 %v1992, %v2584
        %v2594 = vmul.f32 %v1994, %v2584
        %v2595 = vmul.f32 %v1995, %v2584
        %v2596 = vmul.f32 %v1996, %v2584
        %v2597 = vmul.f32 %v1998, %v2584
        %v2598 = vmul.f32 %v1999, %v2584
        %v2599 = vmul.f32 %v2000, %v2584
        %v2600 = vmul.f32 %v2002, %v2584
        %v2601 = vmul.f32 %v2003, %v2584
        %v2602 = vmul.f32 %v2004, %v2584
        %v2603 = vmul.f32 %v2006, %v2584
        %v2604 = vmul.f32 %v2007, %v2584
        %v2605 = vmul.f32 %v2008, %v2584
        %v2606 = vmul.f32 %v2010, %v2584
        %v2607 = vmul.f32 %v2011, %v2584
        %v2608 = vmul.f32 %v2012, %v2584
        %v2633 = vrot.slane %v2585, 5
        %v2634 = vrot.slane %v2586, 5
        %v2635 = vsel %vm867, %v2633, %v2634
        %v2636 = vrot.slane %v2587, 5
        %v2637 = vsel %vm867, %v2634, %v2636
        %v2638 = vrot.slane %v2588, 5
        %v2639 = vrot.slane %v2589, 5
        %v2640 = vsel %vm867, %v2638, %v2639
        %v2641 = vrot.slane %v2590, 5
        %v2642 = vsel %vm867, %v2639, %v2641
        %v2643 = vrot.slane %v2591, 5
        %v2644 = vrot.slane %v2592, 5
        %v2645 = vsel %vm867, %v2643, %v2644
        %v2646 = vrot.slane %v2593, 5
        %v2647 = vsel %vm867, %v2644, %v2646
        %v2648 = vrot.slane %v2594, 5
        %v2649 = vrot.slane %v2595, 5
        %v2650 = vsel %vm867, %v2648, %v2649
        %v2651 = vrot.slane %v2596, 5
        %v2652 = vsel %vm867, %v2649, %v2651
        %v2653 = vrot.slane %v2597, 5
        %v2654 = vrot.slane %v2598, 5
        %v2655 = vsel %vm867, %v2653, %v2654
        %v2656 = vrot.slane %v2599, 5
        %v2657 = vsel %vm867, %v2654, %v2656
        %v2658 = vrot.slane %v2600, 5
        %v2659 = vrot.slane %v2601, 5
        %v2660 = vsel %vm867, %v2658, %v2659
        %v2661 = vrot.slane %v2602, 5
        %v2662 = vsel %vm867, %v2659, %v2661
        %v2663 = vrot.slane %v2603, 5
        %v2664 = vrot.slane %v2604, 5
        %v2665 = vsel %vm867, %v2663, %v2664
        %v2666 = vrot.slane %v2605, 5
        %v2667 = vsel %vm867, %v2664, %v2666
        %v2668 = vrot.slane %v2606, 5
        %v2669 = vrot.slane %v2607, 5
        %v2670 = vsel %vm867, %v2668, %v2669
        %v2671 = vrot.slane %v2608, 5
        %v2672 = vsel %vm867, %v2669, %v2671
        %v2697 = vadd.f32 %v2559, %v2633
        %v2698 = vadd.f32 %v2560, %v2635
        %v2699 = vadd.f32 %v2561, %v2637
        %v2700 = vadd.f32 %v2562, %v2638
        %v2701 = vadd.f32 %v2563, %v2640
        %v2702 = vadd.f32 %v2564, %v2642
        %v2703 = vadd.f32 %v2565, %v2643
        %v2704 = vadd.f32 %v2566, %v2645
        %v2705 = vadd.f32 %v2567, %v2647
        %v2706 = vadd.f32 %v2568, %v2648
        %v2707 = vadd.f32 %v2569, %v2650
        %v2708 = vadd.f32 %v2570, %v2652
        %v2709 = vadd.f32 %v2571, %v2653
        %v2710 = vadd.f32 %v2572, %v2655
        %v2711 = vadd.f32 %v2573, %v2657
        %v2712 = vadd.f32 %v2574, %v2658
        %v2713 = vadd.f32 %v2575, %v2660
        %v2714 = vadd.f32 %v2576, %v2662
        %v2715 = vadd.f32 %v2577, %v2663
        %v2716 = vadd.f32 %v2578, %v2665
        %v2717 = vadd.f32 %v2579, %v2667
        %v2718 = vadd.f32 %v2580, %v2668
        %v2719 = vadd.f32 %v2581, %v2670
        %v2720 = vadd.f32 %v2582, %v2672
        %v2721 = vld [vmem:[%s1 + $0x14] sm:$0x1]
        %v2722 = vperm.slane %v2721, 0
        %v2723 = vmul.f32 %v1982, %v2722
        %v2724 = vmul.f32 %v1983, %v2722
        %v2725 = vmul.f32 %v1984, %v2722
        %v2726 = vmul.f32 %v1986, %v2722
        %v2727 = vmul.f32 %v1987, %v2722
        %v2728 = vmul.f32 %v1988, %v2722
        %v2729 = vmul.f32 %v1990, %v2722
        %v2730 = vmul.f32 %v1991, %v2722
        %v2731 = vmul.f32 %v1992, %v2722
        %v2732 = vmul.f32 %v1994, %v2722
        %v2733 = vmul.f32 %v1995, %v2722
        %v2734 = vmul.f32 %v1996, %v2722
        %v2735 = vmul.f32 %v1998, %v2722
        %v2736 = vmul.f32 %v1999, %v2722
        %v2737 = vmul.f32 %v2000, %v2722
        %v2738 = vmul.f32 %v2002, %v2722
        %v2739 = vmul.f32 %v2003, %v2722
        %v2740 = vmul.f32 %v2004, %v2722
        %v2741 = vmul.f32 %v2006, %v2722
        %v2742 = vmul.f32 %v2007, %v2722
        %v2743 = vmul.f32 %v2008, %v2722
        %v2744 = vmul.f32 %v2010, %v2722
        %v2745 = vmul.f32 %v2011, %v2722
        %v2746 = vmul.f32 %v2012, %v2722
        %v2771 = vrot.slane %v2723, 6
        %v2772 = vrot.slane %v2724, 6
        %v2773 = vsel %vm1006, %v2771, %v2772
        %v2774 = vrot.slane %v2725, 6
        %v2775 = vsel %vm1006, %v2772, %v2774
        %v2776 = vrot.slane %v2726, 6
        %v2777 = vrot.slane %v2727, 6
        %v2778 = vsel %vm1006, %v2776, %v2777
        %v2779 = vrot.slane %v2728, 6
        %v2780 = vsel %vm1006, %v2777, %v2779
        %v2781 = vrot.slane %v2729, 6
        %v2782 = vrot.slane %v2730, 6
        %v2783 = vsel %vm1006, %v2781, %v2782
        %v2784 = vrot.slane %v2731, 6
        %v2785 = vsel %vm1006, %v2782, %v2784
        %v2786 = vrot.slane %v2732, 6
        %v2787 = vrot.slane %v2733, 6
        %v2788 = vsel %vm1006, %v2786, %v2787
        %v2789 = vrot.slane %v2734, 6
        %v2790 = vsel %vm1006, %v2787, %v2789
        %v2791 = vrot.slane %v2735, 6
        %v2792 = vrot.slane %v2736, 6
        %v2793 = vsel %vm1006, %v2791, %v2792
        %v2794 = vrot.slane %v2737, 6
        %v2795 = vsel %vm1006, %v2792, %v2794
        %v2796 = vrot.slane %v2738, 6
        %v2797 = vrot.slane %v2739, 6
        %v2798 = vsel %vm1006, %v2796, %v2797
        %v2799 = vrot.slane %v2740, 6
        %v2800 = vsel %vm1006, %v2797, %v2799
        %v2801 = vrot.slane %v2741, 6
        %v2802 = vrot.slane %v2742, 6
        %v2803 = vsel %vm1006, %v2801, %v2802
        %v2804 = vrot.slane %v2743, 6
        %v2805 = vsel %vm1006, %v2802, %v2804
        %v2806 = vrot.slane %v2744, 6
        %v2807 = vrot.slane %v2745, 6
        %v2808 = vsel %vm1006, %v2806, %v2807
        %v2809 = vrot.slane %v2746, 6
        %v2810 = vsel %vm1006, %v2807, %v2809
        %v2835 = vadd.f32 %v2697, %v2771
        %v2836 = vadd.f32 %v2698, %v2773
        %v2837 = vadd.f32 %v2699, %v2775
        %v2838 = vadd.f32 %v2700, %v2776
        %v2839 = vadd.f32 %v2701, %v2778
        %v2840 = vadd.f32 %v2702, %v2780
        %v2841 = vadd.f32 %v2703, %v2781
        %v2842 = vadd.f32 %v2704, %v2783
        %v2843 = vadd.f32 %v2705, %v2785
        %v2844 = vadd.f32 %v2706, %v2786
        %v2845 = vadd.f32 %v2707, %v2788
        %v2846 = vadd.f32 %v2708, %v2790
        %v2847 = vadd.f32 %v2709, %v2791
        %v2848 = vadd.f32 %v2710, %v2793
        %v2849 = vadd.f32 %v2711, %v2795
        %v2850 = vadd.f32 %v2712, %v2796
        %v2851 = vadd.f32 %v2713, %v2798
        %v2852 = vadd.f32 %v2714, %v2800
        %v2853 = vadd.f32 %v2715, %v2801
        %v2854 = vadd.f32 %v2716, %v2803
        %v2855 = vadd.f32 %v2717, %v2805
        %v2856 = vadd.f32 %v2718, %v2806
        %v2857 = vadd.f32 %v2719, %v2808
        %v2858 = vadd.f32 %v2720, %v2810
        %s2859 = sadd.s32 %s207, 3
        %s2860 = smul.u32 %s2859, 32
        %s2861 = sadd.s32 %s2860, %s59
        %s2862 = scalar_lea.vmem [#allocation2], %s2861
        %v2863 = vld [vmem:[%s2862] sm:$0xff]
        %v2864 = vld [vmem:[%s2862 + $0x8] sm:$0xff]
        %v2865 = vld [vmem:[%s2862 + $0x10] sm:$0xff]
        %v2866 = vld [vmem:[%s2862 + $0x18] sm:$0x7]
        %v2867 = vld [vmem:[%s2862 + $0x20] sm:$0xff]
        %v2868 = vld [vmem:[%s2862 + $0x28] sm:$0xff]
        %v2869 = vld [vmem:[%s2862 + $0x30] sm:$0xff]
        %v2870 = vld [vmem:[%s2862 + $0x38] sm:$0x7]
        %v2871 = vld [vmem:[%s2862 + $0x40] sm:$0xff]
        %v2872 = vld [vmem:[%s2862 + $0x48] sm:$0xff]
        %v2873 = vld [vmem:[%s2862 + $0x50] sm:$0xff]
        %v2874 = vld [vmem:[%s2862 + $0x58] sm:$0x7]
        %v2875 = vld [vmem:[%s2862 + $0x60] sm:$0xff]
        %v2876 = vld [vmem:[%s2862 + $0x68] sm:$0xff]
        %v2877 = vld [vmem:[%s2862 + $0x70] sm:$0xff]
        %v2878 = vld [vmem:[%s2862 + $0x78] sm:$0x7]
        %v2879 = vld [vmem:[%s2862 + $0x80] sm:$0xff]
        %v2880 = vld [vmem:[%s2862 + $0x88] sm:$0xff]
        %v2881 = vld [vmem:[%s2862 + $0x90] sm:$0xff]
        %v2882 = vld [vmem:[%s2862 + $0x98] sm:$0x7]
        %v2883 = vld [vmem:[%s2862 + $0xa0] sm:$0xff]
        %v2884 = vld [vmem:[%s2862 + $0xa8] sm:$0xff]
        %v2885 = vld [vmem:[%s2862 + $0xb0] sm:$0xff]
        %v2886 = vld [vmem:[%s2862 + $0xb8] sm:$0x7]
        %v2887 = vld [vmem:[%s2862 + $0xc0] sm:$0xff]
        %v2888 = vld [vmem:[%s2862 + $0xc8] sm:$0xff]
        %v2889 = vld [vmem:[%s2862 + $0xd0] sm:$0xff]
        %v2890 = vld [vmem:[%s2862 + $0xd8] sm:$0x7]
        %v2891 = vld [vmem:[%s2862 + $0xe0] sm:$0xff]
        %v2892 = vld [vmem:[%s2862 + $0xe8] sm:$0xff]
        %v2893 = vld [vmem:[%s2862 + $0xf0] sm:$0xff]
        %v2894 = vld [vmem:[%s2862 + $0xf8] sm:$0x7]
        %v2895 = vld [vmem:[%s1 + $0x15] sm:$0x1]
        %v2896 = vperm.slane %v2895, 0
        %v2897 = vmul.f32 %v2863, %v2896
        %v2898 = vmul.f32 %v2864, %v2896
        %v2899 = vmul.f32 %v2865, %v2896
        %v2900 = vmul.f32 %v2867, %v2896
        %v2901 = vmul.f32 %v2868, %v2896
        %v2902 = vmul.f32 %v2869, %v2896
        %v2903 = vmul.f32 %v2871, %v2896
        %v2904 = vmul.f32 %v2872, %v2896
        %v2905 = vmul.f32 %v2873, %v2896
        %v2906 = vmul.f32 %v2875, %v2896
        %v2907 = vmul.f32 %v2876, %v2896
        %v2908 = vmul.f32 %v2877, %v2896
        %v2909 = vmul.f32 %v2879, %v2896
        %v2910 = vmul.f32 %v2880, %v2896
        %v2911 = vmul.f32 %v2881, %v2896
        %v2912 = vmul.f32 %v2883, %v2896
        %v2913 = vmul.f32 %v2884, %v2896
        %v2914 = vmul.f32 %v2885, %v2896
        %v2915 = vmul.f32 %v2887, %v2896
        %v2916 = vmul.f32 %v2888, %v2896
        %v2917 = vmul.f32 %v2889, %v2896
        %v2918 = vmul.f32 %v2891, %v2896
        %v2919 = vmul.f32 %v2892, %v2896
        %v2920 = vmul.f32 %v2893, %v2896
        %v2921 = vadd.f32 %v2835, %v2897
        %v2922 = vadd.f32 %v2836, %v2898
        %v2923 = vadd.f32 %v2837, %v2899
        %v2924 = vadd.f32 %v2838, %v2900
        %v2925 = vadd.f32 %v2839, %v2901
        %v2926 = vadd.f32 %v2840, %v2902
        %v2927 = vadd.f32 %v2841, %v2903
        %v2928 = vadd.f32 %v2842, %v2904
        %v2929 = vadd.f32 %v2843, %v2905
        %v2930 = vadd.f32 %v2844, %v2906
        %v2931 = vadd.f32 %v2845, %v2907
        %v2932 = vadd.f32 %v2846, %v2908
        %v2933 = vadd.f32 %v2847, %v2909
        %v2934 = vadd.f32 %v2848, %v2910
        %v2935 = vadd.f32 %v2849, %v2911
        %v2936 = vadd.f32 %v2850, %v2912
        %v2937 = vadd.f32 %v2851, %v2913
        %v2938 = vadd.f32 %v2852, %v2914
        %v2939 = vadd.f32 %v2853, %v2915
        %v2940 = vadd.f32 %v2854, %v2916
        %v2941 = vadd.f32 %v2855, %v2917
        %v2942 = vadd.f32 %v2856, %v2918
        %v2943 = vadd.f32 %v2857, %v2919
        %v2944 = vadd.f32 %v2858, %v2920
        %v2945 = vld [vmem:[%s1 + $0x16] sm:$0x1]
        %v2946 = vperm.slane %v2945, 0
        %v2947 = vmul.f32 %v2863, %v2946
        %v2948 = vmul.f32 %v2864, %v2946
        %v2949 = vmul.f32 %v2865, %v2946
        %v2950 = vmul.f32 %v2867, %v2946
        %v2951 = vmul.f32 %v2868, %v2946
        %v2952 = vmul.f32 %v2869, %v2946
        %v2953 = vmul.f32 %v2871, %v2946
        %v2954 = vmul.f32 %v2872, %v2946
        %v2955 = vmul.f32 %v2873, %v2946
        %v2956 = vmul.f32 %v2875, %v2946
        %v2957 = vmul.f32 %v2876, %v2946
        %v2958 = vmul.f32 %v2877, %v2946
        %v2959 = vmul.f32 %v2879, %v2946
        %v2960 = vmul.f32 %v2880, %v2946
        %v2961 = vmul.f32 %v2881, %v2946
        %v2962 = vmul.f32 %v2883, %v2946
        %v2963 = vmul.f32 %v2884, %v2946
        %v2964 = vmul.f32 %v2885, %v2946
        %v2965 = vmul.f32 %v2887, %v2946
        %v2966 = vmul.f32 %v2888, %v2946
        %v2967 = vmul.f32 %v2889, %v2946
        %v2968 = vmul.f32 %v2891, %v2946
        %v2969 = vmul.f32 %v2892, %v2946
        %v2970 = vmul.f32 %v2893, %v2946
        %v2995 = vrot.slane %v2947, 1
        %v2996 = vrot.slane %v2948, 1
        %v2997 = vsel %vm343, %v2995, %v2996
        %v2998 = vrot.slane %v2949, 1
        %v2999 = vsel %vm343, %v2996, %v2998
        %v3000 = vrot.slane %v2950, 1
        %v3001 = vrot.slane %v2951, 1
        %v3002 = vsel %vm343, %v3000, %v3001
        %v3003 = vrot.slane %v2952, 1
        %v3004 = vsel %vm343, %v3001, %v3003
        %v3005 = vrot.slane %v2953, 1
        %v3006 = vrot.slane %v2954, 1
        %v3007 = vsel %vm343, %v3005, %v3006
        %v3008 = vrot.slane %v2955, 1
        %v3009 = vsel %vm343, %v3006, %v3008
        %v3010 = vrot.slane %v2956, 1
        %v3011 = vrot.slane %v2957, 1
        %v3012 = vsel %vm343, %v3010, %v3011
        %v3013 = vrot.slane %v2958, 1
        %v3014 = vsel %vm343, %v3011, %v3013
        %v3015 = vrot.slane %v2959, 1
        %v3016 = vrot.slane %v2960, 1
        %v3017 = vsel %vm343, %v3015, %v3016
        %v3018 = vrot.slane %v2961, 1
        %v3019 = vsel %vm343, %v3016, %v3018
        %v3020 = vrot.slane %v2962, 1
        %v3021 = vrot.slane %v2963, 1
        %v3022 = vsel %vm343, %v3020, %v3021
        %v3023 = vrot.slane %v2964, 1
        %v3024 = vsel %vm343, %v3021, %v3023
        %v3025 = vrot.slane %v2965, 1
        %v3026 = vrot.slane %v2966, 1
        %v3027 = vsel %vm343, %v3025, %v3026
        %v3028 = vrot.slane %v2967, 1
        %v3029 = vsel %vm343, %v3026, %v3028
        %v3030 = vrot.slane %v2968, 1
        %v3031 = vrot.slane %v2969, 1
        %v3032 = vsel %vm343, %v3030, %v3031
        %v3033 = vrot.slane %v2970, 1
        %v3034 = vsel %vm343, %v3031, %v3033
        %v3059 = vadd.f32 %v2921, %v2997
        %v3060 = vadd.f32 %v2922, %v2999
        %v3061 = vadd.f32 %v2923, %v2998
        %v3062 = vadd.f32 %v2924, %v3002
        %v3063 = vadd.f32 %v2925, %v3004
        %v3064 = vadd.f32 %v2926, %v3003
        %v3065 = vadd.f32 %v2927, %v3007
        %v3066 = vadd.f32 %v2928, %v3009
        %v3067 = vadd.f32 %v2929, %v3008
        %v3068 = vadd.f32 %v2930, %v3012
        %v3069 = vadd.f32 %v2931, %v3014
        %v3070 = vadd.f32 %v2932, %v3013
        %v3071 = vadd.f32 %v2933, %v3017
        %v3072 = vadd.f32 %v2934, %v3019
        %v3073 = vadd.f32 %v2935, %v3018
        %v3074 = vadd.f32 %v2936, %v3022
        %v3075 = vadd.f32 %v2937, %v3024
        %v3076 = vadd.f32 %v2938, %v3023
        %v3077 = vadd.f32 %v2939, %v3027
        %v3078 = vadd.f32 %v2940, %v3029
        %v3079 = vadd.f32 %v2941, %v3028
        %v3080 = vadd.f32 %v2942, %v3032
        %v3081 = vadd.f32 %v2943, %v3034
        %v3082 = vadd.f32 %v2944, %v3033
        %v3083 = vld [vmem:[%s1 + $0x17] sm:$0x1]
        %v3084 = vperm.slane %v3083, 0
        %v3085 = vmul.f32 %v2863, %v3084
        %v3086 = vmul.f32 %v2864, %v3084
        %v3087 = vmul.f32 %v2865, %v3084
        %v3088 = vmul.f32 %v2867, %v3084
        %v3089 = vmul.f32 %v2868, %v3084
        %v3090 = vmul.f32 %v2869, %v3084
        %v3091 = vmul.f32 %v2871, %v3084
        %v3092 = vmul.f32 %v2872, %v3084
        %v3093 = vmul.f32 %v2873, %v3084
        %v3094 = vmul.f32 %v2875, %v3084
        %v3095 = vmul.f32 %v2876, %v3084
        %v3096 = vmul.f32 %v2877, %v3084
        %v3097 = vmul.f32 %v2879, %v3084
        %v3098 = vmul.f32 %v2880, %v3084
        %v3099 = vmul.f32 %v2881, %v3084
        %v3100 = vmul.f32 %v2883, %v3084
        %v3101 = vmul.f32 %v2884, %v3084
        %v3102 = vmul.f32 %v2885, %v3084
        %v3103 = vmul.f32 %v2887, %v3084
        %v3104 = vmul.f32 %v2888, %v3084
        %v3105 = vmul.f32 %v2889, %v3084
        %v3106 = vmul.f32 %v2891, %v3084
        %v3107 = vmul.f32 %v2892, %v3084
        %v3108 = vmul.f32 %v2893, %v3084
        %v3133 = vrot.slane %v3085, 2
        %v3134 = vrot.slane %v3086, 2
        %v3135 = vsel %vm482, %v3133, %v3134
        %v3136 = vrot.slane %v3087, 2
        %v3137 = vsel %vm482, %v3134, %v3136
        %v3138 = vrot.slane %v3088, 2
        %v3139 = vrot.slane %v3089, 2
        %v3140 = vsel %vm482, %v3138, %v3139
        %v3141 = vrot.slane %v3090, 2
        %v3142 = vsel %vm482, %v3139, %v3141
        %v3143 = vrot.slane %v3091, 2
        %v3144 = vrot.slane %v3092, 2
        %v3145 = vsel %vm482, %v3143, %v3144
        %v3146 = vrot.slane %v3093, 2
        %v3147 = vsel %vm482, %v3144, %v3146
        %v3148 = vrot.slane %v3094, 2
        %v3149 = vrot.slane %v3095, 2
        %v3150 = vsel %vm482, %v3148, %v3149
        %v3151 = vrot.slane %v3096, 2
        %v3152 = vsel %vm482, %v3149, %v3151
        %v3153 = vrot.slane %v3097, 2
        %v3154 = vrot.slane %v3098, 2
        %v3155 = vsel %vm482, %v3153, %v3154
        %v3156 = vrot.slane %v3099, 2
        %v3157 = vsel %vm482, %v3154, %v3156
        %v3158 = vrot.slane %v3100, 2
        %v3159 = vrot.slane %v3101, 2
        %v3160 = vsel %vm482, %v3158, %v3159
        %v3161 = vrot.slane %v3102, 2
        %v3162 = vsel %vm482, %v3159, %v3161
        %v3163 = vrot.slane %v3103, 2
        %v3164 = vrot.slane %v3104, 2
        %v3165 = vsel %vm482, %v3163, %v3164
        %v3166 = vrot.slane %v3105, 2
        %v3167 = vsel %vm482, %v3164, %v3166
        %v3168 = vrot.slane %v3106, 2
        %v3169 = vrot.slane %v3107, 2
        %v3170 = vsel %vm482, %v3168, %v3169
        %v3171 = vrot.slane %v3108, 2
        %v3172 = vsel %vm482, %v3169, %v3171
        %v3197 = vadd.f32 %v3059, %v3135
        %v3198 = vadd.f32 %v3060, %v3137
        %v3199 = vadd.f32 %v3061, %v3136
        %v3200 = vadd.f32 %v3062, %v3140
        %v3201 = vadd.f32 %v3063, %v3142
        %v3202 = vadd.f32 %v3064, %v3141
        %v3203 = vadd.f32 %v3065, %v3145
        %v3204 = vadd.f32 %v3066, %v3147
        %v3205 = vadd.f32 %v3067, %v3146
        %v3206 = vadd.f32 %v3068, %v3150
        %v3207 = vadd.f32 %v3069, %v3152
        %v3208 = vadd.f32 %v3070, %v3151
        %v3209 = vadd.f32 %v3071, %v3155
        %v3210 = vadd.f32 %v3072, %v3157
        %v3211 = vadd.f32 %v3073, %v3156
        %v3212 = vadd.f32 %v3074, %v3160
        %v3213 = vadd.f32 %v3075, %v3162
        %v3214 = vadd.f32 %v3076, %v3161
        %v3215 = vadd.f32 %v3077, %v3165
        %v3216 = vadd.f32 %v3078, %v3167
        %v3217 = vadd.f32 %v3079, %v3166
        %v3218 = vadd.f32 %v3080, %v3170
        %v3219 = vadd.f32 %v3081, %v3172
        %v3220 = vadd.f32 %v3082, %v3171
        %v3221 = vld [vmem:[%s1 + $0x18] sm:$0x1]
        %v3222 = vperm.slane %v3221, 0
        %v3223 = vmul.f32 %v2864, %v3222
        %v3224 = vmul.f32 %v2865, %v3222
        %v3225 = vmul.f32 %v2868, %v3222
        %v3226 = vmul.f32 %v2869, %v3222
        %v3227 = vmul.f32 %v2872, %v3222
        %v3228 = vmul.f32 %v2873, %v3222
        %v3229 = vmul.f32 %v2876, %v3222
        %v3230 = vmul.f32 %v2877, %v3222
        %v3231 = vmul.f32 %v2880, %v3222
        %v3232 = vmul.f32 %v2881, %v3222
        %v3233 = vmul.f32 %v2884, %v3222
        %v3234 = vmul.f32 %v2885, %v3222
        %v3235 = vmul.f32 %v2888, %v3222
        %v3236 = vmul.f32 %v2889, %v3222
        %v3237 = vmul.f32 %v2892, %v3222
        %v3238 = vmul.f32 %v2893, %v3222
        %v3255 = vrot.slane %v3223, 3
        %v3256 = vrot.slane %v3224, 3
        %v3257 = vsel %vm605, %v3255, %v3256
        %v3258 = vrot.slane %v3225, 3
        %v3259 = vrot.slane %v3226, 3
        %v3260 = vsel %vm605, %v3258, %v3259
        %v3261 = vrot.slane %v3227, 3
        %v3262 = vrot.slane %v3228, 3
        %v3263 = vsel %vm605, %v3261, %v3262
        %v3264 = vrot.slane %v3229, 3
        %v3265 = vrot.slane %v3230, 3
        %v3266 = vsel %vm605, %v3264, %v3265
        %v3267 = vrot.slane %v3231, 3
        %v3268 = vrot.slane %v3232, 3
        %v3269 = vsel %vm605, %v3267, %v3268
        %v3270 = vrot.slane %v3233, 3
        %v3271 = vrot.slane %v3234, 3
        %v3272 = vsel %vm605, %v3270, %v3271
        %v3273 = vrot.slane %v3235, 3
        %v3274 = vrot.slane %v3236, 3
        %v3275 = vsel %vm605, %v3273, %v3274
        %v3276 = vrot.slane %v3237, 3
        %v3277 = vrot.slane %v3238, 3
        %v3278 = vsel %vm605, %v3276, %v3277
        %v3303 = vadd.f32 %v3197, %v3255
        %v3304 = vadd.f32 %v3198, %v3257
        %v3305 = vadd.f32 %v3199, %v3256
        %v3306 = vadd.f32 %v3200, %v3258
        %v3307 = vadd.f32 %v3201, %v3260
        %v3308 = vadd.f32 %v3202, %v3259
        %v3309 = vadd.f32 %v3203, %v3261
        %v3310 = vadd.f32 %v3204, %v3263
        %v3311 = vadd.f32 %v3205, %v3262
        %v3312 = vadd.f32 %v3206, %v3264
        %v3313 = vadd.f32 %v3207, %v3266
        %v3314 = vadd.f32 %v3208, %v3265
        %v3315 = vadd.f32 %v3209, %v3267
        %v3316 = vadd.f32 %v3210, %v3269
        %v3317 = vadd.f32 %v3211, %v3268
        %v3318 = vadd.f32 %v3212, %v3270
        %v3319 = vadd.f32 %v3213, %v3272
        %v3320 = vadd.f32 %v3214, %v3271
        %v3321 = vadd.f32 %v3215, %v3273
        %v3322 = vadd.f32 %v3216, %v3275
        %v3323 = vadd.f32 %v3217, %v3274
        %v3324 = vadd.f32 %v3218, %v3276
        %v3325 = vadd.f32 %v3219, %v3278
        %v3326 = vadd.f32 %v3220, %v3277
        %v3327 = vld [vmem:[%s1 + $0x19] sm:$0x1]
        %v3328 = vperm.slane %v3327, 0
        %v3329 = vmul.f32 %v2864, %v3328
        %v3330 = vmul.f32 %v2865, %v3328
        %v3331 = vmul.f32 %v2866, %v3328
        %v3332 = vmul.f32 %v2868, %v3328
        %v3333 = vmul.f32 %v2869, %v3328
        %v3334 = vmul.f32 %v2870, %v3328
        %v3335 = vmul.f32 %v2872, %v3328
        %v3336 = vmul.f32 %v2873, %v3328
        %v3337 = vmul.f32 %v2874, %v3328
        %v3338 = vmul.f32 %v2876, %v3328
        %v3339 = vmul.f32 %v2877, %v3328
        %v3340 = vmul.f32 %v2878, %v3328
        %v3341 = vmul.f32 %v2880, %v3328
        %v3342 = vmul.f32 %v2881, %v3328
        %v3343 = vmul.f32 %v2882, %v3328
        %v3344 = vmul.f32 %v2884, %v3328
        %v3345 = vmul.f32 %v2885, %v3328
        %v3346 = vmul.f32 %v2886, %v3328
        %v3347 = vmul.f32 %v2888, %v3328
        %v3348 = vmul.f32 %v2889, %v3328
        %v3349 = vmul.f32 %v2890, %v3328
        %v3350 = vmul.f32 %v2892, %v3328
        %v3351 = vmul.f32 %v2893, %v3328
        %v3352 = vmul.f32 %v2894, %v3328
        %v3377 = vrot.slane %v3329, 4
        %v3378 = vrot.slane %v3330, 4
        %v3379 = vsel %vm728, %v3377, %v3378
        %v3380 = vrot.slane %v3331, 4
        %v3381 = vsel %vm728, %v3378, %v3380
        %v3382 = vrot.slane %v3332, 4
        %v3383 = vrot.slane %v3333, 4
        %v3384 = vsel %vm728, %v3382, %v3383
        %v3385 = vrot.slane %v3334, 4
        %v3386 = vsel %vm728, %v3383, %v3385
        %v3387 = vrot.slane %v3335, 4
        %v3388 = vrot.slane %v3336, 4
        %v3389 = vsel %vm728, %v3387, %v3388
        %v3390 = vrot.slane %v3337, 4
        %v3391 = vsel %vm728, %v3388, %v3390
        %v3392 = vrot.slane %v3338, 4
        %v3393 = vrot.slane %v3339, 4
        %v3394 = vsel %vm728, %v3392, %v3393
        %v3395 = vrot.slane %v3340, 4
        %v3396 = vsel %vm728, %v3393, %v3395
        %v3397 = vrot.slane %v3341, 4
        %v3398 = vrot.slane %v3342, 4
        %v3399 = vsel %vm728, %v3397, %v3398
        %v3400 = vrot.slane %v3343, 4
        %v3401 = vsel %vm728, %v3398, %v3400
        %v3402 = vrot.slane %v3344, 4
        %v3403 = vrot.slane %v3345, 4
        %v3404 = vsel %vm728, %v3402, %v3403
        %v3405 = vrot.slane %v3346, 4
        %v3406 = vsel %vm728, %v3403, %v3405
        %v3407 = vrot.slane %v3347, 4
        %v3408 = vrot.slane %v3348, 4
        %v3409 = vsel %vm728, %v3407, %v3408
        %v3410 = vrot.slane %v3349, 4
        %v3411 = vsel %vm728, %v3408, %v3410
        %v3412 = vrot.slane %v3350, 4
        %v3413 = vrot.slane %v3351, 4
        %v3414 = vsel %vm728, %v3412, %v3413
        %v3415 = vrot.slane %v3352, 4
        %v3416 = vsel %vm728, %v3413, %v3415
        %v3441 = vadd.f32 %v3303, %v3377
        %v3442 = vadd.f32 %v3304, %v3379
        %v3443 = vadd.f32 %v3305, %v3381
        %v3444 = vadd.f32 %v3306, %v3382
        %v3445 = vadd.f32 %v3307, %v3384
        %v3446 = vadd.f32 %v3308, %v3386
        %v3447 = vadd.f32 %v3309, %v3387
        %v3448 = vadd.f32 %v3310, %v3389
        %v3449 = vadd.f32 %v3311, %v3391
        %v3450 = vadd.f32 %v3312, %v3392
        %v3451 = vadd.f32 %v3313, %v3394
        %v3452 = vadd.f32 %v3314, %v3396
        %v3453 = vadd.f32 %v3315, %v3397
        %v3454 = vadd.f32 %v3316, %v3399
        %v3455 = vadd.f32 %v3317, %v3401
        %v3456 = vadd.f32 %v3318, %v3402
        %v3457 = vadd.f32 %v3319, %v3404
        %v3458 = vadd.f32 %v3320, %v3406
        %v3459 = vadd.f32 %v3321, %v3407
        %v3460 = vadd.f32 %v3322, %v3409
        %v3461 = vadd.f32 %v3323, %v3411
        %v3462 = vadd.f32 %v3324, %v3412
        %v3463 = vadd.f32 %v3325, %v3414
        %v3464 = vadd.f32 %v3326, %v3416
        %v3465 = vld [vmem:[%s1 + $0x1a] sm:$0x1]
        %v3466 = vperm.slane %v3465, 0
        %v3467 = vmul.f32 %v2864, %v3466
        %v3468 = vmul.f32 %v2865, %v3466
        %v3469 = vmul.f32 %v2866, %v3466
        %v3470 = vmul.f32 %v2868, %v3466
        %v3471 = vmul.f32 %v2869, %v3466
        %v3472 = vmul.f32 %v2870, %v3466
        %v3473 = vmul.f32 %v2872, %v3466
        %v3474 = vmul.f32 %v2873, %v3466
        %v3475 = vmul.f32 %v2874, %v3466
        %v3476 = vmul.f32 %v2876, %v3466
        %v3477 = vmul.f32 %v2877, %v3466
        %v3478 = vmul.f32 %v2878, %v3466
        %v3479 = vmul.f32 %v2880, %v3466
        %v3480 = vmul.f32 %v2881, %v3466
        %v3481 = vmul.f32 %v2882, %v3466
        %v3482 = vmul.f32 %v2884, %v3466
        %v3483 = vmul.f32 %v2885, %v3466
        %v3484 = vmul.f32 %v2886, %v3466
        %v3485 = vmul.f32 %v2888, %v3466
        %v3486 = vmul.f32 %v2889, %v3466
        %v3487 = vmul.f32 %v2890, %v3466
        %v3488 = vmul.f32 %v2892, %v3466
        %v3489 = vmul.f32 %v2893, %v3466
        %v3490 = vmul.f32 %v2894, %v3466
        %v3515 = vrot.slane %v3467, 5
        %v3516 = vrot.slane %v3468, 5
        %v3517 = vsel %vm867, %v3515, %v3516
        %v3518 = vrot.slane %v3469, 5
        %v3519 = vsel %vm867, %v3516, %v3518
        %v3520 = vrot.slane %v3470, 5
        %v3521 = vrot.slane %v3471, 5
        %v3522 = vsel %vm867, %v3520, %v3521
        %v3523 = vrot.slane %v3472, 5
        %v3524 = vsel %vm867, %v3521, %v3523
        %v3525 = vrot.slane %v3473, 5
        %v3526 = vrot.slane %v3474, 5
        %v3527 = vsel %vm867, %v3525, %v3526
        %v3528 = vrot.slane %v3475, 5
        %v3529 = vsel %vm867, %v3526, %v3528
        %v3530 = vrot.slane %v3476, 5
        %v3531 = vrot.slane %v3477, 5
        %v3532 = vsel %vm867, %v3530, %v3531
        %v3533 = vrot.slane %v3478, 5
        %v3534 = vsel %vm867, %v3531, %v3533
        %v3535 = vrot.slane %v3479, 5
        %v3536 = vrot.slane %v3480, 5
        %v3537 = vsel %vm867, %v3535, %v3536
        %v3538 = vrot.slane %v3481, 5
        %v3539 = vsel %vm867, %v3536, %v3538
        %v3540 = vrot.slane %v3482, 5
        %v3541 = vrot.slane %v3483, 5
        %v3542 = vsel %vm867, %v3540, %v3541
        %v3543 = vrot.slane %v3484, 5
        %v3544 = vsel %vm867, %v3541, %v3543
        %v3545 = vrot.slane %v3485, 5
        %v3546 = vrot.slane %v3486, 5
        %v3547 = vsel %vm867, %v3545, %v3546
        %v3548 = vrot.slane %v3487, 5
        %v3549 = vsel %vm867, %v3546, %v3548
        %v3550 = vrot.slane %v3488, 5
        %v3551 = vrot.slane %v3489, 5
        %v3552 = vsel %vm867, %v3550, %v3551
        %v3553 = vrot.slane %v3490, 5
        %v3554 = vsel %vm867, %v3551, %v3553
        %v3579 = vadd.f32 %v3441, %v3515
        %v3580 = vadd.f32 %v3442, %v3517
        %v3581 = vadd.f32 %v3443, %v3519
        %v3582 = vadd.f32 %v3444, %v3520
        %v3583 = vadd.f32 %v3445, %v3522
        %v3584 = vadd.f32 %v3446, %v3524
        %v3585 = vadd.f32 %v3447, %v3525
        %v3586 = vadd.f32 %v3448, %v3527
        %v3587 = vadd.f32 %v3449, %v3529
        %v3588 = vadd.f32 %v3450, %v3530
        %v3589 = vadd.f32 %v3451, %v3532
        %v3590 = vadd.f32 %v3452, %v3534
        %v3591 = vadd.f32 %v3453, %v3535
        %v3592 = vadd.f32 %v3454, %v3537
        %v3593 = vadd.f32 %v3455, %v3539
        %v3594 = vadd.f32 %v3456, %v3540
        %v3595 = vadd.f32 %v3457, %v3542
        %v3596 = vadd.f32 %v3458, %v3544
        %v3597 = vadd.f32 %v3459, %v3545
        %v3598 = vadd.f32 %v3460, %v3547
        %v3599 = vadd.f32 %v3461, %v3549
        %v3600 = vadd.f32 %v3462, %v3550
        %v3601 = vadd.f32 %v3463, %v3552
        %v3602 = vadd.f32 %v3464, %v3554
        %v3603 = vld [vmem:[%s1 + $0x1b] sm:$0x1]
        %v3604 = vperm.slane %v3603, 0
        %v3605 = vmul.f32 %v2864, %v3604
        %v3606 = vmul.f32 %v2865, %v3604
        %v3607 = vmul.f32 %v2866, %v3604
        %v3608 = vmul.f32 %v2868, %v3604
        %v3609 = vmul.f32 %v2869, %v3604
        %v3610 = vmul.f32 %v2870, %v3604
        %v3611 = vmul.f32 %v2872, %v3604
        %v3612 = vmul.f32 %v2873, %v3604
        %v3613 = vmul.f32 %v2874, %v3604
        %v3614 = vmul.f32 %v2876, %v3604
        %v3615 = vmul.f32 %v2877, %v3604
        %v3616 = vmul.f32 %v2878, %v3604
        %v3617 = vmul.f32 %v2880, %v3604
        %v3618 = vmul.f32 %v2881, %v3604
        %v3619 = vmul.f32 %v2882, %v3604
        %v3620 = vmul.f32 %v2884, %v3604
        %v3621 = vmul.f32 %v2885, %v3604
        %v3622 = vmul.f32 %v2886, %v3604
        %v3623 = vmul.f32 %v2888, %v3604
        %v3624 = vmul.f32 %v2889, %v3604
        %v3625 = vmul.f32 %v2890, %v3604
        %v3626 = vmul.f32 %v2892, %v3604
        %v3627 = vmul.f32 %v2893, %v3604
        %v3628 = vmul.f32 %v2894, %v3604
        %v3653 = vrot.slane %v3605, 6
        %v3654 = vrot.slane %v3606, 6
        %v3655 = vsel %vm1006, %v3653, %v3654
        %v3656 = vrot.slane %v3607, 6
        %v3657 = vsel %vm1006, %v3654, %v3656
        %v3658 = vrot.slane %v3608, 6
        %v3659 = vrot.slane %v3609, 6
        %v3660 = vsel %vm1006, %v3658, %v3659
        %v3661 = vrot.slane %v3610, 6
        %v3662 = vsel %vm1006, %v3659, %v3661
        %v3663 = vrot.slane %v3611, 6
        %v3664 = vrot.slane %v3612, 6
        %v3665 = vsel %vm1006, %v3663, %v3664
        %v3666 = vrot.slane %v3613, 6
        %v3667 = vsel %vm1006, %v3664, %v3666
        %v3668 = vrot.slane %v3614, 6
        %v3669 = vrot.slane %v3615, 6
        %v3670 = vsel %vm1006, %v3668, %v3669
        %v3671 = vrot.slane %v3616, 6
        %v3672 = vsel %vm1006, %v3669, %v3671
        %v3673 = vrot.slane %v3617, 6
        %v3674 = vrot.slane %v3618, 6
        %v3675 = vsel %vm1006, %v3673, %v3674
        %v3676 = vrot.slane %v3619, 6
        %v3677 = vsel %vm1006, %v3674, %v3676
        %v3678 = vrot.slane %v3620, 6
        %v3679 = vrot.slane %v3621, 6
        %v3680 = vsel %vm1006, %v3678, %v3679
        %v3681 = vrot.slane %v3622, 6
        %v3682 = vsel %vm1006, %v3679, %v3681
        %v3683 = vrot.slane %v3623, 6
        %v3684 = vrot.slane %v3624, 6
        %v3685 = vsel %vm1006, %v3683, %v3684
        %v3686 = vrot.slane %v3625, 6
        %v3687 = vsel %vm1006, %v3684, %v3686
        %v3688 = vrot.slane %v3626, 6
        %v3689 = vrot.slane %v3627, 6
        %v3690 = vsel %vm1006, %v3688, %v3689
        %v3691 = vrot.slane %v3628, 6
        %v3692 = vsel %vm1006, %v3689, %v3691
        %v3717 = vadd.f32 %v3579, %v3653
        %v3718 = vadd.f32 %v3580, %v3655
        %v3719 = vadd.f32 %v3581, %v3657
        %v3720 = vadd.f32 %v3582, %v3658
        %v3721 = vadd.f32 %v3583, %v3660
        %v3722 = vadd.f32 %v3584, %v3662
        %v3723 = vadd.f32 %v3585, %v3663
        %v3724 = vadd.f32 %v3586, %v3665
        %v3725 = vadd.f32 %v3587, %v3667
        %v3726 = vadd.f32 %v3588, %v3668
        %v3727 = vadd.f32 %v3589, %v3670
        %v3728 = vadd.f32 %v3590, %v3672
        %v3729 = vadd.f32 %v3591, %v3673
        %v3730 = vadd.f32 %v3592, %v3675
        %v3731 = vadd.f32 %v3593, %v3677
        %v3732 = vadd.f32 %v3594, %v3678
        %v3733 = vadd.f32 %v3595, %v3680
        %v3734 = vadd.f32 %v3596, %v3682
        %v3735 = vadd.f32 %v3597, %v3683
        %v3736 = vadd.f32 %v3598, %v3685
        %v3737 = vadd.f32 %v3599, %v3687
        %v3738 = vadd.f32 %v3600, %v3688
        %v3739 = vadd.f32 %v3601, %v3690
        %v3740 = vadd.f32 %v3602, %v3692
        %s3741 = sadd.s32 %s207, 4
        %s3742 = smul.u32 %s3741, 32
        %s3743 = sadd.s32 %s3742, %s59
        %s3744 = scalar_lea.vmem [#allocation2], %s3743
        %v3745 = vld [vmem:[%s3744] sm:$0xff]
        %v3746 = vld [vmem:[%s3744 + $0x8] sm:$0xff]
        %v3747 = vld [vmem:[%s3744 + $0x10] sm:$0xff]
        %v3748 = vld [vmem:[%s3744 + $0x18] sm:$0x7]
        %v3749 = vld [vmem:[%s3744 + $0x20] sm:$0xff]
        %v3750 = vld [vmem:[%s3744 + $0x28] sm:$0xff]
        %v3751 = vld [vmem:[%s3744 + $0x30] sm:$0xff]
        %v3752 = vld [vmem:[%s3744 + $0x38] sm:$0x7]
        %v3753 = vld [vmem:[%s3744 + $0x40] sm:$0xff]
        %v3754 = vld [vmem:[%s3744 + $0x48] sm:$0xff]
        %v3755 = vld [vmem:[%s3744 + $0x50] sm:$0xff]
        %v3756 = vld [vmem:[%s3744 + $0x58] sm:$0x7]
        %v3757 = vld [vmem:[%s3744 + $0x60] sm:$0xff]
        %v3758 = vld [vmem:[%s3744 + $0x68] sm:$0xff]
        %v3759 = vld [vmem:[%s3744 + $0x70] sm:$0xff]
        %v3760 = vld [vmem:[%s3744 + $0x78] sm:$0x7]
        %v3761 = vld [vmem:[%s3744 + $0x80] sm:$0xff]
        %v3762 = vld [vmem:[%s3744 + $0x88] sm:$0xff]
        %v3763 = vld [vmem:[%s3744 + $0x90] sm:$0xff]
        %v3764 = vld [vmem:[%s3744 + $0x98] sm:$0x7]
        %v3765 = vld [vmem:[%s3744 + $0xa0] sm:$0xff]
        %v3766 = vld [vmem:[%s3744 + $0xa8] sm:$0xff]
        %v3767 = vld [vmem:[%s3744 + $0xb0] sm:$0xff]
        %v3768 = vld [vmem:[%s3744 + $0xb8] sm:$0x7]
        %v3769 = vld [vmem:[%s3744 + $0xc0] sm:$0xff]
        %v3770 = vld [vmem:[%s3744 + $0xc8] sm:$0xff]
        %v3771 = vld [vmem:[%s3744 + $0xd0] sm:$0xff]
        %v3772 = vld [vmem:[%s3744 + $0xd8] sm:$0x7]
        %v3773 = vld [vmem:[%s3744 + $0xe0] sm:$0xff]
        %v3774 = vld [vmem:[%s3744 + $0xe8] sm:$0xff]
        %v3775 = vld [vmem:[%s3744 + $0xf0] sm:$0xff]
        %v3776 = vld [vmem:[%s3744 + $0xf8] sm:$0x7]
        %v3777 = vld [vmem:[%s1 + $0x1c] sm:$0x1]
        %v3778 = vperm.slane %v3777, 0
        %v3779 = vmul.f32 %v3745, %v3778
        %v3780 = vmul.f32 %v3746, %v3778
        %v3781 = vmul.f32 %v3747, %v3778
        %v3782 = vmul.f32 %v3749, %v3778
        %v3783 = vmul.f32 %v3750, %v3778
        %v3784 = vmul.f32 %v3751, %v3778
        %v3785 = vmul.f32 %v3753, %v3778
        %v3786 = vmul.f32 %v3754, %v3778
        %v3787 = vmul.f32 %v3755, %v3778
        %v3788 = vmul.f32 %v3757, %v3778
        %v3789 = vmul.f32 %v3758, %v3778
        %v3790 = vmul.f32 %v3759, %v3778
        %v3791 = vmul.f32 %v3761, %v3778
        %v3792 = vmul.f32 %v3762, %v3778
        %v3793 = vmul.f32 %v3763, %v3778
        %v3794 = vmul.f32 %v3765, %v3778
        %v3795 = vmul.f32 %v3766, %v3778
        %v3796 = vmul.f32 %v3767, %v3778
        %v3797 = vmul.f32 %v3769, %v3778
        %v3798 = vmul.f32 %v3770, %v3778
        %v3799 = vmul.f32 %v3771, %v3778
        %v3800 = vmul.f32 %v3773, %v3778
        %v3801 = vmul.f32 %v3774, %v3778
        %v3802 = vmul.f32 %v3775, %v3778
        %v3803 = vadd.f32 %v3717, %v3779
        %v3804 = vadd.f32 %v3718, %v3780
        %v3805 = vadd.f32 %v3719, %v3781
        %v3806 = vadd.f32 %v3720, %v3782
        %v3807 = vadd.f32 %v3721, %v3783
        %v3808 = vadd.f32 %v3722, %v3784
        %v3809 = vadd.f32 %v3723, %v3785
        %v3810 = vadd.f32 %v3724, %v3786
        %v3811 = vadd.f32 %v3725, %v3787
        %v3812 = vadd.f32 %v3726, %v3788
        %v3813 = vadd.f32 %v3727, %v3789
        %v3814 = vadd.f32 %v3728, %v3790
        %v3815 = vadd.f32 %v3729, %v3791
        %v3816 = vadd.f32 %v3730, %v3792
        %v3817 = vadd.f32 %v3731, %v3793
        %v3818 = vadd.f32 %v3732, %v3794
        %v3819 = vadd.f32 %v3733, %v3795
        %v3820 = vadd.f32 %v3734, %v3796
        %v3821 = vadd.f32 %v3735, %v3797
        %v3822 = vadd.f32 %v3736, %v3798
        %v3823 = vadd.f32 %v3737, %v3799
        %v3824 = vadd.f32 %v3738, %v3800
        %v3825 = vadd.f32 %v3739, %v3801
        %v3826 = vadd.f32 %v3740, %v3802
        %v3827 = vld [vmem:[%s1 + $0x1d] sm:$0x1]
        %v3828 = vperm.slane %v3827, 0
        %v3829 = vmul.f32 %v3745, %v3828
        %v3830 = vmul.f32 %v3746, %v3828
        %v3831 = vmul.f32 %v3747, %v3828
        %v3832 = vmul.f32 %v3749, %v3828
        %v3833 = vmul.f32 %v3750, %v3828
        %v3834 = vmul.f32 %v3751, %v3828
        %v3835 = vmul.f32 %v3753, %v3828
        %v3836 = vmul.f32 %v3754, %v3828
        %v3837 = vmul.f32 %v3755, %v3828
        %v3838 = vmul.f32 %v3757, %v3828
        %v3839 = vmul.f32 %v3758, %v3828
        %v3840 = vmul.f32 %v3759, %v3828
        %v3841 = vmul.f32 %v3761, %v3828
        %v3842 = vmul.f32 %v3762, %v3828
        %v3843 = vmul.f32 %v3763, %v3828
        %v3844 = vmul.f32 %v3765, %v3828
        %v3845 = vmul.f32 %v3766, %v3828
        %v3846 = vmul.f32 %v3767, %v3828
        %v3847 = vmul.f32 %v3769, %v3828
        %v3848 = vmul.f32 %v3770, %v3828
        %v3849 = vmul.f32 %v3771, %v3828
        %v3850 = vmul.f32 %v3773, %v3828
        %v3851 = vmul.f32 %v3774, %v3828
        %v3852 = vmul.f32 %v3775, %v3828
        %v3877 = vrot.slane %v3829, 1
        %v3878 = vrot.slane %v3830, 1
        %v3879 = vsel %vm343, %v3877, %v3878
        %v3880 = vrot.slane %v3831, 1
        %v3881 = vsel %vm343, %v3878, %v3880
        %v3882 = vrot.slane %v3832, 1
        %v3883 = vrot.slane %v3833, 1
        %v3884 = vsel %vm343, %v3882, %v3883
        %v3885 = vrot.slane %v3834, 1
        %v3886 = vsel %vm343, %v3883, %v3885
        %v3887 = vrot.slane %v3835, 1
        %v3888 = vrot.slane %v3836, 1
        %v3889 = vsel %vm343, %v3887, %v3888
        %v3890 = vrot.slane %v3837, 1
        %v3891 = vsel %vm343, %v3888, %v3890
        %v3892 = vrot.slane %v3838, 1
        %v3893 = vrot.slane %v3839, 1
        %v3894 = vsel %vm343, %v3892, %v3893
        %v3895 = vrot.slane %v3840, 1
        %v3896 = vsel %vm343, %v3893, %v3895
        %v3897 = vrot.slane %v3841, 1
        %v3898 = vrot.slane %v3842, 1
        %v3899 = vsel %vm343, %v3897, %v3898
        %v3900 = vrot.slane %v3843, 1
        %v3901 = vsel %vm343, %v3898, %v3900
        %v3902 = vrot.slane %v3844, 1
        %v3903 = vrot.slane %v3845, 1
        %v3904 = vsel %vm343, %v3902, %v3903
        %v3905 = vrot.slane %v3846, 1
        %v3906 = vsel %vm343, %v3903, %v3905
        %v3907 = vrot.slane %v3847, 1
        %v3908 = vrot.slane %v3848, 1
        %v3909 = vsel %vm343, %v3907, %v3908
        %v3910 = vrot.slane %v3849, 1
        %v3911 = vsel %vm343, %v3908, %v3910
        %v3912 = vrot.slane %v3850, 1
        %v3913 = vrot.slane %v3851, 1
        %v3914 = vsel %vm343, %v3912, %v3913
        %v3915 = vrot.slane %v3852, 1
        %v3916 = vsel %vm343, %v3913, %v3915
        %v3941 = vadd.f32 %v3803, %v3879
        %v3942 = vadd.f32 %v3804, %v3881
        %v3943 = vadd.f32 %v3805, %v3880
        %v3944 = vadd.f32 %v3806, %v3884
        %v3945 = vadd.f32 %v3807, %v3886
        %v3946 = vadd.f32 %v3808, %v3885
        %v3947 = vadd.f32 %v3809, %v3889
        %v3948 = vadd.f32 %v3810, %v3891
        %v3949 = vadd.f32 %v3811, %v3890
        %v3950 = vadd.f32 %v3812, %v3894
        %v3951 = vadd.f32 %v3813, %v3896
        %v3952 = vadd.f32 %v3814, %v3895
        %v3953 = vadd.f32 %v3815, %v3899
        %v3954 = vadd.f32 %v3816, %v3901
        %v3955 = vadd.f32 %v3817, %v3900
        %v3956 = vadd.f32 %v3818, %v3904
        %v3957 = vadd.f32 %v3819, %v3906
        %v3958 = vadd.f32 %v3820, %v3905
        %v3959 = vadd.f32 %v3821, %v3909
        %v3960 = vadd.f32 %v3822, %v3911
        %v3961 = vadd.f32 %v3823, %v3910
        %v3962 = vadd.f32 %v3824, %v3914
        %v3963 = vadd.f32 %v3825, %v3916
        %v3964 = vadd.f32 %v3826, %v3915
        %v3965 = vld [vmem:[%s1 + $0x1e] sm:$0x1]
        %v3966 = vperm.slane %v3965, 0
        %v3967 = vmul.f32 %v3745, %v3966
        %v3968 = vmul.f32 %v3746, %v3966
        %v3969 = vmul.f32 %v3747, %v3966
        %v3970 = vmul.f32 %v3749, %v3966
        %v3971 = vmul.f32 %v3750, %v3966
        %v3972 = vmul.f32 %v3751, %v3966
        %v3973 = vmul.f32 %v3753, %v3966
        %v3974 = vmul.f32 %v3754, %v3966
        %v3975 = vmul.f32 %v3755, %v3966
        %v3976 = vmul.f32 %v3757, %v3966
        %v3977 = vmul.f32 %v3758, %v3966
        %v3978 = vmul.f32 %v3759, %v3966
        %v3979 = vmul.f32 %v3761, %v3966
        %v3980 = vmul.f32 %v3762, %v3966
        %v3981 = vmul.f32 %v3763, %v3966
        %v3982 = vmul.f32 %v3765, %v3966
        %v3983 = vmul.f32 %v3766, %v3966
        %v3984 = vmul.f32 %v3767, %v3966
        %v3985 = vmul.f32 %v3769, %v3966
        %v3986 = vmul.f32 %v3770, %v3966
        %v3987 = vmul.f32 %v3771, %v3966
        %v3988 = vmul.f32 %v3773, %v3966
        %v3989 = vmul.f32 %v3774, %v3966
        %v3990 = vmul.f32 %v3775, %v3966
        %v4015 = vrot.slane %v3967, 2
        %v4016 = vrot.slane %v3968, 2
        %v4017 = vsel %vm482, %v4015, %v4016
        %v4018 = vrot.slane %v3969, 2
        %v4019 = vsel %vm482, %v4016, %v4018
        %v4020 = vrot.slane %v3970, 2
        %v4021 = vrot.slane %v3971, 2
        %v4022 = vsel %vm482, %v4020, %v4021
        %v4023 = vrot.slane %v3972, 2
        %v4024 = vsel %vm482, %v4021, %v4023
        %v4025 = vrot.slane %v3973, 2
        %v4026 = vrot.slane %v3974, 2
        %v4027 = vsel %vm482, %v4025, %v4026
        %v4028 = vrot.slane %v3975, 2
        %v4029 = vsel %vm482, %v4026, %v4028
        %v4030 = vrot.slane %v3976, 2
        %v4031 = vrot.slane %v3977, 2
        %v4032 = vsel %vm482, %v4030, %v4031
        %v4033 = vrot.slane %v3978, 2
        %v4034 = vsel %vm482, %v4031, %v4033
        %v4035 = vrot.slane %v3979, 2
        %v4036 = vrot.slane %v3980, 2
        %v4037 = vsel %vm482, %v4035, %v4036
        %v4038 = vrot.slane %v3981, 2
        %v4039 = vsel %vm482, %v4036, %v4038
        %v4040 = vrot.slane %v3982, 2
        %v4041 = vrot.slane %v3983, 2
        %v4042 = vsel %vm482, %v4040, %v4041
        %v4043 = vrot.slane %v3984, 2
        %v4044 = vsel %vm482, %v4041, %v4043
        %v4045 = vrot.slane %v3985, 2
        %v4046 = vrot.slane %v3986, 2
        %v4047 = vsel %vm482, %v4045, %v4046
        %v4048 = vrot.slane %v3987, 2
        %v4049 = vsel %vm482, %v4046, %v4048
        %v4050 = vrot.slane %v3988, 2
        %v4051 = vrot.slane %v3989, 2
        %v4052 = vsel %vm482, %v4050, %v4051
        %v4053 = vrot.slane %v3990, 2
        %v4054 = vsel %vm482, %v4051, %v4053
        %v4079 = vadd.f32 %v3941, %v4017
        %v4080 = vadd.f32 %v3942, %v4019
        %v4081 = vadd.f32 %v3943, %v4018
        %v4082 = vadd.f32 %v3944, %v4022
        %v4083 = vadd.f32 %v3945, %v4024
        %v4084 = vadd.f32 %v3946, %v4023
        %v4085 = vadd.f32 %v3947, %v4027
        %v4086 = vadd.f32 %v3948, %v4029
        %v4087 = vadd.f32 %v3949, %v4028
        %v4088 = vadd.f32 %v3950, %v4032
        %v4089 = vadd.f32 %v3951, %v4034
        %v4090 = vadd.f32 %v3952, %v4033
        %v4091 = vadd.f32 %v3953, %v4037
        %v4092 = vadd.f32 %v3954, %v4039
        %v4093 = vadd.f32 %v3955, %v4038
        %v4094 = vadd.f32 %v3956, %v4042
        %v4095 = vadd.f32 %v3957, %v4044
        %v4096 = vadd.f32 %v3958, %v4043
        %v4097 = vadd.f32 %v3959, %v4047
        %v4098 = vadd.f32 %v3960, %v4049
        %v4099 = vadd.f32 %v3961, %v4048
        %v4100 = vadd.f32 %v3962, %v4052
        %v4101 = vadd.f32 %v3963, %v4054
        %v4102 = vadd.f32 %v3964, %v4053
        %v4103 = vld [vmem:[%s1 + $0x1f] sm:$0x1]
        %v4104 = vperm.slane %v4103, 0
        %v4105 = vmul.f32 %v3746, %v4104
        %v4106 = vmul.f32 %v3747, %v4104
        %v4107 = vmul.f32 %v3750, %v4104
        %v4108 = vmul.f32 %v3751, %v4104
        %v4109 = vmul.f32 %v3754, %v4104
        %v4110 = vmul.f32 %v3755, %v4104
        %v4111 = vmul.f32 %v3758, %v4104
        %v4112 = vmul.f32 %v3759, %v4104
        %v4113 = vmul.f32 %v3762, %v4104
        %v4114 = vmul.f32 %v3763, %v4104
        %v4115 = vmul.f32 %v3766, %v4104
        %v4116 = vmul.f32 %v3767, %v4104
        %v4117 = vmul.f32 %v3770, %v4104
        %v4118 = vmul.f32 %v3771, %v4104
        %v4119 = vmul.f32 %v3774, %v4104
        %v4120 = vmul.f32 %v3775, %v4104
        %v4137 = vrot.slane %v4105, 3
        %v4138 = vrot.slane %v4106, 3
        %v4139 = vsel %vm605, %v4137, %v4138
        %v4140 = vrot.slane %v4107, 3
        %v4141 = vrot.slane %v4108, 3
        %v4142 = vsel %vm605, %v4140, %v4141
        %v4143 = vrot.slane %v4109, 3
        %v4144 = vrot.slane %v4110, 3
        %v4145 = vsel %vm605, %v4143, %v4144
        %v4146 = vrot.slane %v4111, 3
        %v4147 = vrot.slane %v4112, 3
        %v4148 = vsel %vm605, %v4146, %v4147
        %v4149 = vrot.slane %v4113, 3
        %v4150 = vrot.slane %v4114, 3
        %v4151 = vsel %vm605, %v4149, %v4150
        %v4152 = vrot.slane %v4115, 3
        %v4153 = vrot.slane %v4116, 3
        %v4154 = vsel %vm605, %v4152, %v4153
        %v4155 = vrot.slane %v4117, 3
        %v4156 = vrot.slane %v4118, 3
        %v4157 = vsel %vm605, %v4155, %v4156
        %v4158 = vrot.slane %v4119, 3
        %v4159 = vrot.slane %v4120, 3
        %v4160 = vsel %vm605, %v4158, %v4159
        %v4185 = vadd.f32 %v4079, %v4137
        %v4186 = vadd.f32 %v4080, %v4139
        %v4187 = vadd.f32 %v4081, %v4138
        %v4188 = vadd.f32 %v4082, %v4140
        %v4189 = vadd.f32 %v4083, %v4142
        %v4190 = vadd.f32 %v4084, %v4141
        %v4191 = vadd.f32 %v4085, %v4143
        %v4192 = vadd.f32 %v4086, %v4145
        %v4193 = vadd.f32 %v4087, %v4144
        %v4194 = vadd.f32 %v4088, %v4146
        %v4195 = vadd.f32 %v4089, %v4148
        %v4196 = vadd.f32 %v4090, %v4147
        %v4197 = vadd.f32 %v4091, %v4149
        %v4198 = vadd.f32 %v4092, %v4151
        %v4199 = vadd.f32 %v4093, %v4150
        %v4200 = vadd.f32 %v4094, %v4152
        %v4201 = vadd.f32 %v4095, %v4154
        %v4202 = vadd.f32 %v4096, %v4153
        %v4203 = vadd.f32 %v4097, %v4155
        %v4204 = vadd.f32 %v4098, %v4157
        %v4205 = vadd.f32 %v4099, %v4156
        %v4206 = vadd.f32 %v4100, %v4158
        %v4207 = vadd.f32 %v4101, %v4160
        %v4208 = vadd.f32 %v4102, %v4159
        %v4209 = vld [vmem:[%s1 + $0x20] sm:$0x1]
        %v4210 = vperm.slane %v4209, 0
        %v4211 = vmul.f32 %v3746, %v4210
        %v4212 = vmul.f32 %v3747, %v4210
        %v4213 = vmul.f32 %v3748, %v4210
        %v4214 = vmul.f32 %v3750, %v4210
        %v4215 = vmul.f32 %v3751, %v4210
        %v4216 = vmul.f32 %v3752, %v4210
        %v4217 = vmul.f32 %v3754, %v4210
        %v4218 = vmul.f32 %v3755, %v4210
        %v4219 = vmul.f32 %v3756, %v4210
        %v4220 = vmul.f32 %v3758, %v4210
        %v4221 = vmul.f32 %v3759, %v4210
        %v4222 = vmul.f32 %v3760, %v4210
        %v4223 = vmul.f32 %v3762, %v4210
        %v4224 = vmul.f32 %v3763, %v4210
        %v4225 = vmul.f32 %v3764, %v4210
        %v4226 = vmul.f32 %v3766, %v4210
        %v4227 = vmul.f32 %v3767, %v4210
        %v4228 = vmul.f32 %v3768, %v4210
        %v4229 = vmul.f32 %v3770, %v4210
        %v4230 = vmul.f32 %v3771, %v4210
        %v4231 = vmul.f32 %v3772, %v4210
        %v4232 = vmul.f32 %v3774, %v4210
        %v4233 = vmul.f32 %v3775, %v4210
        %v4234 = vmul.f32 %v3776, %v4210
        %v4259 = vrot.slane %v4211, 4
        %v4260 = vrot.slane %v4212, 4
        %v4261 = vsel %vm728, %v4259, %v4260
        %v4262 = vrot.slane %v4213, 4
        %v4263 = vsel %vm728, %v4260, %v4262
        %v4264 = vrot.slane %v4214, 4
        %v4265 = vrot.slane %v4215, 4
        %v4266 = vsel %vm728, %v4264, %v4265
        %v4267 = vrot.slane %v4216, 4
        %v4268 = vsel %vm728, %v4265, %v4267
        %v4269 = vrot.slane %v4217, 4
        %v4270 = vrot.slane %v4218, 4
        %v4271 = vsel %vm728, %v4269, %v4270
        %v4272 = vrot.slane %v4219, 4
        %v4273 = vsel %vm728, %v4270, %v4272
        %v4274 = vrot.slane %v4220, 4
        %v4275 = vrot.slane %v4221, 4
        %v4276 = vsel %vm728, %v4274, %v4275
        %v4277 = vrot.slane %v4222, 4
        %v4278 = vsel %vm728, %v4275, %v4277
        %v4279 = vrot.slane %v4223, 4
        %v4280 = vrot.slane %v4224, 4
        %v4281 = vsel %vm728, %v4279, %v4280
        %v4282 = vrot.slane %v4225, 4
        %v4283 = vsel %vm728, %v4280, %v4282
        %v4284 = vrot.slane %v4226, 4
        %v4285 = vrot.slane %v4227, 4
        %v4286 = vsel %vm728, %v4284, %v4285
        %v4287 = vrot.slane %v4228, 4
        %v4288 = vsel %vm728, %v4285, %v4287
        %v4289 = vrot.slane %v4229, 4
        %v4290 = vrot.slane %v4230, 4
        %v4291 = vsel %vm728, %v4289, %v4290
        %v4292 = vrot.slane %v4231, 4
        %v4293 = vsel %vm728, %v4290, %v4292
        %v4294 = vrot.slane %v4232, 4
        %v4295 = vrot.slane %v4233, 4
        %v4296 = vsel %vm728, %v4294, %v4295
        %v4297 = vrot.slane %v4234, 4
        %v4298 = vsel %vm728, %v4295, %v4297
        %v4323 = vadd.f32 %v4185, %v4259
        %v4324 = vadd.f32 %v4186, %v4261
        %v4325 = vadd.f32 %v4187, %v4263
        %v4326 = vadd.f32 %v4188, %v4264
        %v4327 = vadd.f32 %v4189, %v4266
        %v4328 = vadd.f32 %v4190, %v4268
        %v4329 = vadd.f32 %v4191, %v4269
        %v4330 = vadd.f32 %v4192, %v4271
        %v4331 = vadd.f32 %v4193, %v4273
        %v4332 = vadd.f32 %v4194, %v4274
        %v4333 = vadd.f32 %v4195, %v4276
        %v4334 = vadd.f32 %v4196, %v4278
        %v4335 = vadd.f32 %v4197, %v4279
        %v4336 = vadd.f32 %v4198, %v4281
        %v4337 = vadd.f32 %v4199, %v4283
        %v4338 = vadd.f32 %v4200, %v4284
        %v4339 = vadd.f32 %v4201, %v4286
        %v4340 = vadd.f32 %v4202, %v4288
        %v4341 = vadd.f32 %v4203, %v4289
        %v4342 = vadd.f32 %v4204, %v4291
        %v4343 = vadd.f32 %v4205, %v4293
        %v4344 = vadd.f32 %v4206, %v4294
        %v4345 = vadd.f32 %v4207, %v4296
        %v4346 = vadd.f32 %v4208, %v4298
        %v4347 = vld [vmem:[%s1 + $0x21] sm:$0x1]
        %v4348 = vperm.slane %v4347, 0
        %v4349 = vmul.f32 %v3746, %v4348
        %v4350 = vmul.f32 %v3747, %v4348
        %v4351 = vmul.f32 %v3748, %v4348
        %v4352 = vmul.f32 %v3750, %v4348
        %v4353 = vmul.f32 %v3751, %v4348
        %v4354 = vmul.f32 %v3752, %v4348
        %v4355 = vmul.f32 %v3754, %v4348
        %v4356 = vmul.f32 %v3755, %v4348
        %v4357 = vmul.f32 %v3756, %v4348
        %v4358 = vmul.f32 %v3758, %v4348
        %v4359 = vmul.f32 %v3759, %v4348
        %v4360 = vmul.f32 %v3760, %v4348
        %v4361 = vmul.f32 %v3762, %v4348
        %v4362 = vmul.f32 %v3763, %v4348
        %v4363 = vmul.f32 %v3764, %v4348
        %v4364 = vmul.f32 %v3766, %v4348
        %v4365 = vmul.f32 %v3767, %v4348
        %v4366 = vmul.f32 %v3768, %v4348
        %v4367 = vmul.f32 %v3770, %v4348
        %v4368 = vmul.f32 %v3771, %v4348
        %v4369 = vmul.f32 %v3772, %v4348
        %v4370 = vmul.f32 %v3774, %v4348
        %v4371 = vmul.f32 %v3775, %v4348
        %v4372 = vmul.f32 %v3776, %v4348
        %v4397 = vrot.slane %v4349, 5
        %v4398 = vrot.slane %v4350, 5
        %v4399 = vsel %vm867, %v4397, %v4398
        %v4400 = vrot.slane %v4351, 5
        %v4401 = vsel %vm867, %v4398, %v4400
        %v4402 = vrot.slane %v4352, 5
        %v4403 = vrot.slane %v4353, 5
        %v4404 = vsel %vm867, %v4402, %v4403
        %v4405 = vrot.slane %v4354, 5
        %v4406 = vsel %vm867, %v4403, %v4405
        %v4407 = vrot.slane %v4355, 5
        %v4408 = vrot.slane %v4356, 5
        %v4409 = vsel %vm867, %v4407, %v4408
        %v4410 = vrot.slane %v4357, 5
        %v4411 = vsel %vm867, %v4408, %v4410
        %v4412 = vrot.slane %v4358, 5
        %v4413 = vrot.slane %v4359, 5
        %v4414 = vsel %vm867, %v4412, %v4413
        %v4415 = vrot.slane %v4360, 5
        %v4416 = vsel %vm867, %v4413, %v4415
        %v4417 = vrot.slane %v4361, 5
        %v4418 = vrot.slane %v4362, 5
        %v4419 = vsel %vm867, %v4417, %v4418
        %v4420 = vrot.slane %v4363, 5
        %v4421 = vsel %vm867, %v4418, %v4420
        %v4422 = vrot.slane %v4364, 5
        %v4423 = vrot.slane %v4365, 5
        %v4424 = vsel %vm867, %v4422, %v4423
        %v4425 = vrot.slane %v4366, 5
        %v4426 = vsel %vm867, %v4423, %v4425
        %v4427 = vrot.slane %v4367, 5
        %v4428 = vrot.slane %v4368, 5
        %v4429 = vsel %vm867, %v4427, %v4428
        %v4430 = vrot.slane %v4369, 5
        %v4431 = vsel %vm867, %v4428, %v4430
        %v4432 = vrot.slane %v4370, 5
        %v4433 = vrot.slane %v4371, 5
        %v4434 = vsel %vm867, %v4432, %v4433
        %v4435 = vrot.slane %v4372, 5
        %v4436 = vsel %vm867, %v4433, %v4435
        %v4461 = vadd.f32 %v4323, %v4397
        %v4462 = vadd.f32 %v4324, %v4399
        %v4463 = vadd.f32 %v4325, %v4401
        %v4464 = vadd.f32 %v4326, %v4402
        %v4465 = vadd.f32 %v4327, %v4404
        %v4466 = vadd.f32 %v4328, %v4406
        %v4467 = vadd.f32 %v4329, %v4407
        %v4468 = vadd.f32 %v4330, %v4409
        %v4469 = vadd.f32 %v4331, %v4411
        %v4470 = vadd.f32 %v4332, %v4412
        %v4471 = vadd.f32 %v4333, %v4414
        %v4472 = vadd.f32 %v4334, %v4416
        %v4473 = vadd.f32 %v4335, %v4417
        %v4474 = vadd.f32 %v4336, %v4419
        %v4475 = vadd.f32 %v4337, %v4421
        %v4476 = vadd.f32 %v4338, %v4422
        %v4477 = vadd.f32 %v4339, %v4424
        %v4478 = vadd.f32 %v4340, %v4426
        %v4479 = vadd.f32 %v4341, %v4427
        %v4480 = vadd.f32 %v4342, %v4429
        %v4481 = vadd.f32 %v4343, %v4431
        %v4482 = vadd.f32 %v4344, %v4432
        %v4483 = vadd.f32 %v4345, %v4434
        %v4484 = vadd.f32 %v4346, %v4436
        %v4485 = vld [vmem:[%s1 + $0x22] sm:$0x1]
        %v4486 = vperm.slane %v4485, 0
        %v4487 = vmul.f32 %v3746, %v4486
        %v4488 = vmul.f32 %v3747, %v4486
        %v4489 = vmul.f32 %v3748, %v4486
        %v4490 = vmul.f32 %v3750, %v4486
        %v4491 = vmul.f32 %v3751, %v4486
        %v4492 = vmul.f32 %v3752, %v4486
        %v4493 = vmul.f32 %v3754, %v4486
        %v4494 = vmul.f32 %v3755, %v4486
        %v4495 = vmul.f32 %v3756, %v4486
        %v4496 = vmul.f32 %v3758, %v4486
        %v4497 = vmul.f32 %v3759, %v4486
        %v4498 = vmul.f32 %v3760, %v4486
        %v4499 = vmul.f32 %v3762, %v4486
        %v4500 = vmul.f32 %v3763, %v4486
        %v4501 = vmul.f32 %v3764, %v4486
        %v4502 = vmul.f32 %v3766, %v4486
        %v4503 = vmul.f32 %v3767, %v4486
        %v4504 = vmul.f32 %v3768, %v4486
        %v4505 = vmul.f32 %v3770, %v4486
        %v4506 = vmul.f32 %v3771, %v4486
        %v4507 = vmul.f32 %v3772, %v4486
        %v4508 = vmul.f32 %v3774, %v4486
        %v4509 = vmul.f32 %v3775, %v4486
        %v4510 = vmul.f32 %v3776, %v4486
        %v4535 = vrot.slane %v4487, 6
        %v4536 = vrot.slane %v4488, 6
        %v4537 = vsel %vm1006, %v4535, %v4536
        %v4538 = vrot.slane %v4489, 6
        %v4539 = vsel %vm1006, %v4536, %v4538
        %v4540 = vrot.slane %v4490, 6
        %v4541 = vrot.slane %v4491, 6
        %v4542 = vsel %vm1006, %v4540, %v4541
        %v4543 = vrot.slane %v4492, 6
        %v4544 = vsel %vm1006, %v4541, %v4543
        %v4545 = vrot.slane %v4493, 6
        %v4546 = vrot.slane %v4494, 6
        %v4547 = vsel %vm1006, %v4545, %v4546
        %v4548 = vrot.slane %v4495, 6
        %v4549 = vsel %vm1006, %v4546, %v4548
        %v4550 = vrot.slane %v4496, 6
        %v4551 = vrot.slane %v4497, 6
        %v4552 = vsel %vm1006, %v4550, %v4551
        %v4553 = vrot.slane %v4498, 6
        %v4554 = vsel %vm1006, %v4551, %v4553
        %v4555 = vrot.slane %v4499, 6
        %v4556 = vrot.slane %v4500, 6
        %v4557 = vsel %vm1006, %v4555, %v4556
        %v4558 = vrot.slane %v4501, 6
        %v4559 = vsel %vm1006, %v4556, %v4558
        %v4560 = vrot.slane %v4502, 6
        %v4561 = vrot.slane %v4503, 6
        %v4562 = vsel %vm1006, %v4560, %v4561
        %v4563 = vrot.slane %v4504, 6
        %v4564 = vsel %vm1006, %v4561, %v4563
        %v4565 = vrot.slane %v4505, 6
        %v4566 = vrot.slane %v4506, 6
        %v4567 = vsel %vm1006, %v4565, %v4566
        %v4568 = vrot.slane %v4507, 6
        %v4569 = vsel %vm1006, %v4566, %v4568
        %v4570 = vrot.slane %v4508, 6
        %v4571 = vrot.slane %v4509, 6
        %v4572 = vsel %vm1006, %v4570, %v4571
        %v4573 = vrot.slane %v4510, 6
        %v4574 = vsel %vm1006, %v4571, %v4573
        %v4599 = vadd.f32 %v4461, %v4535
        %v4600 = vadd.f32 %v4462, %v4537
        %v4601 = vadd.f32 %v4463, %v4539
        %v4602 = vadd.f32 %v4464, %v4540
        %v4603 = vadd.f32 %v4465, %v4542
        %v4604 = vadd.f32 %v4466, %v4544
        %v4605 = vadd.f32 %v4467, %v4545
        %v4606 = vadd.f32 %v4468, %v4547
        %v4607 = vadd.f32 %v4469, %v4549
        %v4608 = vadd.f32 %v4470, %v4550
        %v4609 = vadd.f32 %v4471, %v4552
        %v4610 = vadd.f32 %v4472, %v4554
        %v4611 = vadd.f32 %v4473, %v4555
        %v4612 = vadd.f32 %v4474, %v4557
        %v4613 = vadd.f32 %v4475, %v4559
        %v4614 = vadd.f32 %v4476, %v4560
        %v4615 = vadd.f32 %v4477, %v4562
        %v4616 = vadd.f32 %v4478, %v4564
        %v4617 = vadd.f32 %v4479, %v4565
        %v4618 = vadd.f32 %v4480, %v4567
        %v4619 = vadd.f32 %v4481, %v4569
        %v4620 = vadd.f32 %v4482, %v4570
        %v4621 = vadd.f32 %v4483, %v4572
        %v4622 = vadd.f32 %v4484, %v4574
        %s4623 = sadd.s32 %s207, 5
        %s4624 = smul.u32 %s4623, 32
        %s4625 = sadd.s32 %s4624, %s59
        %s4626 = scalar_lea.vmem [#allocation2], %s4625
        %v4627 = vld [vmem:[%s4626] sm:$0xff]
        %v4628 = vld [vmem:[%s4626 + $0x8] sm:$0xff]
        %v4629 = vld [vmem:[%s4626 + $0x10] sm:$0xff]
        %v4630 = vld [vmem:[%s4626 + $0x18] sm:$0x7]
        %v4631 = vld [vmem:[%s4626 + $0x20] sm:$0xff]
        %v4632 = vld [vmem:[%s4626 + $0x28] sm:$0xff]
        %v4633 = vld [vmem:[%s4626 + $0x30] sm:$0xff]
        %v4634 = vld [vmem:[%s4626 + $0x38] sm:$0x7]
        %v4635 = vld [vmem:[%s4626 + $0x40] sm:$0xff]
        %v4636 = vld [vmem:[%s4626 + $0x48] sm:$0xff]
        %v4637 = vld [vmem:[%s4626 + $0x50] sm:$0xff]
        %v4638 = vld [vmem:[%s4626 + $0x58] sm:$0x7]
        %v4639 = vld [vmem:[%s4626 + $0x60] sm:$0xff]
        %v4640 = vld [vmem:[%s4626 + $0x68] sm:$0xff]
        %v4641 = vld [vmem:[%s4626 + $0x70] sm:$0xff]
        %v4642 = vld [vmem:[%s4626 + $0x78] sm:$0x7]
        %v4643 = vld [vmem:[%s4626 + $0x80] sm:$0xff]
        %v4644 = vld [vmem:[%s4626 + $0x88] sm:$0xff]
        %v4645 = vld [vmem:[%s4626 + $0x90] sm:$0xff]
        %v4646 = vld [vmem:[%s4626 + $0x98] sm:$0x7]
        %v4647 = vld [vmem:[%s4626 + $0xa0] sm:$0xff]
        %v4648 = vld [vmem:[%s4626 + $0xa8] sm:$0xff]
        %v4649 = vld [vmem:[%s4626 + $0xb0] sm:$0xff]
        %v4650 = vld [vmem:[%s4626 + $0xb8] sm:$0x7]
        %v4651 = vld [vmem:[%s4626 + $0xc0] sm:$0xff]
        %v4652 = vld [vmem:[%s4626 + $0xc8] sm:$0xff]
        %v4653 = vld [vmem:[%s4626 + $0xd0] sm:$0xff]
        %v4654 = vld [vmem:[%s4626 + $0xd8] sm:$0x7]
        %v4655 = vld [vmem:[%s4626 + $0xe0] sm:$0xff]
        %v4656 = vld [vmem:[%s4626 + $0xe8] sm:$0xff]
        %v4657 = vld [vmem:[%s4626 + $0xf0] sm:$0xff]
        %v4658 = vld [vmem:[%s4626 + $0xf8] sm:$0x7]
        %v4659 = vld [vmem:[%s1 + $0x23] sm:$0x1]
        %v4660 = vperm.slane %v4659, 0
        %v4661 = vmul.f32 %v4627, %v4660
        %v4662 = vmul.f32 %v4628, %v4660
        %v4663 = vmul.f32 %v4629, %v4660
        %v4664 = vmul.f32 %v4631, %v4660
        %v4665 = vmul.f32 %v4632, %v4660
        %v4666 = vmul.f32 %v4633, %v4660
        %v4667 = vmul.f32 %v4635, %v4660
        %v4668 = vmul.f32 %v4636, %v4660
        %v4669 = vmul.f32 %v4637, %v4660
        %v4670 = vmul.f32 %v4639, %v4660
        %v4671 = vmul.f32 %v4640, %v4660
        %v4672 = vmul.f32 %v4641, %v4660
        %v4673 = vmul.f32 %v4643, %v4660
        %v4674 = vmul.f32 %v4644, %v4660
        %v4675 = vmul.f32 %v4645, %v4660
        %v4676 = vmul.f32 %v4647, %v4660
        %v4677 = vmul.f32 %v4648, %v4660
        %v4678 = vmul.f32 %v4649, %v4660
        %v4679 = vmul.f32 %v4651, %v4660
        %v4680 = vmul.f32 %v4652, %v4660
        %v4681 = vmul.f32 %v4653, %v4660
        %v4682 = vmul.f32 %v4655, %v4660
        %v4683 = vmul.f32 %v4656, %v4660
        %v4684 = vmul.f32 %v4657, %v4660
        %v4685 = vadd.f32 %v4599, %v4661
        %v4686 = vadd.f32 %v4600, %v4662
        %v4687 = vadd.f32 %v4601, %v4663
        %v4688 = vadd.f32 %v4602, %v4664
        %v4689 = vadd.f32 %v4603, %v4665
        %v4690 = vadd.f32 %v4604, %v4666
        %v4691 = vadd.f32 %v4605, %v4667
        %v4692 = vadd.f32 %v4606, %v4668
        %v4693 = vadd.f32 %v4607, %v4669
        %v4694 = vadd.f32 %v4608, %v4670
        %v4695 = vadd.f32 %v4609, %v4671
        %v4696 = vadd.f32 %v4610, %v4672
        %v4697 = vadd.f32 %v4611, %v4673
        %v4698 = vadd.f32 %v4612, %v4674
        %v4699 = vadd.f32 %v4613, %v4675
        %v4700 = vadd.f32 %v4614, %v4676
        %v4701 = vadd.f32 %v4615, %v4677
        %v4702 = vadd.f32 %v4616, %v4678
        %v4703 = vadd.f32 %v4617, %v4679
        %v4704 = vadd.f32 %v4618, %v4680
        %v4705 = vadd.f32 %v4619, %v4681
        %v4706 = vadd.f32 %v4620, %v4682
        %v4707 = vadd.f32 %v4621, %v4683
        %v4708 = vadd.f32 %v4622, %v4684
        %v4709 = vld [vmem:[%s1 + $0x24] sm:$0x1]
        %v4710 = vperm.slane %v4709, 0
        %v4711 = vmul.f32 %v4627, %v4710
        %v4712 = vmul.f32 %v4628, %v4710
        %v4713 = vmul.f32 %v4629, %v4710
        %v4714 = vmul.f32 %v4631, %v4710
        %v4715 = vmul.f32 %v4632, %v4710
        %v4716 = vmul.f32 %v4633, %v4710
        %v4717 = vmul.f32 %v4635, %v4710
        %v4718 = vmul.f32 %v4636, %v4710
        %v4719 = vmul.f32 %v4637, %v4710
        %v4720 = vmul.f32 %v4639, %v4710
        %v4721 = vmul.f32 %v4640, %v4710
        %v4722 = vmul.f32 %v4641, %v4710
        %v4723 = vmul.f32 %v4643, %v4710
        %v4724 = vmul.f32 %v4644, %v4710
        %v4725 = vmul.f32 %v4645, %v4710
        %v4726 = vmul.f32 %v4647, %v4710
        %v4727 = vmul.f32 %v4648, %v4710
        %v4728 = vmul.f32 %v4649, %v4710
        %v4729 = vmul.f32 %v4651, %v4710
        %v4730 = vmul.f32 %v4652, %v4710
        %v4731 = vmul.f32 %v4653, %v4710
        %v4732 = vmul.f32 %v4655, %v4710
        %v4733 = vmul.f32 %v4656, %v4710
        %v4734 = vmul.f32 %v4657, %v4710
        %v4759 = vrot.slane %v4711, 1
        %v4760 = vrot.slane %v4712, 1
        %v4761 = vsel %vm343, %v4759, %v4760
        %v4762 = vrot.slane %v4713, 1
        %v4763 = vsel %vm343, %v4760, %v4762
        %v4764 = vrot.slane %v4714, 1
        %v4765 = vrot.slane %v4715, 1
        %v4766 = vsel %vm343, %v4764, %v4765
        %v4767 = vrot.slane %v4716, 1
        %v4768 = vsel %vm343, %v4765, %v4767
        %v4769 = vrot.slane %v4717, 1
        %v4770 = vrot.slane %v4718, 1
        %v4771 = vsel %vm343, %v4769, %v4770
        %v4772 = vrot.slane %v4719, 1
        %v4773 = vsel %vm343, %v4770, %v4772
        %v4774 = vrot.slane %v4720, 1
        %v4775 = vrot.slane %v4721, 1
        %v4776 = vsel %vm343, %v4774, %v4775
        %v4777 = vrot.slane %v4722, 1
        %v4778 = vsel %vm343, %v4775, %v4777
        %v4779 = vrot.slane %v4723, 1
        %v4780 = vrot.slane %v4724, 1
        %v4781 = vsel %vm343, %v4779, %v4780
        %v4782 = vrot.slane %v4725, 1
        %v4783 = vsel %vm343, %v4780, %v4782
        %v4784 = vrot.slane %v4726, 1
        %v4785 = vrot.slane %v4727, 1
        %v4786 = vsel %vm343, %v4784, %v4785
        %v4787 = vrot.slane %v4728, 1
        %v4788 = vsel %vm343, %v4785, %v4787
        %v4789 = vrot.slane %v4729, 1
        %v4790 = vrot.slane %v4730, 1
        %v4791 = vsel %vm343, %v4789, %v4790
        %v4792 = vrot.slane %v4731, 1
        %v4793 = vsel %vm343, %v4790, %v4792
        %v4794 = vrot.slane %v4732, 1
        %v4795 = vrot.slane %v4733, 1
        %v4796 = vsel %vm343, %v4794, %v4795
        %v4797 = vrot.slane %v4734, 1
        %v4798 = vsel %vm343, %v4795, %v4797
        %v4823 = vadd.f32 %v4685, %v4761
        %v4824 = vadd.f32 %v4686, %v4763
        %v4825 = vadd.f32 %v4687, %v4762
        %v4826 = vadd.f32 %v4688, %v4766
        %v4827 = vadd.f32 %v4689, %v4768
        %v4828 = vadd.f32 %v4690, %v4767
        %v4829 = vadd.f32 %v4691, %v4771
        %v4830 = vadd.f32 %v4692, %v4773
        %v4831 = vadd.f32 %v4693, %v4772
        %v4832 = vadd.f32 %v4694, %v4776
        %v4833 = vadd.f32 %v4695, %v4778
        %v4834 = vadd.f32 %v4696, %v4777
        %v4835 = vadd.f32 %v4697, %v4781
        %v4836 = vadd.f32 %v4698, %v4783
        %v4837 = vadd.f32 %v4699, %v4782
        %v4838 = vadd.f32 %v4700, %v4786
        %v4839 = vadd.f32 %v4701, %v4788
        %v4840 = vadd.f32 %v4702, %v4787
        %v4841 = vadd.f32 %v4703, %v4791
        %v4842 = vadd.f32 %v4704, %v4793
        %v4843 = vadd.f32 %v4705, %v4792
        %v4844 = vadd.f32 %v4706, %v4796
        %v4845 = vadd.f32 %v4707, %v4798
        %v4846 = vadd.f32 %v4708, %v4797
        %v4847 = vld [vmem:[%s1 + $0x25] sm:$0x1]
        %v4848 = vperm.slane %v4847, 0
        %v4849 = vmul.f32 %v4627, %v4848
        %v4850 = vmul.f32 %v4628, %v4848
        %v4851 = vmul.f32 %v4629, %v4848
        %v4852 = vmul.f32 %v4631, %v4848
        %v4853 = vmul.f32 %v4632, %v4848
        %v4854 = vmul.f32 %v4633, %v4848
        %v4855 = vmul.f32 %v4635, %v4848
        %v4856 = vmul.f32 %v4636, %v4848
        %v4857 = vmul.f32 %v4637, %v4848
        %v4858 = vmul.f32 %v4639, %v4848
        %v4859 = vmul.f32 %v4640, %v4848
        %v4860 = vmul.f32 %v4641, %v4848
        %v4861 = vmul.f32 %v4643, %v4848
        %v4862 = vmul.f32 %v4644, %v4848
        %v4863 = vmul.f32 %v4645, %v4848
        %v4864 = vmul.f32 %v4647, %v4848
        %v4865 = vmul.f32 %v4648, %v4848
        %v4866 = vmul.f32 %v4649, %v4848
        %v4867 = vmul.f32 %v4651, %v4848
        %v4868 = vmul.f32 %v4652, %v4848
        %v4869 = vmul.f32 %v4653, %v4848
        %v4870 = vmul.f32 %v4655, %v4848
        %v4871 = vmul.f32 %v4656, %v4848
        %v4872 = vmul.f32 %v4657, %v4848
        %v4897 = vrot.slane %v4849, 2
        %v4898 = vrot.slane %v4850, 2
        %v4899 = vsel %vm482, %v4897, %v4898
        %v4900 = vrot.slane %v4851, 2
        %v4901 = vsel %vm482, %v4898, %v4900
        %v4902 = vrot.slane %v4852, 2
        %v4903 = vrot.slane %v4853, 2
        %v4904 = vsel %vm482, %v4902, %v4903
        %v4905 = vrot.slane %v4854, 2
        %v4906 = vsel %vm482, %v4903, %v4905
        %v4907 = vrot.slane %v4855, 2
        %v4908 = vrot.slane %v4856, 2
        %v4909 = vsel %vm482, %v4907, %v4908
        %v4910 = vrot.slane %v4857, 2
        %v4911 = vsel %vm482, %v4908, %v4910
        %v4912 = vrot.slane %v4858, 2
        %v4913 = vrot.slane %v4859, 2
        %v4914 = vsel %vm482, %v4912, %v4913
        %v4915 = vrot.slane %v4860, 2
        %v4916 = vsel %vm482, %v4913, %v4915
        %v4917 = vrot.slane %v4861, 2
        %v4918 = vrot.slane %v4862, 2
        %v4919 = vsel %vm482, %v4917, %v4918
        %v4920 = vrot.slane %v4863, 2
        %v4921 = vsel %vm482, %v4918, %v4920
        %v4922 = vrot.slane %v4864, 2
        %v4923 = vrot.slane %v4865, 2
        %v4924 = vsel %vm482, %v4922, %v4923
        %v4925 = vrot.slane %v4866, 2
        %v4926 = vsel %vm482, %v4923, %v4925
        %v4927 = vrot.slane %v4867, 2
        %v4928 = vrot.slane %v4868, 2
        %v4929 = vsel %vm482, %v4927, %v4928
        %v4930 = vrot.slane %v4869, 2
        %v4931 = vsel %vm482, %v4928, %v4930
        %v4932 = vrot.slane %v4870, 2
        %v4933 = vrot.slane %v4871, 2
        %v4934 = vsel %vm482, %v4932, %v4933
        %v4935 = vrot.slane %v4872, 2
        %v4936 = vsel %vm482, %v4933, %v4935
        %v4961 = vadd.f32 %v4823, %v4899
        %v4962 = vadd.f32 %v4824, %v4901
        %v4963 = vadd.f32 %v4825, %v4900
        %v4964 = vadd.f32 %v4826, %v4904
        %v4965 = vadd.f32 %v4827, %v4906
        %v4966 = vadd.f32 %v4828, %v4905
        %v4967 = vadd.f32 %v4829, %v4909
        %v4968 = vadd.f32 %v4830, %v4911
        %v4969 = vadd.f32 %v4831, %v4910
        %v4970 = vadd.f32 %v4832, %v4914
        %v4971 = vadd.f32 %v4833, %v4916
        %v4972 = vadd.f32 %v4834, %v4915
        %v4973 = vadd.f32 %v4835, %v4919
        %v4974 = vadd.f32 %v4836, %v4921
        %v4975 = vadd.f32 %v4837, %v4920
        %v4976 = vadd.f32 %v4838, %v4924
        %v4977 = vadd.f32 %v4839, %v4926
        %v4978 = vadd.f32 %v4840, %v4925
        %v4979 = vadd.f32 %v4841, %v4929
        %v4980 = vadd.f32 %v4842, %v4931
        %v4981 = vadd.f32 %v4843, %v4930
        %v4982 = vadd.f32 %v4844, %v4934
        %v4983 = vadd.f32 %v4845, %v4936
        %v4984 = vadd.f32 %v4846, %v4935
        %v4985 = vld [vmem:[%s1 + $0x26] sm:$0x1]
        %v4986 = vperm.slane %v4985, 0
        %v4987 = vmul.f32 %v4628, %v4986
        %v4988 = vmul.f32 %v4629, %v4986
        %v4989 = vmul.f32 %v4632, %v4986
        %v4990 = vmul.f32 %v4633, %v4986
        %v4991 = vmul.f32 %v4636, %v4986
        %v4992 = vmul.f32 %v4637, %v4986
        %v4993 = vmul.f32 %v4640, %v4986
        %v4994 = vmul.f32 %v4641, %v4986
        %v4995 = vmul.f32 %v4644, %v4986
        %v4996 = vmul.f32 %v4645, %v4986
        %v4997 = vmul.f32 %v4648, %v4986
        %v4998 = vmul.f32 %v4649, %v4986
        %v4999 = vmul.f32 %v4652, %v4986
        %v5000 = vmul.f32 %v4653, %v4986
        %v5001 = vmul.f32 %v4656, %v4986
        %v5002 = vmul.f32 %v4657, %v4986
        %v5019 = vrot.slane %v4987, 3
        %v5020 = vrot.slane %v4988, 3
        %v5021 = vsel %vm605, %v5019, %v5020
        %v5022 = vrot.slane %v4989, 3
        %v5023 = vrot.slane %v4990, 3
        %v5024 = vsel %vm605, %v5022, %v5023
        %v5025 = vrot.slane %v4991, 3
        %v5026 = vrot.slane %v4992, 3
        %v5027 = vsel %vm605, %v5025, %v5026
        %v5028 = vrot.slane %v4993, 3
        %v5029 = vrot.slane %v4994, 3
        %v5030 = vsel %vm605, %v5028, %v5029
        %v5031 = vrot.slane %v4995, 3
        %v5032 = vrot.slane %v4996, 3
        %v5033 = vsel %vm605, %v5031, %v5032
        %v5034 = vrot.slane %v4997, 3
        %v5035 = vrot.slane %v4998, 3
        %v5036 = vsel %vm605, %v5034, %v5035
        %v5037 = vrot.slane %v4999, 3
        %v5038 = vrot.slane %v5000, 3
        %v5039 = vsel %vm605, %v5037, %v5038
        %v5040 = vrot.slane %v5001, 3
        %v5041 = vrot.slane %v5002, 3
        %v5042 = vsel %vm605, %v5040, %v5041
        %v5067 = vadd.f32 %v4961, %v5019
        %v5068 = vadd.f32 %v4962, %v5021
        %v5069 = vadd.f32 %v4963, %v5020
        %v5070 = vadd.f32 %v4964, %v5022
        %v5071 = vadd.f32 %v4965, %v5024
        %v5072 = vadd.f32 %v4966, %v5023
        %v5073 = vadd.f32 %v4967, %v5025
        %v5074 = vadd.f32 %v4968, %v5027
        %v5075 = vadd.f32 %v4969, %v5026
        %v5076 = vadd.f32 %v4970, %v5028
        %v5077 = vadd.f32 %v4971, %v5030
        %v5078 = vadd.f32 %v4972, %v5029
        %v5079 = vadd.f32 %v4973, %v5031
        %v5080 = vadd.f32 %v4974, %v5033
        %v5081 = vadd.f32 %v4975, %v5032
        %v5082 = vadd.f32 %v4976, %v5034
        %v5083 = vadd.f32 %v4977, %v5036
        %v5084 = vadd.f32 %v4978, %v5035
        %v5085 = vadd.f32 %v4979, %v5037
        %v5086 = vadd.f32 %v4980, %v5039
        %v5087 = vadd.f32 %v4981, %v5038
        %v5088 = vadd.f32 %v4982, %v5040
        %v5089 = vadd.f32 %v4983, %v5042
        %v5090 = vadd.f32 %v4984, %v5041
        %v5091 = vld [vmem:[%s1 + $0x27] sm:$0x1]
        %v5092 = vperm.slane %v5091, 0
        %v5093 = vmul.f32 %v4628, %v5092
        %v5094 = vmul.f32 %v4629, %v5092
        %v5095 = vmul.f32 %v4630, %v5092
        %v5096 = vmul.f32 %v4632, %v5092
        %v5097 = vmul.f32 %v4633, %v5092
        %v5098 = vmul.f32 %v4634, %v5092
        %v5099 = vmul.f32 %v4636, %v5092
        %v5100 = vmul.f32 %v4637, %v5092
        %v5101 = vmul.f32 %v4638, %v5092
        %v5102 = vmul.f32 %v4640, %v5092
        %v5103 = vmul.f32 %v4641, %v5092
        %v5104 = vmul.f32 %v4642, %v5092
        %v5105 = vmul.f32 %v4644, %v5092
        %v5106 = vmul.f32 %v4645, %v5092
        %v5107 = vmul.f32 %v4646, %v5092
        %v5108 = vmul.f32 %v4648, %v5092
        %v5109 = vmul.f32 %v4649, %v5092
        %v5110 = vmul.f32 %v4650, %v5092
        %v5111 = vmul.f32 %v4652, %v5092
        %v5112 = vmul.f32 %v4653, %v5092
        %v5113 = vmul.f32 %v4654, %v5092
        %v5114 = vmul.f32 %v4656, %v5092
        %v5115 = vmul.f32 %v4657, %v5092
        %v5116 = vmul.f32 %v4658, %v5092
        %v5141 = vrot.slane %v5093, 4
        %v5142 = vrot.slane %v5094, 4
        %v5143 = vsel %vm728, %v5141, %v5142
        %v5144 = vrot.slane %v5095, 4
        %v5145 = vsel %vm728, %v5142, %v5144
        %v5146 = vrot.slane %v5096, 4
        %v5147 = vrot.slane %v5097, 4
        %v5148 = vsel %vm728, %v5146, %v5147
        %v5149 = vrot.slane %v5098, 4
        %v5150 = vsel %vm728, %v5147, %v5149
        %v5151 = vrot.slane %v5099, 4
        %v5152 = vrot.slane %v5100, 4
        %v5153 = vsel %vm728, %v5151, %v5152
        %v5154 = vrot.slane %v5101, 4
        %v5155 = vsel %vm728, %v5152, %v5154
        %v5156 = vrot.slane %v5102, 4
        %v5157 = vrot.slane %v5103, 4
        %v5158 = vsel %vm728, %v5156, %v5157
        %v5159 = vrot.slane %v5104, 4
        %v5160 = vsel %vm728, %v5157, %v5159
        %v5161 = vrot.slane %v5105, 4
        %v5162 = vrot.slane %v5106, 4
        %v5163 = vsel %vm728, %v5161, %v5162
        %v5164 = vrot.slane %v5107, 4
        %v5165 = vsel %vm728, %v5162, %v5164
        %v5166 = vrot.slane %v5108, 4
        %v5167 = vrot.slane %v5109, 4
        %v5168 = vsel %vm728, %v5166, %v5167
        %v5169 = vrot.slane %v5110, 4
        %v5170 = vsel %vm728, %v5167, %v5169
        %v5171 = vrot.slane %v5111, 4
        %v5172 = vrot.slane %v5112, 4
        %v5173 = vsel %vm728, %v5171, %v5172
        %v5174 = vrot.slane %v5113, 4
        %v5175 = vsel %vm728, %v5172, %v5174
        %v5176 = vrot.slane %v5114, 4
        %v5177 = vrot.slane %v5115, 4
        %v5178 = vsel %vm728, %v5176, %v5177
        %v5179 = vrot.slane %v5116, 4
        %v5180 = vsel %vm728, %v5177, %v5179
        %v5205 = vadd.f32 %v5067, %v5141
        %v5206 = vadd.f32 %v5068, %v5143
        %v5207 = vadd.f32 %v5069, %v5145
        %v5208 = vadd.f32 %v5070, %v5146
        %v5209 = vadd.f32 %v5071, %v5148
        %v5210 = vadd.f32 %v5072, %v5150
        %v5211 = vadd.f32 %v5073, %v5151
        %v5212 = vadd.f32 %v5074, %v5153
        %v5213 = vadd.f32 %v5075, %v5155
        %v5214 = vadd.f32 %v5076, %v5156
        %v5215 = vadd.f32 %v5077, %v5158
        %v5216 = vadd.f32 %v5078, %v5160
        %v5217 = vadd.f32 %v5079, %v5161
        %v5218 = vadd.f32 %v5080, %v5163
        %v5219 = vadd.f32 %v5081, %v5165
        %v5220 = vadd.f32 %v5082, %v5166
        %v5221 = vadd.f32 %v5083, %v5168
        %v5222 = vadd.f32 %v5084, %v5170
        %v5223 = vadd.f32 %v5085, %v5171
        %v5224 = vadd.f32 %v5086, %v5173
        %v5225 = vadd.f32 %v5087, %v5175
        %v5226 = vadd.f32 %v5088, %v5176
        %v5227 = vadd.f32 %v5089, %v5178
        %v5228 = vadd.f32 %v5090, %v5180
        %v5229 = vld [vmem:[%s1 + $0x28] sm:$0x1]
        %v5230 = vperm.slane %v5229, 0
        %v5231 = vmul.f32 %v4628, %v5230
        %v5232 = vmul.f32 %v4629, %v5230
        %v5233 = vmul.f32 %v4630, %v5230
        %v5234 = vmul.f32 %v4632, %v5230
        %v5235 = vmul.f32 %v4633, %v5230
        %v5236 = vmul.f32 %v4634, %v5230
        %v5237 = vmul.f32 %v4636, %v5230
        %v5238 = vmul.f32 %v4637, %v5230
        %v5239 = vmul.f32 %v4638, %v5230
        %v5240 = vmul.f32 %v4640, %v5230
        %v5241 = vmul.f32 %v4641, %v5230
        %v5242 = vmul.f32 %v4642, %v5230
        %v5243 = vmul.f32 %v4644, %v5230
        %v5244 = vmul.f32 %v4645, %v5230
        %v5245 = vmul.f32 %v4646, %v5230
        %v5246 = vmul.f32 %v4648, %v5230
        %v5247 = vmul.f32 %v4649, %v5230
        %v5248 = vmul.f32 %v4650, %v5230
        %v5249 = vmul.f32 %v4652, %v5230
        %v5250 = vmul.f32 %v4653, %v5230
        %v5251 = vmul.f32 %v4654, %v5230
        %v5252 = vmul.f32 %v4656, %v5230
        %v5253 = vmul.f32 %v4657, %v5230
        %v5254 = vmul.f32 %v4658, %v5230
        %v5279 = vrot.slane %v5231, 5
        %v5280 = vrot.slane %v5232, 5
        %v5281 = vsel %vm867, %v5279, %v5280
        %v5282 = vrot.slane %v5233, 5
        %v5283 = vsel %vm867, %v5280, %v5282
        %v5284 = vrot.slane %v5234, 5
        %v5285 = vrot.slane %v5235, 5
        %v5286 = vsel %vm867, %v5284, %v5285
        %v5287 = vrot.slane %v5236, 5
        %v5288 = vsel %vm867, %v5285, %v5287
        %v5289 = vrot.slane %v5237, 5
        %v5290 = vrot.slane %v5238, 5
        %v5291 = vsel %vm867, %v5289, %v5290
        %v5292 = vrot.slane %v5239, 5
        %v5293 = vsel %vm867, %v5290, %v5292
        %v5294 = vrot.slane %v5240, 5
        %v5295 = vrot.slane %v5241, 5
        %v5296 = vsel %vm867, %v5294, %v5295
        %v5297 = vrot.slane %v5242, 5
        %v5298 = vsel %vm867, %v5295, %v5297
        %v5299 = vrot.slane %v5243, 5
        %v5300 = vrot.slane %v5244, 5
        %v5301 = vsel %vm867, %v5299, %v5300
        %v5302 = vrot.slane %v5245, 5
        %v5303 = vsel %vm867, %v5300, %v5302
        %v5304 = vrot.slane %v5246, 5
        %v5305 = vrot.slane %v5247, 5
        %v5306 = vsel %vm867, %v5304, %v5305
        %v5307 = vrot.slane %v5248, 5
        %v5308 = vsel %vm867, %v5305, %v5307
        %v5309 = vrot.slane %v5249, 5
        %v5310 = vrot.slane %v5250, 5
        %v5311 = vsel %vm867, %v5309, %v5310
        %v5312 = vrot.slane %v5251, 5
        %v5313 = vsel %vm867, %v5310, %v5312
        %v5314 = vrot.slane %v5252, 5
        %v5315 = vrot.slane %v5253, 5
        %v5316 = vsel %vm867, %v5314, %v5315
        %v5317 = vrot.slane %v5254, 5
        %v5318 = vsel %vm867, %v5315, %v5317
        %v5343 = vadd.f32 %v5205, %v5279
        %v5344 = vadd.f32 %v5206, %v5281
        %v5345 = vadd.f32 %v5207, %v5283
        %v5346 = vadd.f32 %v5208, %v5284
        %v5347 = vadd.f32 %v5209, %v5286
        %v5348 = vadd.f32 %v5210, %v5288
        %v5349 = vadd.f32 %v5211, %v5289
        %v5350 = vadd.f32 %v5212, %v5291
        %v5351 = vadd.f32 %v5213, %v5293
        %v5352 = vadd.f32 %v5214, %v5294
        %v5353 = vadd.f32 %v5215, %v5296
        %v5354 = vadd.f32 %v5216, %v5298
        %v5355 = vadd.f32 %v5217, %v5299
        %v5356 = vadd.f32 %v5218, %v5301
        %v5357 = vadd.f32 %v5219, %v5303
        %v5358 = vadd.f32 %v5220, %v5304
        %v5359 = vadd.f32 %v5221, %v5306
        %v5360 = vadd.f32 %v5222, %v5308
        %v5361 = vadd.f32 %v5223, %v5309
        %v5362 = vadd.f32 %v5224, %v5311
        %v5363 = vadd.f32 %v5225, %v5313
        %v5364 = vadd.f32 %v5226, %v5314
        %v5365 = vadd.f32 %v5227, %v5316
        %v5366 = vadd.f32 %v5228, %v5318
        %v5367 = vld [vmem:[%s1 + $0x29] sm:$0x1]
        %v5368 = vperm.slane %v5367, 0
        %v5369 = vmul.f32 %v4628, %v5368
        %v5370 = vmul.f32 %v4629, %v5368
        %v5371 = vmul.f32 %v4630, %v5368
        %v5372 = vmul.f32 %v4632, %v5368
        %v5373 = vmul.f32 %v4633, %v5368
        %v5374 = vmul.f32 %v4634, %v5368
        %v5375 = vmul.f32 %v4636, %v5368
        %v5376 = vmul.f32 %v4637, %v5368
        %v5377 = vmul.f32 %v4638, %v5368
        %v5378 = vmul.f32 %v4640, %v5368
        %v5379 = vmul.f32 %v4641, %v5368
        %v5380 = vmul.f32 %v4642, %v5368
        %v5381 = vmul.f32 %v4644, %v5368
        %v5382 = vmul.f32 %v4645, %v5368
        %v5383 = vmul.f32 %v4646, %v5368
        %v5384 = vmul.f32 %v4648, %v5368
        %v5385 = vmul.f32 %v4649, %v5368
        %v5386 = vmul.f32 %v4650, %v5368
        %v5387 = vmul.f32 %v4652, %v5368
        %v5388 = vmul.f32 %v4653, %v5368
        %v5389 = vmul.f32 %v4654, %v5368
        %v5390 = vmul.f32 %v4656, %v5368
        %v5391 = vmul.f32 %v4657, %v5368
        %v5392 = vmul.f32 %v4658, %v5368
        %v5417 = vrot.slane %v5369, 6
        %v5418 = vrot.slane %v5370, 6
        %v5419 = vsel %vm1006, %v5417, %v5418
        %v5420 = vrot.slane %v5371, 6
        %v5421 = vsel %vm1006, %v5418, %v5420
        %v5422 = vrot.slane %v5372, 6
        %v5423 = vrot.slane %v5373, 6
        %v5424 = vsel %vm1006, %v5422, %v5423
        %v5425 = vrot.slane %v5374, 6
        %v5426 = vsel %vm1006, %v5423, %v5425
        %v5427 = vrot.slane %v5375, 6
        %v5428 = vrot.slane %v5376, 6
        %v5429 = vsel %vm1006, %v5427, %v5428
        %v5430 = vrot.slane %v5377, 6
        %v5431 = vsel %vm1006, %v5428, %v5430
        %v5432 = vrot.slane %v5378, 6
        %v5433 = vrot.slane %v5379, 6
        %v5434 = vsel %vm1006, %v5432, %v5433
        %v5435 = vrot.slane %v5380, 6
        %v5436 = vsel %vm1006, %v5433, %v5435
        %v5437 = vrot.slane %v5381, 6
        %v5438 = vrot.slane %v5382, 6
        %v5439 = vsel %vm1006, %v5437, %v5438
        %v5440 = vrot.slane %v5383, 6
        %v5441 = vsel %vm1006, %v5438, %v5440
        %v5442 = vrot.slane %v5384, 6
        %v5443 = vrot.slane %v5385, 6
        %v5444 = vsel %vm1006, %v5442, %v5443
        %v5445 = vrot.slane %v5386, 6
        %v5446 = vsel %vm1006, %v5443, %v5445
        %v5447 = vrot.slane %v5387, 6
        %v5448 = vrot.slane %v5388, 6
        %v5449 = vsel %vm1006, %v5447, %v5448
        %v5450 = vrot.slane %v5389, 6
        %v5451 = vsel %vm1006, %v5448, %v5450
        %v5452 = vrot.slane %v5390, 6
        %v5453 = vrot.slane %v5391, 6
        %v5454 = vsel %vm1006, %v5452, %v5453
        %v5455 = vrot.slane %v5392, 6
        %v5456 = vsel %vm1006, %v5453, %v5455
        %v5481 = vadd.f32 %v5343, %v5417
        %v5482 = vadd.f32 %v5344, %v5419
        %v5483 = vadd.f32 %v5345, %v5421
        %v5484 = vadd.f32 %v5346, %v5422
        %v5485 = vadd.f32 %v5347, %v5424
        %v5486 = vadd.f32 %v5348, %v5426
        %v5487 = vadd.f32 %v5349, %v5427
        %v5488 = vadd.f32 %v5350, %v5429
        %v5489 = vadd.f32 %v5351, %v5431
        %v5490 = vadd.f32 %v5352, %v5432
        %v5491 = vadd.f32 %v5353, %v5434
        %v5492 = vadd.f32 %v5354, %v5436
        %v5493 = vadd.f32 %v5355, %v5437
        %v5494 = vadd.f32 %v5356, %v5439
        %v5495 = vadd.f32 %v5357, %v5441
        %v5496 = vadd.f32 %v5358, %v5442
        %v5497 = vadd.f32 %v5359, %v5444
        %v5498 = vadd.f32 %v5360, %v5446
        %v5499 = vadd.f32 %v5361, %v5447
        %v5500 = vadd.f32 %v5362, %v5449
        %v5501 = vadd.f32 %v5363, %v5451
        %v5502 = vadd.f32 %v5364, %v5452
        %v5503 = vadd.f32 %v5365, %v5454
        %v5504 = vadd.f32 %v5366, %v5456
        %s5505 = sadd.s32 %s207, 6
        %s5506 = smul.u32 %s5505, 32
        %s5507 = sadd.s32 %s5506, %s59
        %s5508 = scalar_lea.vmem [#allocation2], %s5507
        %v5509 = vld [vmem:[%s5508] sm:$0xff]
        %v5510 = vld [vmem:[%s5508 + $0x8] sm:$0xff]
        %v5511 = vld [vmem:[%s5508 + $0x10] sm:$0xff]
        %v5512 = vld [vmem:[%s5508 + $0x18] sm:$0x7]
        %v5513 = vld [vmem:[%s5508 + $0x20] sm:$0xff]
        %v5514 = vld [vmem:[%s5508 + $0x28] sm:$0xff]
        %v5515 = vld [vmem:[%s5508 + $0x30] sm:$0xff]
        %v5516 = vld [vmem:[%s5508 + $0x38] sm:$0x7]
        %v5517 = vld [vmem:[%s5508 + $0x40] sm:$0xff]
        %v5518 = vld [vmem:[%s5508 + $0x48] sm:$0xff]
        %v5519 = vld [vmem:[%s5508 + $0x50] sm:$0xff]
        %v5520 = vld [vmem:[%s5508 + $0x58] sm:$0x7]
        %v5521 = vld [vmem:[%s5508 + $0x60] sm:$0xff]
        %v5522 = vld [vmem:[%s5508 + $0x68] sm:$0xff]
        %v5523 = vld [vmem:[%s5508 + $0x70] sm:$0xff]
        %v5524 = vld [vmem:[%s5508 + $0x78] sm:$0x7]
        %v5525 = vld [vmem:[%s5508 + $0x80] sm:$0xff]
        %v5526 = vld [vmem:[%s5508 + $0x88] sm:$0xff]
        %v5527 = vld [vmem:[%s5508 + $0x90] sm:$0xff]
        %v5528 = vld [vmem:[%s5508 + $0x98] sm:$0x7]
        %v5529 = vld [vmem:[%s5508 + $0xa0] sm:$0xff]
        %v5530 = vld [vmem:[%s5508 + $0xa8] sm:$0xff]
        %v5531 = vld [vmem:[%s5508 + $0xb0] sm:$0xff]
        %v5532 = vld [vmem:[%s5508 + $0xb8] sm:$0x7]
        %v5533 = vld [vmem:[%s5508 + $0xc0] sm:$0xff]
        %v5534 = vld [vmem:[%s5508 + $0xc8] sm:$0xff]
        %v5535 = vld [vmem:[%s5508 + $0xd0] sm:$0xff]
        %v5536 = vld [vmem:[%s5508 + $0xd8] sm:$0x7]
        %v5537 = vld [vmem:[%s5508 + $0xe0] sm:$0xff]
        %v5538 = vld [vmem:[%s5508 + $0xe8] sm:$0xff]
        %v5539 = vld [vmem:[%s5508 + $0xf0] sm:$0xff]
        %v5540 = vld [vmem:[%s5508 + $0xf8] sm:$0x7]
        %v5541 = vld [vmem:[%s1 + $0x2a] sm:$0x1]
        %v5542 = vperm.slane %v5541, 0
        %v5543 = vmul.f32 %v5509, %v5542
        %v5544 = vmul.f32 %v5510, %v5542
        %v5545 = vmul.f32 %v5511, %v5542
        %v5546 = vmul.f32 %v5513, %v5542
        %v5547 = vmul.f32 %v5514, %v5542
        %v5548 = vmul.f32 %v5515, %v5542
        %v5549 = vmul.f32 %v5517, %v5542
        %v5550 = vmul.f32 %v5518, %v5542
        %v5551 = vmul.f32 %v5519, %v5542
        %v5552 = vmul.f32 %v5521, %v5542
        %v5553 = vmul.f32 %v5522, %v5542
        %v5554 = vmul.f32 %v5523, %v5542
        %v5555 = vmul.f32 %v5525, %v5542
        %v5556 = vmul.f32 %v5526, %v5542
        %v5557 = vmul.f32 %v5527, %v5542
        %v5558 = vmul.f32 %v5529, %v5542
        %v5559 = vmul.f32 %v5530, %v5542
        %v5560 = vmul.f32 %v5531, %v5542
        %v5561 = vmul.f32 %v5533, %v5542
        %v5562 = vmul.f32 %v5534, %v5542
        %v5563 = vmul.f32 %v5535, %v5542
        %v5564 = vmul.f32 %v5537, %v5542
        %v5565 = vmul.f32 %v5538, %v5542
        %v5566 = vmul.f32 %v5539, %v5542
        %v5567 = vadd.f32 %v5481, %v5543
        %v5568 = vadd.f32 %v5482, %v5544
        %v5569 = vadd.f32 %v5483, %v5545
        %v5570 = vadd.f32 %v5484, %v5546
        %v5571 = vadd.f32 %v5485, %v5547
        %v5572 = vadd.f32 %v5486, %v5548
        %v5573 = vadd.f32 %v5487, %v5549
        %v5574 = vadd.f32 %v5488, %v5550
        %v5575 = vadd.f32 %v5489, %v5551
        %v5576 = vadd.f32 %v5490, %v5552
        %v5577 = vadd.f32 %v5491, %v5553
        %v5578 = vadd.f32 %v5492, %v5554
        %v5579 = vadd.f32 %v5493, %v5555
        %v5580 = vadd.f32 %v5494, %v5556
        %v5581 = vadd.f32 %v5495, %v5557
        %v5582 = vadd.f32 %v5496, %v5558
        %v5583 = vadd.f32 %v5497, %v5559
        %v5584 = vadd.f32 %v5498, %v5560
        %v5585 = vadd.f32 %v5499, %v5561
        %v5586 = vadd.f32 %v5500, %v5562
        %v5587 = vadd.f32 %v5501, %v5563
        %v5588 = vadd.f32 %v5502, %v5564
        %v5589 = vadd.f32 %v5503, %v5565
        %v5590 = vadd.f32 %v5504, %v5566
        %v5591 = vld [vmem:[%s1 + $0x2b] sm:$0x1]
        %v5592 = vperm.slane %v5591, 0
        %v5593 = vmul.f32 %v5509, %v5592
        %v5594 = vmul.f32 %v5510, %v5592
        %v5595 = vmul.f32 %v5511, %v5592
        %v5596 = vmul.f32 %v5513, %v5592
        %v5597 = vmul.f32 %v5514, %v5592
        %v5598 = vmul.f32 %v5515, %v5592
        %v5599 = vmul.f32 %v5517, %v5592
        %v5600 = vmul.f32 %v5518, %v5592
        %v5601 = vmul.f32 %v5519, %v5592
        %v5602 = vmul.f32 %v5521, %v5592
        %v5603 = vmul.f32 %v5522, %v5592
        %v5604 = vmul.f32 %v5523, %v5592
        %v5605 = vmul.f32 %v5525, %v5592
        %v5606 = vmul.f32 %v5526, %v5592
        %v5607 = vmul.f32 %v5527, %v5592
        %v5608 = vmul.f32 %v5529, %v5592
        %v5609 = vmul.f32 %v5530, %v5592
        %v5610 = vmul.f32 %v5531, %v5592
        %v5611 = vmul.f32 %v5533, %v5592
        %v5612 = vmul.f32 %v5534, %v5592
        %v5613 = vmul.f32 %v5535, %v5592
        %v5614 = vmul.f32 %v5537, %v5592
        %v5615 = vmul.f32 %v5538, %v5592
        %v5616 = vmul.f32 %v5539, %v5592
        %v5641 = vrot.slane %v5593, 1
        %v5642 = vrot.slane %v5594, 1
        %v5643 = vsel %vm343, %v5641, %v5642
        %v5644 = vrot.slane %v5595, 1
        %v5645 = vsel %vm343, %v5642, %v5644
        %v5646 = vrot.slane %v5596, 1
        %v5647 = vrot.slane %v5597, 1
        %v5648 = vsel %vm343, %v5646, %v5647
        %v5649 = vrot.slane %v5598, 1
        %v5650 = vsel %vm343, %v5647, %v5649
        %v5651 = vrot.slane %v5599, 1
        %v5652 = vrot.slane %v5600, 1
        %v5653 = vsel %vm343, %v5651, %v5652
        %v5654 = vrot.slane %v5601, 1
        %v5655 = vsel %vm343, %v5652, %v5654
        %v5656 = vrot.slane %v5602, 1
        %v5657 = vrot.slane %v5603, 1
        %v5658 = vsel %vm343, %v5656, %v5657
        %v5659 = vrot.slane %v5604, 1
        %v5660 = vsel %vm343, %v5657, %v5659
        %v5661 = vrot.slane %v5605, 1
        %v5662 = vrot.slane %v5606, 1
        %v5663 = vsel %vm343, %v5661, %v5662
        %v5664 = vrot.slane %v5607, 1
        %v5665 = vsel %vm343, %v5662, %v5664
        %v5666 = vrot.slane %v5608, 1
        %v5667 = vrot.slane %v5609, 1
        %v5668 = vsel %vm343, %v5666, %v5667
        %v5669 = vrot.slane %v5610, 1
        %v5670 = vsel %vm343, %v5667, %v5669
        %v5671 = vrot.slane %v5611, 1
        %v5672 = vrot.slane %v5612, 1
        %v5673 = vsel %vm343, %v5671, %v5672
        %v5674 = vrot.slane %v5613, 1
        %v5675 = vsel %vm343, %v5672, %v5674
        %v5676 = vrot.slane %v5614, 1
        %v5677 = vrot.slane %v5615, 1
        %v5678 = vsel %vm343, %v5676, %v5677
        %v5679 = vrot.slane %v5616, 1
        %v5680 = vsel %vm343, %v5677, %v5679
        %v5705 = vadd.f32 %v5567, %v5643
        %v5706 = vadd.f32 %v5568, %v5645
        %v5707 = vadd.f32 %v5569, %v5644
        %v5708 = vadd.f32 %v5570, %v5648
        %v5709 = vadd.f32 %v5571, %v5650
        %v5710 = vadd.f32 %v5572, %v5649
        %v5711 = vadd.f32 %v5573, %v5653
        %v5712 = vadd.f32 %v5574, %v5655
        %v5713 = vadd.f32 %v5575, %v5654
        %v5714 = vadd.f32 %v5576, %v5658
        %v5715 = vadd.f32 %v5577, %v5660
        %v5716 = vadd.f32 %v5578, %v5659
        %v5717 = vadd.f32 %v5579, %v5663
        %v5718 = vadd.f32 %v5580, %v5665
        %v5719 = vadd.f32 %v5581, %v5664
        %v5720 = vadd.f32 %v5582, %v5668
        %v5721 = vadd.f32 %v5583, %v5670
        %v5722 = vadd.f32 %v5584, %v5669
        %v5723 = vadd.f32 %v5585, %v5673
        %v5724 = vadd.f32 %v5586, %v5675
        %v5725 = vadd.f32 %v5587, %v5674
        %v5726 = vadd.f32 %v5588, %v5678
        %v5727 = vadd.f32 %v5589, %v5680
        %v5728 = vadd.f32 %v5590, %v5679
        %v5729 = vld [vmem:[%s1 + $0x2c] sm:$0x1]
        %v5730 = vperm.slane %v5729, 0
        %v5731 = vmul.f32 %v5509, %v5730
        %v5732 = vmul.f32 %v5510, %v5730
        %v5733 = vmul.f32 %v5511, %v5730
        %v5734 = vmul.f32 %v5513, %v5730
        %v5735 = vmul.f32 %v5514, %v5730
        %v5736 = vmul.f32 %v5515, %v5730
        %v5737 = vmul.f32 %v5517, %v5730
        %v5738 = vmul.f32 %v5518, %v5730
        %v5739 = vmul.f32 %v5519, %v5730
        %v5740 = vmul.f32 %v5521, %v5730
        %v5741 = vmul.f32 %v5522, %v5730
        %v5742 = vmul.f32 %v5523, %v5730
        %v5743 = vmul.f32 %v5525, %v5730
        %v5744 = vmul.f32 %v5526, %v5730
        %v5745 = vmul.f32 %v5527, %v5730
        %v5746 = vmul.f32 %v5529, %v5730
        %v5747 = vmul.f32 %v5530, %v5730
        %v5748 = vmul.f32 %v5531, %v5730
        %v5749 = vmul.f32 %v5533, %v5730
        %v5750 = vmul.f32 %v5534, %v5730
        %v5751 = vmul.f32 %v5535, %v5730
        %v5752 = vmul.f32 %v5537, %v5730
        %v5753 = vmul.f32 %v5538, %v5730
        %v5754 = vmul.f32 %v5539, %v5730
        %v5779 = vrot.slane %v5731, 2
        %v5780 = vrot.slane %v5732, 2
        %v5781 = vsel %vm482, %v5779, %v5780
        %v5782 = vrot.slane %v5733, 2
        %v5783 = vsel %vm482, %v5780, %v5782
        %v5784 = vrot.slane %v5734, 2
        %v5785 = vrot.slane %v5735, 2
        %v5786 = vsel %vm482, %v5784, %v5785
        %v5787 = vrot.slane %v5736, 2
        %v5788 = vsel %vm482, %v5785, %v5787
        %v5789 = vrot.slane %v5737, 2
        %v5790 = vrot.slane %v5738, 2
        %v5791 = vsel %vm482, %v5789, %v5790
        %v5792 = vrot.slane %v5739, 2
        %v5793 = vsel %vm482, %v5790, %v5792
        %v5794 = vrot.slane %v5740, 2
        %v5795 = vrot.slane %v5741, 2
        %v5796 = vsel %vm482, %v5794, %v5795
        %v5797 = vrot.slane %v5742, 2
        %v5798 = vsel %vm482, %v5795, %v5797
        %v5799 = vrot.slane %v5743, 2
        %v5800 = vrot.slane %v5744, 2
        %v5801 = vsel %vm482, %v5799, %v5800
        %v5802 = vrot.slane %v5745, 2
        %v5803 = vsel %vm482, %v5800, %v5802
        %v5804 = vrot.slane %v5746, 2
        %v5805 = vrot.slane %v5747, 2
        %v5806 = vsel %vm482, %v5804, %v5805
        %v5807 = vrot.slane %v5748, 2
        %v5808 = vsel %vm482, %v5805, %v5807
        %v5809 = vrot.slane %v5749, 2
        %v5810 = vrot.slane %v5750, 2
        %v5811 = vsel %vm482, %v5809, %v5810
        %v5812 = vrot.slane %v5751, 2
        %v5813 = vsel %vm482, %v5810, %v5812
        %v5814 = vrot.slane %v5752, 2
        %v5815 = vrot.slane %v5753, 2
        %v5816 = vsel %vm482, %v5814, %v5815
        %v5817 = vrot.slane %v5754, 2
        %v5818 = vsel %vm482, %v5815, %v5817
        %v5843 = vadd.f32 %v5705, %v5781
        %v5844 = vadd.f32 %v5706, %v5783
        %v5845 = vadd.f32 %v5707, %v5782
        %v5846 = vadd.f32 %v5708, %v5786
        %v5847 = vadd.f32 %v5709, %v5788
        %v5848 = vadd.f32 %v5710, %v5787
        %v5849 = vadd.f32 %v5711, %v5791
        %v5850 = vadd.f32 %v5712, %v5793
        %v5851 = vadd.f32 %v5713, %v5792
        %v5852 = vadd.f32 %v5714, %v5796
        %v5853 = vadd.f32 %v5715, %v5798
        %v5854 = vadd.f32 %v5716, %v5797
        %v5855 = vadd.f32 %v5717, %v5801
        %v5856 = vadd.f32 %v5718, %v5803
        %v5857 = vadd.f32 %v5719, %v5802
        %v5858 = vadd.f32 %v5720, %v5806
        %v5859 = vadd.f32 %v5721, %v5808
        %v5860 = vadd.f32 %v5722, %v5807
        %v5861 = vadd.f32 %v5723, %v5811
        %v5862 = vadd.f32 %v5724, %v5813
        %v5863 = vadd.f32 %v5725, %v5812
        %v5864 = vadd.f32 %v5726, %v5816
        %v5865 = vadd.f32 %v5727, %v5818
        %v5866 = vadd.f32 %v5728, %v5817
        %v5867 = vld [vmem:[%s1 + $0x2d] sm:$0x1]
        %v5868 = vperm.slane %v5867, 0
        %v5869 = vmul.f32 %v5510, %v5868
        %v5870 = vmul.f32 %v5511, %v5868
        %v5871 = vmul.f32 %v5514, %v5868
        %v5872 = vmul.f32 %v5515, %v5868
        %v5873 = vmul.f32 %v5518, %v5868
        %v5874 = vmul.f32 %v5519, %v5868
        %v5875 = vmul.f32 %v5522, %v5868
        %v5876 = vmul.f32 %v5523, %v5868
        %v5877 = vmul.f32 %v5526, %v5868
        %v5878 = vmul.f32 %v5527, %v5868
        %v5879 = vmul.f32 %v5530, %v5868
        %v5880 = vmul.f32 %v5531, %v5868
        %v5881 = vmul.f32 %v5534, %v5868
        %v5882 = vmul.f32 %v5535, %v5868
        %v5883 = vmul.f32 %v5538, %v5868
        %v5884 = vmul.f32 %v5539, %v5868
        %v5901 = vrot.slane %v5869, 3
        %v5902 = vrot.slane %v5870, 3
        %v5903 = vsel %vm605, %v5901, %v5902
        %v5904 = vrot.slane %v5871, 3
        %v5905 = vrot.slane %v5872, 3
        %v5906 = vsel %vm605, %v5904, %v5905
        %v5907 = vrot.slane %v5873, 3
        %v5908 = vrot.slane %v5874, 3
        %v5909 = vsel %vm605, %v5907, %v5908
        %v5910 = vrot.slane %v5875, 3
        %v5911 = vrot.slane %v5876, 3
        %v5912 = vsel %vm605, %v5910, %v5911
        %v5913 = vrot.slane %v5877, 3
        %v5914 = vrot.slane %v5878, 3
        %v5915 = vsel %vm605, %v5913, %v5914
        %v5916 = vrot.slane %v5879, 3
        %v5917 = vrot.slane %v5880, 3
        %v5918 = vsel %vm605, %v5916, %v5917
        %v5919 = vrot.slane %v5881, 3
        %v5920 = vrot.slane %v5882, 3
        %v5921 = vsel %vm605, %v5919, %v5920
        %v5922 = vrot.slane %v5883, 3
        %v5923 = vrot.slane %v5884, 3
        %v5924 = vsel %vm605, %v5922, %v5923
        %v5949 = vadd.f32 %v5843, %v5901
        %v5950 = vadd.f32 %v5844, %v5903
        %v5951 = vadd.f32 %v5845, %v5902
        %v5952 = vadd.f32 %v5846, %v5904
        %v5953 = vadd.f32 %v5847, %v5906
        %v5954 = vadd.f32 %v5848, %v5905
        %v5955 = vadd.f32 %v5849, %v5907
        %v5956 = vadd.f32 %v5850, %v5909
        %v5957 = vadd.f32 %v5851, %v5908
        %v5958 = vadd.f32 %v5852, %v5910
        %v5959 = vadd.f32 %v5853, %v5912
        %v5960 = vadd.f32 %v5854, %v5911
        %v5961 = vadd.f32 %v5855, %v5913
        %v5962 = vadd.f32 %v5856, %v5915
        %v5963 = vadd.f32 %v5857, %v5914
        %v5964 = vadd.f32 %v5858, %v5916
        %v5965 = vadd.f32 %v5859, %v5918
        %v5966 = vadd.f32 %v5860, %v5917
        %v5967 = vadd.f32 %v5861, %v5919
        %v5968 = vadd.f32 %v5862, %v5921
        %v5969 = vadd.f32 %v5863, %v5920
        %v5970 = vadd.f32 %v5864, %v5922
        %v5971 = vadd.f32 %v5865, %v5924
        %v5972 = vadd.f32 %v5866, %v5923
        %v5973 = vld [vmem:[%s1 + $0x2e] sm:$0x1]
        %v5974 = vperm.slane %v5973, 0
        %v5975 = vmul.f32 %v5510, %v5974
        %v5976 = vmul.f32 %v5511, %v5974
        %v5977 = vmul.f32 %v5512, %v5974
        %v5978 = vmul.f32 %v5514, %v5974
        %v5979 = vmul.f32 %v5515, %v5974
        %v5980 = vmul.f32 %v5516, %v5974
        %v5981 = vmul.f32 %v5518, %v5974
        %v5982 = vmul.f32 %v5519, %v5974
        %v5983 = vmul.f32 %v5520, %v5974
        %v5984 = vmul.f32 %v5522, %v5974
        %v5985 = vmul.f32 %v5523, %v5974
        %v5986 = vmul.f32 %v5524, %v5974
        %v5987 = vmul.f32 %v5526, %v5974
        %v5988 = vmul.f32 %v5527, %v5974
        %v5989 = vmul.f32 %v5528, %v5974
        %v5990 = vmul.f32 %v5530, %v5974
        %v5991 = vmul.f32 %v5531, %v5974
        %v5992 = vmul.f32 %v5532, %v5974
        %v5993 = vmul.f32 %v5534, %v5974
        %v5994 = vmul.f32 %v5535, %v5974
        %v5995 = vmul.f32 %v5536, %v5974
        %v5996 = vmul.f32 %v5538, %v5974
        %v5997 = vmul.f32 %v5539, %v5974
        %v5998 = vmul.f32 %v5540, %v5974
        %v6023 = vrot.slane %v5975, 4
        %v6024 = vrot.slane %v5976, 4
        %v6025 = vsel %vm728, %v6023, %v6024
        %v6026 = vrot.slane %v5977, 4
        %v6027 = vsel %vm728, %v6024, %v6026
        %v6028 = vrot.slane %v5978, 4
        %v6029 = vrot.slane %v5979, 4
        %v6030 = vsel %vm728, %v6028, %v6029
        %v6031 = vrot.slane %v5980, 4
        %v6032 = vsel %vm728, %v6029, %v6031
        %v6033 = vrot.slane %v5981, 4
        %v6034 = vrot.slane %v5982, 4
        %v6035 = vsel %vm728, %v6033, %v6034
        %v6036 = vrot.slane %v5983, 4
        %v6037 = vsel %vm728, %v6034, %v6036
        %v6038 = vrot.slane %v5984, 4
        %v6039 = vrot.slane %v5985, 4
        %v6040 = vsel %vm728, %v6038, %v6039
        %v6041 = vrot.slane %v5986, 4
        %v6042 = vsel %vm728, %v6039, %v6041
        %v6043 = vrot.slane %v5987, 4
        %v6044 = vrot.slane %v5988, 4
        %v6045 = vsel %vm728, %v6043, %v6044
        %v6046 = vrot.slane %v5989, 4
        %v6047 = vsel %vm728, %v6044, %v6046
        %v6048 = vrot.slane %v5990, 4
        %v6049 = vrot.slane %v5991, 4
        %v6050 = vsel %vm728, %v6048, %v6049
        %v6051 = vrot.slane %v5992, 4
        %v6052 = vsel %vm728, %v6049, %v6051
        %v6053 = vrot.slane %v5993, 4
        %v6054 = vrot.slane %v5994, 4
        %v6055 = vsel %vm728, %v6053, %v6054
        %v6056 = vrot.slane %v5995, 4
        %v6057 = vsel %vm728, %v6054, %v6056
        %v6058 = vrot.slane %v5996, 4
        %v6059 = vrot.slane %v5997, 4
        %v6060 = vsel %vm728, %v6058, %v6059
        %v6061 = vrot.slane %v5998, 4
        %v6062 = vsel %vm728, %v6059, %v6061
        %v6087 = vadd.f32 %v5949, %v6023
        %v6088 = vadd.f32 %v5950, %v6025
        %v6089 = vadd.f32 %v5951, %v6027
        %v6090 = vadd.f32 %v5952, %v6028
        %v6091 = vadd.f32 %v5953, %v6030
        %v6092 = vadd.f32 %v5954, %v6032
        %v6093 = vadd.f32 %v5955, %v6033
        %v6094 = vadd.f32 %v5956, %v6035
        %v6095 = vadd.f32 %v5957, %v6037
        %v6096 = vadd.f32 %v5958, %v6038
        %v6097 = vadd.f32 %v5959, %v6040
        %v6098 = vadd.f32 %v5960, %v6042
        %v6099 = vadd.f32 %v5961, %v6043
        %v6100 = vadd.f32 %v5962, %v6045
        %v6101 = vadd.f32 %v5963, %v6047
        %v6102 = vadd.f32 %v5964, %v6048
        %v6103 = vadd.f32 %v5965, %v6050
        %v6104 = vadd.f32 %v5966, %v6052
        %v6105 = vadd.f32 %v5967, %v6053
        %v6106 = vadd.f32 %v5968, %v6055
        %v6107 = vadd.f32 %v5969, %v6057
        %v6108 = vadd.f32 %v5970, %v6058
        %v6109 = vadd.f32 %v5971, %v6060
        %v6110 = vadd.f32 %v5972, %v6062
        %v6111 = vld [vmem:[%s1 + $0x2f] sm:$0x1]
        %v6112 = vperm.slane %v6111, 0
        %v6113 = vmul.f32 %v5510, %v6112
        %v6114 = vmul.f32 %v5511, %v6112
        %v6115 = vmul.f32 %v5512, %v6112
        %v6116 = vmul.f32 %v5514, %v6112
        %v6117 = vmul.f32 %v5515, %v6112
        %v6118 = vmul.f32 %v5516, %v6112
        %v6119 = vmul.f32 %v5518, %v6112
        %v6120 = vmul.f32 %v5519, %v6112
        %v6121 = vmul.f32 %v5520, %v6112
        %v6122 = vmul.f32 %v5522, %v6112
        %v6123 = vmul.f32 %v5523, %v6112
        %v6124 = vmul.f32 %v5524, %v6112
        %v6125 = vmul.f32 %v5526, %v6112
        %v6126 = vmul.f32 %v5527, %v6112
        %v6127 = vmul.f32 %v5528, %v6112
        %v6128 = vmul.f32 %v5530, %v6112
        %v6129 = vmul.f32 %v5531, %v6112
        %v6130 = vmul.f32 %v5532, %v6112
        %v6131 = vmul.f32 %v5534, %v6112
        %v6132 = vmul.f32 %v5535, %v6112
        %v6133 = vmul.f32 %v5536, %v6112
        %v6134 = vmul.f32 %v5538, %v6112
        %v6135 = vmul.f32 %v5539, %v6112
        %v6136 = vmul.f32 %v5540, %v6112
        %v6161 = vrot.slane %v6113, 5
        %v6162 = vrot.slane %v6114, 5
        %v6163 = vsel %vm867, %v6161, %v6162
        %v6164 = vrot.slane %v6115, 5
        %v6165 = vsel %vm867, %v6162, %v6164
        %v6166 = vrot.slane %v6116, 5
        %v6167 = vrot.slane %v6117, 5
        %v6168 = vsel %vm867, %v6166, %v6167
        %v6169 = vrot.slane %v6118, 5
        %v6170 = vsel %vm867, %v6167, %v6169
        %v6171 = vrot.slane %v6119, 5
        %v6172 = vrot.slane %v6120, 5
        %v6173 = vsel %vm867, %v6171, %v6172
        %v6174 = vrot.slane %v6121, 5
        %v6175 = vsel %vm867, %v6172, %v6174
        %v6176 = vrot.slane %v6122, 5
        %v6177 = vrot.slane %v6123, 5
        %v6178 = vsel %vm867, %v6176, %v6177
        %v6179 = vrot.slane %v6124, 5
        %v6180 = vsel %vm867, %v6177, %v6179
        %v6181 = vrot.slane %v6125, 5
        %v6182 = vrot.slane %v6126, 5
        %v6183 = vsel %vm867, %v6181, %v6182
        %v6184 = vrot.slane %v6127, 5
        %v6185 = vsel %vm867, %v6182, %v6184
        %v6186 = vrot.slane %v6128, 5
        %v6187 = vrot.slane %v6129, 5
        %v6188 = vsel %vm867, %v6186, %v6187
        %v6189 = vrot.slane %v6130, 5
        %v6190 = vsel %vm867, %v6187, %v6189
        %v6191 = vrot.slane %v6131, 5
        %v6192 = vrot.slane %v6132, 5
        %v6193 = vsel %vm867, %v6191, %v6192
        %v6194 = vrot.slane %v6133, 5
        %v6195 = vsel %vm867, %v6192, %v6194
        %v6196 = vrot.slane %v6134, 5
        %v6197 = vrot.slane %v6135, 5
        %v6198 = vsel %vm867, %v6196, %v6197
        %v6199 = vrot.slane %v6136, 5
        %v6200 = vsel %vm867, %v6197, %v6199
        %v6225 = vadd.f32 %v6087, %v6161
        %v6226 = vadd.f32 %v6088, %v6163
        %v6227 = vadd.f32 %v6089, %v6165
        %v6228 = vadd.f32 %v6090, %v6166
        %v6229 = vadd.f32 %v6091, %v6168
        %v6230 = vadd.f32 %v6092, %v6170
        %v6231 = vadd.f32 %v6093, %v6171
        %v6232 = vadd.f32 %v6094, %v6173
        %v6233 = vadd.f32 %v6095, %v6175
        %v6234 = vadd.f32 %v6096, %v6176
        %v6235 = vadd.f32 %v6097, %v6178
        %v6236 = vadd.f32 %v6098, %v6180
        %v6237 = vadd.f32 %v6099, %v6181
        %v6238 = vadd.f32 %v6100, %v6183
        %v6239 = vadd.f32 %v6101, %v6185
        %v6240 = vadd.f32 %v6102, %v6186
        %v6241 = vadd.f32 %v6103, %v6188
        %v6242 = vadd.f32 %v6104, %v6190
        %v6243 = vadd.f32 %v6105, %v6191
        %v6244 = vadd.f32 %v6106, %v6193
        %v6245 = vadd.f32 %v6107, %v6195
        %v6246 = vadd.f32 %v6108, %v6196
        %v6247 = vadd.f32 %v6109, %v6198
        %v6248 = vadd.f32 %v6110, %v6200
        %v6249 = vld [vmem:[%s1 + $0x30] sm:$0x1]
        %v6250 = vperm.slane %v6249, 0
        %v6251 = vmul.f32 %v5510, %v6250
        %v6252 = vmul.f32 %v5511, %v6250
        %v6253 = vmul.f32 %v5512, %v6250
        %v6254 = vmul.f32 %v5514, %v6250
        %v6255 = vmul.f32 %v5515, %v6250
        %v6256 = vmul.f32 %v5516, %v6250
        %v6257 = vmul.f32 %v5518, %v6250
        %v6258 = vmul.f32 %v5519, %v6250
        %v6259 = vmul.f32 %v5520, %v6250
        %v6260 = vmul.f32 %v5522, %v6250
        %v6261 = vmul.f32 %v5523, %v6250
        %v6262 = vmul.f32 %v5524, %v6250
        %v6263 = vmul.f32 %v5526, %v6250
        %v6264 = vmul.f32 %v5527, %v6250
        %v6265 = vmul.f32 %v5528, %v6250
        %v6266 = vmul.f32 %v5530, %v6250
        %v6267 = vmul.f32 %v5531, %v6250
        %v6268 = vmul.f32 %v5532, %v6250
        %v6269 = vmul.f32 %v5534, %v6250
        %v6270 = vmul.f32 %v5535, %v6250
        %v6271 = vmul.f32 %v5536, %v6250
        %v6272 = vmul.f32 %v5538, %v6250
        %v6273 = vmul.f32 %v5539, %v6250
        %v6274 = vmul.f32 %v5540, %v6250
        %v6299 = vrot.slane %v6251, 6
        %v6300 = vrot.slane %v6252, 6
        %v6301 = vsel %vm1006, %v6299, %v6300
        %v6302 = vrot.slane %v6253, 6
        %v6303 = vsel %vm1006, %v6300, %v6302
        %v6304 = vrot.slane %v6254, 6
        %v6305 = vrot.slane %v6255, 6
        %v6306 = vsel %vm1006, %v6304, %v6305
        %v6307 = vrot.slane %v6256, 6
        %v6308 = vsel %vm1006, %v6305, %v6307
        %v6309 = vrot.slane %v6257, 6
        %v6310 = vrot.slane %v6258, 6
        %v6311 = vsel %vm1006, %v6309, %v6310
        %v6312 = vrot.slane %v6259, 6
        %v6313 = vsel %vm1006, %v6310, %v6312
        %v6314 = vrot.slane %v6260, 6
        %v6315 = vrot.slane %v6261, 6
        %v6316 = vsel %vm1006, %v6314, %v6315
        %v6317 = vrot.slane %v6262, 6
        %v6318 = vsel %vm1006, %v6315, %v6317
        %v6319 = vrot.slane %v6263, 6
        %v6320 = vrot.slane %v6264, 6
        %v6321 = vsel %vm1006, %v6319, %v6320
        %v6322 = vrot.slane %v6265, 6
        %v6323 = vsel %vm1006, %v6320, %v6322
        %v6324 = vrot.slane %v6266, 6
        %v6325 = vrot.slane %v6267, 6
        %v6326 = vsel %vm1006, %v6324, %v6325
        %v6327 = vrot.slane %v6268, 6
        %v6328 = vsel %vm1006, %v6325, %v6327
        %v6329 = vrot.slane %v6269, 6
        %v6330 = vrot.slane %v6270, 6
        %v6331 = vsel %vm1006, %v6329, %v6330
        %v6332 = vrot.slane %v6271, 6
        %v6333 = vsel %vm1006, %v6330, %v6332
        %v6334 = vrot.slane %v6272, 6
        %v6335 = vrot.slane %v6273, 6
        %v6336 = vsel %vm1006, %v6334, %v6335
        %v6337 = vrot.slane %v6274, 6
        %v6338 = vsel %vm1006, %v6335, %v6337
        %v6363 = vadd.f32 %v6225, %v6299
        %v6364 = vadd.f32 %v6226, %v6301
        %v6365 = vadd.f32 %v6227, %v6303
        %v6366 = vadd.f32 %v6228, %v6304
        %v6367 = vadd.f32 %v6229, %v6306
        %v6368 = vadd.f32 %v6230, %v6308
        %v6369 = vadd.f32 %v6231, %v6309
        %v6370 = vadd.f32 %v6232, %v6311
        %v6371 = vadd.f32 %v6233, %v6313
        %v6372 = vadd.f32 %v6234, %v6314
        %v6373 = vadd.f32 %v6235, %v6316
        %v6374 = vadd.f32 %v6236, %v6318
        %v6375 = vadd.f32 %v6237, %v6319
        %v6376 = vadd.f32 %v6238, %v6321
        %v6377 = vadd.f32 %v6239, %v6323
        %v6378 = vadd.f32 %v6240, %v6324
        %v6379 = vadd.f32 %v6241, %v6326
        %v6380 = vadd.f32 %v6242, %v6328
        %v6381 = vadd.f32 %v6243, %v6329
        %v6382 = vadd.f32 %v6244, %v6331
        %v6383 = vadd.f32 %v6245, %v6333
        %v6384 = vadd.f32 %v6246, %v6334
        %v6385 = vadd.f32 %v6247, %v6336
        %v6386 = vadd.f32 %v6248, %v6338
        %v6387 = vld [vmem:[%s2] sm:$0x1]
        %v6389 = vperm.slane %v6387, 0
        %v6391 = vadd.f32 %v6363, %v6389
        %v6392 = vadd.f32 %v6364, %v6389
        %v6393 = vadd.f32 %v6365, %v6389
        %v6394 = vadd.f32 %v6366, %v6389
        %v6395 = vadd.f32 %v6367, %v6389
        %v6396 = vadd.f32 %v6368, %v6389
        %v6397 = vadd.f32 %v6369, %v6389
        %v6398 = vadd.f32 %v6370, %v6389
        %v6399 = vadd.f32 %v6371, %v6389
        %v6400 = vadd.f32 %v6372, %v6389
        %v6401 = vadd.f32 %v6373, %v6389
        %v6402 = vadd.f32 %v6374, %v6389
        %v6403 = vadd.f32 %v6375, %v6389
        %v6404 = vadd.f32 %v6376, %v6389
        %v6405 = vadd.f32 %v6377, %v6389
        %v6406 = vadd.f32 %v6378, %v6389
        %v6407 = vadd.f32 %v6379, %v6389
        %v6408 = vadd.f32 %v6380, %v6389
        %v6409 = vadd.f32 %v6381, %v6389
        %v6410 = vadd.f32 %v6382, %v6389
        %v6411 = vadd.f32 %v6383, %v6389
        %v6412 = vadd.f32 %v6384, %v6389
        %v6413 = vadd.f32 %v6385, %v6389
        %v6414 = vadd.f32 %v6386, %v6389
        %v6439 = vrot.slane %v6391, 5
        %v6440 = vrot.slane %v6392, 5
        %v6441 = vsel %vm867, %v6439, %v6440
        %v6442 = vrot.slane %v6393, 5
        %v6443 = vsel %vm867, %v6440, %v6442
        %v6444 = vrot.slane %v6394, 5
        %v6445 = vrot.slane %v6395, 5
        %v6446 = vsel %vm867, %v6444, %v6445
        %v6447 = vrot.slane %v6396, 5
        %v6448 = vsel %vm867, %v6445, %v6447
        %v6449 = vrot.slane %v6397, 5
        %v6450 = vrot.slane %v6398, 5
        %v6451 = vsel %vm867, %v6449, %v6450
        %v6452 = vrot.slane %v6399, 5
        %v6453 = vsel %vm867, %v6450, %v6452
        %v6454 = vrot.slane %v6400, 5
        %v6455 = vrot.slane %v6401, 5
        %v6456 = vsel %vm867, %v6454, %v6455
        %v6457 = vrot.slane %v6402, 5
        %v6458 = vsel %vm867, %v6455, %v6457
        %v6459 = vrot.slane %v6403, 5
        %v6460 = vrot.slane %v6404, 5
        %v6461 = vsel %vm867, %v6459, %v6460
        %v6462 = vrot.slane %v6405, 5
        %v6463 = vsel %vm867, %v6460, %v6462
        %v6464 = vrot.slane %v6406, 5
        %v6465 = vrot.slane %v6407, 5
        %v6466 = vsel %vm867, %v6464, %v6465
        %v6467 = vrot.slane %v6408, 5
        %v6468 = vsel %vm867, %v6465, %v6467
        %v6469 = vrot.slane %v6409, 5
        %v6470 = vrot.slane %v6410, 5
        %v6471 = vsel %vm867, %v6469, %v6470
        %v6472 = vrot.slane %v6411, 5
        %v6473 = vsel %vm867, %v6470, %v6472
        %v6474 = vrot.slane %v6412, 5
        %v6475 = vrot.slane %v6413, 5
        %v6476 = vsel %vm867, %v6474, %v6475
        %v6477 = vrot.slane %v6414, 5
        %v6478 = vsel %vm867, %v6475, %v6477
        %v6495 = vsel %vm61, %v6441, 0.0
        %6496 = vadd.xlane.f32.xlu0 %v6495
        %v6497 = vpop.xlane.xlu0 %6496
        %v6498 = vsel %vm61, %v6443, 0.0
        %6499 = vadd.xlane.f32.xlu0 %v6498
        %v6500 = vpop.xlane.xlu0 %6499
        %v6501 = vsel %vm61, %v6446, 0.0
        %6502 = vadd.xlane.f32.xlu0 %v6501
        %v6503 = vpop.xlane.xlu0 %6502
        %v6504 = vsel %vm61, %v6448, 0.0
        %6505 = vadd.xlane.f32.xlu0 %v6504
        %v6506 = vpop.xlane.xlu0 %6505
        %v6507 = vsel %vm61, %v6451, 0.0
        %6508 = vadd.xlane.f32.xlu0 %v6507
        %v6509 = vpop.xlane.xlu0 %6508
        %v6510 = vsel %vm61, %v6453, 0.0
        %6511 = vadd.xlane.f32.xlu0 %v6510
        %v6512 = vpop.xlane.xlu0 %6511
        %v6513 = vsel %vm61, %v6456, 0.0
        %6514 = vadd.xlane.f32.xlu0 %v6513
        %v6515 = vpop.xlane.xlu0 %6514
        %v6516 = vsel %vm61, %v6458, 0.0
        %6517 = vadd.xlane.f32.xlu0 %v6516
        %v6518 = vpop.xlane.xlu0 %6517
        %v6519 = vsel %vm61, %v6461, 0.0
        %6520 = vadd.xlane.f32.xlu0 %v6519
        %v6521 = vpop.xlane.xlu0 %6520
        %v6522 = vsel %vm61, %v6463, 0.0
        %6523 = vadd.xlane.f32.xlu0 %v6522
        %v6524 = vpop.xlane.xlu0 %6523
        %v6525 = vsel %vm61, %v6466, 0.0
        %6526 = vadd.xlane.f32.xlu0 %v6525
        %v6527 = vpop.xlane.xlu0 %6526
        %v6528 = vsel %vm61, %v6468, 0.0
        %6529 = vadd.xlane.f32.xlu0 %v6528
        %v6530 = vpop.xlane.xlu0 %6529
        %v6531 = vsel %vm61, %v6471, 0.0
        %6532 = vadd.xlane.f32.xlu0 %v6531
        %v6533 = vpop.xlane.xlu0 %6532
        %v6534 = vsel %vm61, %v6473, 0.0
        %6535 = vadd.xlane.f32.xlu0 %v6534
        %v6536 = vpop.xlane.xlu0 %6535
        %v6537 = vsel %vm61, %v6476, 0.0
        %6538 = vadd.xlane.f32.xlu0 %v6537
        %v6539 = vpop.xlane.xlu0 %6538
        %v6540 = vsel %vm61, %v6478, 0.0
        %6541 = vadd.xlane.f32.xlu0 %v6540
        %v6542 = vpop.xlane.xlu0 %6541
        %v6543 = vrcp.pop 32.0
        %v6544 = vmul.f32 32.0, %v6543
        %v6545 = vsub.f32 1.0, %v6544
        %v6546 = vmul.f32 %v6543, %v6545
        %v6547 = vadd.f32 %v6543, %v6546
        %vm6548 = vweird.f32 %v6543
        %v6549 = vsel %vm6548, %v6543, %v6547
        %v6550 = vmul.f32 %v6497, %v6549
        %v6551 = vmul.f32 %v6500, %v6549
        %v6552 = vmul.f32 %v6503, %v6549
        %v6553 = vmul.f32 %v6506, %v6549
        %v6554 = vmul.f32 %v6509, %v6549
        %v6555 = vmul.f32 %v6512, %v6549
        %v6556 = vmul.f32 %v6515, %v6549
        %v6557 = vmul.f32 %v6518, %v6549
        %v6558 = vmul.f32 %v6521, %v6549
        %v6559 = vmul.f32 %v6524, %v6549
        %v6560 = vmul.f32 %v6527, %v6549
        %v6561 = vmul.f32 %v6530, %v6549
        %v6562 = vmul.f32 %v6533, %v6549
        %v6563 = vmul.f32 %v6536, %v6549
        %v6564 = vmul.f32 %v6539, %v6549
        %v6565 = vmul.f32 %v6542, %v6549
        %v6566 = vsub.f32 %v6441, %v6550
        %v6567 = vsub.f32 %v6443, %v6551
        %v6568 = vsub.f32 %v6446, %v6552
        %v6569 = vsub.f32 %v6448, %v6553
        %v6570 = vsub.f32 %v6451, %v6554
        %v6571 = vsub.f32 %v6453, %v6555
        %v6572 = vsub.f32 %v6456, %v6556
        %v6573 = vsub.f32 %v6458, %v6557
        %v6574 = vsub.f32 %v6461, %v6558
        %v6575 = vsub.f32 %v6463, %v6559
        %v6576 = vsub.f32 %v6466, %v6560
        %v6577 = vsub.f32 %v6468, %v6561
        %v6578 = vsub.f32 %v6471, %v6562
        %v6579 = vsub.f32 %v6473, %v6563
        %v6580 = vsub.f32 %v6476, %v6564
        %v6581 = vsub.f32 %v6478, %v6565
        %v6582 = vmul.f32 %v6566, %v6566
        %v6583 = vmul.f32 %v6567, %v6567
        %v6584 = vmul.f32 %v6568, %v6568
        %v6585 = vmul.f32 %v6569, %v6569
        %v6586 = vmul.f32 %v6570, %v6570
        %v6587 = vmul.f32 %v6571, %v6571
        %v6588 = vmul.f32 %v6572, %v6572
        %v6589 = vmul.f32 %v6573, %v6573
        %v6590 = vmul.f32 %v6574, %v6574
        %v6591 = vmul.f32 %v6575, %v6575
        %v6592 = vmul.f32 %v6576, %v6576
        %v6593 = vmul.f32 %v6577, %v6577
        %v6594 = vmul.f32 %v6578, %v6578
        %v6595 = vmul.f32 %v6579, %v6579
        %v6596 = vmul.f32 %v6580, %v6580
        %v6597 = vmul.f32 %v6581, %v6581
        %v6598 = vsel %vm61, %v6582, 0.0
        %6599 = vadd.xlane.f32.xlu0 %v6598
        %v6600 = vpop.xlane.xlu0 %6599
        %v6601 = vsel %vm61, %v6583, 0.0
        %6602 = vadd.xlane.f32.xlu0 %v6601
        %v6603 = vpop.xlane.xlu0 %6602
        %v6604 = vsel %vm61, %v6584, 0.0
        %6605 = vadd.xlane.f32.xlu0 %v6604
        %v6606 = vpop.xlane.xlu0 %6605
        %v6607 = vsel %vm61, %v6585, 0.0
        %6608 = vadd.xlane.f32.xlu0 %v6607
        %v6609 = vpop.xlane.xlu0 %6608
        %v6610 = vsel %vm61, %v6586, 0.0
        %6611 = vadd.xlane.f32.xlu0 %v6610
        %v6612 = vpop.xlane.xlu0 %6611
        %v6613 = vsel %vm61, %v6587, 0.0
        %6614 = vadd.xlane.f32.xlu0 %v6613
        %v6615 = vpop.xlane.xlu0 %6614
        %v6616 = vsel %vm61, %v6588, 0.0
        %6617 = vadd.xlane.f32.xlu0 %v6616
        %v6618 = vpop.xlane.xlu0 %6617
        %v6619 = vsel %vm61, %v6589, 0.0
        %6620 = vadd.xlane.f32.xlu0 %v6619
        %v6621 = vpop.xlane.xlu0 %6620
        %v6622 = vsel %vm61, %v6590, 0.0
        %6623 = vadd.xlane.f32.xlu0 %v6622
        %v6624 = vpop.xlane.xlu0 %6623
        %v6625 = vsel %vm61, %v6591, 0.0
        %6626 = vadd.xlane.f32.xlu0 %v6625
        %v6627 = vpop.xlane.xlu0 %6626
        %v6628 = vsel %vm61, %v6592, 0.0
        %6629 = vadd.xlane.f32.xlu0 %v6628
        %v6630 = vpop.xlane.xlu0 %6629
        %v6631 = vsel %vm61, %v6593, 0.0
        %6632 = vadd.xlane.f32.xlu0 %v6631
        %v6633 = vpop.xlane.xlu0 %6632
        %v6634 = vsel %vm61, %v6594, 0.0
        %6635 = vadd.xlane.f32.xlu0 %v6634
        %v6636 = vpop.xlane.xlu0 %6635
        %v6637 = vsel %vm61, %v6595, 0.0
        %6638 = vadd.xlane.f32.xlu0 %v6637
        %v6639 = vpop.xlane.xlu0 %6638
        %v6640 = vsel %vm61, %v6596, 0.0
        %6641 = vadd.xlane.f32.xlu0 %v6640
        %v6642 = vpop.xlane.xlu0 %6641
        %v6643 = vsel %vm61, %v6597, 0.0
        %6644 = vadd.xlane.f32.xlu0 %v6643
        %v6645 = vpop.xlane.xlu0 %6644
        %v6646 = vmul.f32 %v6600, %v6549
        %v6647 = vmul.f32 %v6603, %v6549
        %v6648 = vmul.f32 %v6606, %v6549
        %v6649 = vmul.f32 %v6609, %v6549
        %v6650 = vmul.f32 %v6612, %v6549
        %v6651 = vmul.f32 %v6615, %v6549
        %v6652 = vmul.f32 %v6618, %v6549
        %v6653 = vmul.f32 %v6621, %v6549
        %v6654 = vmul.f32 %v6624, %v6549
        %v6655 = vmul.f32 %v6627, %v6549
        %v6656 = vmul.f32 %v6630, %v6549
        %v6657 = vmul.f32 %v6633, %v6549
        %v6658 = vmul.f32 %v6636, %v6549
        %v6659 = vmul.f32 %v6639, %v6549
        %v6660 = vmul.f32 %v6642, %v6549
        %v6661 = vmul.f32 %v6645, %v6549
        %v6662 = vadd.f32 %v6646, 1e-06
        %v6663 = vadd.f32 %v6647, 1e-06
        %v6664 = vadd.f32 %v6648, 1e-06
        %v6665 = vadd.f32 %v6649, 1e-06
        %v6666 = vadd.f32 %v6650, 1e-06
        %v6667 = vadd.f32 %v6651, 1e-06
        %v6668 = vadd.f32 %v6652, 1e-06
        %v6669 = vadd.f32 %v6653, 1e-06
        %v6670 = vadd.f32 %v6654, 1e-06
        %v6671 = vadd.f32 %v6655, 1e-06
        %v6672 = vadd.f32 %v6656, 1e-06
        %v6673 = vadd.f32 %v6657, 1e-06
        %v6674 = vadd.f32 %v6658, 1e-06
        %v6675 = vadd.f32 %v6659, 1e-06
        %v6676 = vadd.f32 %v6660, 1e-06
        %v6677 = vadd.f32 %v6661, 1e-06
        %v6678 = vrsqrt.pop %v6662
        %v6679 = vmul.f32 %v6678, %v6662
        %v6680 = vmul.f32 %v6679, %v6678
        %v6681 = vmul.f32 0.5, %v6680
        %v6682 = vsub.f32 1.5, %v6681
        %v6683 = vmul.f32 %v6678, %v6682
        %vm6684 = vweird.f32 %v6662
        %vm6685 = vweird.f32 %v6678
        %vm6686 = vmor %vm6684, %vm6685
        %v6687 = vsel %vm6686, %v6678, %v6683
        %v6688 = vrsqrt.pop %v6663
        %v6689 = vmul.f32 %v6688, %v6663
        %v6690 = vmul.f32 %v6689, %v6688
        %v6691 = vmul.f32 0.5, %v6690
        %v6692 = vsub.f32 1.5, %v6691
        %v6693 = vmul.f32 %v6688, %v6692
        %vm6694 = vweird.f32 %v6663
        %vm6695 = vweird.f32 %v6688
        %vm6696 = vmor %vm6694, %vm6695
        %v6697 = vsel %vm6696, %v6688, %v6693
        %v6698 = vrsqrt.pop %v6664
        %v6699 = vmul.f32 %v6698, %v6664
        %v6700 = vmul.f32 %v6699, %v6698
        %v6701 = vmul.f32 0.5, %v6700
        %v6702 = vsub.f32 1.5, %v6701
        %v6703 = vmul.f32 %v6698, %v6702
        %vm6704 = vweird.f32 %v6664
        %vm6705 = vweird.f32 %v6698
        %vm6706 = vmor %vm6704, %vm6705
        %v6707 = vsel %vm6706, %v6698, %v6703
        %v6708 = vrsqrt.pop %v6665
        %v6709 = vmul.f32 %v6708, %v6665
        %v6710 = vmul.f32 %v6709, %v6708
        %v6711 = vmul.f32 0.5, %v6710
        %v6712 = vsub.f32 1.5, %v6711
        %v6713 = vmul.f32 %v6708, %v6712
        %vm6714 = vweird.f32 %v6665
        %vm6715 = vweird.f32 %v6708
        %vm6716 = vmor %vm6714, %vm6715
        %v6717 = vsel %vm6716, %v6708, %v6713
        %v6718 = vrsqrt.pop %v6666
        %v6719 = vmul.f32 %v6718, %v6666
        %v6720 = vmul.f32 %v6719, %v6718
        %v6721 = vmul.f32 0.5, %v6720
        %v6722 = vsub.f32 1.5, %v6721
        %v6723 = vmul.f32 %v6718, %v6722
        %vm6724 = vweird.f32 %v6666
        %vm6725 = vweird.f32 %v6718
        %vm6726 = vmor %vm6724, %vm6725
        %v6727 = vsel %vm6726, %v6718, %v6723
        %v6728 = vrsqrt.pop %v6667
        %v6729 = vmul.f32 %v6728, %v6667
        %v6730 = vmul.f32 %v6729, %v6728
        %v6731 = vmul.f32 0.5, %v6730
        %v6732 = vsub.f32 1.5, %v6731
        %v6733 = vmul.f32 %v6728, %v6732
        %vm6734 = vweird.f32 %v6667
        %vm6735 = vweird.f32 %v6728
        %vm6736 = vmor %vm6734, %vm6735
        %v6737 = vsel %vm6736, %v6728, %v6733
        %v6738 = vrsqrt.pop %v6668
        %v6739 = vmul.f32 %v6738, %v6668
        %v6740 = vmul.f32 %v6739, %v6738
        %v6741 = vmul.f32 0.5, %v6740
        %v6742 = vsub.f32 1.5, %v6741
        %v6743 = vmul.f32 %v6738, %v6742
        %vm6744 = vweird.f32 %v6668
        %vm6745 = vweird.f32 %v6738
        %vm6746 = vmor %vm6744, %vm6745
        %v6747 = vsel %vm6746, %v6738, %v6743
        %v6748 = vrsqrt.pop %v6669
        %v6749 = vmul.f32 %v6748, %v6669
        %v6750 = vmul.f32 %v6749, %v6748
        %v6751 = vmul.f32 0.5, %v6750
        %v6752 = vsub.f32 1.5, %v6751
        %v6753 = vmul.f32 %v6748, %v6752
        %vm6754 = vweird.f32 %v6669
        %vm6755 = vweird.f32 %v6748
        %vm6756 = vmor %vm6754, %vm6755
        %v6757 = vsel %vm6756, %v6748, %v6753
        %v6758 = vrsqrt.pop %v6670
        %v6759 = vmul.f32 %v6758, %v6670
        %v6760 = vmul.f32 %v6759, %v6758
        %v6761 = vmul.f32 0.5, %v6760
        %v6762 = vsub.f32 1.5, %v6761
        %v6763 = vmul.f32 %v6758, %v6762
        %vm6764 = vweird.f32 %v6670
        %vm6765 = vweird.f32 %v6758
        %vm6766 = vmor %vm6764, %vm6765
        %v6767 = vsel %vm6766, %v6758, %v6763
        %v6768 = vrsqrt.pop %v6671
        %v6769 = vmul.f32 %v6768, %v6671
        %v6770 = vmul.f32 %v6769, %v6768
        %v6771 = vmul.f32 0.5, %v6770
        %v6772 = vsub.f32 1.5, %v6771
        %v6773 = vmul.f32 %v6768, %v6772
        %vm6774 = vweird.f32 %v6671
        %vm6775 = vweird.f32 %v6768
        %vm6776 = vmor %vm6774, %vm6775
        %v6777 = vsel %vm6776, %v6768, %v6773
        %v6778 = vrsqrt.pop %v6672
        %v6779 = vmul.f32 %v6778, %v6672
        %v6780 = vmul.f32 %v6779, %v6778
        %v6781 = vmul.f32 0.5, %v6780
        %v6782 = vsub.f32 1.5, %v6781
        %v6783 = vmul.f32 %v6778, %v6782
        %vm6784 = vweird.f32 %v6672
        %vm6785 = vweird.f32 %v6778
        %vm6786 = vmor %vm6784, %vm6785
        %v6787 = vsel %vm6786, %v6778, %v6783
        %v6788 = vrsqrt.pop %v6673
        %v6789 = vmul.f32 %v6788, %v6673
        %v6790 = vmul.f32 %v6789, %v6788
        %v6791 = vmul.f32 0.5, %v6790
        %v6792 = vsub.f32 1.5, %v6791
        %v6793 = vmul.f32 %v6788, %v6792
        %vm6794 = vweird.f32 %v6673
        %vm6795 = vweird.f32 %v6788
        %vm6796 = vmor %vm6794, %vm6795
        %v6797 = vsel %vm6796, %v6788, %v6793
        %v6798 = vrsqrt.pop %v6674
        %v6799 = vmul.f32 %v6798, %v6674
        %v6800 = vmul.f32 %v6799, %v6798
        %v6801 = vmul.f32 0.5, %v6800
        %v6802 = vsub.f32 1.5, %v6801
        %v6803 = vmul.f32 %v6798, %v6802
        %vm6804 = vweird.f32 %v6674
        %vm6805 = vweird.f32 %v6798
        %vm6806 = vmor %vm6804, %vm6805
        %v6807 = vsel %vm6806, %v6798, %v6803
        %v6808 = vrsqrt.pop %v6675
        %v6809 = vmul.f32 %v6808, %v6675
        %v6810 = vmul.f32 %v6809, %v6808
        %v6811 = vmul.f32 0.5, %v6810
        %v6812 = vsub.f32 1.5, %v6811
        %v6813 = vmul.f32 %v6808, %v6812
        %vm6814 = vweird.f32 %v6675
        %vm6815 = vweird.f32 %v6808
        %vm6816 = vmor %vm6814, %vm6815
        %v6817 = vsel %vm6816, %v6808, %v6813
        %v6818 = vrsqrt.pop %v6676
        %v6819 = vmul.f32 %v6818, %v6676
        %v6820 = vmul.f32 %v6819, %v6818
        %v6821 = vmul.f32 0.5, %v6820
        %v6822 = vsub.f32 1.5, %v6821
        %v6823 = vmul.f32 %v6818, %v6822
        %vm6824 = vweird.f32 %v6676
        %vm6825 = vweird.f32 %v6818
        %vm6826 = vmor %vm6824, %vm6825
        %v6827 = vsel %vm6826, %v6818, %v6823
        %v6828 = vrsqrt.pop %v6677
        %v6829 = vmul.f32 %v6828, %v6677
        %v6830 = vmul.f32 %v6829, %v6828
        %v6831 = vmul.f32 0.5, %v6830
        %v6832 = vsub.f32 1.5, %v6831
        %v6833 = vmul.f32 %v6828, %v6832
        %vm6834 = vweird.f32 %v6677
        %vm6835 = vweird.f32 %v6828
        %vm6836 = vmor %vm6834, %vm6835
        %v6837 = vsel %vm6836, %v6828, %v6833
        %v6838 = vmul.f32 %v6566, %v6687
        %v6839 = vmul.f32 %v6567, %v6697
        %v6840 = vmul.f32 %v6568, %v6707
        %v6841 = vmul.f32 %v6569, %v6717
        %v6842 = vmul.f32 %v6570, %v6727
        %v6843 = vmul.f32 %v6571, %v6737
        %v6844 = vmul.f32 %v6572, %v6747
        %v6845 = vmul.f32 %v6573, %v6757
        %v6846 = vmul.f32 %v6574, %v6767
        %v6847 = vmul.f32 %v6575, %v6777
        %v6848 = vmul.f32 %v6576, %v6787
        %v6849 = vmul.f32 %v6577, %v6797
        %v6850 = vmul.f32 %v6578, %v6807
        %v6851 = vmul.f32 %v6579, %v6817
        %v6852 = vmul.f32 %v6580, %v6827
        %v6853 = vmul.f32 %v6581, %v6837
        %v6854 = vld [vmem:[%s3] sm:$0x1]
        %v6856 = vperm.slane %v6854, 0
        %v6858 = vmul.f32 %v6838, %v6856
        %v6859 = vmul.f32 %v6839, %v6856
        %v6860 = vmul.f32 %v6840, %v6856
        %v6861 = vmul.f32 %v6841, %v6856
        %v6862 = vmul.f32 %v6842, %v6856
        %v6863 = vmul.f32 %v6843, %v6856
        %v6864 = vmul.f32 %v6844, %v6856
        %v6865 = vmul.f32 %v6845, %v6856
        %v6866 = vmul.f32 %v6846, %v6856
        %v6867 = vmul.f32 %v6847, %v6856
        %v6868 = vmul.f32 %v6848, %v6856
        %v6869 = vmul.f32 %v6849, %v6856
        %v6870 = vmul.f32 %v6850, %v6856
        %v6871 = vmul.f32 %v6851, %v6856
        %v6872 = vmul.f32 %v6852, %v6856
        %v6873 = vmul.f32 %v6853, %v6856
        %v6874 = vld [vmem:[%s4] sm:$0x1]
        %v6876 = vperm.slane %v6874, 0
        %v6878 = vadd.f32 %v6858, %v6876
        %v6879 = vadd.f32 %v6859, %v6876
        %v6880 = vadd.f32 %v6860, %v6876
        %v6881 = vadd.f32 %v6861, %v6876
        %v6882 = vadd.f32 %v6862, %v6876
        %v6883 = vadd.f32 %v6863, %v6876
        %v6884 = vadd.f32 %v6864, %v6876
        %v6885 = vadd.f32 %v6865, %v6876
        %v6886 = vadd.f32 %v6866, %v6876
        %v6887 = vadd.f32 %v6867, %v6876
        %v6888 = vadd.f32 %v6868, %v6876
        %v6889 = vadd.f32 %v6869, %v6876
        %v6890 = vadd.f32 %v6870, %v6876
        %v6891 = vadd.f32 %v6871, %v6876
        %v6892 = vadd.f32 %v6872, %v6876
        %v6893 = vadd.f32 %v6873, %v6876
        %s6894 = smul.u32 %s54, 16
        %s6895 = sadd.s32 %s6894, %s207
        %s6896 = smul.u32 %s6895, 16
        %v6897 = vpack.c.bf16 %v6878, %v6878
        %v6898 = vpack.c.bf16 %v6879, %v6879
        %v6899 = vpack.c.bf16 %v6880, %v6880
        %v6900 = vpack.c.bf16 %v6881, %v6881
        %v6901 = vpack.c.bf16 %v6882, %v6882
        %v6902 = vpack.c.bf16 %v6883, %v6883
        %v6903 = vpack.c.bf16 %v6884, %v6884
        %v6904 = vpack.c.bf16 %v6885, %v6885
        %v6905 = vpack.c.bf16 %v6886, %v6886
        %v6906 = vpack.c.bf16 %v6887, %v6887
        %v6907 = vpack.c.bf16 %v6888, %v6888
        %v6908 = vpack.c.bf16 %v6889, %v6889
        %v6909 = vpack.c.bf16 %v6890, %v6890
        %v6910 = vpack.c.bf16 %v6891, %v6891
        %v6911 = vpack.c.bf16 %v6892, %v6892
        %v6912 = vpack.c.bf16 %v6893, %v6893
        %s6913 = sshra.s32 %s6896, 3
        %s6914 = sand.u32 %s6896, 7
        %s6915 = smul.addr %s6913, 4
        %s6916 = scalar_lea.vmem [#allocation3], %s6915
        %vm6917 = vcmask 257024
        %6918 = vst.msk [vmem:[%s6916] sm:$0xf] %vm6917, %v6897
        %6919 = vst.msk [vmem:[%s6916 + $0x4] sm:$0xf] %vm6917, %v6898
        %6920 = vst.msk [vmem:[%s6916 + $0x8] sm:$0xf] %vm6917, %v6899
        %6921 = vst.msk [vmem:[%s6916 + $0xc] sm:$0xf] %vm6917, %v6900
        %6922 = vst.msk [vmem:[%s6916 + $0x10] sm:$0xf] %vm6917, %v6901
        %6923 = vst.msk [vmem:[%s6916 + $0x14] sm:$0xf] %vm6917, %v6902
        %6924 = vst.msk [vmem:[%s6916 + $0x18] sm:$0xf] %vm6917, %v6903
        %6925 = vst.msk [vmem:[%s6916 + $0x1c] sm:$0xf] %vm6917, %v6904
        %6926 = vst.msk [vmem:[%s6916 + $0x20] sm:$0xf] %vm6917, %v6905
        %6927 = vst.msk [vmem:[%s6916 + $0x24] sm:$0xf] %vm6917, %v6906
        %6928 = vst.msk [vmem:[%s6916 + $0x28] sm:$0xf] %vm6917, %v6907
        %6929 = vst.msk [vmem:[%s6916 + $0x2c] sm:$0xf] %vm6917, %v6908
        %6930 = vst.msk [vmem:[%s6916 + $0x30] sm:$0xf] %vm6917, %v6909
        %6931 = vst.msk [vmem:[%s6916 + $0x34] sm:$0xf] %vm6917, %v6910
        %6932 = vst.msk [vmem:[%s6916 + $0x38] sm:$0xf] %vm6917, %v6911
        %6933 = vst.msk [vmem:[%s6916 + $0x3c] sm:$0xf] %vm6917, %v6912
      $region57: #{block_forward.1} parent=49 // loop_footer
        %s206 = sadd.s32 1, %s202
      $region58: #{block_forward.1} parent=49 // loop_footer_branch
        %201 = sbr.rel target = $region54
      $region59: #{block_forward.1} parent=49 // loop_exit
        _
    $region50: #{block_forward.1} parent=1 // loop_footer
      %s58 = sadd.s32 1, %s54
    $region51: #{block_forward.1} parent=1 // loop_footer_branch
      %53 = sbr.rel target = $region47
    $region52: #{block_forward.1} parent=1 // loop_exit
      _
    %v6934 = vld [vmem:[#allocation3] sm:$0xf]
    %v6935 = vld [vmem:[#allocation3 + $0x4] sm:$0xf]
    %v6936 = vld [vmem:[#allocation3 + $0x8] sm:$0xf]
    %v6937 = vld [vmem:[#allocation3 + $0xc] sm:$0xf]
    %v6938 = vld [vmem:[#allocation3 + $0x10] sm:$0xf]
    %v6939 = vld [vmem:[#allocation3 + $0x14] sm:$0xf]
    %v6940 = vld [vmem:[#allocation3 + $0x18] sm:$0xf]
    %v6941 = vld [vmem:[#allocation3 + $0x1c] sm:$0xf]
    %v6942 = vld [vmem:[#allocation3 + $0x20] sm:$0xf]
    %v6943 = vld [vmem:[#allocation3 + $0x24] sm:$0xf]
    %v6944 = vld [vmem:[#allocation3 + $0x28] sm:$0xf]
    %v6945 = vld [vmem:[#allocation3 + $0x2c] sm:$0xf]
    %v6946 = vld [vmem:[#allocation3 + $0x30] sm:$0xf]
    %v6947 = vld [vmem:[#allocation3 + $0x34] sm:$0xf]
    %v6948 = vld [vmem:[#allocation3 + $0x38] sm:$0xf]
    %v6949 = vld [vmem:[#allocation3 + $0x3c] sm:$0xf]
    %v6950 = vld [vmem:[#allocation3 + $0x40] sm:$0xf]
    %v6951 = vld [vmem:[#allocation3 + $0x44] sm:$0xf]
    %v6952 = vld [vmem:[#allocation3 + $0x48] sm:$0xf]
    %v6953 = vld [vmem:[#allocation3 + $0x4c] sm:$0xf]
    %v6954 = vld [vmem:[#allocation3 + $0x50] sm:$0xf]
    %v6955 = vld [vmem:[#allocation3 + $0x54] sm:$0xf]
    %v6956 = vld [vmem:[#allocation3 + $0x58] sm:$0xf]
    %v6957 = vld [vmem:[#allocation3 + $0x5c] sm:$0xf]
    %v6958 = vld [vmem:[#allocation3 + $0x60] sm:$0xf]
    %v6959 = vld [vmem:[#allocation3 + $0x64] sm:$0xf]
    %v6960 = vld [vmem:[#allocation3 + $0x68] sm:$0xf]
    %v6961 = vld [vmem:[#allocation3 + $0x6c] sm:$0xf]
    %v6962 = vld [vmem:[#allocation3 + $0x70] sm:$0xf]
    %v6963 = vld [vmem:[#allocation3 + $0x74] sm:$0xf]
    %v6964 = vld [vmem:[#allocation3 + $0x78] sm:$0xf]
    %v6965 = vld [vmem:[#allocation3 + $0x7c] sm:$0xf]
    %v6966 = vld [vmem:[#allocation3 + $0x80] sm:$0xf]
    %v6967 = vld [vmem:[#allocation3 + $0x84] sm:$0xf]
    %v6968 = vld [vmem:[#allocation3 + $0x88] sm:$0xf]
    %v6969 = vld [vmem:[#allocation3 + $0x8c] sm:$0xf]
    %v6970 = vld [vmem:[#allocation3 + $0x90] sm:$0xf]
    %v6971 = vld [vmem:[#allocation3 + $0x94] sm:$0xf]
    %v6972 = vld [vmem:[#allocation3 + $0x98] sm:$0xf]
    %v6973 = vld [vmem:[#allocation3 + $0x9c] sm:$0xf]
    %v6974 = vld [vmem:[#allocation3 + $0xa0] sm:$0xf]
    %v6975 = vld [vmem:[#allocation3 + $0xa4] sm:$0xf]
    %v6976 = vld [vmem:[#allocation3 + $0xa8] sm:$0xf]
    %v6977 = vld [vmem:[#allocation3 + $0xac] sm:$0xf]
    %v6978 = vld [vmem:[#allocation3 + $0xb0] sm:$0xf]
    %v6979 = vld [vmem:[#allocation3 + $0xb4] sm:$0xf]
    %v6980 = vld [vmem:[#allocation3 + $0xb8] sm:$0xf]
    %v6981 = vld [vmem:[#allocation3 + $0xbc] sm:$0xf]
    %v6982 = vld [vmem:[#allocation3 + $0xc0] sm:$0xf]
    %v6983 = vld [vmem:[#allocation3 + $0xc4] sm:$0xf]
    %v6984 = vld [vmem:[#allocation3 + $0xc8] sm:$0xf]
    %v6985 = vld [vmem:[#allocation3 + $0xcc] sm:$0xf]
    %v6986 = vld [vmem:[#allocation3 + $0xd0] sm:$0xf]
    %v6987 = vld [vmem:[#allocation3 + $0xd4] sm:$0xf]
    %v6988 = vld [vmem:[#allocation3 + $0xd8] sm:$0xf]
    %v6989 = vld [vmem:[#allocation3 + $0xdc] sm:$0xf]
    %v6990 = vld [vmem:[#allocation3 + $0xe0] sm:$0xf]
    %v6991 = vld [vmem:[#allocation3 + $0xe4] sm:$0xf]
    %v6992 = vld [vmem:[#allocation3 + $0xe8] sm:$0xf]
    %v6993 = vld [vmem:[#allocation3 + $0xec] sm:$0xf]
    %v6994 = vld [vmem:[#allocation3 + $0xf0] sm:$0xf]
    %v6995 = vld [vmem:[#allocation3 + $0xf4] sm:$0xf]
    %v6996 = vld [vmem:[#allocation3 + $0xf8] sm:$0xf]
    %v6997 = vld [vmem:[#allocation3 + $0xfc] sm:$0xf]
    %v6998 = vld [vmem:[%s5] sm:$0xf]
    %v6999 = vld [vmem:[%s5 + $0x4] sm:$0xf]
    %v7000 = vld [vmem:[%s5 + $0x8] sm:$0xf]
    %v7001 = vld [vmem:[%s5 + $0xc] sm:$0xf]
    %v7002 = vld [vmem:[%s6] sm:$0x1]
    %v7004 = vperm.slane %v7002, 0
    %v7070 = vunpack.c.l.b16 %v6934
    %v7071 = vunpack.c.l.b16 %v6935
    %v7072 = vunpack.c.l.b16 %v6936
    %v7073 = vunpack.c.l.b16 %v6937
    %v7074 = vunpack.c.l.b16 %v6938
    %v7075 = vunpack.c.l.b16 %v6939
    %v7076 = vunpack.c.l.b16 %v6940
    %v7077 = vunpack.c.l.b16 %v6941
    %v7078 = vunpack.c.l.b16 %v6942
    %v7079 = vunpack.c.l.b16 %v6943
    %v7080 = vunpack.c.l.b16 %v6944
    %v7081 = vunpack.c.l.b16 %v6945
    %v7082 = vunpack.c.l.b16 %v6946
    %v7083 = vunpack.c.l.b16 %v6947
    %v7084 = vunpack.c.l.b16 %v6948
    %v7085 = vunpack.c.l.b16 %v6949
    %v7086 = vunpack.c.l.b16 %v6950
    %v7087 = vunpack.c.l.b16 %v6951
    %v7088 = vunpack.c.l.b16 %v6952
    %v7089 = vunpack.c.l.b16 %v6953
    %v7090 = vunpack.c.l.b16 %v6954
    %v7091 = vunpack.c.l.b16 %v6955
    %v7092 = vunpack.c.l.b16 %v6956
    %v7093 = vunpack.c.l.b16 %v6957
    %v7094 = vunpack.c.l.b16 %v6958
    %v7095 = vunpack.c.l.b16 %v6959
    %v7096 = vunpack.c.l.b16 %v6960
    %v7097 = vunpack.c.l.b16 %v6961
    %v7098 = vunpack.c.l.b16 %v6962
    %v7099 = vunpack.c.l.b16 %v6963
    %v7100 = vunpack.c.l.b16 %v6964
    %v7101 = vunpack.c.l.b16 %v6965
    %v7102 = vunpack.c.l.b16 %v6966
    %v7103 = vunpack.c.l.b16 %v6967
    %v7104 = vunpack.c.l.b16 %v6968
    %v7105 = vunpack.c.l.b16 %v6969
    %v7106 = vunpack.c.l.b16 %v6970
    %v7107 = vunpack.c.l.b16 %v6971
    %v7108 = vunpack.c.l.b16 %v6972
    %v7109 = vunpack.c.l.b16 %v6973
    %v7110 = vunpack.c.l.b16 %v6974
    %v7111 = vunpack.c.l.b16 %v6975
    %v7112 = vunpack.c.l.b16 %v6976
    %v7113 = vunpack.c.l.b16 %v6977
    %v7114 = vunpack.c.l.b16 %v6978
    %v7115 = vunpack.c.l.b16 %v6979
    %v7116 = vunpack.c.l.b16 %v6980
    %v7117 = vunpack.c.l.b16 %v6981
    %v7118 = vunpack.c.l.b16 %v6982
    %v7119 = vunpack.c.l.b16 %v6983
    %v7120 = vunpack.c.l.b16 %v6984
    %v7121 = vunpack.c.l.b16 %v6985
    %v7122 = vunpack.c.l.b16 %v6986
    %v7123 = vunpack.c.l.b16 %v6987
    %v7124 = vunpack.c.l.b16 %v6988
    %v7125 = vunpack.c.l.b16 %v6989
    %v7126 = vunpack.c.l.b16 %v6990
    %v7127 = vunpack.c.l.b16 %v6991
    %v7128 = vunpack.c.l.b16 %v6992
    %v7129 = vunpack.c.l.b16 %v6993
    %v7130 = vunpack.c.l.b16 %v6994
    %v7131 = vunpack.c.l.b16 %v6995
    %v7132 = vunpack.c.l.b16 %v6996
    %v7133 = vunpack.c.l.b16 %v6997
    %v7134 = vpack.c.b16 %v7071, %v7070
    %v7135 = vpack.c.b16 %v7073, %v7072
    %v7136 = vpack.c.b16 %v7075, %v7074
    %v7137 = vpack.c.b16 %v7077, %v7076
    %v7138 = vpack.c.b16 %v7079, %v7078
    %v7139 = vpack.c.b16 %v7081, %v7080
    %v7140 = vpack.c.b16 %v7083, %v7082
    %v7141 = vpack.c.b16 %v7085, %v7084
    %v7142 = vpack.c.b16 %v7087, %v7086
    %v7143 = vpack.c.b16 %v7089, %v7088
    %v7144 = vpack.c.b16 %v7091, %v7090
    %v7145 = vpack.c.b16 %v7093, %v7092
    %v7146 = vpack.c.b16 %v7095, %v7094
    %v7147 = vpack.c.b16 %v7097, %v7096
    %v7148 = vpack.c.b16 %v7099, %v7098
    %v7149 = vpack.c.b16 %v7101, %v7100
    %v7150 = vpack.c.b16 %v7103, %v7102
    %v7151 = vpack.c.b16 %v7105, %v7104
    %v7152 = vpack.c.b16 %v7107, %v7106
    %v7153 = vpack.c.b16 %v7109, %v7108
    %v7154 = vpack.c.b16 %v7111, %v7110
    %v7155 = vpack.c.b16 %v7113, %v7112
    %v7156 = vpack.c.b16 %v7115, %v7114
    %v7157 = vpack.c.b16 %v7117, %v7116
    %v7158 = vpack.c.b16 %v7119, %v7118
    %v7159 = vpack.c.b16 %v7121, %v7120
    %v7160 = vpack.c.b16 %v7123, %v7122
    %v7161 = vpack.c.b16 %v7125, %v7124
    %v7162 = vpack.c.b16 %v7127, %v7126
    %v7163 = vpack.c.b16 %v7129, %v7128
    %v7164 = vpack.c.b16 %v7131, %v7130
    %v7165 = vpack.c.b16 %v7133, %v7132
    %v7170 = vunpack.c.l.b16 %v6998
    %v7171 = vunpack.c.l.b16 %v6999
    %v7172 = vunpack.c.l.b16 %v7000
    %v7173 = vunpack.c.l.b16 %v7001
    %v7174 = vpack.c.b16 %v7171, %v7170
    %v7175 = vpack.c.b16 %v7173, %v7172
    %vm7178 = vcmask 261120
    %v7180 = vsel %vm7178, %v7134, 0
    %v7183 = vsel %vm7178, %v7135, 0
    %v7186 = vsel %vm7178, %v7136, 0
    %v7189 = vsel %vm7178, %v7137, 0
    %v7192 = vsel %vm7178, %v7138, 0
    %v7195 = vsel %vm7178, %v7139, 0
    %v7198 = vsel %vm7178, %v7140, 0
    %v7201 = vsel %vm7178, %v7141, 0
    %v7204 = vsel %vm7178, %v7142, 0
    %v7207 = vsel %vm7178, %v7143, 0
    %v7210 = vsel %vm7178, %v7144, 0
    %v7213 = vsel %vm7178, %v7145, 0
    %v7216 = vsel %vm7178, %v7146, 0
    %v7219 = vsel %vm7178, %v7147, 0
    %v7222 = vsel %vm7178, %v7148, 0
    %v7225 = vsel %vm7178, %v7149, 0
    %v7228 = vsel %vm7178, %v7150, 0
    %v7231 = vsel %vm7178, %v7151, 0
    %v7234 = vsel %vm7178, %v7152, 0
    %v7237 = vsel %vm7178, %v7153, 0
    %v7240 = vsel %vm7178, %v7154, 0
    %v7243 = vsel %vm7178, %v7155, 0
    %v7246 = vsel %vm7178, %v7156, 0
    %v7249 = vsel %vm7178, %v7157, 0
    %v7252 = vsel %vm7178, %v7158, 0
    %v7255 = vsel %vm7178, %v7159, 0
    %v7258 = vsel %vm7178, %v7160, 0
    %v7261 = vsel %vm7178, %v7161, 0
    %v7264 = vsel %vm7178, %v7162, 0
    %v7267 = vsel %vm7178, %v7163, 0
    %v7270 = vsel %vm7178, %v7164, 0
    %v7273 = vsel %vm7178, %v7165, 0
    %7275 = vmatpush.bf16.msra.mxu0 0
    %7276 = vmatpush.bf16.msra.mxu0 0
    %7277 = vmatpush.bf16.msra.mxu0 0
    %7278 = vmatpush.bf16.msra.mxu0 0
    %7279 = vmatpush.bf16.msra.mxu0 0
    %7280 = vmatpush.bf16.msra.mxu0 0
    %7281 = vmatpush.bf16.msra.mxu0 %v7175
    %7282 = vmatpush.bf16.msra.mxu0 %v7174
    %7283 = vmatmul.bf16.gmra.mxu0 %v7180
    %v7284 = vpop.f32.mrf.mxu0
    %v7285 = vadd.f32 %v7004, %v7284
    %v7286 = vpop.f32.mrf.mxu0
    %v7287 = vadd.f32 %v7004, %v7286
    %7288 = vmatmul.bf16.gmra.mxu0 %v7183
    %v7289 = vpop.f32.mrf.mxu0
    %v7290 = vadd.f32 %v7004, %v7289
    %v7291 = vpop.f32.mrf.mxu0
    %v7292 = vadd.f32 %v7004, %v7291
    %7293 = vmatmul.bf16.gmra.mxu0 %v7186
    %v7294 = vpop.f32.mrf.mxu0
    %v7295 = vadd.f32 %v7004, %v7294
    %v7296 = vpop.f32.mrf.mxu0
    %v7297 = vadd.f32 %v7004, %v7296
    %7298 = vmatmul.bf16.gmra.mxu0 %v7189
    %v7299 = vpop.f32.mrf.mxu0
    %v7300 = vadd.f32 %v7004, %v7299
    %v7301 = vpop.f32.mrf.mxu0
    %v7302 = vadd.f32 %v7004, %v7301
    %7303 = vmatmul.bf16.gmra.mxu0 %v7192
    %v7304 = vpop.f32.mrf.mxu0
    %v7305 = vadd.f32 %v7004, %v7304
    %v7306 = vpop.f32.mrf.mxu0
    %v7307 = vadd.f32 %v7004, %v7306
    %7308 = vmatmul.bf16.gmra.mxu0 %v7195
    %v7309 = vpop.f32.mrf.mxu0
    %v7310 = vadd.f32 %v7004, %v7309
    %v7311 = vpop.f32.mrf.mxu0
    %v7312 = vadd.f32 %v7004, %v7311
    %7313 = vmatmul.bf16.gmra.mxu0 %v7198
    %v7314 = vpop.f32.mrf.mxu0
    %v7315 = vadd.f32 %v7004, %v7314
    %v7316 = vpop.f32.mrf.mxu0
    %v7317 = vadd.f32 %v7004, %v7316
    %7318 = vmatmul.bf16.gmra.mxu0 %v7201
    %v7319 = vpop.f32.mrf.mxu0
    %v7320 = vadd.f32 %v7004, %v7319
    %v7321 = vpop.f32.mrf.mxu0
    %v7322 = vadd.f32 %v7004, %v7321
    %7323 = vmatmul.bf16.gmra.mxu0 %v7204
    %v7324 = vpop.f32.mrf.mxu0
    %v7325 = vadd.f32 %v7004, %v7324
    %v7326 = vpop.f32.mrf.mxu0
    %v7327 = vadd.f32 %v7004, %v7326
    %7328 = vmatmul.bf16.gmra.mxu0 %v7207
    %v7329 = vpop.f32.mrf.mxu0
    %v7330 = vadd.f32 %v7004, %v7329
    %v7331 = vpop.f32.mrf.mxu0
    %v7332 = vadd.f32 %v7004, %v7331
    %7333 = vmatmul.bf16.gmra.mxu0 %v7210
    %v7334 = vpop.f32.mrf.mxu0
    %v7335 = vadd.f32 %v7004, %v7334
    %v7336 = vpop.f32.mrf.mxu0
    %v7337 = vadd.f32 %v7004, %v7336
    %7338 = vmatmul.bf16.gmra.mxu0 %v7213
    %v7339 = vpop.f32.mrf.mxu0
    %v7340 = vadd.f32 %v7004, %v7339
    %v7341 = vpop.f32.mrf.mxu0
    %v7342 = vadd.f32 %v7004, %v7341
    %7343 = vmatmul.bf16.gmra.mxu0 %v7216
    %v7344 = vpop.f32.mrf.mxu0
    %v7345 = vadd.f32 %v7004, %v7344
    %v7346 = vpop.f32.mrf.mxu0
    %v7347 = vadd.f32 %v7004, %v7346
    %7348 = vmatmul.bf16.gmra.mxu0 %v7219
    %v7349 = vpop.f32.mrf.mxu0
    %v7350 = vadd.f32 %v7004, %v7349
    %v7351 = vpop.f32.mrf.mxu0
    %v7352 = vadd.f32 %v7004, %v7351
    %7353 = vmatmul.bf16.gmra.mxu0 %v7222
    %v7354 = vpop.f32.mrf.mxu0
    %v7355 = vadd.f32 %v7004, %v7354
    %v7356 = vpop.f32.mrf.mxu0
    %v7357 = vadd.f32 %v7004, %v7356
    %7358 = vmatmul.bf16.gmra.mxu0 %v7225
    %v7359 = vpop.f32.mrf.mxu0
    %v7360 = vadd.f32 %v7004, %v7359
    %v7361 = vpop.f32.mrf.mxu0
    %v7362 = vadd.f32 %v7004, %v7361
    %7363 = vmatmul.bf16.gmra.mxu0 %v7228
    %v7364 = vpop.f32.mrf.mxu0
    %v7365 = vadd.f32 %v7004, %v7364
    %v7366 = vpop.f32.mrf.mxu0
    %v7367 = vadd.f32 %v7004, %v7366
    %7368 = vmatmul.bf16.gmra.mxu0 %v7231
    %v7369 = vpop.f32.mrf.mxu0
    %v7370 = vadd.f32 %v7004, %v7369
    %v7371 = vpop.f32.mrf.mxu0
    %v7372 = vadd.f32 %v7004, %v7371
    %7373 = vmatmul.bf16.gmra.mxu0 %v7234
    %v7374 = vpop.f32.mrf.mxu0
    %v7375 = vadd.f32 %v7004, %v7374
    %v7376 = vpop.f32.mrf.mxu0
    %v7377 = vadd.f32 %v7004, %v7376
    %7378 = vmatmul.bf16.gmra.mxu0 %v7237
    %v7379 = vpop.f32.mrf.mxu0
    %v7380 = vadd.f32 %v7004, %v7379
    %v7381 = vpop.f32.mrf.mxu0
    %v7382 = vadd.f32 %v7004, %v7381
    %7383 = vmatmul.bf16.gmra.mxu0 %v7240
    %v7384 = vpop.f32.mrf.mxu0
    %v7385 = vadd.f32 %v7004, %v7384
    %v7386 = vpop.f32.mrf.mxu0
    %v7387 = vadd.f32 %v7004, %v7386
    %7388 = vmatmul.bf16.gmra.mxu0 %v7243
    %v7389 = vpop.f32.mrf.mxu0
    %v7390 = vadd.f32 %v7004, %v7389
    %v7391 = vpop.f32.mrf.mxu0
    %v7392 = vadd.f32 %v7004, %v7391
    %7393 = vmatmul.bf16.gmra.mxu0 %v7246
    %v7394 = vpop.f32.mrf.mxu0
    %v7395 = vadd.f32 %v7004, %v7394
    %v7396 = vpop.f32.mrf.mxu0
    %v7397 = vadd.f32 %v7004, %v7396
    %7398 = vmatmul.bf16.gmra.mxu0 %v7249
    %v7399 = vpop.f32.mrf.mxu0
    %v7400 = vadd.f32 %v7004, %v7399
    %v7401 = vpop.f32.mrf.mxu0
    %v7402 = vadd.f32 %v7004, %v7401
    %7403 = vmatmul.bf16.gmra.mxu0 %v7252
    %v7404 = vpop.f32.mrf.mxu0
    %v7405 = vadd.f32 %v7004, %v7404
    %v7406 = vpop.f32.mrf.mxu0
    %v7407 = vadd.f32 %v7004, %v7406
    %7408 = vmatmul.bf16.gmra.mxu0 %v7255
    %v7409 = vpop.f32.mrf.mxu0
    %v7410 = vadd.f32 %v7004, %v7409
    %v7411 = vpop.f32.mrf.mxu0
    %v7412 = vadd.f32 %v7004, %v7411
    %7413 = vmatmul.bf16.gmra.mxu0 %v7258
    %v7414 = vpop.f32.mrf.mxu0
    %v7415 = vadd.f32 %v7004, %v7414
    %v7416 = vpop.f32.mrf.mxu0
    %v7417 = vadd.f32 %v7004, %v7416
    %7418 = vmatmul.bf16.gmra.mxu0 %v7261
    %v7419 = vpop.f32.mrf.mxu0
    %v7420 = vadd.f32 %v7004, %v7419
    %v7421 = vpop.f32.mrf.mxu0
    %v7422 = vadd.f32 %v7004, %v7421
    %7423 = vmatmul.bf16.gmra.mxu0 %v7264
    %v7424 = vpop.f32.mrf.mxu0
    %v7425 = vadd.f32 %v7004, %v7424
    %v7426 = vpop.f32.mrf.mxu0
    %v7427 = vadd.f32 %v7004, %v7426
    %7428 = vmatmul.bf16.gmra.mxu0 %v7267
    %v7429 = vpop.f32.mrf.mxu0
    %v7430 = vadd.f32 %v7004, %v7429
    %v7431 = vpop.f32.mrf.mxu0
    %v7432 = vadd.f32 %v7004, %v7431
    %7433 = vmatmul.bf16.gmra.mxu0 %v7270
    %v7434 = vpop.f32.mrf.mxu0
    %v7435 = vadd.f32 %v7004, %v7434
    %v7436 = vpop.f32.mrf.mxu0
    %v7437 = vadd.f32 %v7004, %v7436
    %7438 = vmatmul.bf16.gmra.mxu0 %v7273
    %v7439 = vpop.f32.mrf.mxu0
    %v7440 = vadd.f32 %v7004, %v7439
    %v7441 = vpop.f32.mrf.mxu0
    %v7442 = vadd.f32 %v7004, %v7441
    %7443 = vdwg.mxu0
    %v7444 = vmul.f32 %v7285, 0.5
    %v7445 = vmul.f32 %v7287, 0.5
    %v7446 = vmul.f32 %v7290, 0.5
    %v7447 = vmul.f32 %v7292, 0.5
    %v7448 = vmul.f32 %v7295, 0.5
    %v7449 = vmul.f32 %v7297, 0.5
    %v7450 = vmul.f32 %v7300, 0.5
    %v7451 = vmul.f32 %v7302, 0.5
    %v7452 = vmul.f32 %v7305, 0.5
    %v7453 = vmul.f32 %v7307, 0.5
    %v7454 = vmul.f32 %v7310, 0.5
    %v7455 = vmul.f32 %v7312, 0.5
    %v7456 = vmul.f32 %v7315, 0.5
    %v7457 = vmul.f32 %v7317, 0.5
    %v7458 = vmul.f32 %v7320, 0.5
    %v7459 = vmul.f32 %v7322, 0.5
    %v7460 = vmul.f32 %v7325, 0.5
    %v7461 = vmul.f32 %v7327, 0.5
    %v7462 = vmul.f32 %v7330, 0.5
    %v7463 = vmul.f32 %v7332, 0.5
    %v7464 = vmul.f32 %v7335, 0.5
    %v7465 = vmul.f32 %v7337, 0.5
    %v7466 = vmul.f32 %v7340, 0.5
    %v7467 = vmul.f32 %v7342, 0.5
    %v7468 = vmul.f32 %v7345, 0.5
    %v7469 = vmul.f32 %v7347, 0.5
    %v7470 = vmul.f32 %v7350, 0.5
    %v7471 = vmul.f32 %v7352, 0.5
    %v7472 = vmul.f32 %v7355, 0.5
    %v7473 = vmul.f32 %v7357, 0.5
    %v7474 = vmul.f32 %v7360, 0.5
    %v7475 = vmul.f32 %v7362, 0.5
    %v7476 = vmul.f32 %v7365, 0.5
    %v7477 = vmul.f32 %v7367, 0.5
    %v7478 = vmul.f32 %v7370, 0.5
    %v7479 = vmul.f32 %v7372, 0.5
    %v7480 = vmul.f32 %v7375, 0.5
    %v7481 = vmul.f32 %v7377, 0.5
    %v7482 = vmul.f32 %v7380, 0.5
    %v7483 = vmul.f32 %v7382, 0.5
    %v7484 = vmul.f32 %v7385, 0.5
    %v7485 = vmul.f32 %v7387, 0.5
    %v7486 = vmul.f32 %v7390, 0.5
    %v7487 = vmul.f32 %v7392, 0.5
    %v7488 = vmul.f32 %v7395, 0.5
    %v7489 = vmul.f32 %v7397, 0.5
    %v7490 = vmul.f32 %v7400, 0.5
    %v7491 = vmul.f32 %v7402, 0.5
    %v7492 = vmul.f32 %v7405, 0.5
    %v7493 = vmul.f32 %v7407, 0.5
    %v7494 = vmul.f32 %v7410, 0.5
    %v7495 = vmul.f32 %v7412, 0.5
    %v7496 = vmul.f32 %v7415, 0.5
    %v7497 = vmul.f32 %v7417, 0.5
    %v7498 = vmul.f32 %v7420, 0.5
    %v7499 = vmul.f32 %v7422, 0.5
    %v7500 = vmul.f32 %v7425, 0.5
    %v7501 = vmul.f32 %v7427, 0.5
    %v7502 = vmul.f32 %v7430, 0.5
    %v7503 = vmul.f32 %v7432, 0.5
    %v7504 = vmul.f32 %v7435, 0.5
    %v7505 = vmul.f32 %v7437, 0.5
    %v7506 = vmul.f32 %v7440, 0.5
    %v7507 = vmul.f32 %v7442, 0.5
    %v7508 = vmul.f32 %v7285, 0.044715
    %v7509 = vmul.f32 %v7287, 0.044715
    %v7510 = vmul.f32 %v7290, 0.044715
    %v7511 = vmul.f32 %v7292, 0.044715
    %v7512 = vmul.f32 %v7295, 0.044715
    %v7513 = vmul.f32 %v7297, 0.044715
    %v7514 = vmul.f32 %v7300, 0.044715
    %v7515 = vmul.f32 %v7302, 0.044715
    %v7516 = vmul.f32 %v7305, 0.044715
    %v7517 = vmul.f32 %v7307, 0.044715
    %v7518 = vmul.f32 %v7310, 0.044715
    %v7519 = vmul.f32 %v7312, 0.044715
    %v7520 = vmul.f32 %v7315, 0.044715
    %v7521 = vmul.f32 %v7317, 0.044715
    %v7522 = vmul.f32 %v7320, 0.044715
    %v7523 = vmul.f32 %v7322, 0.044715
    %v7524 = vmul.f32 %v7325, 0.044715
    %v7525 = vmul.f32 %v7327, 0.044715
    %v7526 = vmul.f32 %v7330, 0.044715
    %v7527 = vmul.f32 %v7332, 0.044715
    %v7528 = vmul.f32 %v7335, 0.044715
    %v7529 = vmul.f32 %v7337, 0.044715
    %v7530 = vmul.f32 %v7340, 0.044715
    %v7531 = vmul.f32 %v7342, 0.044715
    %v7532 = vmul.f32 %v7345, 0.044715
    %v7533 = vmul.f32 %v7347, 0.044715
    %v7534 = vmul.f32 %v7350, 0.044715
    %v7535 = vmul.f32 %v7352, 0.044715
    %v7536 = vmul.f32 %v7355, 0.044715
    %v7537 = vmul.f32 %v7357, 0.044715
    %v7538 = vmul.f32 %v7360, 0.044715
    %v7539 = vmul.f32 %v7362, 0.044715
    %v7540 = vmul.f32 %v7365, 0.044715
    %v7541 = vmul.f32 %v7367, 0.044715
    %v7542 = vmul.f32 %v7370, 0.044715
    %v7543 = vmul.f32 %v7372, 0.044715
    %v7544 = vmul.f32 %v7375, 0.044715
    %v7545 = vmul.f32 %v7377, 0.044715
    %v7546 = vmul.f32 %v7380, 0.044715
    %v7547 = vmul.f32 %v7382, 0.044715
    %v7548 = vmul.f32 %v7385, 0.044715
    %v7549 = vmul.f32 %v7387, 0.044715
    %v7550 = vmul.f32 %v7390, 0.044715
    %v7551 = vmul.f32 %v7392, 0.044715
    %v7552 = vmul.f32 %v7395, 0.044715
    %v7553 = vmul.f32 %v7397, 0.044715
    %v7554 = vmul.f32 %v7400, 0.044715
    %v7555 = vmul.f32 %v7402, 0.044715
    %v7556 = vmul.f32 %v7405, 0.044715
    %v7557 = vmul.f32 %v7407, 0.044715
    %v7558 = vmul.f32 %v7410, 0.044715
    %v7559 = vmul.f32 %v7412, 0.044715
    %v7560 = vmul.f32 %v7415, 0.044715
    %v7561 = vmul.f32 %v7417, 0.044715
    %v7562 = vmul.f32 %v7420, 0.044715
    %v7563 = vmul.f32 %v7422, 0.044715
    %v7564 = vmul.f32 %v7425, 0.044715
    %v7565 = vmul.f32 %v7427, 0.044715
    %v7566 = vmul.f32 %v7430, 0.044715
    %v7567 = vmul.f32 %v7432, 0.044715
    %v7568 = vmul.f32 %v7435, 0.044715
    %v7569 = vmul.f32 %v7437, 0.044715
    %v7570 = vmul.f32 %v7440, 0.044715
    %v7571 = vmul.f32 %v7442, 0.044715
    %v7572 = vmul.f32 %v7508, %v7285
    %v7573 = vmul.f32 %v7509, %v7287
    %v7574 = vmul.f32 %v7510, %v7290
    %v7575 = vmul.f32 %v7511, %v7292
    %v7576 = vmul.f32 %v7512, %v7295
    %v7577 = vmul.f32 %v7513, %v7297
    %v7578 = vmul.f32 %v7514, %v7300
    %v7579 = vmul.f32 %v7515, %v7302
    %v7580 = vmul.f32 %v7516, %v7305
    %v7581 = vmul.f32 %v7517, %v7307
    %v7582 = vmul.f32 %v7518, %v7310
    %v7583 = vmul.f32 %v7519, %v7312
    %v7584 = vmul.f32 %v7520, %v7315
    %v7585 = vmul.f32 %v7521, %v7317
    %v7586 = vmul.f32 %v7522, %v7320
    %v7587 = vmul.f32 %v7523, %v7322
    %v7588 = vmul.f32 %v7524, %v7325
    %v7589 = vmul.f32 %v7525, %v7327
    %v7590 = vmul.f32 %v7526, %v7330
    %v7591 = vmul.f32 %v7527, %v7332
    %v7592 = vmul.f32 %v7528, %v7335
    %v7593 = vmul.f32 %v7529, %v7337
    %v7594 = vmul.f32 %v7530, %v7340
    %v7595 = vmul.f32 %v7531, %v7342
    %v7596 = vmul.f32 %v7532, %v7345
    %v7597 = vmul.f32 %v7533, %v7347
    %v7598 = vmul.f32 %v7534, %v7350
    %v7599 = vmul.f32 %v7535, %v7352
    %v7600 = vmul.f32 %v7536, %v7355
    %v7601 = vmul.f32 %v7537, %v7357
    %v7602 = vmul.f32 %v7538, %v7360
    %v7603 = vmul.f32 %v7539, %v7362
    %v7604 = vmul.f32 %v7540, %v7365
    %v7605 = vmul.f32 %v7541, %v7367
    %v7606 = vmul.f32 %v7542, %v7370
    %v7607 = vmul.f32 %v7543, %v7372
    %v7608 = vmul.f32 %v7544, %v7375
    %v7609 = vmul.f32 %v7545, %v7377
    %v7610 = vmul.f32 %v7546, %v7380
    %v7611 = vmul.f32 %v7547, %v7382
    %v7612 = vmul.f32 %v7548, %v7385
    %v7613 = vmul.f32 %v7549, %v7387
    %v7614 = vmul.f32 %v7550, %v7390
    %v7615 = vmul.f32 %v7551, %v7392
    %v7616 = vmul.f32 %v7552, %v7395
    %v7617 = vmul.f32 %v7553, %v7397
    %v7618 = vmul.f32 %v7554, %v7400
    %v7619 = vmul.f32 %v7555, %v7402
    %v7620 = vmul.f32 %v7556, %v7405
    %v7621 = vmul.f32 %v7557, %v7407
    %v7622 = vmul.f32 %v7558, %v7410
    %v7623 = vmul.f32 %v7559, %v7412
    %v7624 = vmul.f32 %v7560, %v7415
    %v7625 = vmul.f32 %v7561, %v7417
    %v7626 = vmul.f32 %v7562, %v7420
    %v7627 = vmul.f32 %v7563, %v7422
    %v7628 = vmul.f32 %v7564, %v7425
    %v7629 = vmul.f32 %v7565, %v7427
    %v7630 = vmul.f32 %v7566, %v7430
    %v7631 = vmul.f32 %v7567, %v7432
    %v7632 = vmul.f32 %v7568, %v7435
    %v7633 = vmul.f32 %v7569, %v7437
    %v7634 = vmul.f32 %v7570, %v7440
    %v7635 = vmul.f32 %v7571, %v7442
    %v7636 = vmul.f32 %v7572, %v7285
    %v7637 = vmul.f32 %v7573, %v7287
    %v7638 = vmul.f32 %v7574, %v7290
    %v7639 = vmul.f32 %v7575, %v7292
    %v7640 = vmul.f32 %v7576, %v7295
    %v7641 = vmul.f32 %v7577, %v7297
    %v7642 = vmul.f32 %v7578, %v7300
    %v7643 = vmul.f32 %v7579, %v7302
    %v7644 = vmul.f32 %v7580, %v7305
    %v7645 = vmul.f32 %v7581, %v7307
    %v7646 = vmul.f32 %v7582, %v7310
    %v7647 = vmul.f32 %v7583, %v7312
    %v7648 = vmul.f32 %v7584, %v7315
    %v7649 = vmul.f32 %v7585, %v7317
    %v7650 = vmul.f32 %v7586, %v7320
    %v7651 = vmul.f32 %v7587, %v7322
    %v7652 = vmul.f32 %v7588, %v7325
    %v7653 = vmul.f32 %v7589, %v7327
    %v7654 = vmul.f32 %v7590, %v7330
    %v7655 = vmul.f32 %v7591, %v7332
    %v7656 = vmul.f32 %v7592, %v7335
    %v7657 = vmul.f32 %v7593, %v7337
    %v7658 = vmul.f32 %v7594, %v7340
    %v7659 = vmul.f32 %v7595, %v7342
    %v7660 = vmul.f32 %v7596, %v7345
    %v7661 = vmul.f32 %v7597, %v7347
    %v7662 = vmul.f32 %v7598, %v7350
    %v7663 = vmul.f32 %v7599, %v7352
    %v7664 = vmul.f32 %v7600, %v7355
    %v7665 = vmul.f32 %v7601, %v7357
    %v7666 = vmul.f32 %v7602, %v7360
    %v7667 = vmul.f32 %v7603, %v7362
    %v7668 = vmul.f32 %v7604, %v7365
    %v7669 = vmul.f32 %v7605, %v7367
    %v7670 = vmul.f32 %v7606, %v7370
    %v7671 = vmul.f32 %v7607, %v7372
    %v7672 = vmul.f32 %v7608, %v7375
    %v7673 = vmul.f32 %v7609, %v7377
    %v7674 = vmul.f32 %v7610, %v7380
    %v7675 = vmul.f32 %v7611, %v7382
    %v7676 = vmul.f32 %v7612, %v7385
    %v7677 = vmul.f32 %v7613, %v7387
    %v7678 = vmul.f32 %v7614, %v7390
    %v7679 = vmul.f32 %v7615, %v7392
    %v7680 = vmul.f32 %v7616, %v7395
    %v7681 = vmul.f32 %v7617, %v7397
    %v7682 = vmul.f32 %v7618, %v7400
    %v7683 = vmul.f32 %v7619, %v7402
    %v7684 = vmul.f32 %v7620, %v7405
    %v7685 = vmul.f32 %v7621, %v7407
    %v7686 = vmul.f32 %v7622, %v7410
    %v7687 = vmul.f32 %v7623, %v7412
    %v7688 = vmul.f32 %v7624, %v7415
    %v7689 = vmul.f32 %v7625, %v7417
    %v7690 = vmul.f32 %v7626, %v7420
    %v7691 = vmul.f32 %v7627, %v7422
    %v7692 = vmul.f32 %v7628, %v7425
    %v7693 = vmul.f32 %v7629, %v7427
    %v7694 = vmul.f32 %v7630, %v7430
    %v7695 = vmul.f32 %v7631, %v7432
    %v7696 = vmul.f32 %v7632, %v7435
    %v7697 = vmul.f32 %v7633, %v7437
    %v7698 = vmul.f32 %v7634, %v7440
    %v7699 = vmul.f32 %v7635, %v7442
    %v7700 = vadd.f32 %v7285, %v7636
    %v7701 = vadd.f32 %v7287, %v7637
    %v7702 = vadd.f32 %v7290, %v7638
    %v7703 = vadd.f32 %v7292, %v7639
    %v7704 = vadd.f32 %v7295, %v7640
    %v7705 = vadd.f32 %v7297, %v7641
    %v7706 = vadd.f32 %v7300, %v7642
    %v7707 = vadd.f32 %v7302, %v7643
    %v7708 = vadd.f32 %v7305, %v7644
    %v7709 = vadd.f32 %v7307, %v7645
    %v7710 = vadd.f32 %v7310, %v7646
    %v7711 = vadd.f32 %v7312, %v7647
    %v7712 = vadd.f32 %v7315, %v7648
    %v7713 = vadd.f32 %v7317, %v7649
    %v7714 = vadd.f32 %v7320, %v7650
    %v7715 = vadd.f32 %v7322, %v7651
    %v7716 = vadd.f32 %v7325, %v7652
    %v7717 = vadd.f32 %v7327, %v7653
    %v7718 = vadd.f32 %v7330, %v7654
    %v7719 = vadd.f32 %v7332, %v7655
    %v7720 = vadd.f32 %v7335, %v7656
    %v7721 = vadd.f32 %v7337, %v7657
    %v7722 = vadd.f32 %v7340, %v7658
    %v7723 = vadd.f32 %v7342, %v7659
    %v7724 = vadd.f32 %v7345, %v7660
    %v7725 = vadd.f32 %v7347, %v7661
    %v7726 = vadd.f32 %v7350, %v7662
    %v7727 = vadd.f32 %v7352, %v7663
    %v7728 = vadd.f32 %v7355, %v7664
    %v7729 = vadd.f32 %v7357, %v7665
    %v7730 = vadd.f32 %v7360, %v7666
    %v7731 = vadd.f32 %v7362, %v7667
    %v7732 = vadd.f32 %v7365, %v7668
    %v7733 = vadd.f32 %v7367, %v7669
    %v7734 = vadd.f32 %v7370, %v7670
    %v7735 = vadd.f32 %v7372, %v7671
    %v7736 = vadd.f32 %v7375, %v7672
    %v7737 = vadd.f32 %v7377, %v7673
    %v7738 = vadd.f32 %v7380, %v7674
    %v7739 = vadd.f32 %v7382, %v7675
    %v7740 = vadd.f32 %v7385, %v7676
    %v7741 = vadd.f32 %v7387, %v7677
    %v7742 = vadd.f32 %v7390, %v7678
    %v7743 = vadd.f32 %v7392, %v7679
    %v7744 = vadd.f32 %v7395, %v7680
    %v7745 = vadd.f32 %v7397, %v7681
    %v7746 = vadd.f32 %v7400, %v7682
    %v7747 = vadd.f32 %v7402, %v7683
    %v7748 = vadd.f32 %v7405, %v7684
    %v7749 = vadd.f32 %v7407, %v7685
    %v7750 = vadd.f32 %v7410, %v7686
    %v7751 = vadd.f32 %v7412, %v7687
    %v7752 = vadd.f32 %v7415, %v7688
    %v7753 = vadd.f32 %v7417, %v7689
    %v7754 = vadd.f32 %v7420, %v7690
    %v7755 = vadd.f32 %v7422, %v7691
    %v7756 = vadd.f32 %v7425, %v7692
    %v7757 = vadd.f32 %v7427, %v7693
    %v7758 = vadd.f32 %v7430, %v7694
    %v7759 = vadd.f32 %v7432, %v7695
    %v7760 = vadd.f32 %v7435, %v7696
    %v7761 = vadd.f32 %v7437, %v7697
    %v7762 = vadd.f32 %v7440, %v7698
    %v7763 = vadd.f32 %v7442, %v7699
    %v7764 = vmul.f32 %v7700, 0.7978846
    %v7765 = vmul.f32 %v7701, 0.7978846
    %v7766 = vmul.f32 %v7702, 0.7978846
    %v7767 = vmul.f32 %v7703, 0.7978846
    %v7768 = vmul.f32 %v7704, 0.7978846
    %v7769 = vmul.f32 %v7705, 0.7978846
    %v7770 = vmul.f32 %v7706, 0.7978846
    %v7771 = vmul.f32 %v7707, 0.7978846
    %v7772 = vmul.f32 %v7708, 0.7978846
    %v7773 = vmul.f32 %v7709, 0.7978846
    %v7774 = vmul.f32 %v7710, 0.7978846
    %v7775 = vmul.f32 %v7711, 0.7978846
    %v7776 = vmul.f32 %v7712, 0.7978846
    %v7777 = vmul.f32 %v7713, 0.7978846
    %v7778 = vmul.f32 %v7714, 0.7978846
    %v7779 = vmul.f32 %v7715, 0.7978846
    %v7780 = vmul.f32 %v7716, 0.7978846
    %v7781 = vmul.f32 %v7717, 0.7978846
    %v7782 = vmul.f32 %v7718, 0.7978846
    %v7783 = vmul.f32 %v7719, 0.7978846
    %v7784 = vmul.f32 %v7720, 0.7978846
    %v7785 = vmul.f32 %v7721, 0.7978846
    %v7786 = vmul.f32 %v7722, 0.7978846
    %v7787 = vmul.f32 %v7723, 0.7978846
    %v7788 = vmul.f32 %v7724, 0.7978846
    %v7789 = vmul.f32 %v7725, 0.7978846
    %v7790 = vmul.f32 %v7726, 0.7978846
    %v7791 = vmul.f32 %v7727, 0.7978846
    %v7792 = vmul.f32 %v7728, 0.7978846
    %v7793 = vmul.f32 %v7729, 0.7978846
    %v7794 = vmul.f32 %v7730, 0.7978846
    %v7795 = vmul.f32 %v7731, 0.7978846
    %v7796 = vmul.f32 %v7732, 0.7978846
    %v7797 = vmul.f32 %v7733, 0.7978846
    %v7798 = vmul.f32 %v7734, 0.7978846
    %v7799 = vmul.f32 %v7735, 0.7978846
    %v7800 = vmul.f32 %v7736, 0.7978846
    %v7801 = vmul.f32 %v7737, 0.7978846
    %v7802 = vmul.f32 %v7738, 0.7978846
    %v7803 = vmul.f32 %v7739, 0.7978846
    %v7804 = vmul.f32 %v7740, 0.7978846
    %v7805 = vmul.f32 %v7741, 0.7978846
    %v7806 = vmul.f32 %v7742, 0.7978846
    %v7807 = vmul.f32 %v7743, 0.7978846
    %v7808 = vmul.f32 %v7744, 0.7978846
    %v7809 = vmul.f32 %v7745, 0.7978846
    %v7810 = vmul.f32 %v7746, 0.7978846
    %v7811 = vmul.f32 %v7747, 0.7978846
    %v7812 = vmul.f32 %v7748, 0.7978846
    %v7813 = vmul.f32 %v7749, 0.7978846
    %v7814 = vmul.f32 %v7750, 0.7978846
    %v7815 = vmul.f32 %v7751, 0.7978846
    %v7816 = vmul.f32 %v7752, 0.7978846
    %v7817 = vmul.f32 %v7753, 0.7978846
    %v7818 = vmul.f32 %v7754, 0.7978846
    %v7819 = vmul.f32 %v7755, 0.7978846
    %v7820 = vmul.f32 %v7756, 0.7978846
    %v7821 = vmul.f32 %v7757, 0.7978846
    %v7822 = vmul.f32 %v7758, 0.7978846
    %v7823 = vmul.f32 %v7759, 0.7978846
    %v7824 = vmul.f32 %v7760, 0.7978846
    %v7825 = vmul.f32 %v7761, 0.7978846
    %v7826 = vmul.f32 %v7762, 0.7978846
    %v7827 = vmul.f32 %v7763, 0.7978846
    %v7828 = vtanh.pop %v7764
    %v7829 = vtanh.pop %v7765
    %v7830 = vtanh.pop %v7766
    %v7831 = vtanh.pop %v7767
    %v7832 = vtanh.pop %v7768
    %v7833 = vtanh.pop %v7769
    %v7834 = vtanh.pop %v7770
    %v7835 = vtanh.pop %v7771
    %v7836 = vtanh.pop %v7772
    %v7837 = vtanh.pop %v7773
    %v7838 = vtanh.pop %v7774
    %v7839 = vtanh.pop %v7775
    %v7840 = vtanh.pop %v7776
    %v7841 = vtanh.pop %v7777
    %v7842 = vtanh.pop %v7778
    %v7843 = vtanh.pop %v7779
    %v7844 = vtanh.pop %v7780
    %v7845 = vtanh.pop %v7781
    %v7846 = vtanh.pop %v7782
    %v7847 = vtanh.pop %v7783
    %v7848 = vtanh.pop %v7784
    %v7849 = vtanh.pop %v7785
    %v7850 = vtanh.pop %v7786
    %v7851 = vtanh.pop %v7787
    %v7852 = vtanh.pop %v7788
    %v7853 = vtanh.pop %v7789
    %v7854 = vtanh.pop %v7790
    %v7855 = vtanh.pop %v7791
    %v7856 = vtanh.pop %v7792
    %v7857 = vtanh.pop %v7793
    %v7858 = vtanh.pop %v7794
    %v7859 = vtanh.pop %v7795
    %v7860 = vtanh.pop %v7796
    %v7861 = vtanh.pop %v7797
    %v7862 = vtanh.pop %v7798
    %v7863 = vtanh.pop %v7799
    %v7864 = vtanh.pop %v7800
    %v7865 = vtanh.pop %v7801
    %v7866 = vtanh.pop %v7802
    %v7867 = vtanh.pop %v7803
    %v7868 = vtanh.pop %v7804
    %v7869 = vtanh.pop %v7805
    %v7870 = vtanh.pop %v7806
    %v7871 = vtanh.pop %v7807
    %v7872 = vtanh.pop %v7808
    %v7873 = vtanh.pop %v7809
    %v7874 = vtanh.pop %v7810
    %v7875 = vtanh.pop %v7811
    %v7876 = vtanh.pop %v7812
    %v7877 = vtanh.pop %v7813
    %v7878 = vtanh.pop %v7814
    %v7879 = vtanh.pop %v7815
    %v7880 = vtanh.pop %v7816
    %v7881 = vtanh.pop %v7817
    %v7882 = vtanh.pop %v7818
    %v7883 = vtanh.pop %v7819
    %v7884 = vtanh.pop %v7820
    %v7885 = vtanh.pop %v7821
    %v7886 = vtanh.pop %v7822
    %v7887 = vtanh.pop %v7823
    %v7888 = vtanh.pop %v7824
    %v7889 = vtanh.pop %v7825
    %v7890 = vtanh.pop %v7826
    %v7891 = vtanh.pop %v7827
    %v7892 = vadd.f32 %v7828, 1.0
    %v7893 = vadd.f32 %v7829, 1.0
    %v7894 = vadd.f32 %v7830, 1.0
    %v7895 = vadd.f32 %v7831, 1.0
    %v7896 = vadd.f32 %v7832, 1.0
    %v7897 = vadd.f32 %v7833, 1.0
    %v7898 = vadd.f32 %v7834, 1.0
    %v7899 = vadd.f32 %v7835, 1.0
    %v7900 = vadd.f32 %v7836, 1.0
    %v7901 = vadd.f32 %v7837, 1.0
    %v7902 = vadd.f32 %v7838, 1.0
    %v7903 = vadd.f32 %v7839, 1.0
    %v7904 = vadd.f32 %v7840, 1.0
    %v7905 = vadd.f32 %v7841, 1.0
    %v7906 = vadd.f32 %v7842, 1.0
    %v7907 = vadd.f32 %v7843, 1.0
    %v7908 = vadd.f32 %v7844, 1.0
    %v7909 = vadd.f32 %v7845, 1.0
    %v7910 = vadd.f32 %v7846, 1.0
    %v7911 = vadd.f32 %v7847, 1.0
    %v7912 = vadd.f32 %v7848, 1.0
    %v7913 = vadd.f32 %v7849, 1.0
    %v7914 = vadd.f32 %v7850, 1.0
    %v7915 = vadd.f32 %v7851, 1.0
    %v7916 = vadd.f32 %v7852, 1.0
    %v7917 = vadd.f32 %v7853, 1.0
    %v7918 = vadd.f32 %v7854, 1.0
    %v7919 = vadd.f32 %v7855, 1.0
    %v7920 = vadd.f32 %v7856, 1.0
    %v7921 = vadd.f32 %v7857, 1.0
    %v7922 = vadd.f32 %v7858, 1.0
    %v7923 = vadd.f32 %v7859, 1.0
    %v7924 = vadd.f32 %v7860, 1.0
    %v7925 = vadd.f32 %v7861, 1.0
    %v7926 = vadd.f32 %v7862, 1.0
    %v7927 = vadd.f32 %v7863, 1.0
    %v7928 = vadd.f32 %v7864, 1.0
    %v7929 = vadd.f32 %v7865, 1.0
    %v7930 = vadd.f32 %v7866, 1.0
    %v7931 = vadd.f32 %v7867, 1.0
    %v7932 = vadd.f32 %v7868, 1.0
    %v7933 = vadd.f32 %v7869, 1.0
    %v7934 = vadd.f32 %v7870, 1.0
    %v7935 = vadd.f32 %v7871, 1.0
    %v7936 = vadd.f32 %v7872, 1.0
    %v7937 = vadd.f32 %v7873, 1.0
    %v7938 = vadd.f32 %v7874, 1.0
    %v7939 = vadd.f32 %v7875, 1.0
    %v7940 = vadd.f32 %v7876, 1.0
    %v7941 = vadd.f32 %v7877, 1.0
    %v7942 = vadd.f32 %v7878, 1.0
    %v7943 = vadd.f32 %v7879, 1.0
    %v7944 = vadd.f32 %v7880, 1.0
    %v7945 = vadd.f32 %v7881, 1.0
    %v7946 = vadd.f32 %v7882, 1.0
    %v7947 = vadd.f32 %v7883, 1.0
    %v7948 = vadd.f32 %v7884, 1.0
    %v7949 = vadd.f32 %v7885, 1.0
    %v7950 = vadd.f32 %v7886, 1.0
    %v7951 = vadd.f32 %v7887, 1.0
    %v7952 = vadd.f32 %v7888, 1.0
    %v7953 = vadd.f32 %v7889, 1.0
    %v7954 = vadd.f32 %v7890, 1.0
    %v7955 = vadd.f32 %v7891, 1.0
    %v7956 = vmul.f32 %v7444, %v7892
    %v7957 = vmul.f32 %v7445, %v7893
    %v7958 = vmul.f32 %v7446, %v7894
    %v7959 = vmul.f32 %v7447, %v7895
    %v7960 = vmul.f32 %v7448, %v7896
    %v7961 = vmul.f32 %v7449, %v7897
    %v7962 = vmul.f32 %v7450, %v7898
    %v7963 = vmul.f32 %v7451, %v7899
    %v7964 = vmul.f32 %v7452, %v7900
    %v7965 = vmul.f32 %v7453, %v7901
    %v7966 = vmul.f32 %v7454, %v7902
    %v7967 = vmul.f32 %v7455, %v7903
    %v7968 = vmul.f32 %v7456, %v7904
    %v7969 = vmul.f32 %v7457, %v7905
    %v7970 = vmul.f32 %v7458, %v7906
    %v7971 = vmul.f32 %v7459, %v7907
    %v7972 = vmul.f32 %v7460, %v7908
    %v7973 = vmul.f32 %v7461, %v7909
    %v7974 = vmul.f32 %v7462, %v7910
    %v7975 = vmul.f32 %v7463, %v7911
    %v7976 = vmul.f32 %v7464, %v7912
    %v7977 = vmul.f32 %v7465, %v7913
    %v7978 = vmul.f32 %v7466, %v7914
    %v7979 = vmul.f32 %v7467, %v7915
    %v7980 = vmul.f32 %v7468, %v7916
    %v7981 = vmul.f32 %v7469, %v7917
    %v7982 = vmul.f32 %v7470, %v7918
    %v7983 = vmul.f32 %v7471, %v7919
    %v7984 = vmul.f32 %v7472, %v7920
    %v7985 = vmul.f32 %v7473, %v7921
    %v7986 = vmul.f32 %v7474, %v7922
    %v7987 = vmul.f32 %v7475, %v7923
    %v7988 = vmul.f32 %v7476, %v7924
    %v7989 = vmul.f32 %v7477, %v7925
    %v7990 = vmul.f32 %v7478, %v7926
    %v7991 = vmul.f32 %v7479, %v7927
    %v7992 = vmul.f32 %v7480, %v7928
    %v7993 = vmul.f32 %v7481, %v7929
    %v7994 = vmul.f32 %v7482, %v7930
    %v7995 = vmul.f32 %v7483, %v7931
    %v7996 = vmul.f32 %v7484, %v7932
    %v7997 = vmul.f32 %v7485, %v7933
    %v7998 = vmul.f32 %v7486, %v7934
    %v7999 = vmul.f32 %v7487, %v7935
    %v8000 = vmul.f32 %v7488, %v7936
    %v8001 = vmul.f32 %v7489, %v7937
    %v8002 = vmul.f32 %v7490, %v7938
    %v8003 = vmul.f32 %v7491, %v7939
    %v8004 = vmul.f32 %v7492, %v7940
    %v8005 = vmul.f32 %v7493, %v7941
    %v8006 = vmul.f32 %v7494, %v7942
    %v8007 = vmul.f32 %v7495, %v7943
    %v8008 = vmul.f32 %v7496, %v7944
    %v8009 = vmul.f32 %v7497, %v7945
    %v8010 = vmul.f32 %v7498, %v7946
    %v8011 = vmul.f32 %v7499, %v7947
    %v8012 = vmul.f32 %v7500, %v7948
    %v8013 = vmul.f32 %v7501, %v7949
    %v8014 = vmul.f32 %v7502, %v7950
    %v8015 = vmul.f32 %v7503, %v7951
    %v8016 = vmul.f32 %v7504, %v7952
    %v8017 = vmul.f32 %v7505, %v7953
    %v8018 = vmul.f32 %v7506, %v7954
    %v8019 = vmul.f32 %v7507, %v7955
    %v8020 = vpack.c.bf16 %v7957, %v7956
    %v8021 = vpack.c.bf16 %v7959, %v7958
    %v8022 = vpack.c.bf16 %v7961, %v7960
    %v8023 = vpack.c.bf16 %v7963, %v7962
    %v8024 = vpack.c.bf16 %v7965, %v7964
    %v8025 = vpack.c.bf16 %v7967, %v7966
    %v8026 = vpack.c.bf16 %v7969, %v7968
    %v8027 = vpack.c.bf16 %v7971, %v7970
    %v8028 = vpack.c.bf16 %v7973, %v7972
    %v8029 = vpack.c.bf16 %v7975, %v7974
    %v8030 = vpack.c.bf16 %v7977, %v7976
    %v8031 = vpack.c.bf16 %v7979, %v7978
    %v8032 = vpack.c.bf16 %v7981, %v7980
    %v8033 = vpack.c.bf16 %v7983, %v7982
    %v8034 = vpack.c.bf16 %v7985, %v7984
    %v8035 = vpack.c.bf16 %v7987, %v7986
    %v8036 = vpack.c.bf16 %v7989, %v7988
    %v8037 = vpack.c.bf16 %v7991, %v7990
    %v8038 = vpack.c.bf16 %v7993, %v7992
    %v8039 = vpack.c.bf16 %v7995, %v7994
    %v8040 = vpack.c.bf16 %v7997, %v7996
    %v8041 = vpack.c.bf16 %v7999, %v7998
    %v8042 = vpack.c.bf16 %v8001, %v8000
    %v8043 = vpack.c.bf16 %v8003, %v8002
    %v8044 = vpack.c.bf16 %v8005, %v8004
    %v8045 = vpack.c.bf16 %v8007, %v8006
    %v8046 = vpack.c.bf16 %v8009, %v8008
    %v8047 = vpack.c.bf16 %v8011, %v8010
    %v8048 = vpack.c.bf16 %v8013, %v8012
    %v8049 = vpack.c.bf16 %v8015, %v8014
    %v8050 = vpack.c.bf16 %v8017, %v8016
    %v8051 = vpack.c.bf16 %v8019, %v8018
    %v8052 = vld [vmem:[%s7] sm:$0xf]
    %v8053 = vld [vmem:[%s7 + $0x4] sm:$0xf]
    %v8054 = vld [vmem:[%s7 + $0x8] sm:$0xf]
    %v8055 = vld [vmem:[%s7 + $0xc] sm:$0xf]
    %v8056 = vld [vmem:[%s7 + $0x10] sm:$0xf]
    %v8057 = vld [vmem:[%s7 + $0x14] sm:$0xf]
    %v8058 = vld [vmem:[%s7 + $0x18] sm:$0xf]
    %v8059 = vld [vmem:[%s7 + $0x1c] sm:$0xf]
    %v8060 = vld [vmem:[%s7 + $0x20] sm:$0xf]
    %v8061 = vld [vmem:[%s7 + $0x24] sm:$0xf]
    %v8062 = vld [vmem:[%s7 + $0x28] sm:$0xf]
    %v8063 = vld [vmem:[%s7 + $0x2c] sm:$0xf]
    %v8064 = vld [vmem:[%s7 + $0x30] sm:$0xf]
    %v8065 = vld [vmem:[%s7 + $0x34] sm:$0xf]
    %v8066 = vld [vmem:[%s7 + $0x38] sm:$0xf]
    %v8067 = vld [vmem:[%s7 + $0x3c] sm:$0xf]
    %v8068 = vld [vmem:[%s8] sm:$0x1]
    %v8070 = vperm.slane %v8068, 0
    %v8088 = vunpack.c.l.b16 %v8052
    %v8089 = vunpack.c.l.b16 %v8053
    %v8090 = vunpack.c.l.b16 %v8054
    %v8091 = vunpack.c.l.b16 %v8055
    %v8092 = vunpack.c.l.b16 %v8056
    %v8093 = vunpack.c.l.b16 %v8057
    %v8094 = vunpack.c.l.b16 %v8058
    %v8095 = vunpack.c.l.b16 %v8059
    %v8096 = vunpack.c.l.b16 %v8060
    %v8097 = vunpack.c.l.b16 %v8061
    %v8098 = vunpack.c.l.b16 %v8062
    %v8099 = vunpack.c.l.b16 %v8063
    %v8100 = vunpack.c.l.b16 %v8064
    %v8101 = vunpack.c.l.b16 %v8065
    %v8102 = vunpack.c.l.b16 %v8066
    %v8103 = vunpack.c.l.b16 %v8067
    %v8104 = vpack.c.b16 %v8089, %v8088
    %v8105 = vpack.c.b16 %v8091, %v8090
    %v8106 = vpack.c.b16 %v8093, %v8092
    %v8107 = vpack.c.b16 %v8095, %v8094
    %v8108 = vpack.c.b16 %v8097, %v8096
    %v8109 = vpack.c.b16 %v8099, %v8098
    %v8110 = vpack.c.b16 %v8101, %v8100
    %v8111 = vpack.c.b16 %v8103, %v8102
    %8120 = vmatpush.bf16.msra.mxu0 %v8111
    %8121 = vmatpush.bf16.msra.mxu0 %v8110
    %8122 = vmatpush.bf16.msra.mxu0 %v8109
    %8123 = vmatpush.bf16.msra.mxu0 %v8108
    %8124 = vmatpush.bf16.msra.mxu0 %v8107
    %8125 = vmatpush.bf16.msra.mxu0 %v8106
    %8126 = vmatpush.bf16.msra.mxu0 %v8105
    %8127 = vmatpush.bf16.msra.mxu0 %v8104
    %8128 = vmatmul.bf16.gmra.mxu0 %v8020
    %v8129 = vpop.f32.mrf.mxu0
    %v8130 = vadd.f32 %v8070, %v8129
    %v8131 = vpop.f32.mrf.mxu0
    %v8132 = vadd.f32 %v8070, %v8131
    %8133 = vmatmul.bf16.gmra.mxu0 %v8021
    %v8134 = vpop.f32.mrf.mxu0
    %v8135 = vadd.f32 %v8070, %v8134
    %v8136 = vpop.f32.mrf.mxu0
    %v8137 = vadd.f32 %v8070, %v8136
    %8138 = vmatmul.bf16.gmra.mxu0 %v8022
    %v8139 = vpop.f32.mrf.mxu0
    %v8140 = vadd.f32 %v8070, %v8139
    %v8141 = vpop.f32.mrf.mxu0
    %v8142 = vadd.f32 %v8070, %v8141
    %8143 = vmatmul.bf16.gmra.mxu0 %v8023
    %v8144 = vpop.f32.mrf.mxu0
    %v8145 = vadd.f32 %v8070, %v8144
    %v8146 = vpop.f32.mrf.mxu0
    %v8147 = vadd.f32 %v8070, %v8146
    %8148 = vmatmul.bf16.gmra.mxu0 %v8024
    %v8149 = vpop.f32.mrf.mxu0
    %v8150 = vadd.f32 %v8070, %v8149
    %v8151 = vpop.f32.mrf.mxu0
    %v8152 = vadd.f32 %v8070, %v8151
    %8153 = vmatmul.bf16.gmra.mxu0 %v8025
    %v8154 = vpop.f32.mrf.mxu0
    %v8155 = vadd.f32 %v8070, %v8154
    %v8156 = vpop.f32.mrf.mxu0
    %v8157 = vadd.f32 %v8070, %v8156
    %8158 = vmatmul.bf16.gmra.mxu0 %v8026
    %v8159 = vpop.f32.mrf.mxu0
    %v8160 = vadd.f32 %v8070, %v8159
    %v8161 = vpop.f32.mrf.mxu0
    %v8162 = vadd.f32 %v8070, %v8161
    %8163 = vmatmul.bf16.gmra.mxu0 %v8027
    %v8164 = vpop.f32.mrf.mxu0
    %v8165 = vadd.f32 %v8070, %v8164
    %v8166 = vpop.f32.mrf.mxu0
    %v8167 = vadd.f32 %v8070, %v8166
    %8168 = vmatmul.bf16.gmra.mxu0 %v8028
    %v8169 = vpop.f32.mrf.mxu0
    %v8170 = vadd.f32 %v8070, %v8169
    %v8171 = vpop.f32.mrf.mxu0
    %v8172 = vadd.f32 %v8070, %v8171
    %8173 = vmatmul.bf16.gmra.mxu0 %v8029
    %v8174 = vpop.f32.mrf.mxu0
    %v8175 = vadd.f32 %v8070, %v8174
    %v8176 = vpop.f32.mrf.mxu0
    %v8177 = vadd.f32 %v8070, %v8176
    %8178 = vmatmul.bf16.gmra.mxu0 %v8030
    %v8179 = vpop.f32.mrf.mxu0
    %v8180 = vadd.f32 %v8070, %v8179
    %v8181 = vpop.f32.mrf.mxu0
    %v8182 = vadd.f32 %v8070, %v8181
    %8183 = vmatmul.bf16.gmra.mxu0 %v8031
    %v8184 = vpop.f32.mrf.mxu0
    %v8185 = vadd.f32 %v8070, %v8184
    %v8186 = vpop.f32.mrf.mxu0
    %v8187 = vadd.f32 %v8070, %v8186
    %8188 = vmatmul.bf16.gmra.mxu0 %v8032
    %v8189 = vpop.f32.mrf.mxu0
    %v8190 = vadd.f32 %v8070, %v8189
    %v8191 = vpop.f32.mrf.mxu0
    %v8192 = vadd.f32 %v8070, %v8191
    %8193 = vmatmul.bf16.gmra.mxu0 %v8033
    %v8194 = vpop.f32.mrf.mxu0
    %v8195 = vadd.f32 %v8070, %v8194
    %v8196 = vpop.f32.mrf.mxu0
    %v8197 = vadd.f32 %v8070, %v8196
    %8198 = vmatmul.bf16.gmra.mxu0 %v8034
    %v8199 = vpop.f32.mrf.mxu0
    %v8200 = vadd.f32 %v8070, %v8199
    %v8201 = vpop.f32.mrf.mxu0
    %v8202 = vadd.f32 %v8070, %v8201
    %8203 = vmatmul.bf16.gmra.mxu0 %v8035
    %v8204 = vpop.f32.mrf.mxu0
    %v8205 = vadd.f32 %v8070, %v8204
    %v8206 = vpop.f32.mrf.mxu0
    %v8207 = vadd.f32 %v8070, %v8206
    %8208 = vmatmul.bf16.gmra.mxu0 %v8036
    %v8209 = vpop.f32.mrf.mxu0
    %v8210 = vadd.f32 %v8070, %v8209
    %v8211 = vpop.f32.mrf.mxu0
    %v8212 = vadd.f32 %v8070, %v8211
    %8213 = vmatmul.bf16.gmra.mxu0 %v8037
    %v8214 = vpop.f32.mrf.mxu0
    %v8215 = vadd.f32 %v8070, %v8214
    %v8216 = vpop.f32.mrf.mxu0
    %v8217 = vadd.f32 %v8070, %v8216
    %8218 = vmatmul.bf16.gmra.mxu0 %v8038
    %v8219 = vpop.f32.mrf.mxu0
    %v8220 = vadd.f32 %v8070, %v8219
    %v8221 = vpop.f32.mrf.mxu0
    %v8222 = vadd.f32 %v8070, %v8221
    %8223 = vmatmul.bf16.gmra.mxu0 %v8039
    %v8224 = vpop.f32.mrf.mxu0
    %v8225 = vadd.f32 %v8070, %v8224
    %v8226 = vpop.f32.mrf.mxu0
    %v8227 = vadd.f32 %v8070, %v8226
    %8228 = vmatmul.bf16.gmra.mxu0 %v8040
    %v8229 = vpop.f32.mrf.mxu0
    %v8230 = vadd.f32 %v8070, %v8229
    %v8231 = vpop.f32.mrf.mxu0
    %v8232 = vadd.f32 %v8070, %v8231
    %8233 = vmatmul.bf16.gmra.mxu0 %v8041
    %v8234 = vpop.f32.mrf.mxu0
    %v8235 = vadd.f32 %v8070, %v8234
    %v8236 = vpop.f32.mrf.mxu0
    %v8237 = vadd.f32 %v8070, %v8236
    %8238 = vmatmul.bf16.gmra.mxu0 %v8042
    %v8239 = vpop.f32.mrf.mxu0
    %v8240 = vadd.f32 %v8070, %v8239
    %v8241 = vpop.f32.mrf.mxu0
    %v8242 = vadd.f32 %v8070, %v8241
    %8243 = vmatmul.bf16.gmra.mxu0 %v8043
    %v8244 = vpop.f32.mrf.mxu0
    %v8245 = vadd.f32 %v8070, %v8244
    %v8246 = vpop.f32.mrf.mxu0
    %v8247 = vadd.f32 %v8070, %v8246
    %8248 = vmatmul.bf16.gmra.mxu0 %v8044
    %v8249 = vpop.f32.mrf.mxu0
    %v8250 = vadd.f32 %v8070, %v8249
    %v8251 = vpop.f32.mrf.mxu0
    %v8252 = vadd.f32 %v8070, %v8251
    %8253 = vmatmul.bf16.gmra.mxu0 %v8045
    %v8254 = vpop.f32.mrf.mxu0
    %v8255 = vadd.f32 %v8070, %v8254
    %v8256 = vpop.f32.mrf.mxu0
    %v8257 = vadd.f32 %v8070, %v8256
    %8258 = vmatmul.bf16.gmra.mxu0 %v8046
    %v8259 = vpop.f32.mrf.mxu0
    %v8260 = vadd.f32 %v8070, %v8259
    %v8261 = vpop.f32.mrf.mxu0
    %v8262 = vadd.f32 %v8070, %v8261
    %8263 = vmatmul.bf16.gmra.mxu0 %v8047
    %v8264 = vpop.f32.mrf.mxu0
    %v8265 = vadd.f32 %v8070, %v8264
    %v8266 = vpop.f32.mrf.mxu0
    %v8267 = vadd.f32 %v8070, %v8266
    %8268 = vmatmul.bf16.gmra.mxu0 %v8048
    %v8269 = vpop.f32.mrf.mxu0
    %v8270 = vadd.f32 %v8070, %v8269
    %v8271 = vpop.f32.mrf.mxu0
    %v8272 = vadd.f32 %v8070, %v8271
    %8273 = vmatmul.bf16.gmra.mxu0 %v8049
    %v8274 = vpop.f32.mrf.mxu0
    %v8275 = vadd.f32 %v8070, %v8274
    %v8276 = vpop.f32.mrf.mxu0
    %v8277 = vadd.f32 %v8070, %v8276
    %8278 = vmatmul.bf16.gmra.mxu0 %v8050
    %v8279 = vpop.f32.mrf.mxu0
    %v8280 = vadd.f32 %v8070, %v8279
    %v8281 = vpop.f32.mrf.mxu0
    %v8282 = vadd.f32 %v8070, %v8281
    %8283 = vmatmul.bf16.gmra.mxu0 %v8051
    %v8284 = vpop.f32.mrf.mxu0
    %v8285 = vadd.f32 %v8070, %v8284
    %v8286 = vpop.f32.mrf.mxu0
    %v8287 = vadd.f32 %v8070, %v8286
    %8288 = vdwg.mxu0
    %v8289 = vld [vmem:[%s9] sm:$0x1]
    %v8291 = vperm.slane %v8289, 0
    %v8293 = vmul.f32 %v8130, %v8291
    %v8294 = vmul.f32 %v8132, %v8291
    %v8295 = vmul.f32 %v8135, %v8291
    %v8296 = vmul.f32 %v8137, %v8291
    %v8297 = vmul.f32 %v8140, %v8291
    %v8298 = vmul.f32 %v8142, %v8291
    %v8299 = vmul.f32 %v8145, %v8291
    %v8300 = vmul.f32 %v8147, %v8291
    %v8301 = vmul.f32 %v8150, %v8291
    %v8302 = vmul.f32 %v8152, %v8291
    %v8303 = vmul.f32 %v8155, %v8291
    %v8304 = vmul.f32 %v8157, %v8291
    %v8305 = vmul.f32 %v8160, %v8291
    %v8306 = vmul.f32 %v8162, %v8291
    %v8307 = vmul.f32 %v8165, %v8291
    %v8308 = vmul.f32 %v8167, %v8291
    %v8309 = vmul.f32 %v8170, %v8291
    %v8310 = vmul.f32 %v8172, %v8291
    %v8311 = vmul.f32 %v8175, %v8291
    %v8312 = vmul.f32 %v8177, %v8291
    %v8313 = vmul.f32 %v8180, %v8291
    %v8314 = vmul.f32 %v8182, %v8291
    %v8315 = vmul.f32 %v8185, %v8291
    %v8316 = vmul.f32 %v8187, %v8291
    %v8317 = vmul.f32 %v8190, %v8291
    %v8318 = vmul.f32 %v8192, %v8291
    %v8319 = vmul.f32 %v8195, %v8291
    %v8320 = vmul.f32 %v8197, %v8291
    %v8321 = vmul.f32 %v8200, %v8291
    %v8322 = vmul.f32 %v8202, %v8291
    %v8323 = vmul.f32 %v8205, %v8291
    %v8324 = vmul.f32 %v8207, %v8291
    %v8325 = vmul.f32 %v8210, %v8291
    %v8326 = vmul.f32 %v8212, %v8291
    %v8327 = vmul.f32 %v8215, %v8291
    %v8328 = vmul.f32 %v8217, %v8291
    %v8329 = vmul.f32 %v8220, %v8291
    %v8330 = vmul.f32 %v8222, %v8291
    %v8331 = vmul.f32 %v8225, %v8291
    %v8332 = vmul.f32 %v8227, %v8291
    %v8333 = vmul.f32 %v8230, %v8291
    %v8334 = vmul.f32 %v8232, %v8291
    %v8335 = vmul.f32 %v8235, %v8291
    %v8336 = vmul.f32 %v8237, %v8291
    %v8337 = vmul.f32 %v8240, %v8291
    %v8338 = vmul.f32 %v8242, %v8291
    %v8339 = vmul.f32 %v8245, %v8291
    %v8340 = vmul.f32 %v8247, %v8291
    %v8341 = vmul.f32 %v8250, %v8291
    %v8342 = vmul.f32 %v8252, %v8291
    %v8343 = vmul.f32 %v8255, %v8291
    %v8344 = vmul.f32 %v8257, %v8291
    %v8345 = vmul.f32 %v8260, %v8291
    %v8346 = vmul.f32 %v8262, %v8291
    %v8347 = vmul.f32 %v8265, %v8291
    %v8348 = vmul.f32 %v8267, %v8291
    %v8349 = vmul.f32 %v8270, %v8291
    %v8350 = vmul.f32 %v8272, %v8291
    %v8351 = vmul.f32 %v8275, %v8291
    %v8352 = vmul.f32 %v8277, %v8291
    %v8353 = vmul.f32 %v8280, %v8291
    %v8354 = vmul.f32 %v8282, %v8291
    %v8355 = vmul.f32 %v8285, %v8291
    %v8356 = vmul.f32 %v8287, %v8291
    %v8357 = vld [vmem:[#allocation4] sm:$0xff]
    %v8358 = vld [vmem:[#allocation4 + $0x8] sm:$0xff]
    %v8359 = vld [vmem:[#allocation4 + $0x10] sm:$0xff]
    %v8360 = vld [vmem:[#allocation4 + $0x18] sm:$0xff]
    %v8361 = vld [vmem:[#allocation4 + $0x20] sm:$0xff]
    %v8362 = vld [vmem:[#allocation4 + $0x28] sm:$0xff]
    %v8363 = vld [vmem:[#allocation4 + $0x30] sm:$0xff]
    %v8364 = vld [vmem:[#allocation4 + $0x38] sm:$0xff]
    %v8365 = vld [vmem:[#allocation4 + $0x40] sm:$0xff]
    %v8366 = vld [vmem:[#allocation4 + $0x48] sm:$0xff]
    %v8367 = vld [vmem:[#allocation4 + $0x50] sm:$0xff]
    %v8368 = vld [vmem:[#allocation4 + $0x58] sm:$0xff]
    %v8369 = vld [vmem:[#allocation4 + $0x60] sm:$0xff]
    %v8370 = vld [vmem:[#allocation4 + $0x68] sm:$0xff]
    %v8371 = vld [vmem:[#allocation4 + $0x70] sm:$0xff]
    %v8372 = vld [vmem:[#allocation4 + $0x78] sm:$0xff]
    %v8373 = vld [vmem:[#allocation4 + $0x80] sm:$0xff]
    %v8374 = vld [vmem:[#allocation4 + $0x88] sm:$0xff]
    %v8375 = vld [vmem:[#allocation4 + $0x90] sm:$0xff]
    %v8376 = vld [vmem:[#allocation4 + $0x98] sm:$0xff]
    %v8377 = vld [vmem:[#allocation4 + $0xa0] sm:$0xff]
    %v8378 = vld [vmem:[#allocation4 + $0xa8] sm:$0xff]
    %v8379 = vld [vmem:[#allocation4 + $0xb0] sm:$0xff]
    %v8380 = vld [vmem:[#allocation4 + $0xb8] sm:$0xff]
    %v8381 = vld [vmem:[#allocation4 + $0xc0] sm:$0xff]
    %v8382 = vld [vmem:[#allocation4 + $0xc8] sm:$0xff]
    %v8383 = vld [vmem:[#allocation4 + $0xd0] sm:$0xff]
    %v8384 = vld [vmem:[#allocation4 + $0xd8] sm:$0xff]
    %v8385 = vld [vmem:[#allocation4 + $0xe0] sm:$0xff]
    %v8386 = vld [vmem:[#allocation4 + $0xe8] sm:$0xff]
    %v8387 = vld [vmem:[#allocation4 + $0xf0] sm:$0xff]
    %v8388 = vld [vmem:[#allocation4 + $0xf8] sm:$0xff]
    %v8389 = vld [vmem:[#allocation4 + $0x100] sm:$0xff]
    %v8390 = vld [vmem:[#allocation4 + $0x108] sm:$0xff]
    %v8391 = vld [vmem:[#allocation4 + $0x110] sm:$0xff]
    %v8392 = vld [vmem:[#allocation4 + $0x118] sm:$0xff]
    %v8393 = vld [vmem:[#allocation4 + $0x120] sm:$0xff]
    %v8394 = vld [vmem:[#allocation4 + $0x128] sm:$0xff]
    %v8395 = vld [vmem:[#allocation4 + $0x130] sm:$0xff]
    %v8396 = vld [vmem:[#allocation4 + $0x138] sm:$0xff]
    %v8397 = vld [vmem:[#allocation4 + $0x140] sm:$0xff]
    %v8398 = vld [vmem:[#allocation4 + $0x148] sm:$0xff]
    %v8399 = vld [vmem:[#allocation4 + $0x150] sm:$0xff]
    %v8400 = vld [vmem:[#allocation4 + $0x158] sm:$0xff]
    %v8401 = vld [vmem:[#allocation4 + $0x160] sm:$0xff]
    %v8402 = vld [vmem:[#allocation4 + $0x168] sm:$0xff]
    %v8403 = vld [vmem:[#allocation4 + $0x170] sm:$0xff]
    %v8404 = vld [vmem:[#allocation4 + $0x178] sm:$0xff]
    %v8405 = vld [vmem:[#allocation4 + $0x180] sm:$0xff]
    %v8406 = vld [vmem:[#allocation4 + $0x188] sm:$0xff]
    %v8407 = vld [vmem:[#allocation4 + $0x190] sm:$0xff]
    %v8408 = vld [vmem:[#allocation4 + $0x198] sm:$0xff]
    %v8409 = vld [vmem:[#allocation4 + $0x1a0] sm:$0xff]
    %v8410 = vld [vmem:[#allocation4 + $0x1a8] sm:$0xff]
    %v8411 = vld [vmem:[#allocation4 + $0x1b0] sm:$0xff]
    %v8412 = vld [vmem:[#allocation4 + $0x1b8] sm:$0xff]
    %v8413 = vld [vmem:[#allocation4 + $0x1c0] sm:$0xff]
    %v8414 = vld [vmem:[#allocation4 + $0x1c8] sm:$0xff]
    %v8415 = vld [vmem:[#allocation4 + $0x1d0] sm:$0xff]
    %v8416 = vld [vmem:[#allocation4 + $0x1d8] sm:$0xff]
    %v8417 = vld [vmem:[#allocation4 + $0x1e0] sm:$0xff]
    %v8418 = vld [vmem:[#allocation4 + $0x1e8] sm:$0xff]
    %v8419 = vld [vmem:[#allocation4 + $0x1f0] sm:$0xff]
    %v8420 = vld [vmem:[#allocation4 + $0x1f8] sm:$0xff]
    %v8421 = vadd.f32 %v8357, %v8293
    %v8422 = vadd.f32 %v8358, %v8294
    %v8423 = vadd.f32 %v8359, %v8295
    %v8424 = vadd.f32 %v8360, %v8296
    %v8425 = vadd.f32 %v8361, %v8297
    %v8426 = vadd.f32 %v8362, %v8298
    %v8427 = vadd.f32 %v8363, %v8299
    %v8428 = vadd.f32 %v8364, %v8300
    %v8429 = vadd.f32 %v8365, %v8301
    %v8430 = vadd.f32 %v8366, %v8302
    %v8431 = vadd.f32 %v8367, %v8303
    %v8432 = vadd.f32 %v8368, %v8304
    %v8433 = vadd.f32 %v8369, %v8305
    %v8434 = vadd.f32 %v8370, %v8306
    %v8435 = vadd.f32 %v8371, %v8307
    %v8436 = vadd.f32 %v8372, %v8308
    %v8437 = vadd.f32 %v8373, %v8309
    %v8438 = vadd.f32 %v8374, %v8310
    %v8439 = vadd.f32 %v8375, %v8311
    %v8440 = vadd.f32 %v8376, %v8312
    %v8441 = vadd.f32 %v8377, %v8313
    %v8442 = vadd.f32 %v8378, %v8314
    %v8443 = vadd.f32 %v8379, %v8315
    %v8444 = vadd.f32 %v8380, %v8316
    %v8445 = vadd.f32 %v8381, %v8317
    %v8446 = vadd.f32 %v8382, %v8318
    %v8447 = vadd.f32 %v8383, %v8319
    %v8448 = vadd.f32 %v8384, %v8320
    %v8449 = vadd.f32 %v8385, %v8321
    %v8450 = vadd.f32 %v8386, %v8322
    %v8451 = vadd.f32 %v8387, %v8323
    %v8452 = vadd.f32 %v8388, %v8324
    %v8453 = vadd.f32 %v8389, %v8325
    %v8454 = vadd.f32 %v8390, %v8326
    %v8455 = vadd.f32 %v8391, %v8327
    %v8456 = vadd.f32 %v8392, %v8328
    %v8457 = vadd.f32 %v8393, %v8329
    %v8458 = vadd.f32 %v8394, %v8330
    %v8459 = vadd.f32 %v8395, %v8331
    %v8460 = vadd.f32 %v8396, %v8332
    %v8461 = vadd.f32 %v8397, %v8333
    %v8462 = vadd.f32 %v8398, %v8334
    %v8463 = vadd.f32 %v8399, %v8335
    %v8464 = vadd.f32 %v8400, %v8336
    %v8465 = vadd.f32 %v8401, %v8337
    %v8466 = vadd.f32 %v8402, %v8338
    %v8467 = vadd.f32 %v8403, %v8339
    %v8468 = vadd.f32 %v8404, %v8340
    %v8469 = vadd.f32 %v8405, %v8341
    %v8470 = vadd.f32 %v8406, %v8342
    %v8471 = vadd.f32 %v8407, %v8343
    %v8472 = vadd.f32 %v8408, %v8344
    %v8473 = vadd.f32 %v8409, %v8345
    %v8474 = vadd.f32 %v8410, %v8346
    %v8475 = vadd.f32 %v8411, %v8347
    %v8476 = vadd.f32 %v8412, %v8348
    %v8477 = vadd.f32 %v8413, %v8349
    %v8478 = vadd.f32 %v8414, %v8350
    %v8479 = vadd.f32 %v8415, %v8351
    %v8480 = vadd.f32 %v8416, %v8352
    %v8481 = vadd.f32 %v8417, %v8353
    %v8482 = vadd.f32 %v8418, %v8354
    %v8483 = vadd.f32 %v8419, %v8355
    %v8484 = vadd.f32 %v8420, %v8356
    %8485 = vst.msk [vmem:[#allocation7] sm:$0xff] %vm7178, %v8421
    %8486 = vst.msk [vmem:[#allocation7 + $0x8] sm:$0xff] %vm7178, %v8422
    %8487 = vst.msk [vmem:[#allocation7 + $0x10] sm:$0xff] %vm7178, %v8423
    %8488 = vst.msk [vmem:[#allocation7 + $0x18] sm:$0xff] %vm7178, %v8424
    %8489 = vst.msk [vmem:[#allocation7 + $0x20] sm:$0xff] %vm7178, %v8425
    %8490 = vst.msk [vmem:[#allocation7 + $0x28] sm:$0xff] %vm7178, %v8426
    %8491 = vst.msk [vmem:[#allocation7 + $0x30] sm:$0xff] %vm7178, %v8427
    %8492 = vst.msk [vmem:[#allocation7 + $0x38] sm:$0xff] %vm7178, %v8428
    %8493 = vst.msk [vmem:[#allocation7 + $0x40] sm:$0xff] %vm7178, %v8429
    %8494 = vst.msk [vmem:[#allocation7 + $0x48] sm:$0xff] %vm7178, %v8430
    %8495 = vst.msk [vmem:[#allocation7 + $0x50] sm:$0xff] %vm7178, %v8431
    %8496 = vst.msk [vmem:[#allocation7 + $0x58] sm:$0xff] %vm7178, %v8432
    %8497 = vst.msk [vmem:[#allocation7 + $0x60] sm:$0xff] %vm7178, %v8433
    %8498 = vst.msk [vmem:[#allocation7 + $0x68] sm:$0xff] %vm7178, %v8434
    %8499 = vst.msk [vmem:[#allocation7 + $0x70] sm:$0xff] %vm7178, %v8435
    %8500 = vst.msk [vmem:[#allocation7 + $0x78] sm:$0xff] %vm7178, %v8436
    %8501 = vst.msk [vmem:[#allocation7 + $0x80] sm:$0xff] %vm7178, %v8437
    %8502 = vst.msk [vmem:[#allocation7 + $0x88] sm:$0xff] %vm7178, %v8438
    %8503 = vst.msk [vmem:[#allocation7 + $0x90] sm:$0xff] %vm7178, %v8439
    %8504 = vst.msk [vmem:[#allocation7 + $0x98] sm:$0xff] %vm7178, %v8440
    %8505 = vst.msk [vmem:[#allocation7 + $0xa0] sm:$0xff] %vm7178, %v8441
    %8506 = vst.msk [vmem:[#allocation7 + $0xa8] sm:$0xff] %vm7178, %v8442
    %8507 = vst.msk [vmem:[#allocation7 + $0xb0] sm:$0xff] %vm7178, %v8443
    %8508 = vst.msk [vmem:[#allocation7 + $0xb8] sm:$0xff] %vm7178, %v8444
    %8509 = vst.msk [vmem:[#allocation7 + $0xc0] sm:$0xff] %vm7178, %v8445
    %8510 = vst.msk [vmem:[#allocation7 + $0xc8] sm:$0xff] %vm7178, %v8446
    %8511 = vst.msk [vmem:[#allocation7 + $0xd0] sm:$0xff] %vm7178, %v8447
    %8512 = vst.msk [vmem:[#allocation7 + $0xd8] sm:$0xff] %vm7178, %v8448
    %8513 = vst.msk [vmem:[#allocation7 + $0xe0] sm:$0xff] %vm7178, %v8449
    %8514 = vst.msk [vmem:[#allocation7 + $0xe8] sm:$0xff] %vm7178, %v8450
    %8515 = vst.msk [vmem:[#allocation7 + $0xf0] sm:$0xff] %vm7178, %v8451
    %8516 = vst.msk [vmem:[#allocation7 + $0xf8] sm:$0xff] %vm7178, %v8452
    %8517 = vst.msk [vmem:[#allocation7 + $0x100] sm:$0xff] %vm7178, %v8453
    %8518 = vst.msk [vmem:[#allocation7 + $0x108] sm:$0xff] %vm7178, %v8454
    %8519 = vst.msk [vmem:[#allocation7 + $0x110] sm:$0xff] %vm7178, %v8455
    %8520 = vst.msk [vmem:[#allocation7 + $0x118] sm:$0xff] %vm7178, %v8456
    %8521 = vst.msk [vmem:[#allocation7 + $0x120] sm:$0xff] %vm7178, %v8457
    %8522 = vst.msk [vmem:[#allocation7 + $0x128] sm:$0xff] %vm7178, %v8458
    %8523 = vst.msk [vmem:[#allocation7 + $0x130] sm:$0xff] %vm7178, %v8459
    %8524 = vst.msk [vmem:[#allocation7 + $0x138] sm:$0xff] %vm7178, %v8460
    %8525 = vst.msk [vmem:[#allocation7 + $0x140] sm:$0xff] %vm7178, %v8461
    %8526 = vst.msk [vmem:[#allocation7 + $0x148] sm:$0xff] %vm7178, %v8462
    %8527 = vst.msk [vmem:[#allocation7 + $0x150] sm:$0xff] %vm7178, %v8463
    %8528 = vst.msk [vmem:[#allocation7 + $0x158] sm:$0xff] %vm7178, %v8464
    %8529 = vst.msk [vmem:[#allocation7 + $0x160] sm:$0xff] %vm7178, %v8465
    %8530 = vst.msk [vmem:[#allocation7 + $0x168] sm:$0xff] %vm7178, %v8466
    %8531 = vst.msk [vmem:[#allocation7 + $0x170] sm:$0xff] %vm7178, %v8467
    %8532 = vst.msk [vmem:[#allocation7 + $0x178] sm:$0xff] %vm7178, %v8468
    %8533 = vst.msk [vmem:[#allocation7 + $0x180] sm:$0xff] %vm7178, %v8469
    %8534 = vst.msk [vmem:[#allocation7 + $0x188] sm:$0xff] %vm7178, %v8470
    %8535 = vst.msk [vmem:[#allocation7 + $0x190] sm:$0xff] %vm7178, %v8471
    %8536 = vst.msk [vmem:[#allocation7 + $0x198] sm:$0xff] %vm7178, %v8472
    %8537 = vst.msk [vmem:[#allocation7 + $0x1a0] sm:$0xff] %vm7178, %v8473
    %8538 = vst.msk [vmem:[#allocation7 + $0x1a8] sm:$0xff] %vm7178, %v8474
    %8539 = vst.msk [vmem:[#allocation7 + $0x1b0] sm:$0xff] %vm7178, %v8475
    %8540 = vst.msk [vmem:[#allocation7 + $0x1b8] sm:$0xff] %vm7178, %v8476
    %8541 = vst.msk [vmem:[#allocation7 + $0x1c0] sm:$0xff] %vm7178, %v8477
    %8542 = vst.msk [vmem:[#allocation7 + $0x1c8] sm:$0xff] %vm7178, %v8478
    %8543 = vst.msk [vmem:[#allocation7 + $0x1d0] sm:$0xff] %vm7178, %v8479
    %8544 = vst.msk [vmem:[#allocation7 + $0x1d8] sm:$0xff] %vm7178, %v8480
    %8545 = vst.msk [vmem:[#allocation7 + $0x1e0] sm:$0xff] %vm7178, %v8481
    %8546 = vst.msk [vmem:[#allocation7 + $0x1e8] sm:$0xff] %vm7178, %v8482
    %8547 = vst.msk [vmem:[#allocation7 + $0x1f0] sm:$0xff] %vm7178, %v8483
    %8548 = vst.msk [vmem:[#allocation7 + $0x1f8] sm:$0xff] %vm7178, %v8484
    // Predicated region
    $region60: #{block_forward.1} parent=1 // pred_check
      _
    $region61: #{block_forward.1} parent=1 // pred_check_branch
      %8550 = sbr.rel (0) target = $region63
    $region62: #{block_forward.1} parent=1 // pred_region
      %8552 = vsyncadd [#allocation6], 0
      %s8553 = sshll.u32 [#allocation7], 4
      %s8554 = int_to_ptr.vmem [resolvable:$true] %s8553
      %s8555 = sshll.u32 %s10, 4
      %s8556 = int_to_ptr.hbm [resolvable:$true] %s8555
      %8561 = dma.vmem_to_hbm [thread:$0]  %s8554, 8192, %s8556, [#allocation6], 128, 128, 8
    $region63: #{block_forward.1} parent=1 // pred_fallthru
      _
    // Predicated region
    $region64: #{block_forward.1} parent=1 // pred_check
      _
    $region65: #{block_forward.1} parent=1 // pred_check_branch
      %8563 = sbr.rel (0) target = $region67
    $region66: #{block_forward.1} parent=1 // pred_region
      %8565 = dma.done [#allocation6], 8192
    $region67: #{block_forward.1} parent=1 // pred_fallthru
      _
    %8566 = vsyncpa [#allocation5], 1
    %8567 = vsyncpa [#allocation6], 1

</llo_original>
